<compile_context>
chip_gen: v6e
topology: v6e:2x2x1
jax: 0.10.0
libtpu: 0.0.40
codegen_flags: <defaults>
</compile_context>

<pallas_src>
import functools

import numpy as np

import jax
import jax.numpy as jnp
from jax.experimental import pallas as pl
from jax.experimental.pallas import tpu as pltpu

EPS = 1e-5
NEG_SLOPE = 0.01                     # PyTorch LeakyReLU default slope


# --------------------------------------------------------------------------------- #
# small helpers
# --------------------------------------------------------------------------------- #

def _full_spec(shape):
    """BlockSpec covering the whole array (every kernel here runs with grid=(1,))."""
    nd = len(shape)
    return pl.BlockSpec(tuple(shape), lambda i: (0,) * nd)


def _mm_f32(w, a):
    """(C, K) @ (K, M) with f32 accumulation.  K == 1 (the 1x1x1 conv of block 1)
    avoids a degenerate MXU matmul and uses a VPU broadcast-multiply instead."""
    if w.shape[1] == 1:
        return w.astype(jnp.float32) * a.astype(jnp.float32)
    return jnp.dot(w, a, preferred_element_type=jnp.float32)


def _leaky(x):
    return jnp.where(x >= 0, x, NEG_SLOPE * x)


# --------------------------------------------------------------------------------- #
# Pallas kernels (activations are channel-major (C, M) with M = B*D*H*W on lanes)
# --------------------------------------------------------------------------------- #

def _conv_kernel(w_ref, a_ref, b_ref, o_ref):
    """Plain conv-as-matmul: o = W @ A + b."""
    y = _mm_f32(w_ref[...], a_ref[...]) + b_ref[...]
    o_ref[...] = y.astype(o_ref.dtype)


def conv_bias(w_mat, a_mat, bias_col, out_dtype=jnp.float32):
    c, k = w_mat.shape
    m = a_mat.shape[1]
    return pl.pallas_call(
        _conv_kernel,
        out_shape=jax.ShapeDtypeStruct((c, m), out_dtype),
        grid=(1,),
        in_specs=[_full_spec((c, k)), _full_spec((k, m)), _full_spec((c, 1))],
        out_specs=_full_spec((c, m)),
        compiler_params=pltpu.CompilerParams(dimension_semantics=("arbitrary",)),
    )(w_mat, a_mat, bias_col.astype(jnp.float32))


def _conv_bn_act_kernel(w_ref, a_ref, b_ref, g_ref, be_ref, o_ref, *, act, per_row, eps):
    """Fused conv + training-mode BatchNorm (stats computed in-kernel) + activation."""
    y = _mm_f32(w_ref[...], a_ref[...]) + b_ref[...]
    if per_row:                                   # rows == channels
        n = y.shape[1]
        s1 = jnp.sum(y, axis=1, keepdims=True)
        s2 = jnp.sum(y * y, axis=1, keepdims=True)
    else:                                         # all rows are one channel (phase-major)
        n = y.shape[0] * y.shape[1]
        s1 = jnp.sum(jnp.sum(y, axis=1, keepdims=True), axis=0, keepdims=True)
        s2 = jnp.sum(jnp.sum(y * y, axis=1, keepdims=True), axis=0, keepdims=True)
    mean = s1 * (1.0 / n)
    var = jnp.maximum(s2 * (1.0 / n) - mean * mean, 0.0)
    scale = g_ref[...] * jax.lax.rsqrt(var + eps)
    shift = be_ref[...] - mean * scale
    z = y * scale + shift
    if act == "leaky":
        z = jnp.where(z >= 0, z, NEG_SLOPE * z)
    elif act == "tanh":
        z = jnp.tanh(z)
    o_ref[...] = z.astype(o_ref.dtype)


def conv_bn_act(w_mat, a_mat, bias_col, gamma_col, beta_col, *, act, per_row, out_dtype):
    c, k = w_mat.shape
    m = a_mat.shape[1]
    kern = functools.partial(_conv_bn_act_kernel, act=act, per_row=per_row, eps=EPS)
    return pl.pallas_call(
        kern,
        out_shape=jax.ShapeDtypeStruct((c, m), out_dtype),
        grid=(1,),
        in_specs=[_full_spec((c, k)), _full_spec((k, m)), _full_spec(bias_col.shape),
                  _full_spec(gamma_col.shape), _full_spec(beta_col.shape)],
        out_specs=_full_spec((c, m)),
        compiler_params=pltpu.CompilerParams(dimension_semantics=("arbitrary",)),
    )(w_mat, a_mat, bias_col.astype(jnp.float32),
      gamma_col.astype(jnp.float32), beta_col.astype(jnp.float32))


def _conv_stats_pool_kernel(w_ref, a_ref, b_ref, o_ref, sum_ref, ssq_ref, pool_ref, *, dhw):
    """conv2 of the resblock: y = W@A + b, plus per-channel sum / sum-of-squares (for
    BN2) and the per-(batch, channel) SE average pool, all in one pass."""
    y = _mm_f32(w_ref[...], a_ref[...]) + b_ref[...]
    o_ref[...] = y
    sum_ref[...] = jnp.sum(y, axis=1, keepdims=True)
    ssq_ref[...] = jnp.sum(y * y, axis=1, keepdims=True)
    c, m = y.shape
    lane = jax.lax.broadcasted_iota(jnp.int32, (c, m), 1)
    for b in range(m // dhw):                                   # static batch loop
        mask = (lane >= b * dhw) & (lane < (b + 1) * dhw)
        pool_ref[b] = jnp.sum(jnp.where(mask, y, 0.0), axis=1, keepdims=True) * (1.0 / dhw)


def conv_stats_pool(w_mat, a_mat, bias_col, dhw):
    c, k = w_mat.shape
    m = a_mat.shape[1]
    nb = m // dhw
    kern = functools.partial(_conv_stats_pool_kernel, dhw=dhw)
    return pl.pallas_call(
        kern,
        out_shape=(jax.ShapeDtypeStruct((c, m), jnp.float32),
                   jax.ShapeDtypeStruct((c, 1), jnp.float32),
                   jax.ShapeDtypeStruct((c, 1), jnp.float32),
                   jax.ShapeDtypeStruct((nb, c, 1), jnp.float32)),
        grid=(1,),
        in_specs=[_full_spec((c, k)), _full_spec((k, m)), _full_spec((c, 1))],
        out_specs=(_full_spec((c, m)), _full_spec((c, 1)), _full_spec((c, 1)),
                   _full_spec((nb, c, 1))),
        compiler_params=pltpu.CompilerParams(dimension_semantics=("arbitrary",)),
    )(w_mat, a_mat, bias_col.astype(jnp.float32))


def _se_tail_kernel(x_ref, sc_ref, sh_ref, gate_ref, res_ref, gg_ref, gb_ref, o_ref,
                    *, dhw, eps):
    """Fused resblock tail + outer block BN + LeakyReLU:
       z = LeakyReLU( (x*sc2 + sh2) * gate_b + residual )
       o = LeakyReLU( BN_block(z) )   (block BN stats computed in-kernel)."""
    x = x_ref[...]
    c, m = x.shape
    lane = jax.lax.broadcasted_iota(jnp.int32, (c, m), 1)
    gate_full = jnp.zeros((c, m), jnp.float32)
    for b in range(m // dhw):                                   # static batch loop
        mask = (lane >= b * dhw) & (lane < (b + 1) * dhw)
        gate_full = jnp.where(mask, gate_ref[b], gate_full)     # gate_ref[b]: (C, 1)
    z = (x * sc_ref[...] + sh_ref[...]) * gate_full + res_ref[...]
    z = jnp.where(z >= 0, z, NEG_SLOPE * z)
    mean = jnp.sum(z, axis=1, keepdims=True) * (1.0 / m)
    var = jnp.maximum(jnp.sum(z * z, axis=1, keepdims=True) * (1.0 / m) - mean * mean, 0.0)
    scz = gg_ref[...] * jax.lax.rsqrt(var + eps)
    shz = gb_ref[...] - mean * scz
    out = z * scz + shz
    o_ref[...] = jnp.where(out >= 0, out, NEG_SLOPE * out).astype(o_ref.dtype)


def se_tail(h2, sc2, sh2, gate_bc1, res, gamma_col, beta_col, dhw, out_dtype):
    c, m = h2.shape
    nb = gate_bc1.shape[0]
    kern = functools.partial(_se_tail_kernel, dhw=dhw, eps=EPS)
    return pl.pallas_call(
        kern,
        out_shape=jax.ShapeDtypeStruct((c, m), out_dtype),
        grid=(1,),
        in_specs=[_full_spec((c, m)), _full_spec((c, 1)), _full_spec((c, 1)),
                  _full_spec((nb, c, 1)), _full_spec((c, m)),
                  _full_spec((c, 1)), _full_spec((c, 1))],
        out_specs=_full_spec((c, m)),
        compiler_params=pltpu.CompilerParams(dimension_semantics=("arbitrary",)),
    )(h2, sc2, sh2, gate_bc1, res, gamma_col, beta_col)


# --------------------------------------------------------------------------------- #
# ConvTranspose3d lowering (XLA im2col + weight matrices; phase-decomposed stride 2)
# --------------------------------------------------------------------------------- #

_PHASE_SEL = np.zeros((2, 3, 4), np.float32)
# (output phase p, window offset on the 1-padded input) -> original kernel tap index
_PHASE_SEL[0, 0, 3] = 1.0
_PHASE_SEL[0, 1, 1] = 1.0
_PHASE_SEL[1, 1, 2] = 1.0
_PHASE_SEL[1, 2, 0] = 1.0


def _weights_stride1(wt):
    """(Cin, Cout, k, k, k) -> (Cout, k^3*Cin) correlation matrix (flipped taps)."""
    cin, cout, k = wt.shape[0], wt.shape[1], wt.shape[2]
    wf = jnp.flip(wt, axis=(2, 3, 4))
    return jnp.transpose(wf, (1, 2, 3, 4, 0)).reshape(cout, k * k * k * cin)


def _weights_stride2(wt):
    """(Cin, Cout, 4, 4, 4) -> (8*Cout, 27*Cin): all 8 sub-pixel output phases of a
    k=4 / stride=2 / padding=1 transposed conv over the 27 union taps of the 1-padded
    input (taps a phase does not use are zero)."""
    cin, cout = wt.shape[0], wt.shape[1]
    sel = jnp.asarray(_PHASE_SEL, wt.dtype)
    w_all = jnp.einsum("adk,bel,cfm,ioklm->abcodefi", sel, sel, sel, wt)
    return w_all.reshape(8 * cout, 27 * cin)


def _im2col_s1(x_cm, shp, k, padding):
    """im2col (bf16) for the stride-1 transposed conv == correlation with pad k-1-p."""
    b, d, h, w = shp
    c = x_cm.shape[0]
    x = x_cm.reshape(c, b, d, h, w).astype(jnp.bfloat16)
    if k == 1:
        return x.reshape(c, b * d * h * w), shp
    pad = k - 1 - padding
    do = d + k - 1 - 2 * padding
    ho = h + k - 1 - 2 * padding
    wo = w + k - 1 - 2 * padding
    xp = jnp.pad(x, ((0, 0), (0, 0), (pad, pad), (pad, pad), (pad, pad)))
    wins = [xp[:, :, a:a + do, bb:bb + ho, cc:cc + wo]
            for a in range(k) for bb in range(k) for cc in range(k)]
    a_mat = jnp.stack(wins, axis=0).reshape(k ** 3 * c, b * do * ho * wo)
    return a_mat, (b, do, ho, wo)


def _im2col_s2(x_cm, shp):
    """27-tap union im2col (bf16) for the k=4 / s=2 / p=1 sub-pixel decomposition."""
    b, d, h, w = shp
    c = x_cm.shape[0]
    x = x_cm.reshape(c, b, d, h, w).astype(jnp.bfloat16)
    xp = jnp.pad(x, ((0, 0), (0, 0), (1, 1), (1, 1), (1, 1)))
    wins = [xp[:, :, a:a + d, bb:bb + h, cc:cc + w]
            for a in range(3) for bb in range(3) for cc in range(3)]
    a_mat = jnp.stack(wins, axis=0).reshape(27 * c, b * d * h * w)
    return a_mat, (b, 2 * d, 2 * h, 2 * w)


def _phase_interleave(y_pm, cout, shp_in):
    """Phase-major (8*Cout, M_in) -> channel-major (Cout, 8*M_in) (XLA transpose)."""
    b, d, h, w = shp_in
    y8 = y_pm.reshape(2, 2, 2, cout, b, d, h, w)
    return jnp.transpose(y8, (3, 4, 5, 0, 6, 1, 7, 2)).reshape(cout, b * 8 * d * h * w)


def bn_affine(chan_sum, chan_ssq, n, gamma, beta, eps=EPS):
    """Training-mode BatchNorm3d (biased variance) scale/shift from fused sums."""
    mean = chan_sum / n
    var = jnp.maximum(chan_ssq / n - mean * mean, 0.0)
    scale = gamma * jax.lax.rsqrt(var + eps)
    shift = beta - mean * scale
    return scale, shift


def se_gate(pooled, se_p):
    """pooled: (B, C) -> sigmoid gate (B, C).  Matches torch SEBlock (reduction=16;
    C//16 == 0 for C < 16 gives a bias-only gate, like torch)."""
    r = se_p["w1"].shape[0]
    if r == 0:
        b = pooled.shape[0]
        return jax.nn.sigmoid(jnp.broadcast_to(se_p["b2"][None, :], (b, se_p["b2"].shape[0])))
    hid = jnp.maximum(pooled @ se_p["w1"].T + se_p["b1"], 0.0)
    return jax.nn.sigmoid(hid @ se_p["w2"].T + se_p["b2"])


# --------------------------------------------------------------------------------- #
# decoder blocks
# --------------------------------------------------------------------------------- #

def se_resnet_block(y0_cm, shp, bp):
    """DecoderSEResNetBlock (identity shortcut, in==out channels) followed by the
    outer Sequential's BatchNorm3d + LeakyReLU.  y0_cm: (C, M) f32."""
    c, m = y0_cm.shape
    bsz, d, h, w = shp
    dhw = d * h * w
    rp = bp["res"]

    # conv1 -> BN1 -> LeakyReLU, one fused kernel (bf16 out: only consumed as patches)
    a1, _ = _im2col_s1(y0_cm, shp, 3, 1)
    w1 = _weights_stride1(rp["conv1_w"]).astype(jnp.bfloat16)
    h1a = conv_bn_act(w1, a1, rp["conv1_b"].reshape(c, 1),
                      rp["bn1_g"].reshape(c, 1), rp["bn1_b"].reshape(c, 1),
                      act="leaky", per_row=True, out_dtype=jnp.bfloat16)

    # conv2 + BN2 statistics + SE average pool, one fused kernel
    a2, _ = _im2col_s1(h1a, shp, 3, 1)
    w2 = _weights_stride1(rp["conv2_w"]).astype(jnp.bfloat16)
    h2, csum, cssq, pooled_raw = conv_stats_pool(w2, a2, rp["conv2_b"].reshape(c, 1), dhw)

    # tiny per-channel / per-batch scalar math (fused by XLA under jit)
    sc2, sh2 = bn_affine(csum[:, 0], cssq[:, 0], m, rp["bn2_g"], rp["bn2_b"])
    pooled_bn = sc2[None, :] * pooled_raw[:, :, 0] + sh2[None, :]      # (B, C)
    gate = se_gate(pooled_bn, rp["se"])                                 # (B, C)

    # fused tail: LeakyReLU(BN2(h2)*gate + residual) -> block BN -> LeakyReLU
    return se_tail(h2, sc2.reshape(c, 1), sh2.reshape(c, 1),
                   gate.reshape(bsz, c, 1), y0_cm,
                   bp["bn_g"].reshape(c, 1), bp["bn_b"].reshape(c, 1),
                   dhw, out_dtype=jnp.bfloat16)


def svs_decoder_forward(x_ncdhw, params):
    """x_ncdhw: (B, latent_channels, D, H, W) -> (B, 1, 4D, 4H, 4W) (NCDHW)."""
    bsz, c_lat, d, h, w = x_ncdhw.shape
    x = jnp.transpose(x_ncdhw, (1, 0, 2, 3, 4)).reshape(c_lat, bsz * d * h * w)
    shp = (bsz, d, h, w)

    # Blocks 1-4: ConvT -> DecoderSEResNetBlock -> BatchNorm3d -> LeakyReLU
    outer = [(1, 1, 0), (3, 1, 1), (3, 1, 1), (4, 2, 1)]        # (k, stride, padding)
    for i, (k, stride, padding) in enumerate(outer):
        bp = params["blocks"][i]
        cout = bp["conv_w"].shape[1]
        if stride == 1:
            a_mat, shp = _im2col_s1(x, shp, k, padding)
            w_mat = _weights_stride1(bp["conv_w"]).astype(jnp.bfloat16)
            y0 = conv_bias(w_mat, a_mat, bp["conv_b"].reshape(cout, 1))
        else:
            shp_in = shp
            a_mat, shp = _im2col_s2(x, shp)
            w_mat = _weights_stride2(bp["conv_w"]).astype(jnp.bfloat16)
            bias8 = jnp.tile(bp["conv_b"], 8).reshape(8 * cout, 1)
            y_pm = conv_bias(w_mat, a_mat, bias8)
            y0 = _phase_interleave(y_pm, cout, shp_in)
        x = se_resnet_block(y0, shp, bp)

    # Block 5: ConvT(4->1, k=4, s=2, p=1) -> BatchNorm3d -> Tanh, one fused kernel
    # operating on the phase-major (8, M) layout (full 8-sublane vregs for the tanh).
    bp = params["blocks"][4]
    assert bp["conv_w"].shape[1] == 1
    shp_in = shp
    a_mat, shp = _im2col_s2(x, shp)
    w_mat = _weights_stride2(bp["conv_w"]).astype(jnp.bfloat16)
    y_pm = conv_bn_act(w_mat, a_mat, bp["conv_b"].reshape(1, 1),
                       bp["bn_g"].reshape(1, 1), bp["bn_b"].reshape(1, 1),
                       act="tanh", per_row=False, out_dtype=jnp.float32)
    y = _phase_interleave(y_pm, 1, shp_in)
    b5, d5, h5, w5 = shp
    return jnp.transpose(y.reshape(1, b5, d5, h5, w5), (1, 0, 2, 3, 4))


# --------------------------------------------------------------------------------- #
# pure-XLA reference (same bf16 cast points) for parity checking
# --------------------------------------------------------------------------------- #

def _convtranspose3d_ref(x, wt, bias, stride, padding):
    k = wt.shape[2]
    w_conv = jnp.flip(jnp.transpose(wt, (1, 0, 2, 3, 4)), axis=(2, 3, 4))
    q = k - 1 - padding
    y = jax.lax.conv_general_dilated(
        x.astype(jnp.bfloat16), w_conv.astype(jnp.bfloat16),
        window_strides=(1, 1, 1), padding=[(q, q)] * 3, lhs_dilation=(stride,) * 3,
        dimension_numbers=("NCDHW", "OIDHW", "NCDHW"),
        preferred_element_type=jnp.float32)
    return y + bias.reshape(1, -1, 1, 1, 1)


def _bn_ref(x, gamma, beta, eps=EPS):
    mean = jnp.mean(x, axis=(0, 2, 3, 4), keepdims=True)
    var = jnp.mean((x - mean) ** 2, axis=(0, 2, 3, 4), keepdims=True)
    return ((x - mean) * jax.lax.rsqrt(var + eps) * gamma.reshape(1, -1, 1, 1, 1)
            + beta.reshape(1, -1, 1, 1, 1))


def svs_decoder_reference(x, params):
    outer = [(1, 1, 0), (3, 1, 1), (3, 1, 1), (4, 2, 1)]
    for i, (k, stride, padding) in enumerate(outer):
        bp = params["blocks"][i]
        rp = bp["res"]
        y0 = _convtranspose3d_ref(x, bp["conv_w"], bp["conv_b"], stride, padding)
        h1 = _leaky(_bn_ref(_convtranspose3d_ref(y0, rp["conv1_w"], rp["conv1_b"], 1, 1),
                            rp["bn1_g"], rp["bn1_b"]))
        h2 = _bn_ref(_convtranspose3d_ref(h1, rp["conv2_w"], rp["conv2_b"], 1, 1),
                     rp["bn2_g"], rp["bn2_b"])
        bb, cc = h2.shape[:2]
        gate = se_gate(h2.mean(axis=(2, 3, 4)), rp["se"])
        z = _leaky(h2 * gate.reshape(bb, cc, 1, 1, 1) + y0)
        x = _leaky(_bn_ref(z, bp["bn_g"], bp["bn_b"]))
    bp = params["blocks"][4]
    y = _convtranspose3d_ref(x, bp["conv_w"], bp["conv_b"], 2, 1)
    return jnp.tanh(_bn_ref(y, bp["bn_g"], bp["bn_b"]))


# --------------------------------------------------------------------------------- #
# deterministic parameters
# --------------------------------------------------------------------------------- #

def init_params(key):
    keys = iter(jax.random.split(key, 256))

    def randn(shape, scale=0.1):
        return scale * jax.random.normal(next(keys), shape, dtype=jnp.float32)

    def convt(cin, cout, k):
        return randn((cin, cout, k, k, k)), randn((cout,), 0.01)

    def bn(c):
        return jnp.ones((c,), jnp.float32), jnp.zeros((c,), jnp.float32)

    def se(c, reduction=16):
        r = c // reduction          # 0 for C < 16 -> bias-only gate (like torch)
        return {"w1": randn((r, c)), "b1": randn((r,), 0.01),
                "w2": randn((c, r)), "b2": randn((c,), 0.01)}

    def resblock(c):
        c1w, c1b = convt(c, c, 3)
        c2w, c2b = convt(c, c, 3)
        g1, b1 = bn(c)
        g2, b2 = bn(c)
        return {"conv1_w": c1w, "conv1_b": c1b, "bn1_g": g1, "bn1_b": b1,
                "conv2_w": c2w, "conv2_b": c2b, "bn2_g": g2, "bn2_b": b2,
                "se": se(c)}

    blocks = []
    outer = [(1, 32, 1), (32, 16, 3), (16, 8, 3), (8, 4, 4)]
    for cin, cout, k in outer:
        wgt, b = convt(cin, cout, k)
        g, bb = bn(cout)
        blocks.append({"conv_w": wgt, "conv_b": b, "res": resblock(cout),
                       "bn_g": g, "bn_b": bb})
    wgt, b = convt(4, 1, 4)
    g, bb = bn(1)
    blocks.append({"conv_w": wgt, "conv_b": b, "bn_g": g, "bn_b": bb})
    return {"blocks": blocks}


# --------------------------------------------------------------------------------- #
# main
# --------------------------------------------------------------------------------- #

if __name__ == "__main__":
    key = jax.random.PRNGKey(0)
    pkey, xkey = jax.random.split(key)
    params = init_params(pkey)

    # PyTorch-style latent input: (B, latent_channels, D, H, W) = (2, 1, 4, 4, 4)
    x_ncdhw = jax.random.normal(xkey, (2, 1, 4, 4, 4), dtype=jnp.float32)

    fwd = jax.jit(svs_decoder_forward)
    y = jax.block_until_ready(fwd(x_ncdhw, params))

    # spatial 4 -> 4 -> 4 -> 8 -> 16, channels -> 1 (NCDHW, like the torch module)
    assert y.shape == (2, 1, 16, 16, 16), y.shape
    assert bool(jnp.all(jnp.isfinite(y)))
    assert bool(jnp.all(jnp.abs(y) <= 1.0 + 1e-6))           # tanh output range

    # parity against a pure-XLA reference with identical bf16 cast points
    y_ref = jax.block_until_ready(jax.jit(svs_decoder_reference)(x_ncdhw, params))
    np.testing.assert_allclose(np.asarray(y), np.asarray(y_ref), atol=2e-2, rtol=0)

    print("KERNEL_OK")
</pallas_src>

<mosaic_0001>
module attributes {stable_mosaic.version = 11 : i64} {
  func.func @_conv_kernel(%arg0: i32, %arg1: memref<32x1xbf16, #tpu.memory_space<vmem>>, %arg2: memref<1x128xbf16, #tpu.memory_space<vmem>>, %arg3: memref<32x1xf32, #tpu.memory_space<vmem>>, %arg4: memref<32x128xf32, #tpu.memory_space<vmem>>) attributes {dimension_semantics = [#tpu.dimension_semantics<arbitrary>], iteration_bounds = array<i64: 1>, scalar_prefetch = 0 : i64, scratch_operands = 0 : i64, tpu.core_type = #tpu.core_type<tc>, window_params = [{pipeline_mode = #tpu.pipeline_mode<synchronous>, transform_indices = @transform_0, window_bounds = array<i64: 32, 1>}, {pipeline_mode = #tpu.pipeline_mode<synchronous>, transform_indices = @transform_1, window_bounds = array<i64: 1, 128>}, {pipeline_mode = #tpu.pipeline_mode<synchronous>, transform_indices = @transform_2, window_bounds = array<i64: 32, 1>}, {pipeline_mode = #tpu.pipeline_mode<synchronous>, transform_indices = @transform_3, window_bounds = array<i64: 32, 128>}]} {
    %c0 = arith.constant 0 : index
    %c0_0 = arith.constant 0 : index
    %0 = vector.load %arg1[%c0, %c0_0] : memref<32x1xbf16, #tpu.memory_space<vmem>>, vector<32x1xbf16>
    %c0_1 = arith.constant 0 : index
    %c0_2 = arith.constant 0 : index
    %1 = vector.load %arg2[%c0_1, %c0_2] : memref<1x128xbf16, #tpu.memory_space<vmem>>, vector<1x128xbf16>
    %2 = arith.extf %0 : vector<32x1xbf16> to vector<32x1xf32>
    %3 = arith.extf %1 : vector<1x128xbf16> to vector<1x128xf32>
    %4 = vector.broadcast %2 : vector<32x1xf32> to vector<32x128xf32>
    %5 = vector.broadcast %3 : vector<1x128xf32> to vector<32x128xf32>
    %6 = arith.mulf %4, %5 : vector<32x128xf32>
    %c0_3 = arith.constant 0 : index
    %c0_4 = arith.constant 0 : index
    %7 = vector.load %arg3[%c0_3, %c0_4] : memref<32x1xf32, #tpu.memory_space<vmem>>, vector<32x1xf32>
    %8 = vector.broadcast %7 : vector<32x1xf32> to vector<32x128xf32>
    %9 = arith.addf %6, %8 : vector<32x128xf32>
    %c0_5 = arith.constant 0 : index
    %c0_6 = arith.constant 0 : index
    %10 = vector.load %arg4[%c0_5, %c0_6] : memref<32x128xf32, #tpu.memory_space<vmem>>, vector<32x128xf32>
    tpu.vector_store %arg4[%c0_5, %c0_6], %9 {strides = array<i32>} : memref<32x128xf32, #tpu.memory_space<vmem>>, vector<32x128xf32>,
    return
  }
  func.func @transform_0(%arg0: i32) -> (i32, i32) {
    %c0_i32 = arith.constant 0 : i32
    %c0_i32_0 = arith.constant 0 : i32
    %c0_i32_1 = arith.constant 0 : i32
    return %c0_i32, %c0_i32_0 : i32, i32
  }
  func.func @transform_1(%arg0: i32) -> (i32, i32) {
    %c0_i32 = arith.constant 0 : i32
    %c0_i32_0 = arith.constant 0 : i32
    %c0_i32_1 = arith.constant 0 : i32
    return %c0_i32, %c0_i32_0 : i32, i32
  }
  func.func @transform_2(%arg0: i32) -> (i32, i32) {
    %c0_i32 = arith.constant 0 : i32
    %c0_i32_0 = arith.constant 0 : i32
    %c0_i32_1 = arith.constant 0 : i32
    return %c0_i32, %c0_i32_0 : i32, i32
  }
  func.func @transform_3(%arg0: i32) -> (i32, i32) {
    %c0_i32 = arith.constant 0 : i32
    %c0_i32_0 = arith.constant 0 : i32
    %c0_i32_1 = arith.constant 0 : i32
    return %c0_i32, %c0_i32_0 : i32, i32
  }
}

module attributes {stable_mosaic.version = 11 : i64} {
  func.func @_conv_bn_act_kernel(%arg0: i32, %arg1: memref<32x864xbf16, #tpu.memory_space<vmem>>, %arg2: memref<864x128xbf16, #tpu.memory_space<vmem>>, %arg3: memref<32x1xf32, #tpu.memory_space<vmem>>, %arg4: memref<32x1xf32, #tpu.memory_space<vmem>>, %arg5: memref<32x1xf32, #tpu.memory_space<vmem>>, %arg6: memref<32x128xbf16, #tpu.memory_space<vmem>>) attributes {dimension_semantics = [#tpu.dimension_semantics<arbitrary>], iteration_bounds = array<i64: 1>, scalar_prefetch = 0 : i64, scratch_operands = 0 : i64, tpu.core_type = #tpu.core_type<tc>, window_params = [{pipeline_mode = #tpu.pipeline_mode<synchronous>, transform_indices = @transform_0, window_bounds = array<i64: 32, 864>}, {pipeline_mode = #tpu.pipeline_mode<synchronous>, transform_indices = @transform_1, window_bounds = array<i64: 864, 128>}, {pipeline_mode = #tpu.pipeline_mode<synchronous>, transform_indices = @transform_2, window_bounds = array<i64: 32, 1>}, {pipeline_mode = #tpu.pipeline_mode<synchronous>, transform_indices = @transform_3, window_bounds = array<i64: 32, 1>}, {pipeline_mode = #tpu.pipeline_mode<synchronous>, transform_indices = @transform_4, window_bounds = array<i64: 32, 1>}, {pipeline_mode = #tpu.pipeline_mode<synchronous>, transform_indices = @transform_5, window_bounds = array<i64: 32, 128>}]} {
    %c0 = arith.constant 0 : index
    %c0_0 = arith.constant 0 : index
    %0 = vector.load %arg1[%c0, %c0_0] : memref<32x864xbf16, #tpu.memory_space<vmem>>, vector<32x864xbf16>
    %c0_1 = arith.constant 0 : index
    %c0_2 = arith.constant 0 : index
    %1 = vector.load %arg2[%c0_1, %c0_2] : memref<864x128xbf16, #tpu.memory_space<vmem>>, vector<864x128xbf16>
    %cst = arith.constant dense<0.000000e+00> : vector<32x128xf32>
    %2 = tpu.matmul %0, %1, %cst {dimension_numbers = #tpu.dot_dimension_numbers<[1], [0], [0], [1], [0, 0, 1, 1], [], []>} : vector<32x864xbf16>, vector<864x128xbf16>, vector<32x128xf32> -> vector<32x128xf32>
    %c0_3 = arith.constant 0 : index
    %c0_4 = arith.constant 0 : index
    %3 = vector.load %arg3[%c0_3, %c0_4] : memref<32x1xf32, #tpu.memory_space<vmem>>, vector<32x1xf32>
    %4 = vector.broadcast %3 : vector<32x1xf32> to vector<32x128xf32>
    %5 = arith.addf %2, %4 : vector<32x128xf32>
    %cst_5 = arith.constant dense<0.000000e+00> : vector<32xf32>
    %6 = vector.multi_reduction <add>, %5, %cst_5 [1] : vector<32x128xf32> to vector<32xf32>
    %7 = vector.shape_cast %6 : vector<32xf32> to vector<32x1xf32>
    %8 = arith.mulf %5, %5 : vector<32x128xf32>
    %cst_6 = arith.constant dense<0.000000e+00> : vector<32xf32>
    %9 = vector.multi_reduction <add>, %8, %cst_6 [1] : vector<32x128xf32> to vector<32xf32>
    %10 = vector.shape_cast %9 : vector<32xf32> to vector<32x1xf32>
    %cst_7 = arith.constant 7.812500e-03 : f32
    %11 = vector.broadcast %cst_7 : f32 to vector<32x1xf32>
    %12 = arith.mulf %7, %11 : vector<32x1xf32>
    %cst_8 = arith.constant 7.812500e-03 : f32
    %13 = vector.broadcast %cst_8 : f32 to vector<32x1xf32>
    %14 = arith.mulf %10, %13 : vector<32x1xf32>
    %15 = arith.mulf %12, %12 : vector<32x1xf32>
    %16 = arith.subf %14, %15 : vector<32x1xf32>
    %cst_9 = arith.constant 0.000000e+00 : f32
    %17 = vector.broadcast %cst_9 : f32 to vector<32x1xf32>
    %18 = arith.maximumf %16, %17 : vector<32x1xf32>
    %c0_10 = arith.constant 0 : index
    %c0_11 = arith.constant 0 : index
    %19 = vector.load %arg4[%c0_10, %c0_11] : memref<32x1xf32, #tpu.memory_space<vmem>>, vector<32x1xf32>
    %cst_12 = arith.constant 9.99999974E-6 : f32
    %20 = vector.broadcast %cst_12 : f32 to vector<32x1xf32>
    %21 = arith.addf %18, %20 : vector<32x1xf32>
    %22 = math.rsqrt %21 : vector<32x1xf32>
    %23 = arith.mulf %19, %22 : vector<32x1xf32>
    %c0_13 = arith.constant 0 : index
    %c0_14 = arith.constant 0 : index
    %24 = vector.load %arg5[%c0_13, %c0_14] : memref<32x1xf32, #tpu.memory_space<vmem>>, vector<32x1xf32>
    %25 = arith.mulf %12, %23 : vector<32x1xf32>
    %26 = arith.subf %24, %25 : vector<32x1xf32>
    %27 = vector.broadcast %23 : vector<32x1xf32> to vector<32x128xf32>
    %28 = arith.mulf %5, %27 : vector<32x128xf32>
    %29 = vector.broadcast %26 : vector<32x1xf32> to vector<32x128xf32>
    %30 = arith.addf %28, %29 : vector<32x128xf32>
    %cst_15 = arith.constant 0.000000e+00 : f32
    %31 = vector.broadcast %cst_15 : f32 to vector<32x128xf32>
    %32 = arith.cmpf oge, %30, %31 : vector<32x128xf32>
    %cst_16 = arith.constant 0.00999999977 : f32
    %33 = vector.broadcast %cst_16 : f32 to vector<32x128xf32>
    %34 = arith.mulf %33, %30 : vector<32x128xf32>
    %35 = arith.select %32, %30, %34 : vector<32x128xi1>, vector<32x128xf32>
    %36 = arith.truncf %35 : vector<32x128xf32> to vector<32x128xbf16>
    %c0_17 = arith.constant 0 : index
    %c0_18 = arith.constant 0 : index
    %37 = vector.load %arg6[%c0_17, %c0_18] : memref<32x128xbf16, #tpu.memory_space<vmem>>, vector<32x128xbf16>
    tpu.vector_store %arg6[%c0_17, %c0_18], %36 {strides = array<i32>} : memref<32x128xbf16, #tpu.memory_space<vmem>>, vector<32x128xbf16>,
    return
  }
  func.func @transform_0(%arg0: i32) -> (i32, i32) {
    %c0_i32 = arith.constant 0 : i32
    %c0_i32_0 = arith.constant 0 : i32
    %c0_i32_1 = arith.constant 0 : i32
    return %c0_i32, %c0_i32_0 : i32, i32
  }
  func.func @transform_1(%arg0: i32) -> (i32, i32) {
    %c0_i32 = arith.constant 0 : i32
    %c0_i32_0 = arith.constant 0 : i32
    %c0_i32_1 = arith.constant 0 : i32
    return %c0_i32, %c0_i32_0 : i32, i32
  }
  func.func @transform_2(%arg0: i32) -> (i32, i32) {
    %c0_i32 = arith.constant 0 : i32
    %c0_i32_0 = arith.constant 0 : i32
    %c0_i32_1 = arith.constant 0 : i32
    return %c0_i32, %c0_i32_0 : i32, i32
  }
  func.func @transform_3(%arg0: i32) -> (i32, i32) {
    %c0_i32 = arith.constant 0 : i32
    %c0_i32_0 = arith.constant 0 : i32
    %c0_i32_1 = arith.constant 0 : i32
    return %c0_i32, %c0_i32_0 : i32, i32
  }
  func.func @transform_4(%arg0: i32) -> (i32, i32) {
    %c0_i32 = arith.constant 0 : i32
    %c0_i32_0 = arith.constant 0 : i32
    %c0_i32_1 = arith.constant 0 : i32
    return %c0_i32, %c0_i32_0 : i32, i32
  }
  func.func @transform_5(%arg0: i32) -> (i32, i32) {
    %c0_i32 = arith.constant 0 : i32
    %c0_i32_0 = arith.constant 0 : i32
    %c0_i32_1 = arith.constant 0 : i32
    return %c0_i32, %c0_i32_0 : i32, i32
  }
}

module attributes {stable_mosaic.version = 11 : i64} {
  func.func @_conv_stats_pool_kernel(%arg0: i32, %arg1: memref<32x864xbf16, #tpu.memory_space<vmem>>, %arg2: memref<864x128xbf16, #tpu.memory_space<vmem>>, %arg3: memref<32x1xf32, #tpu.memory_space<vmem>>, %arg4: memref<32x128xf32, #tpu.memory_space<vmem>>, %arg5: memref<32x1xf32, #tpu.memory_space<vmem>>, %arg6: memref<32x1xf32, #tpu.memory_space<vmem>>, %arg7: memref<2x32x1xf32, #tpu.memory_space<vmem>>) attributes {dimension_semantics = [#tpu.dimension_semantics<arbitrary>], iteration_bounds = array<i64: 1>, scalar_prefetch = 0 : i64, scratch_operands = 0 : i64, tpu.core_type = #tpu.core_type<tc>, window_params = [{pipeline_mode = #tpu.pipeline_mode<synchronous>, transform_indices = @transform_0, window_bounds = array<i64: 32, 864>}, {pipeline_mode = #tpu.pipeline_mode<synchronous>, transform_indices = @transform_1, window_bounds = array<i64: 864, 128>}, {pipeline_mode = #tpu.pipeline_mode<synchronous>, transform_indices = @transform_2, window_bounds = array<i64: 32, 1>}, {pipeline_mode = #tpu.pipeline_mode<synchronous>, transform_indices = @transform_3, window_bounds = array<i64: 32, 128>}, {pipeline_mode = #tpu.pipeline_mode<synchronous>, transform_indices = @transform_4, window_bounds = array<i64: 32, 1>}, {pipeline_mode = #tpu.pipeline_mode<synchronous>, transform_indices = @transform_5, window_bounds = array<i64: 32, 1>}, {pipeline_mode = #tpu.pipeline_mode<synchronous>, transform_indices = @transform_6, window_bounds = array<i64: 2, 32, 1>}]} {
    %c0 = arith.constant 0 : index
    %c0_0 = arith.constant 0 : index
    %0 = vector.load %arg1[%c0, %c0_0] : memref<32x864xbf16, #tpu.memory_space<vmem>>, vector<32x864xbf16>
    %c0_1 = arith.constant 0 : index
    %c0_2 = arith.constant 0 : index
    %1 = vector.load %arg2[%c0_1, %c0_2] : memref<864x128xbf16, #tpu.memory_space<vmem>>, vector<864x128xbf16>
    %cst = arith.constant dense<0.000000e+00> : vector<32x128xf32>
    %2 = tpu.matmul %0, %1, %cst {dimension_numbers = #tpu.dot_dimension_numbers<[1], [0], [0], [1], [0, 0, 1, 1], [], []>} : vector<32x864xbf16>, vector<864x128xbf16>, vector<32x128xf32> -> vector<32x128xf32>
    %c0_3 = arith.constant 0 : index
    %c0_4 = arith.constant 0 : index
    %3 = vector.load %arg3[%c0_3, %c0_4] : memref<32x1xf32, #tpu.memory_space<vmem>>, vector<32x1xf32>
    %4 = vector.broadcast %3 : vector<32x1xf32> to vector<32x128xf32>
    %5 = arith.addf %2, %4 : vector<32x128xf32>
    %c0_5 = arith.constant 0 : index
    %c0_6 = arith.constant 0 : index
    %6 = vector.load %arg4[%c0_5, %c0_6] : memref<32x128xf32, #tpu.memory_space<vmem>>, vector<32x128xf32>
    tpu.vector_store %arg4[%c0_5, %c0_6], %5 {strides = array<i32>} : memref<32x128xf32, #tpu.memory_space<vmem>>, vector<32x128xf32>,
    %cst_7 = arith.constant dense<0.000000e+00> : vector<32xf32>
    %7 = vector.multi_reduction <add>, %5, %cst_7 [1] : vector<32x128xf32> to vector<32xf32>
    %8 = vector.shape_cast %7 : vector<32xf32> to vector<32x1xf32>
    %c0_8 = arith.constant 0 : index
    %c0_9 = arith.constant 0 : index
    %9 = vector.load %arg5[%c0_8, %c0_9] : memref<32x1xf32, #tpu.memory_space<vmem>>, vector<32x1xf32>
    tpu.vector_store %arg5[%c0_8, %c0_9], %8 {strides = array<i32>} : memref<32x1xf32, #tpu.memory_space<vmem>>, vector<32x1xf32>,
    %10 = arith.mulf %5, %5 : vector<32x128xf32>
    %cst_10 = arith.constant dense<0.000000e+00> : vector<32xf32>
    %11 = vector.multi_reduction <add>, %10, %cst_10 [1] : vector<32x128xf32> to vector<32xf32>
    %12 = vector.shape_cast %11 : vector<32xf32> to vector<32x1xf32>
    %c0_11 = arith.constant 0 : index
    %c0_12 = arith.constant 0 : index
    %13 = vector.load %arg6[%c0_11, %c0_12] : memref<32x1xf32, #tpu.memory_space<vmem>>, vector<32x1xf32>
    tpu.vector_store %arg6[%c0_11, %c0_12], %12 {strides = array<i32>} : memref<32x1xf32, #tpu.memory_space<vmem>>, vector<32x1xf32>,
    %14 = tpu.iota {dimensions = array<i32: 1>} : vector<32x128xi32>
    %c0_i32 = arith.constant 0 : i32
    %15 = vector.broadcast %c0_i32 : i32 to vector<32x128xi32>
    %16 = arith.cmpi sge, %14, %15 : vector<32x128xi32>
    %c64_i32 = arith.constant 64 : i32
    %17 = vector.broadcast %c64_i32 : i32 to vector<32x128xi32>
    %18 = arith.cmpi slt, %14, %17 : vector<32x128xi32>
    %19 = arith.andi %16, %18 : vector<32x128xi1>
    %cst_13 = arith.constant 0.000000e+00 : f32
    %20 = vector.broadcast %cst_13 : f32 to vector<32x128xf32>
    %21 = arith.select %19, %5, %20 : vector<32x128xi1>, vector<32x128xf32>
    %cst_14 = arith.constant dense<0.000000e+00> : vector<32xf32>
    %22 = vector.multi_reduction <add>, %21, %cst_14 [1] : vector<32x128xf32> to vector<32xf32>
    %23 = vector.shape_cast %22 : vector<32xf32> to vector<32x1xf32>
    %cst_15 = arith.constant 1.562500e-02 : f32
    %24 = vector.broadcast %cst_15 : f32 to vector<32x1xf32>
    %25 = arith.mulf %23, %24 : vector<32x1xf32>
    %c0_16 = arith.constant 0 : index
    %c0_17 = arith.constant 0 : index
    %c0_18 = arith.constant 0 : index
    %26 = vector.load %arg7[%c0_16, %c0_17, %c0_18] : memref<2x32x1xf32, #tpu.memory_space<vmem>>, vector<1x32x1xf32>
    %27 = vector.shape_cast %26 : vector<1x32x1xf32> to vector<32x1xf32>
    %28 = vector.shape_cast %25 : vector<32x1xf32> to vector<1x32x1xf32>
    tpu.vector_store %arg7[%c0_16, %c0_17, %c0_18], %28 {strides = array<i32>} : memref<2x32x1xf32, #tpu.memory_space<vmem>>, vector<1x32x1xf32>,
    %c64_i32_19 = arith.constant 64 : i32
    %29 = vector.broadcast %c64_i32_19 : i32 to vector<32x128xi32>
    %30 = arith.cmpi sge, %14, %29 : vector<32x128xi32>
    %c128_i32 = arith.constant 128 : i32
    %31 = vector.broadcast %c128_i32 : i32 to vector<32x128xi32>
    %32 = arith.cmpi slt, %14, %31 : vector<32x128xi32>
    %33 = arith.andi %30, %32 : vector<32x128xi1>
    %cst_20 = arith.constant 0.000000e+00 : f32
    %34 = vector.broadcast %cst_20 : f32 to vector<32x128xf32>
    %35 = arith.select %33, %5, %34 : vector<32x128xi1>, vector<32x128xf32>
    %cst_21 = arith.constant dense<0.000000e+00> : vector<32xf32>
    %36 = vector.multi_reduction <add>, %35, %cst_21 [1] : vector<32x128xf32> to vector<32xf32>
    %37 = vector.shape_cast %36 : vector<32xf32> to vector<32x1xf32>
    %cst_22 = arith.constant 1.562500e-02 : f32
    %38 = vector.broadcast %cst_22 : f32 to vector<32x1xf32>
    %39 = arith.mulf %37, %38 : vector<32x1xf32>
    %c1 = arith.constant 1 : index
    %c0_23 = arith.constant 0 : index
    %c0_24 = arith.constant 0 : index
    %40 = vector.load %arg7[%c1, %c0_23, %c0_24] : memref<2x32x1xf32, #tpu.memory_space<vmem>>, vector<1x32x1xf32>
    %41 = vector.shape_cast %40 : vector<1x32x1xf32> to vector<32x1xf32>
    %42 = vector.shape_cast %39 : vector<32x1xf32> to vector<1x32x1xf32>
    tpu.vector_store %arg7[%c1, %c0_23, %c0_24], %42 {strides = array<i32>} : memref<2x32x1xf32, #tpu.memory_space<vmem>>, vector<1x32x1xf32>,
    return
  }
  func.func @transform_0(%arg0: i32) -> (i32, i32) {
    %c0_i32 = arith.constant 0 : i32
    %c0_i32_0 = arith.constant 0 : i32
    %c0_i32_1 = arith.constant 0 : i32
    return %c0_i32, %c0_i32_0 : i32, i32
  }
  func.func @transform_1(%arg0: i32) -> (i32, i32) {
    %c0_i32 = arith.constant 0 : i32
    %c0_i32_0 = arith.constant 0 : i32
    %c0_i32_1 = arith.constant 0 : i32
    return %c0_i32, %c0_i32_0 : i32, i32
  }
  func.func @transform_2(%arg0: i32) -> (i32, i32) {
    %c0_i32 = arith.constant 0 : i32
    %c0_i32_0 = arith.constant 0 : i32
    %c0_i32_1 = arith.constant 0 : i32
    return %c0_i32, %c0_i32_0 : i32, i32
  }
  func.func @transform_3(%arg0: i32) -> (i32, i32) {
    %c0_i32 = arith.constant 0 : i32
    %c0_i32_0 = arith.constant 0 : i32
    %c0_i32_1 = arith.constant 0 : i32
    return %c0_i32, %c0_i32_0 : i32, i32
  }
  func.func @transform_4(%arg0: i32) -> (i32, i32) {
    %c0_i32 = arith.constant 0 : i32
    %c0_i32_0 = arith.constant 0 : i32
    %c0_i32_1 = arith.constant 0 : i32
    return %c0_i32, %c0_i32_0 : i32, i32
  }
  func.func @transform_5(%arg0: i32) -> (i32, i32) {
    %c0_i32 = arith.constant 0 : i32
    %c0_i32_0 = arith.constant 0 : i32
    %c0_i32_1 = arith.constant 0 : i32
    return %c0_i32, %c0_i32_0 : i32, i32
  }
  func.func @transform_6(%arg0: i32) -> (i32, i32, i32) {
    %c0_i32 = arith.constant 0 : i32
    %c0_i32_0 = arith.constant 0 : i32
    %c0_i32_1 = arith.constant 0 : i32
    %c0_i32_2 = arith.constant 0 : i32
    return %c0_i32, %c0_i32_0, %c0_i32_1 : i32, i32, i32
  }
}

module attributes {stable_mosaic.version = 11 : i64} {
  func.func @_se_tail_kernel(%arg0: i32, %arg1: memref<32x128xf32, #tpu.memory_space<vmem>>, %arg2: memref<32x1xf32, #tpu.memory_space<vmem>>, %arg3: memref<32x1xf32, #tpu.memory_space<vmem>>, %arg4: memref<2x32x1xf32, #tpu.memory_space<vmem>>, %arg5: memref<32x128xf32, #tpu.memory_space<vmem>>, %arg6: memref<32x1xf32, #tpu.memory_space<vmem>>, %arg7: memref<32x1xf32, #tpu.memory_space<vmem>>, %arg8: memref<32x128xbf16, #tpu.memory_space<vmem>>) attributes {dimension_semantics = [#tpu.dimension_semantics<arbitrary>], iteration_bounds = array<i64: 1>, scalar_prefetch = 0 : i64, scratch_operands = 0 : i64, tpu.core_type = #tpu.core_type<tc>, window_params = [{pipeline_mode = #tpu.pipeline_mode<synchronous>, transform_indices = @transform_0, window_bounds = array<i64: 32, 128>}, {pipeline_mode = #tpu.pipeline_mode<synchronous>, transform_indices = @transform_1, window_bounds = array<i64: 32, 1>}, {pipeline_mode = #tpu.pipeline_mode<synchronous>, transform_indices = @transform_2, window_bounds = array<i64: 32, 1>}, {pipeline_mode = #tpu.pipeline_mode<synchronous>, transform_indices = @transform_3, window_bounds = array<i64: 2, 32, 1>}, {pipeline_mode = #tpu.pipeline_mode<synchronous>, transform_indices = @transform_4, window_bounds = array<i64: 32, 128>}, {pipeline_mode = #tpu.pipeline_mode<synchronous>, transform_indices = @transform_5, window_bounds = array<i64: 32, 1>}, {pipeline_mode = #tpu.pipeline_mode<synchronous>, transform_indices = @transform_6, window_bounds = array<i64: 32, 1>}, {pipeline_mode = #tpu.pipeline_mode<synchronous>, transform_indices = @transform_7, window_bounds = array<i64: 32, 128>}]} {
    %c0 = arith.constant 0 : index
    %c0_0 = arith.constant 0 : index
    %0 = vector.load %arg1[%c0, %c0_0] : memref<32x128xf32, #tpu.memory_space<vmem>>, vector<32x128xf32>
    %1 = tpu.iota {dimensions = array<i32: 1>} : vector<32x128xi32>
    %cst = arith.constant 0.000000e+00 : f32
    %2 = vector.broadcast %cst : f32 to vector<32x128xf32>
    %c0_i32 = arith.constant 0 : i32
    %3 = vector.broadcast %c0_i32 : i32 to vector<32x128xi32>
    %4 = arith.cmpi sge, %1, %3 : vector<32x128xi32>
    %c64_i32 = arith.constant 64 : i32
    %5 = vector.broadcast %c64_i32 : i32 to vector<32x128xi32>
    %6 = arith.cmpi slt, %1, %5 : vector<32x128xi32>
    %7 = arith.andi %4, %6 : vector<32x128xi1>
    %c0_1 = arith.constant 0 : index
    %c0_2 = arith.constant 0 : index
    %c0_3 = arith.constant 0 : index
    %8 = vector.load %arg4[%c0_1, %c0_2, %c0_3] : memref<2x32x1xf32, #tpu.memory_space<vmem>>, vector<1x32x1xf32>
    %9 = vector.shape_cast %8 : vector<1x32x1xf32> to vector<32x1xf32>
    %10 = vector.shape_cast %9 : vector<32x1xf32> to vector<32x1xf32>
    %11 = vector.broadcast %10 : vector<32x1xf32> to vector<32x128xf32>
    %12 = arith.select %7, %11, %2 : vector<32x128xi1>, vector<32x128xf32>
    %c64_i32_4 = arith.constant 64 : i32
    %13 = vector.broadcast %c64_i32_4 : i32 to vector<32x128xi32>
    %14 = arith.cmpi sge, %1, %13 : vector<32x128xi32>
    %c128_i32 = arith.constant 128 : i32
    %15 = vector.broadcast %c128_i32 : i32 to vector<32x128xi32>
    %16 = arith.cmpi slt, %1, %15 : vector<32x128xi32>
    %17 = arith.andi %14, %16 : vector<32x128xi1>
    %c1 = arith.constant 1 : index
    %c0_5 = arith.constant 0 : index
    %c0_6 = arith.constant 0 : index
    %18 = vector.load %arg4[%c1, %c0_5, %c0_6] : memref<2x32x1xf32, #tpu.memory_space<vmem>>, vector<1x32x1xf32>
    %19 = vector.shape_cast %18 : vector<1x32x1xf32> to vector<32x1xf32>
    %20 = vector.shape_cast %19 : vector<32x1xf32> to vector<32x1xf32>
    %21 = vector.broadcast %20 : vector<32x1xf32> to vector<32x128xf32>
    %22 = arith.select %17, %21, %12 : vector<32x128xi1>, vector<32x128xf32>
    %c0_7 = arith.constant 0 : index
    %c0_8 = arith.constant 0 : index
    %23 = vector.load %arg2[%c0_7, %c0_8] : memref<32x1xf32, #tpu.memory_space<vmem>>, vector<32x1xf32>
    %24 = vector.broadcast %23 : vector<32x1xf32> to vector<32x128xf32>
    %25 = arith.mulf %0, %24 : vector<32x128xf32>
    %c0_9 = arith.constant 0 : index
    %c0_10 = arith.constant 0 : index
    %26 = vector.load %arg3[%c0_9, %c0_10] : memref<32x1xf32, #tpu.memory_space<vmem>>, vector<32x1xf32>
    %27 = vector.broadcast %26 : vector<32x1xf32> to vector<32x128xf32>
    %28 = arith.addf %25, %27 : vector<32x128xf32>
    %29 = arith.mulf %28, %22 : vector<32x128xf32>
    %c0_11 = arith.constant 0 : index
    %c0_12 = arith.constant 0 : index
    %30 = vector.load %arg5[%c0_11, %c0_12] : memref<32x128xf32, #tpu.memory_space<vmem>>, vector<32x128xf32>
    %31 = arith.addf %29, %30 : vector<32x128xf32>
    %cst_13 = arith.constant 0.000000e+00 : f32
    %32 = vector.broadcast %cst_13 : f32 to vector<32x128xf32>
    %33 = arith.cmpf oge, %31, %32 : vector<32x128xf32>
    %cst_14 = arith.constant 0.00999999977 : f32
    %34 = vector.broadcast %cst_14 : f32 to vector<32x128xf32>
    %35 = arith.mulf %34, %31 : vector<32x128xf32>
    %36 = arith.select %33, %31, %35 : vector<32x128xi1>, vector<32x128xf32>
    %cst_15 = arith.constant dense<0.000000e+00> : vector<32xf32>
    %37 = vector.multi_reduction <add>, %36, %cst_15 [1] : vector<32x128xf32> to vector<32xf32>
    %38 = vector.shape_cast %37 : vector<32xf32> to vector<32x1xf32>
    %cst_16 = arith.constant 7.812500e-03 : f32
    %39 = vector.broadcast %cst_16 : f32 to vector<32x1xf32>
    %40 = arith.mulf %38, %39 : vector<32x1xf32>
    %41 = arith.mulf %36, %36 : vector<32x128xf32>
    %cst_17 = arith.constant dense<0.000000e+00> : vector<32xf32>
    %42 = vector.multi_reduction <add>, %41, %cst_17 [1] : vector<32x128xf32> to vector<32xf32>
    %43 = vector.shape_cast %42 : vector<32xf32> to vector<32x1xf32>
    %cst_18 = arith.constant 7.812500e-03 : f32
    %44 = vector.broadcast %cst_18 : f32 to vector<32x1xf32>
    %45 = arith.mulf %43, %44 : vector<32x1xf32>
    %46 = arith.mulf %40, %40 : vector<32x1xf32>
    %47 = arith.subf %45, %46 : vector<32x1xf32>
    %cst_19 = arith.constant 0.000000e+00 : f32
    %48 = vector.broadcast %cst_19 : f32 to vector<32x1xf32>
    %49 = arith.maximumf %47, %48 : vector<32x1xf32>
    %c0_20 = arith.constant 0 : index
    %c0_21 = arith.constant 0 : index
    %50 = vector.load %arg6[%c0_20, %c0_21] : memref<32x1xf32, #tpu.memory_space<vmem>>, vector<32x1xf32>
    %cst_22 = arith.constant 9.99999974E-6 : f32
    %51 = vector.broadcast %cst_22 : f32 to vector<32x1xf32>
    %52 = arith.addf %49, %51 : vector<32x1xf32>
    %53 = math.rsqrt %52 : vector<32x1xf32>
    %54 = arith.mulf %50, %53 : vector<32x1xf32>
    %c0_23 = arith.constant 0 : index
    %c0_24 = arith.constant 0 : index
    %55 = vector.load %arg7[%c0_23, %c0_24] : memref<32x1xf32, #tpu.memory_space<vmem>>, vector<32x1xf32>
    %56 = arith.mulf %40, %54 : vector<32x1xf32>
    %57 = arith.subf %55, %56 : vector<32x1xf32>
    %58 = vector.broadcast %54 : vector<32x1xf32> to vector<32x128xf32>
    %59 = arith.mulf %36, %58 : vector<32x128xf32>
    %60 = vector.broadcast %57 : vector<32x1xf32> to vector<32x128xf32>
    %61 = arith.addf %59, %60 : vector<32x128xf32>
    %cst_25 = arith.constant 0.000000e+00 : f32
    %62 = vector.broadcast %cst_25 : f32 to vector<32x128xf32>
    %63 = arith.cmpf oge, %61, %62 : vector<32x128xf32>
    %cst_26 = arith.constant 0.00999999977 : f32
    %64 = vector.broadcast %cst_26 : f32 to vector<32x128xf32>
    %65 = arith.mulf %64, %61 : vector<32x128xf32>
    %66 = arith.select %63, %61, %65 : vector<32x128xi1>, vector<32x128xf32>
    %67 = arith.truncf %66 : vector<32x128xf32> to vector<32x128xbf16>
    %c0_27 = arith.constant 0 : index
    %c0_28 = arith.constant 0 : index
    %68 = vector.load %arg8[%c0_27, %c0_28] : memref<32x128xbf16, #tpu.memory_space<vmem>>, vector<32x128xbf16>
    tpu.vector_store %arg8[%c0_27, %c0_28], %67 {strides = array<i32>} : memref<32x128xbf16, #tpu.memory_space<vmem>>, vector<32x128xbf16>,
    return
  }
  func.func @transform_0(%arg0: i32) -> (i32, i32) {
    %c0_i32 = arith.constant 0 : i32
    %c0_i32_0 = arith.constant 0 : i32
    %c0_i32_1 = arith.constant 0 : i32
    return %c0_i32, %c0_i32_0 : i32, i32
  }
  func.func @transform_1(%arg0: i32) -> (i32, i32) {
    %c0_i32 = arith.constant 0 : i32
    %c0_i32_0 = arith.constant 0 : i32
    %c0_i32_1 = arith.constant 0 : i32
    return %c0_i32, %c0_i32_0 : i32, i32
  }
  func.func @transform_2(%arg0: i32) -> (i32, i32) {
    %c0_i32 = arith.constant 0 : i32
    %c0_i32_0 = arith.constant 0 : i32
    %c0_i32_1 = arith.constant 0 : i32
    return %c0_i32, %c0_i32_0 : i32, i32
  }
  func.func @transform_3(%arg0: i32) -> (i32, i32, i32) {
    %c0_i32 = arith.constant 0 : i32
    %c0_i32_0 = arith.constant 0 : i32
    %c0_i32_1 = arith.constant 0 : i32
    %c0_i32_2 = arith.constant 0 : i32
    return %c0_i32, %c0_i32_0, %c0_i32_1 : i32, i32, i32
  }
  func.func @transform_4(%arg0: i32) -> (i32, i32) {
    %c0_i32 = arith.constant 0 : i32
    %c0_i32_0 = arith.constant 0 : i32
    %c0_i32_1 = arith.constant 0 : i32
    return %c0_i32, %c0_i32_0 : i32, i32
  }
  func.func @transform_5(%arg0: i32) -> (i32, i32) {
    %c0_i32 = arith.constant 0 : i32
    %c0_i32_0 = arith.constant 0 : i32
    %c0_i32_1 = arith.constant 0 : i32
    return %c0_i32, %c0_i32_0 : i32, i32
  }
  func.func @transform_6(%arg0: i32) -> (i32, i32) {
    %c0_i32 = arith.constant 0 : i32
    %c0_i32_0 = arith.constant 0 : i32
    %c0_i32_1 = arith.constant 0 : i32
    return %c0_i32, %c0_i32_0 : i32, i32
  }
  func.func @transform_7(%arg0: i32) -> (i32, i32) {
    %c0_i32 = arith.constant 0 : i32
    %c0_i32_0 = arith.constant 0 : i32
    %c0_i32_1 = arith.constant 0 : i32
    return %c0_i32, %c0_i32_0 : i32, i32
  }
}

module attributes {stable_mosaic.version = 11 : i64} {
  func.func @_conv_kernel(%arg0: i32, %arg1: memref<16x864xbf16, #tpu.memory_space<vmem>>, %arg2: memref<864x128xbf16, #tpu.memory_space<vmem>>, %arg3: memref<16x1xf32, #tpu.memory_space<vmem>>, %arg4: memref<16x128xf32, #tpu.memory_space<vmem>>) attributes {dimension_semantics = [#tpu.dimension_semantics<arbitrary>], iteration_bounds = array<i64: 1>, scalar_prefetch = 0 : i64, scratch_operands = 0 : i64, tpu.core_type = #tpu.core_type<tc>, window_params = [{pipeline_mode = #tpu.pipeline_mode<synchronous>, transform_indices = @transform_0, window_bounds = array<i64: 16, 864>}, {pipeline_mode = #tpu.pipeline_mode<synchronous>, transform_indices = @transform_1, window_bounds = array<i64: 864, 128>}, {pipeline_mode = #tpu.pipeline_mode<synchronous>, transform_indices = @transform_2, window_bounds = array<i64: 16, 1>}, {pipeline_mode = #tpu.pipeline_mode<synchronous>, transform_indices = @transform_3, window_bounds = array<i64: 16, 128>}]} {
    %c0 = arith.constant 0 : index
    %c0_0 = arith.constant 0 : index
    %0 = vector.load %arg1[%c0, %c0_0] : memref<16x864xbf16, #tpu.memory_space<vmem>>, vector<16x864xbf16>
    %c0_1 = arith.constant 0 : index
    %c0_2 = arith.constant 0 : index
    %1 = vector.load %arg2[%c0_1, %c0_2] : memref<864x128xbf16, #tpu.memory_space<vmem>>, vector<864x128xbf16>
    %cst = arith.constant dense<0.000000e+00> : vector<16x128xf32>
    %2 = tpu.matmul %0, %1, %cst {dimension_numbers = #tpu.dot_dimension_numbers<[1], [0], [0], [1], [0, 0, 1, 1], [], []>} : vector<16x864xbf16>, vector<864x128xbf16>, vector<16x128xf32> -> vector<16x128xf32>
    %c0_3 = arith.constant 0 : index
    %c0_4 = arith.constant 0 : index
    %3 = vector.load %arg3[%c0_3, %c0_4] : memref<16x1xf32, #tpu.memory_space<vmem>>, vector<16x1xf32>
    %4 = vector.broadcast %3 : vector<16x1xf32> to vector<16x128xf32>
    %5 = arith.addf %2, %4 : vector<16x128xf32>
    %c0_5 = arith.constant 0 : index
    %c0_6 = arith.constant 0 : index
    %6 = vector.load %arg4[%c0_5, %c0_6] : memref<16x128xf32, #tpu.memory_space<vmem>>, vector<16x128xf32>
    tpu.vector_store %arg4[%c0_5, %c0_6], %5 {strides = array<i32>} : memref<16x128xf32, #tpu.memory_space<vmem>>, vector<16x128xf32>,
    return
  }
  func.func @transform_0(%arg0: i32) -> (i32, i32) {
    %c0_i32 = arith.constant 0 : i32
    %c0_i32_0 = arith.constant 0 : i32
    %c0_i32_1 = arith.constant 0 : i32
    return %c0_i32, %c0_i32_0 : i32, i32
  }
  func.func @transform_1(%arg0: i32) -> (i32, i32) {
    %c0_i32 = arith.constant 0 : i32
    %c0_i32_0 = arith.constant 0 : i32
    %c0_i32_1 = arith.constant 0 : i32
    return %c0_i32, %c0_i32_0 : i32, i32
  }
  func.func @transform_2(%arg0: i32) -> (i32, i32) {
    %c0_i32 = arith.constant 0 : i32
    %c0_i32_0 = arith.constant 0 : i32
    %c0_i32_1 = arith.constant 0 : i32
    return %c0_i32, %c0_i32_0 : i32, i32
  }
  func.func @transform_3(%arg0: i32) -> (i32, i32) {
    %c0_i32 = arith.constant 0 : i32
    %c0_i32_0 = arith.constant 0 : i32
    %c0_i32_1 = arith.constant 0 : i32
    return %c0_i32, %c0_i32_0 : i32, i32
  }
}

module attributes {stable_mosaic.version = 11 : i64} {
  func.func @_conv_bn_act_kernel(%arg0: i32, %arg1: memref<16x432xbf16, #tpu.memory_space<vmem>>, %arg2: memref<432x128xbf16, #tpu.memory_space<vmem>>, %arg3: memref<16x1xf32, #tpu.memory_space<vmem>>, %arg4: memref<16x1xf32, #tpu.memory_space<vmem>>, %arg5: memref<16x1xf32, #tpu.memory_space<vmem>>, %arg6: memref<16x128xbf16, #tpu.memory_space<vmem>>) attributes {dimension_semantics = [#tpu.dimension_semantics<arbitrary>], iteration_bounds = array<i64: 1>, scalar_prefetch = 0 : i64, scratch_operands = 0 : i64, tpu.core_type = #tpu.core_type<tc>, window_params = [{pipeline_mode = #tpu.pipeline_mode<synchronous>, transform_indices = @transform_0, window_bounds = array<i64: 16, 432>}, {pipeline_mode = #tpu.pipeline_mode<synchronous>, transform_indices = @transform_1, window_bounds = array<i64: 432, 128>}, {pipeline_mode = #tpu.pipeline_mode<synchronous>, transform_indices = @transform_2, window_bounds = array<i64: 16, 1>}, {pipeline_mode = #tpu.pipeline_mode<synchronous>, transform_indices = @transform_3, window_bounds = array<i64: 16, 1>}, {pipeline_mode = #tpu.pipeline_mode<synchronous>, transform_indices = @transform_4, window_bounds = array<i64: 16, 1>}, {pipeline_mode = #tpu.pipeline_mode<synchronous>, transform_indices = @transform_5, window_bounds = array<i64: 16, 128>}]} {
    %c0 = arith.constant 0 : index
    %c0_0 = arith.constant 0 : index
    %0 = vector.load %arg1[%c0, %c0_0] : memref<16x432xbf16, #tpu.memory_space<vmem>>, vector<16x432xbf16>
    %c0_1 = arith.constant 0 : index
    %c0_2 = arith.constant 0 : index
    %1 = vector.load %arg2[%c0_1, %c0_2] : memref<432x128xbf16, #tpu.memory_space<vmem>>, vector<432x128xbf16>
    %cst = arith.constant dense<0.000000e+00> : vector<16x128xf32>
    %2 = tpu.matmul %0, %1, %cst {dimension_numbers = #tpu.dot_dimension_numbers<[1], [0], [0], [1], [0, 0, 1, 1], [], []>} : vector<16x432xbf16>, vector<432x128xbf16>, vector<16x128xf32> -> vector<16x128xf32>
    %c0_3 = arith.constant 0 : index
    %c0_4 = arith.constant 0 : index
    %3 = vector.load %arg3[%c0_3, %c0_4] : memref<16x1xf32, #tpu.memory_space<vmem>>, vector<16x1xf32>
    %4 = vector.broadcast %3 : vector<16x1xf32> to vector<16x128xf32>
    %5 = arith.addf %2, %4 : vector<16x128xf32>
    %cst_5 = arith.constant dense<0.000000e+00> : vector<16xf32>
    %6 = vector.multi_reduction <add>, %5, %cst_5 [1] : vector<16x128xf32> to vector<16xf32>
    %7 = vector.shape_cast %6 : vector<16xf32> to vector<16x1xf32>
    %8 = arith.mulf %5, %5 : vector<16x128xf32>
    %cst_6 = arith.constant dense<0.000000e+00> : vector<16xf32>
    %9 = vector.multi_reduction <add>, %8, %cst_6 [1] : vector<16x128xf32> to vector<16xf32>
    %10 = vector.shape_cast %9 : vector<16xf32> to vector<16x1xf32>
    %cst_7 = arith.constant 7.812500e-03 : f32
    %11 = vector.broadcast %cst_7 : f32 to vector<16x1xf32>
    %12 = arith.mulf %7, %11 : vector<16x1xf32>
    %cst_8 = arith.constant 7.812500e-03 : f32
    %13 = vector.broadcast %cst_8 : f32 to vector<16x1xf32>
    %14 = arith.mulf %10, %13 : vector<16x1xf32>
    %15 = arith.mulf %12, %12 : vector<16x1xf32>
    %16 = arith.subf %14, %15 : vector<16x1xf32>
    %cst_9 = arith.constant 0.000000e+00 : f32
    %17 = vector.broadcast %cst_9 : f32 to vector<16x1xf32>
    %18 = arith.maximumf %16, %17 : vector<16x1xf32>
    %c0_10 = arith.constant 0 : index
    %c0_11 = arith.constant 0 : index
    %19 = vector.load %arg4[%c0_10, %c0_11] : memref<16x1xf32, #tpu.memory_space<vmem>>, vector<16x1xf32>
    %cst_12 = arith.constant 9.99999974E-6 : f32
    %20 = vector.broadcast %cst_12 : f32 to vector<16x1xf32>
    %21 = arith.addf %18, %20 : vector<16x1xf32>
    %22 = math.rsqrt %21 : vector<16x1xf32>
    %23 = arith.mulf %19, %22 : vector<16x1xf32>
    %c0_13 = arith.constant 0 : index
    %c0_14 = arith.constant 0 : index
    %24 = vector.load %arg5[%c0_13, %c0_14] : memref<16x1xf32, #tpu.memory_space<vmem>>, vector<16x1xf32>
    %25 = arith.mulf %12, %23 : vector<16x1xf32>
    %26 = arith.subf %24, %25 : vector<16x1xf32>
    %27 = vector.broadcast %23 : vector<16x1xf32> to vector<16x128xf32>
    %28 = arith.mulf %5, %27 : vector<16x128xf32>
    %29 = vector.broadcast %26 : vector<16x1xf32> to vector<16x128xf32>
    %30 = arith.addf %28, %29 : vector<16x128xf32>
    %cst_15 = arith.constant 0.000000e+00 : f32
    %31 = vector.broadcast %cst_15 : f32 to vector<16x128xf32>
    %32 = arith.cmpf oge, %30, %31 : vector<16x128xf32>
    %cst_16 = arith.constant 0.00999999977 : f32
    %33 = vector.broadcast %cst_16 : f32 to vector<16x128xf32>
    %34 = arith.mulf %33, %30 : vector<16x128xf32>
    %35 = arith.select %32, %30, %34 : vector<16x128xi1>, vector<16x128xf32>
    %36 = arith.truncf %35 : vector<16x128xf32> to vector<16x128xbf16>
    %c0_17 = arith.constant 0 : index
    %c0_18 = arith.constant 0 : index
    %37 = vector.load %arg6[%c0_17, %c0_18] : memref<16x128xbf16, #tpu.memory_space<vmem>>, vector<16x128xbf16>
    tpu.vector_store %arg6[%c0_17, %c0_18], %36 {strides = array<i32>} : memref<16x128xbf16, #tpu.memory_space<vmem>>, vector<16x128xbf16>,
    return
  }
  func.func @transform_0(%arg0: i32) -> (i32, i32) {
    %c0_i32 = arith.constant 0 : i32
    %c0_i32_0 = arith.constant 0 : i32
    %c0_i32_1 = arith.constant 0 : i32
    return %c0_i32, %c0_i32_0 : i32, i32
  }
  func.func @transform_1(%arg0: i32) -> (i32, i32) {
    %c0_i32 = arith.constant 0 : i32
    %c0_i32_0 = arith.constant 0 : i32
    %c0_i32_1 = arith.constant 0 : i32
    return %c0_i32, %c0_i32_0 : i32, i32
  }
  func.func @transform_2(%arg0: i32) -> (i32, i32) {
    %c0_i32 = arith.constant 0 : i32
    %c0_i32_0 = arith.constant 0 : i32
    %c0_i32_1 = arith.constant 0 : i32
    return %c0_i32, %c0_i32_0 : i32, i32
  }
  func.func @transform_3(%arg0: i32) -> (i32, i32) {
    %c0_i32 = arith.constant 0 : i32
    %c0_i32_0 = arith.constant 0 : i32
    %c0_i32_1 = arith.constant 0 : i32
    return %c0_i32, %c0_i32_0 : i32, i32
  }
  func.func @transform_4(%arg0: i32) -> (i32, i32) {
    %c0_i32 = arith.constant 0 : i32
    %c0_i32_0 = arith.constant 0 : i32
    %c0_i32_1 = arith.constant 0 : i32
    return %c0_i32, %c0_i32_0 : i32, i32
  }
  func.func @transform_5(%arg0: i32) -> (i32, i32) {
    %c0_i32 = arith.constant 0 : i32
    %c0_i32_0 = arith.constant 0 : i32
    %c0_i32_1 = arith.constant 0 : i32
    return %c0_i32, %c0_i32_0 : i32, i32
  }
}

module attributes {stable_mosaic.version = 11 : i64} {
  func.func @_conv_stats_pool_kernel(%arg0: i32, %arg1: memref<16x432xbf16, #tpu.memory_space<vmem>>, %arg2: memref<432x128xbf16, #tpu.memory_space<vmem>>, %arg3: memref<16x1xf32, #tpu.memory_space<vmem>>, %arg4: memref<16x128xf32, #tpu.memory_space<vmem>>, %arg5: memref<16x1xf32, #tpu.memory_space<vmem>>, %arg6: memref<16x1xf32, #tpu.memory_space<vmem>>, %arg7: memref<2x16x1xf32, #tpu.memory_space<vmem>>) attributes {dimension_semantics = [#tpu.dimension_semantics<arbitrary>], iteration_bounds = array<i64: 1>, scalar_prefetch = 0 : i64, scratch_operands = 0 : i64, tpu.core_type = #tpu.core_type<tc>, window_params = [{pipeline_mode = #tpu.pipeline_mode<synchronous>, transform_indices = @transform_0, window_bounds = array<i64: 16, 432>}, {pipeline_mode = #tpu.pipeline_mode<synchronous>, transform_indices = @transform_1, window_bounds = array<i64: 432, 128>}, {pipeline_mode = #tpu.pipeline_mode<synchronous>, transform_indices = @transform_2, window_bounds = array<i64: 16, 1>}, {pipeline_mode = #tpu.pipeline_mode<synchronous>, transform_indices = @transform_3, window_bounds = array<i64: 16, 128>}, {pipeline_mode = #tpu.pipeline_mode<synchronous>, transform_indices = @transform_4, window_bounds = array<i64: 16, 1>}, {pipeline_mode = #tpu.pipeline_mode<synchronous>, transform_indices = @transform_5, window_bounds = array<i64: 16, 1>}, {pipeline_mode = #tpu.pipeline_mode<synchronous>, transform_indices = @transform_6, window_bounds = array<i64: 2, 16, 1>}]} {
    %c0 = arith.constant 0 : index
    %c0_0 = arith.constant 0 : index
    %0 = vector.load %arg1[%c0, %c0_0] : memref<16x432xbf16, #tpu.memory_space<vmem>>, vector<16x432xbf16>
    %c0_1 = arith.constant 0 : index
    %c0_2 = arith.constant 0 : index
    %1 = vector.load %arg2[%c0_1, %c0_2] : memref<432x128xbf16, #tpu.memory_space<vmem>>, vector<432x128xbf16>
    %cst = arith.constant dense<0.000000e+00> : vector<16x128xf32>
    %2 = tpu.matmul %0, %1, %cst {dimension_numbers = #tpu.dot_dimension_numbers<[1], [0], [0], [1], [0, 0, 1, 1], [], []>} : vector<16x432xbf16>, vector<432x128xbf16>, vector<16x128xf32> -> vector<16x128xf32>
    %c0_3 = arith.constant 0 : index
    %c0_4 = arith.constant 0 : index
    %3 = vector.load %arg3[%c0_3, %c0_4] : memref<16x1xf32, #tpu.memory_space<vmem>>, vector<16x1xf32>
    %4 = vector.broadcast %3 : vector<16x1xf32> to vector<16x128xf32>
    %5 = arith.addf %2, %4 : vector<16x128xf32>
    %c0_5 = arith.constant 0 : index
    %c0_6 = arith.constant 0 : index
    %6 = vector.load %arg4[%c0_5, %c0_6] : memref<16x128xf32, #tpu.memory_space<vmem>>, vector<16x128xf32>
    tpu.vector_store %arg4[%c0_5, %c0_6], %5 {strides = array<i32>} : memref<16x128xf32, #tpu.memory_space<vmem>>, vector<16x128xf32>,
    %cst_7 = arith.constant dense<0.000000e+00> : vector<16xf32>
    %7 = vector.multi_reduction <add>, %5, %cst_7 [1] : vector<16x128xf32> to vector<16xf32>
    %8 = vector.shape_cast %7 : vector<16xf32> to vector<16x1xf32>
    %c0_8 = arith.constant 0 : index
    %c0_9 = arith.constant 0 : index
    %9 = vector.load %arg5[%c0_8, %c0_9] : memref<16x1xf32, #tpu.memory_space<vmem>>, vector<16x1xf32>
    tpu.vector_store %arg5[%c0_8, %c0_9], %8 {strides = array<i32>} : memref<16x1xf32, #tpu.memory_space<vmem>>, vector<16x1xf32>,
    %10 = arith.mulf %5, %5 : vector<16x128xf32>
    %cst_10 = arith.constant dense<0.000000e+00> : vector<16xf32>
    %11 = vector.multi_reduction <add>, %10, %cst_10 [1] : vector<16x128xf32> to vector<16xf32>
    %12 = vector.shape_cast %11 : vector<16xf32> to vector<16x1xf32>
    %c0_11 = arith.constant 0 : index
    %c0_12 = arith.constant 0 : index
    %13 = vector.load %arg6[%c0_11, %c0_12] : memref<16x1xf32, #tpu.memory_space<vmem>>, vector<16x1xf32>
    tpu.vector_store %arg6[%c0_11, %c0_12], %12 {strides = array<i32>} : memref<16x1xf32, #tpu.memory_space<vmem>>, vector<16x1xf32>,
    %14 = tpu.iota {dimensions = array<i32: 1>} : vector<16x128xi32>
    %c0_i32 = arith.constant 0 : i32
    %15 = vector.broadcast %c0_i32 : i32 to vector<16x128xi32>
    %16 = arith.cmpi sge, %14, %15 : vector<16x128xi32>
    %c64_i32 = arith.constant 64 : i32
    %17 = vector.broadcast %c64_i32 : i32 to vector<16x128xi32>
    %18 = arith.cmpi slt, %14, %17 : vector<16x128xi32>
    %19 = arith.andi %16, %18 : vector<16x128xi1>
    %cst_13 = arith.constant 0.000000e+00 : f32
    %20 = vector.broadcast %cst_13 : f32 to vector<16x128xf32>
    %21 = arith.select %19, %5, %20 : vector<16x128xi1>, vector<16x128xf32>
    %cst_14 = arith.constant dense<0.000000e+00> : vector<16xf32>
    %22 = vector.multi_reduction <add>, %21, %cst_14 [1] : vector<16x128xf32> to vector<16xf32>
    %23 = vector.shape_cast %22 : vector<16xf32> to vector<16x1xf32>
    %cst_15 = arith.constant 1.562500e-02 : f32
    %24 = vector.broadcast %cst_15 : f32 to vector<16x1xf32>
    %25 = arith.mulf %23, %24 : vector<16x1xf32>
    %c0_16 = arith.constant 0 : index
    %c0_17 = arith.constant 0 : index
    %c0_18 = arith.constant 0 : index
    %26 = vector.load %arg7[%c0_16, %c0_17, %c0_18] : memref<2x16x1xf32, #tpu.memory_space<vmem>>, vector<1x16x1xf32>
    %27 = vector.shape_cast %26 : vector<1x16x1xf32> to vector<16x1xf32>
    %28 = vector.shape_cast %25 : vector<16x1xf32> to vector<1x16x1xf32>
    tpu.vector_store %arg7[%c0_16, %c0_17, %c0_18], %28 {strides = array<i32>} : memref<2x16x1xf32, #tpu.memory_space<vmem>>, vector<1x16x1xf32>,
    %c64_i32_19 = arith.constant 64 : i32
    %29 = vector.broadcast %c64_i32_19 : i32 to vector<16x128xi32>
    %30 = arith.cmpi sge, %14, %29 : vector<16x128xi32>
    %c128_i32 = arith.constant 128 : i32
    %31 = vector.broadcast %c128_i32 : i32 to vector<16x128xi32>
    %32 = arith.cmpi slt, %14, %31 : vector<16x128xi32>
    %33 = arith.andi %30, %32 : vector<16x128xi1>
    %cst_20 = arith.constant 0.000000e+00 : f32
    %34 = vector.broadcast %cst_20 : f32 to vector<16x128xf32>
    %35 = arith.select %33, %5, %34 : vector<16x128xi1>, vector<16x128xf32>
    %cst_21 = arith.constant dense<0.000000e+00> : vector<16xf32>
    %36 = vector.multi_reduction <add>, %35, %cst_21 [1] : vector<16x128xf32> to vector<16xf32>
    %37 = vector.shape_cast %36 : vector<16xf32> to vector<16x1xf32>
    %cst_22 = arith.constant 1.562500e-02 : f32
    %38 = vector.broadcast %cst_22 : f32 to vector<16x1xf32>
    %39 = arith.mulf %37, %38 : vector<16x1xf32>
    %c1 = arith.constant 1 : index
    %c0_23 = arith.constant 0 : index
    %c0_24 = arith.constant 0 : index
    %40 = vector.load %arg7[%c1, %c0_23, %c0_24] : memref<2x16x1xf32, #tpu.memory_space<vmem>>, vector<1x16x1xf32>
    %41 = vector.shape_cast %40 : vector<1x16x1xf32> to vector<16x1xf32>
    %42 = vector.shape_cast %39 : vector<16x1xf32> to vector<1x16x1xf32>
    tpu.vector_store %arg7[%c1, %c0_23, %c0_24], %42 {strides = array<i32>} : memref<2x16x1xf32, #tpu.memory_space<vmem>>, vector<1x16x1xf32>,
    return
  }
  func.func @transform_0(%arg0: i32) -> (i32, i32) {
    %c0_i32 = arith.constant 0 : i32
    %c0_i32_0 = arith.constant 0 : i32
    %c0_i32_1 = arith.constant 0 : i32
    return %c0_i32, %c0_i32_0 : i32, i32
  }
  func.func @transform_1(%arg0: i32) -> (i32, i32) {
    %c0_i32 = arith.constant 0 : i32
    %c0_i32_0 = arith.constant 0 : i32
    %c0_i32_1 = arith.constant 0 : i32
    return %c0_i32, %c0_i32_0 : i32, i32
  }
  func.func @transform_2(%arg0: i32) -> (i32, i32) {
    %c0_i32 = arith.constant 0 : i32
    %c0_i32_0 = arith.constant 0 : i32
    %c0_i32_1 = arith.constant 0 : i32
    return %c0_i32, %c0_i32_0 : i32, i32
  }
  func.func @transform_3(%arg0: i32) -> (i32, i32) {
    %c0_i32 = arith.constant 0 : i32
    %c0_i32_0 = arith.constant 0 : i32
    %c0_i32_1 = arith.constant 0 : i32
    return %c0_i32, %c0_i32_0 : i32, i32
  }
  func.func @transform_4(%arg0: i32) -> (i32, i32) {
    %c0_i32 = arith.constant 0 : i32
    %c0_i32_0 = arith.constant 0 : i32
    %c0_i32_1 = arith.constant 0 : i32
    return %c0_i32, %c0_i32_0 : i32, i32
  }
  func.func @transform_5(%arg0: i32) -> (i32, i32) {
    %c0_i32 = arith.constant 0 : i32
    %c0_i32_0 = arith.constant 0 : i32
    %c0_i32_1 = arith.constant 0 : i32
    return %c0_i32, %c0_i32_0 : i32, i32
  }
  func.func @transform_6(%arg0: i32) -> (i32, i32, i32) {
    %c0_i32 = arith.constant 0 : i32
    %c0_i32_0 = arith.constant 0 : i32
    %c0_i32_1 = arith.constant 0 : i32
    %c0_i32_2 = arith.constant 0 : i32
    return %c0_i32, %c0_i32_0, %c0_i32_1 : i32, i32, i32
  }
}

module attributes {stable_mosaic.version = 11 : i64} {
  func.func @_se_tail_kernel(%arg0: i32, %arg1: memref<16x128xf32, #tpu.memory_space<vmem>>, %arg2: memref<16x1xf32, #tpu.memory_space<vmem>>, %arg3: memref<16x1xf32, #tpu.memory_space<vmem>>, %arg4: memref<2x16x1xf32, #tpu.memory_space<vmem>>, %arg5: memref<16x128xf32, #tpu.memory_space<vmem>>, %arg6: memref<16x1xf32, #tpu.memory_space<vmem>>, %arg7: memref<16x1xf32, #tpu.memory_space<vmem>>, %arg8: memref<16x128xbf16, #tpu.memory_space<vmem>>) attributes {dimension_semantics = [#tpu.dimension_semantics<arbitrary>], iteration_bounds = array<i64: 1>, scalar_prefetch = 0 : i64, scratch_operands = 0 : i64, tpu.core_type = #tpu.core_type<tc>, window_params = [{pipeline_mode = #tpu.pipeline_mode<synchronous>, transform_indices = @transform_0, window_bounds = array<i64: 16, 128>}, {pipeline_mode = #tpu.pipeline_mode<synchronous>, transform_indices = @transform_1, window_bounds = array<i64: 16, 1>}, {pipeline_mode = #tpu.pipeline_mode<synchronous>, transform_indices = @transform_2, window_bounds = array<i64: 16, 1>}, {pipeline_mode = #tpu.pipeline_mode<synchronous>, transform_indices = @transform_3, window_bounds = array<i64: 2, 16, 1>}, {pipeline_mode = #tpu.pipeline_mode<synchronous>, transform_indices = @transform_4, window_bounds = array<i64: 16, 128>}, {pipeline_mode = #tpu.pipeline_mode<synchronous>, transform_indices = @transform_5, window_bounds = array<i64: 16, 1>}, {pipeline_mode = #tpu.pipeline_mode<synchronous>, transform_indices = @transform_6, window_bounds = array<i64: 16, 1>}, {pipeline_mode = #tpu.pipeline_mode<synchronous>, transform_indices = @transform_7, window_bounds = array<i64: 16, 128>}]} {
    %c0 = arith.constant 0 : index
    %c0_0 = arith.constant 0 : index
    %0 = vector.load %arg1[%c0, %c0_0] : memref<16x128xf32, #tpu.memory_space<vmem>>, vector<16x128xf32>
    %1 = tpu.iota {dimensions = array<i32: 1>} : vector<16x128xi32>
    %cst = arith.constant 0.000000e+00 : f32
    %2 = vector.broadcast %cst : f32 to vector<16x128xf32>
    %c0_i32 = arith.constant 0 : i32
    %3 = vector.broadcast %c0_i32 : i32 to vector<16x128xi32>
    %4 = arith.cmpi sge, %1, %3 : vector<16x128xi32>
    %c64_i32 = arith.constant 64 : i32
    %5 = vector.broadcast %c64_i32 : i32 to vector<16x128xi32>
    %6 = arith.cmpi slt, %1, %5 : vector<16x128xi32>
    %7 = arith.andi %4, %6 : vector<16x128xi1>
    %c0_1 = arith.constant 0 : index
    %c0_2 = arith.constant 0 : index
    %c0_3 = arith.constant 0 : index
    %8 = vector.load %arg4[%c0_1, %c0_2, %c0_3] : memref<2x16x1xf32, #tpu.memory_space<vmem>>, vector<1x16x1xf32>
    %9 = vector.shape_cast %8 : vector<1x16x1xf32> to vector<16x1xf32>
    %10 = vector.shape_cast %9 : vector<16x1xf32> to vector<16x1xf32>
    %11 = vector.broadcast %10 : vector<16x1xf32> to vector<16x128xf32>
    %12 = arith.select %7, %11, %2 : vector<16x128xi1>, vector<16x128xf32>
    %c64_i32_4 = arith.constant 64 : i32
    %13 = vector.broadcast %c64_i32_4 : i32 to vector<16x128xi32>
    %14 = arith.cmpi sge, %1, %13 : vector<16x128xi32>
    %c128_i32 = arith.constant 128 : i32
    %15 = vector.broadcast %c128_i32 : i32 to vector<16x128xi32>
    %16 = arith.cmpi slt, %1, %15 : vector<16x128xi32>
    %17 = arith.andi %14, %16 : vector<16x128xi1>
    %c1 = arith.constant 1 : index
    %c0_5 = arith.constant 0 : index
    %c0_6 = arith.constant 0 : index
    %18 = vector.load %arg4[%c1, %c0_5, %c0_6] : memref<2x16x1xf32, #tpu.memory_space<vmem>>, vector<1x16x1xf32>
    %19 = vector.shape_cast %18 : vector<1x16x1xf32> to vector<16x1xf32>
    %20 = vector.shape_cast %19 : vector<16x1xf32> to vector<16x1xf32>
    %21 = vector.broadcast %20 : vector<16x1xf32> to vector<16x128xf32>
    %22 = arith.select %17, %21, %12 : vector<16x128xi1>, vector<16x128xf32>
    %c0_7 = arith.constant 0 : index
    %c0_8 = arith.constant 0 : index
    %23 = vector.load %arg2[%c0_7, %c0_8] : memref<16x1xf32, #tpu.memory_space<vmem>>, vector<16x1xf32>
    %24 = vector.broadcast %23 : vector<16x1xf32> to vector<16x128xf32>
    %25 = arith.mulf %0, %24 : vector<16x128xf32>
    %c0_9 = arith.constant 0 : index
    %c0_10 = arith.constant 0 : index
    %26 = vector.load %arg3[%c0_9, %c0_10] : memref<16x1xf32, #tpu.memory_space<vmem>>, vector<16x1xf32>
    %27 = vector.broadcast %26 : vector<16x1xf32> to vector<16x128xf32>
    %28 = arith.addf %25, %27 : vector<16x128xf32>
    %29 = arith.mulf %28, %22 : vector<16x128xf32>
    %c0_11 = arith.constant 0 : index
    %c0_12 = arith.constant 0 : index
    %30 = vector.load %arg5[%c0_11, %c0_12] : memref<16x128xf32, #tpu.memory_space<vmem>>, vector<16x128xf32>
    %31 = arith.addf %29, %30 : vector<16x128xf32>
    %cst_13 = arith.constant 0.000000e+00 : f32
    %32 = vector.broadcast %cst_13 : f32 to vector<16x128xf32>
    %33 = arith.cmpf oge, %31, %32 : vector<16x128xf32>
    %cst_14 = arith.constant 0.00999999977 : f32
    %34 = vector.broadcast %cst_14 : f32 to vector<16x128xf32>
    %35 = arith.mulf %34, %31 : vector<16x128xf32>
    %36 = arith.select %33, %31, %35 : vector<16x128xi1>, vector<16x128xf32>
    %cst_15 = arith.constant dense<0.000000e+00> : vector<16xf32>
    %37 = vector.multi_reduction <add>, %36, %cst_15 [1] : vector<16x128xf32> to vector<16xf32>
    %38 = vector.shape_cast %37 : vector<16xf32> to vector<16x1xf32>
    %cst_16 = arith.constant 7.812500e-03 : f32
    %39 = vector.broadcast %cst_16 : f32 to vector<16x1xf32>
    %40 = arith.mulf %38, %39 : vector<16x1xf32>
    %41 = arith.mulf %36, %36 : vector<16x128xf32>
    %cst_17 = arith.constant dense<0.000000e+00> : vector<16xf32>
    %42 = vector.multi_reduction <add>, %41, %cst_17 [1] : vector<16x128xf32> to vector<16xf32>
    %43 = vector.shape_cast %42 : vector<16xf32> to vector<16x1xf32>
    %cst_18 = arith.constant 7.812500e-03 : f32
    %44 = vector.broadcast %cst_18 : f32 to vector<16x1xf32>
    %45 = arith.mulf %43, %44 : vector<16x1xf32>
    %46 = arith.mulf %40, %40 : vector<16x1xf32>
    %47 = arith.subf %45, %46 : vector<16x1xf32>
    %cst_19 = arith.constant 0.000000e+00 : f32
    %48 = vector.broadcast %cst_19 : f32 to vector<16x1xf32>
    %49 = arith.maximumf %47, %48 : vector<16x1xf32>
    %c0_20 = arith.constant 0 : index
    %c0_21 = arith.constant 0 : index
    %50 = vector.load %arg6[%c0_20, %c0_21] : memref<16x1xf32, #tpu.memory_space<vmem>>, vector<16x1xf32>
    %cst_22 = arith.constant 9.99999974E-6 : f32
    %51 = vector.broadcast %cst_22 : f32 to vector<16x1xf32>
    %52 = arith.addf %49, %51 : vector<16x1xf32>
    %53 = math.rsqrt %52 : vector<16x1xf32>
    %54 = arith.mulf %50, %53 : vector<16x1xf32>
    %c0_23 = arith.constant 0 : index
    %c0_24 = arith.constant 0 : index
    %55 = vector.load %arg7[%c0_23, %c0_24] : memref<16x1xf32, #tpu.memory_space<vmem>>, vector<16x1xf32>
    %56 = arith.mulf %40, %54 : vector<16x1xf32>
    %57 = arith.subf %55, %56 : vector<16x1xf32>
    %58 = vector.broadcast %54 : vector<16x1xf32> to vector<16x128xf32>
    %59 = arith.mulf %36, %58 : vector<16x128xf32>
    %60 = vector.broadcast %57 : vector<16x1xf32> to vector<16x128xf32>
    %61 = arith.addf %59, %60 : vector<16x128xf32>
    %cst_25 = arith.constant 0.000000e+00 : f32
    %62 = vector.broadcast %cst_25 : f32 to vector<16x128xf32>
    %63 = arith.cmpf oge, %61, %62 : vector<16x128xf32>
    %cst_26 = arith.constant 0.00999999977 : f32
    %64 = vector.broadcast %cst_26 : f32 to vector<16x128xf32>
    %65 = arith.mulf %64, %61 : vector<16x128xf32>
    %66 = arith.select %63, %61, %65 : vector<16x128xi1>, vector<16x128xf32>
    %67 = arith.truncf %66 : vector<16x128xf32> to vector<16x128xbf16>
    %c0_27 = arith.constant 0 : index
    %c0_28 = arith.constant 0 : index
    %68 = vector.load %arg8[%c0_27, %c0_28] : memref<16x128xbf16, #tpu.memory_space<vmem>>, vector<16x128xbf16>
    tpu.vector_store %arg8[%c0_27, %c0_28], %67 {strides = array<i32>} : memref<16x128xbf16, #tpu.memory_space<vmem>>, vector<16x128xbf16>,
    return
  }
  func.func @transform_0(%arg0: i32) -> (i32, i32) {
    %c0_i32 = arith.constant 0 : i32
    %c0_i32_0 = arith.constant 0 : i32
    %c0_i32_1 = arith.constant 0 : i32
    return %c0_i32, %c0_i32_0 : i32, i32
  }
  func.func @transform_1(%arg0: i32) -> (i32, i32) {
    %c0_i32 = arith.constant 0 : i32
    %c0_i32_0 = arith.constant 0 : i32
    %c0_i32_1 = arith.constant 0 : i32
    return %c0_i32, %c0_i32_0 : i32, i32
  }
  func.func @transform_2(%arg0: i32) -> (i32, i32) {
    %c0_i32 = arith.constant 0 : i32
    %c0_i32_0 = arith.constant 0 : i32
    %c0_i32_1 = arith.constant 0 : i32
    return %c0_i32, %c0_i32_0 : i32, i32
  }
  func.func @transform_3(%arg0: i32) -> (i32, i32, i32) {
    %c0_i32 = arith.constant 0 : i32
    %c0_i32_0 = arith.constant 0 : i32
    %c0_i32_1 = arith.constant 0 : i32
    %c0_i32_2 = arith.constant 0 : i32
    return %c0_i32, %c0_i32_0, %c0_i32_1 : i32, i32, i32
  }
  func.func @transform_4(%arg0: i32) -> (i32, i32) {
    %c0_i32 = arith.constant 0 : i32
    %c0_i32_0 = arith.constant 0 : i32
    %c0_i32_1 = arith.constant 0 : i32
    return %c0_i32, %c0_i32_0 : i32, i32
  }
  func.func @transform_5(%arg0: i32) -> (i32, i32) {
    %c0_i32 = arith.constant 0 : i32
    %c0_i32_0 = arith.constant 0 : i32
    %c0_i32_1 = arith.constant 0 : i32
    return %c0_i32, %c0_i32_0 : i32, i32
  }
  func.func @transform_6(%arg0: i32) -> (i32, i32) {
    %c0_i32 = arith.constant 0 : i32
    %c0_i32_0 = arith.constant 0 : i32
    %c0_i32_1 = arith.constant 0 : i32
    return %c0_i32, %c0_i32_0 : i32, i32
  }
  func.func @transform_7(%arg0: i32) -> (i32, i32) {
    %c0_i32 = arith.constant 0 : i32
    %c0_i32_0 = arith.constant 0 : i32
    %c0_i32_1 = arith.constant 0 : i32
    return %c0_i32, %c0_i32_0 : i32, i32
  }
}

module attributes {stable_mosaic.version = 11 : i64} {
  func.func @_conv_kernel(%arg0: i32, %arg1: memref<8x432xbf16, #tpu.memory_space<vmem>>, %arg2: memref<432x128xbf16, #tpu.memory_space<vmem>>, %arg3: memref<8x1xf32, #tpu.memory_space<vmem>>, %arg4: memref<8x128xf32, #tpu.memory_space<vmem>>) attributes {dimension_semantics = [#tpu.dimension_semantics<arbitrary>], iteration_bounds = array<i64: 1>, scalar_prefetch = 0 : i64, scratch_operands = 0 : i64, tpu.core_type = #tpu.core_type<tc>, window_params = [{pipeline_mode = #tpu.pipeline_mode<synchronous>, transform_indices = @transform_0, window_bounds = array<i64: 8, 432>}, {pipeline_mode = #tpu.pipeline_mode<synchronous>, transform_indices = @transform_1, window_bounds = array<i64: 432, 128>}, {pipeline_mode = #tpu.pipeline_mode<synchronous>, transform_indices = @transform_2, window_bounds = array<i64: 8, 1>}, {pipeline_mode = #tpu.pipeline_mode<synchronous>, transform_indices = @transform_3, window_bounds = array<i64: 8, 128>}]} {
    %c0 = arith.constant 0 : index
    %c0_0 = arith.constant 0 : index
    %0 = vector.load %arg1[%c0, %c0_0] : memref<8x432xbf16, #tpu.memory_space<vmem>>, vector<8x432xbf16>
    %c0_1 = arith.constant 0 : index
    %c0_2 = arith.constant 0 : index
    %1 = vector.load %arg2[%c0_1, %c0_2] : memref<432x128xbf16, #tpu.memory_space<vmem>>, vector<432x128xbf16>
    %cst = arith.constant dense<0.000000e+00> : vector<8x128xf32>
    %2 = tpu.matmul %0, %1, %cst {dimension_numbers = #tpu.dot_dimension_numbers<[1], [0], [0], [1], [0, 0, 1, 1], [], []>} : vector<8x432xbf16>, vector<432x128xbf16>, vector<8x128xf32> -> vector<8x128xf32>
    %c0_3 = arith.constant 0 : index
    %c0_4 = arith.constant 0 : index
    %3 = vector.load %arg3[%c0_3, %c0_4] : memref<8x1xf32, #tpu.memory_space<vmem>>, vector<8x1xf32>
    %4 = vector.broadcast %3 : vector<8x1xf32> to vector<8x128xf32>
    %5 = arith.addf %2, %4 : vector<8x128xf32>
    %c0_5 = arith.constant 0 : index
    %c0_6 = arith.constant 0 : index
    %6 = vector.load %arg4[%c0_5, %c0_6] : memref<8x128xf32, #tpu.memory_space<vmem>>, vector<8x128xf32>
    tpu.vector_store %arg4[%c0_5, %c0_6], %5 {strides = array<i32>} : memref<8x128xf32, #tpu.memory_space<vmem>>, vector<8x128xf32>,
    return
  }
  func.func @transform_0(%arg0: i32) -> (i32, i32) {
    %c0_i32 = arith.constant 0 : i32
    %c0_i32_0 = arith.constant 0 : i32
    %c0_i32_1 = arith.constant 0 : i32
    return %c0_i32, %c0_i32_0 : i32, i32
  }
  func.func @transform_1(%arg0: i32) -> (i32, i32) {
    %c0_i32 = arith.constant 0 : i32
    %c0_i32_0 = arith.constant 0 : i32
    %c0_i32_1 = arith.constant 0 : i32
    return %c0_i32, %c0_i32_0 : i32, i32
  }
  func.func @transform_2(%arg0: i32) -> (i32, i32) {
    %c0_i32 = arith.constant 0 : i32
    %c0_i32_0 = arith.constant 0 : i32
    %c0_i32_1 = arith.constant 0 : i32
    return %c0_i32, %c0_i32_0 : i32, i32
  }
  func.func @transform_3(%arg0: i32) -> (i32, i32) {
    %c0_i32 = arith.constant 0 : i32
    %c0_i32_0 = arith.constant 0 : i32
    %c0_i32_1 = arith.constant 0 : i32
    return %c0_i32, %c0_i32_0 : i32, i32
  }
}

module attributes {stable_mosaic.version = 11 : i64} {
  func.func @_conv_bn_act_kernel(%arg0: i32, %arg1: memref<8x216xbf16, #tpu.memory_space<vmem>>, %arg2: memref<216x128xbf16, #tpu.memory_space<vmem>>, %arg3: memref<8x1xf32, #tpu.memory_space<vmem>>, %arg4: memref<8x1xf32, #tpu.memory_space<vmem>>, %arg5: memref<8x1xf32, #tpu.memory_space<vmem>>, %arg6: memref<8x128xbf16, #tpu.memory_space<vmem>>) attributes {dimension_semantics = [#tpu.dimension_semantics<arbitrary>], iteration_bounds = array<i64: 1>, scalar_prefetch = 0 : i64, scratch_operands = 0 : i64, tpu.core_type = #tpu.core_type<tc>, window_params = [{pipeline_mode = #tpu.pipeline_mode<synchronous>, transform_indices = @transform_0, window_bounds = array<i64: 8, 216>}, {pipeline_mode = #tpu.pipeline_mode<synchronous>, transform_indices = @transform_1, window_bounds = array<i64: 216, 128>}, {pipeline_mode = #tpu.pipeline_mode<synchronous>, transform_indices = @transform_2, window_bounds = array<i64: 8, 1>}, {pipeline_mode = #tpu.pipeline_mode<synchronous>, transform_indices = @transform_3, window_bounds = array<i64: 8, 1>}, {pipeline_mode = #tpu.pipeline_mode<synchronous>, transform_indices = @transform_4, window_bounds = array<i64: 8, 1>}, {pipeline_mode = #tpu.pipeline_mode<synchronous>, transform_indices = @transform_5, window_bounds = array<i64: 8, 128>}]} {
    %c0 = arith.constant 0 : index
    %c0_0 = arith.constant 0 : index
    %0 = vector.load %arg1[%c0, %c0_0] : memref<8x216xbf16, #tpu.memory_space<vmem>>, vector<8x216xbf16>
    %c0_1 = arith.constant 0 : index
    %c0_2 = arith.constant 0 : index
    %1 = vector.load %arg2[%c0_1, %c0_2] : memref<216x128xbf16, #tpu.memory_space<vmem>>, vector<216x128xbf16>
    %cst = arith.constant dense<0.000000e+00> : vector<8x128xf32>
    %2 = tpu.matmul %0, %1, %cst {dimension_numbers = #tpu.dot_dimension_numbers<[1], [0], [0], [1], [0, 0, 1, 1], [], []>} : vector<8x216xbf16>, vector<216x128xbf16>, vector<8x128xf32> -> vector<8x128xf32>
    %c0_3 = arith.constant 0 : index
    %c0_4 = arith.constant 0 : index
    %3 = vector.load %arg3[%c0_3, %c0_4] : memref<8x1xf32, #tpu.memory_space<vmem>>, vector<8x1xf32>
    %4 = vector.broadcast %3 : vector<8x1xf32> to vector<8x128xf32>
    %5 = arith.addf %2, %4 : vector<8x128xf32>
    %cst_5 = arith.constant dense<0.000000e+00> : vector<8xf32>
    %6 = vector.multi_reduction <add>, %5, %cst_5 [1] : vector<8x128xf32> to vector<8xf32>
    %7 = vector.shape_cast %6 : vector<8xf32> to vector<8x1xf32>
    %8 = arith.mulf %5, %5 : vector<8x128xf32>
    %cst_6 = arith.constant dense<0.000000e+00> : vector<8xf32>
    %9 = vector.multi_reduction <add>, %8, %cst_6 [1] : vector<8x128xf32> to vector<8xf32>
    %10 = vector.shape_cast %9 : vector<8xf32> to vector<8x1xf32>
    %cst_7 = arith.constant 7.812500e-03 : f32
    %11 = vector.broadcast %cst_7 : f32 to vector<8x1xf32>
    %12 = arith.mulf %7, %11 : vector<8x1xf32>
    %cst_8 = arith.constant 7.812500e-03 : f32
    %13 = vector.broadcast %cst_8 : f32 to vector<8x1xf32>
    %14 = arith.mulf %10, %13 : vector<8x1xf32>
    %15 = arith.mulf %12, %12 : vector<8x1xf32>
    %16 = arith.subf %14, %15 : vector<8x1xf32>
    %cst_9 = arith.constant 0.000000e+00 : f32
    %17 = vector.broadcast %cst_9 : f32 to vector<8x1xf32>
    %18 = arith.maximumf %16, %17 : vector<8x1xf32>
    %c0_10 = arith.constant 0 : index
    %c0_11 = arith.constant 0 : index
    %19 = vector.load %arg4[%c0_10, %c0_11] : memref<8x1xf32, #tpu.memory_space<vmem>>, vector<8x1xf32>
    %cst_12 = arith.constant 9.99999974E-6 : f32
    %20 = vector.broadcast %cst_12 : f32 to vector<8x1xf32>
    %21 = arith.addf %18, %20 : vector<8x1xf32>
    %22 = math.rsqrt %21 : vector<8x1xf32>
    %23 = arith.mulf %19, %22 : vector<8x1xf32>
    %c0_13 = arith.constant 0 : index
    %c0_14 = arith.constant 0 : index
    %24 = vector.load %arg5[%c0_13, %c0_14] : memref<8x1xf32, #tpu.memory_space<vmem>>, vector<8x1xf32>
    %25 = arith.mulf %12, %23 : vector<8x1xf32>
    %26 = arith.subf %24, %25 : vector<8x1xf32>
    %27 = vector.broadcast %23 : vector<8x1xf32> to vector<8x128xf32>
    %28 = arith.mulf %5, %27 : vector<8x128xf32>
    %29 = vector.broadcast %26 : vector<8x1xf32> to vector<8x128xf32>
    %30 = arith.addf %28, %29 : vector<8x128xf32>
    %cst_15 = arith.constant 0.000000e+00 : f32
    %31 = vector.broadcast %cst_15 : f32 to vector<8x128xf32>
    %32 = arith.cmpf oge, %30, %31 : vector<8x128xf32>
    %cst_16 = arith.constant 0.00999999977 : f32
    %33 = vector.broadcast %cst_16 : f32 to vector<8x128xf32>
    %34 = arith.mulf %33, %30 : vector<8x128xf32>
    %35 = arith.select %32, %30, %34 : vector<8x128xi1>, vector<8x128xf32>
    %36 = arith.truncf %35 : vector<8x128xf32> to vector<8x128xbf16>
    %c0_17 = arith.constant 0 : index
    %c0_18 = arith.constant 0 : index
    %37 = vector.load %arg6[%c0_17, %c0_18] : memref<8x128xbf16, #tpu.memory_space<vmem>>, vector<8x128xbf16>
    tpu.vector_store %arg6[%c0_17, %c0_18], %36 {strides = array<i32>} : memref<8x128xbf16, #tpu.memory_space<vmem>>, vector<8x128xbf16>,
    return
  }
  func.func @transform_0(%arg0: i32) -> (i32, i32) {
    %c0_i32 = arith.constant 0 : i32
    %c0_i32_0 = arith.constant 0 : i32
    %c0_i32_1 = arith.constant 0 : i32
    return %c0_i32, %c0_i32_0 : i32, i32
  }
  func.func @transform_1(%arg0: i32) -> (i32, i32) {
    %c0_i32 = arith.constant 0 : i32
    %c0_i32_0 = arith.constant 0 : i32
    %c0_i32_1 = arith.constant 0 : i32
    return %c0_i32, %c0_i32_0 : i32, i32
  }
  func.func @transform_2(%arg0: i32) -> (i32, i32) {
    %c0_i32 = arith.constant 0 : i32
    %c0_i32_0 = arith.constant 0 : i32
    %c0_i32_1 = arith.constant 0 : i32
    return %c0_i32, %c0_i32_0 : i32, i32
  }
  func.func @transform_3(%arg0: i32) -> (i32, i32) {
    %c0_i32 = arith.constant 0 : i32
    %c0_i32_0 = arith.constant 0 : i32
    %c0_i32_1 = arith.constant 0 : i32
    return %c0_i32, %c0_i32_0 : i32, i32
  }
  func.func @transform_4(%arg0: i32) -> (i32, i32) {
    %c0_i32 = arith.constant 0 : i32
    %c0_i32_0 = arith.constant 0 : i32
    %c0_i32_1 = arith.constant 0 : i32
    return %c0_i32, %c0_i32_0 : i32, i32
  }
  func.func @transform_5(%arg0: i32) -> (i32, i32) {
    %c0_i32 = arith.constant 0 : i32
    %c0_i32_0 = arith.constant 0 : i32
    %c0_i32_1 = arith.constant 0 : i32
    return %c0_i32, %c0_i32_0 : i32, i32
  }
}

module attributes {stable_mosaic.version = 11 : i64} {
  func.func @_conv_stats_pool_kernel(%arg0: i32, %arg1: memref<8x216xbf16, #tpu.memory_space<vmem>>, %arg2: memref<216x128xbf16, #tpu.memory_space<vmem>>, %arg3: memref<8x1xf32, #tpu.memory_space<vmem>>, %arg4: memref<8x128xf32, #tpu.memory_space<vmem>>, %arg5: memref<8x1xf32, #tpu.memory_space<vmem>>, %arg6: memref<8x1xf32, #tpu.memory_space<vmem>>, %arg7: memref<2x8x1xf32, #tpu.memory_space<vmem>>) attributes {dimension_semantics = [#tpu.dimension_semantics<arbitrary>], iteration_bounds = array<i64: 1>, scalar_prefetch = 0 : i64, scratch_operands = 0 : i64, tpu.core_type = #tpu.core_type<tc>, window_params = [{pipeline_mode = #tpu.pipeline_mode<synchronous>, transform_indices = @transform_0, window_bounds = array<i64: 8, 216>}, {pipeline_mode = #tpu.pipeline_mode<synchronous>, transform_indices = @transform_1, window_bounds = array<i64: 216, 128>}, {pipeline_mode = #tpu.pipeline_mode<synchronous>, transform_indices = @transform_2, window_bounds = array<i64: 8, 1>}, {pipeline_mode = #tpu.pipeline_mode<synchronous>, transform_indices = @transform_3, window_bounds = array<i64: 8, 128>}, {pipeline_mode = #tpu.pipeline_mode<synchronous>, transform_indices = @transform_4, window_bounds = array<i64: 8, 1>}, {pipeline_mode = #tpu.pipeline_mode<synchronous>, transform_indices = @transform_5, window_bounds = array<i64: 8, 1>}, {pipeline_mode = #tpu.pipeline_mode<synchronous>, transform_indices = @transform_6, window_bounds = array<i64: 2, 8, 1>}]} {
    %c0 = arith.constant 0 : index
    %c0_0 = arith.constant 0 : index
    %0 = vector.load %arg1[%c0, %c0_0] : memref<8x216xbf16, #tpu.memory_space<vmem>>, vector<8x216xbf16>
    %c0_1 = arith.constant 0 : index
    %c0_2 = arith.constant 0 : index
    %1 = vector.load %arg2[%c0_1, %c0_2] : memref<216x128xbf16, #tpu.memory_space<vmem>>, vector<216x128xbf16>
    %cst = arith.constant dense<0.000000e+00> : vector<8x128xf32>
    %2 = tpu.matmul %0, %1, %cst {dimension_numbers = #tpu.dot_dimension_numbers<[1], [0], [0], [1], [0, 0, 1, 1], [], []>} : vector<8x216xbf16>, vector<216x128xbf16>, vector<8x128xf32> -> vector<8x128xf32>
    %c0_3 = arith.constant 0 : index
    %c0_4 = arith.constant 0 : index
    %3 = vector.load %arg3[%c0_3, %c0_4] : memref<8x1xf32, #tpu.memory_space<vmem>>, vector<8x1xf32>
    %4 = vector.broadcast %3 : vector<8x1xf32> to vector<8x128xf32>
    %5 = arith.addf %2, %4 : vector<8x128xf32>
    %c0_5 = arith.constant 0 : index
    %c0_6 = arith.constant 0 : index
    %6 = vector.load %arg4[%c0_5, %c0_6] : memref<8x128xf32, #tpu.memory_space<vmem>>, vector<8x128xf32>
    tpu.vector_store %arg4[%c0_5, %c0_6], %5 {strides = array<i32>} : memref<8x128xf32, #tpu.memory_space<vmem>>, vector<8x128xf32>,
    %cst_7 = arith.constant dense<0.000000e+00> : vector<8xf32>
    %7 = vector.multi_reduction <add>, %5, %cst_7 [1] : vector<8x128xf32> to vector<8xf32>
    %8 = vector.shape_cast %7 : vector<8xf32> to vector<8x1xf32>
    %c0_8 = arith.constant 0 : index
    %c0_9 = arith.constant 0 : index
    %9 = vector.load %arg5[%c0_8, %c0_9] : memref<8x1xf32, #tpu.memory_space<vmem>>, vector<8x1xf32>
    tpu.vector_store %arg5[%c0_8, %c0_9], %8 {strides = array<i32>} : memref<8x1xf32, #tpu.memory_space<vmem>>, vector<8x1xf32>,
    %10 = arith.mulf %5, %5 : vector<8x128xf32>
    %cst_10 = arith.constant dense<0.000000e+00> : vector<8xf32>
    %11 = vector.multi_reduction <add>, %10, %cst_10 [1] : vector<8x128xf32> to vector<8xf32>
    %12 = vector.shape_cast %11 : vector<8xf32> to vector<8x1xf32>
    %c0_11 = arith.constant 0 : index
    %c0_12 = arith.constant 0 : index
    %13 = vector.load %arg6[%c0_11, %c0_12] : memref<8x1xf32, #tpu.memory_space<vmem>>, vector<8x1xf32>
    tpu.vector_store %arg6[%c0_11, %c0_12], %12 {strides = array<i32>} : memref<8x1xf32, #tpu.memory_space<vmem>>, vector<8x1xf32>,
    %14 = tpu.iota {dimensions = array<i32: 1>} : vector<8x128xi32>
    %c0_i32 = arith.constant 0 : i32
    %15 = vector.broadcast %c0_i32 : i32 to vector<8x128xi32>
    %16 = arith.cmpi sge, %14, %15 : vector<8x128xi32>
    %c64_i32 = arith.constant 64 : i32
    %17 = vector.broadcast %c64_i32 : i32 to vector<8x128xi32>
    %18 = arith.cmpi slt, %14, %17 : vector<8x128xi32>
    %19 = arith.andi %16, %18 : vector<8x128xi1>
    %cst_13 = arith.constant 0.000000e+00 : f32
    %20 = vector.broadcast %cst_13 : f32 to vector<8x128xf32>
    %21 = arith.select %19, %5, %20 : vector<8x128xi1>, vector<8x128xf32>
    %cst_14 = arith.constant dense<0.000000e+00> : vector<8xf32>
    %22 = vector.multi_reduction <add>, %21, %cst_14 [1] : vector<8x128xf32> to vector<8xf32>
    %23 = vector.shape_cast %22 : vector<8xf32> to vector<8x1xf32>
    %cst_15 = arith.constant 1.562500e-02 : f32
    %24 = vector.broadcast %cst_15 : f32 to vector<8x1xf32>
    %25 = arith.mulf %23, %24 : vector<8x1xf32>
    %c0_16 = arith.constant 0 : index
    %c0_17 = arith.constant 0 : index
    %c0_18 = arith.constant 0 : index
    %26 = vector.load %arg7[%c0_16, %c0_17, %c0_18] : memref<2x8x1xf32, #tpu.memory_space<vmem>>, vector<1x8x1xf32>
    %27 = vector.shape_cast %26 : vector<1x8x1xf32> to vector<8x1xf32>
    %28 = vector.shape_cast %25 : vector<8x1xf32> to vector<1x8x1xf32>
    tpu.vector_store %arg7[%c0_16, %c0_17, %c0_18], %28 {strides = array<i32>} : memref<2x8x1xf32, #tpu.memory_space<vmem>>, vector<1x8x1xf32>,
    %c64_i32_19 = arith.constant 64 : i32
    %29 = vector.broadcast %c64_i32_19 : i32 to vector<8x128xi32>
    %30 = arith.cmpi sge, %14, %29 : vector<8x128xi32>
    %c128_i32 = arith.constant 128 : i32
    %31 = vector.broadcast %c128_i32 : i32 to vector<8x128xi32>
    %32 = arith.cmpi slt, %14, %31 : vector<8x128xi32>
    %33 = arith.andi %30, %32 : vector<8x128xi1>
    %cst_20 = arith.constant 0.000000e+00 : f32
    %34 = vector.broadcast %cst_20 : f32 to vector<8x128xf32>
    %35 = arith.select %33, %5, %34 : vector<8x128xi1>, vector<8x128xf32>
    %cst_21 = arith.constant dense<0.000000e+00> : vector<8xf32>
    %36 = vector.multi_reduction <add>, %35, %cst_21 [1] : vector<8x128xf32> to vector<8xf32>
    %37 = vector.shape_cast %36 : vector<8xf32> to vector<8x1xf32>
    %cst_22 = arith.constant 1.562500e-02 : f32
    %38 = vector.broadcast %cst_22 : f32 to vector<8x1xf32>
    %39 = arith.mulf %37, %38 : vector<8x1xf32>
    %c1 = arith.constant 1 : index
    %c0_23 = arith.constant 0 : index
    %c0_24 = arith.constant 0 : index
    %40 = vector.load %arg7[%c1, %c0_23, %c0_24] : memref<2x8x1xf32, #tpu.memory_space<vmem>>, vector<1x8x1xf32>
    %41 = vector.shape_cast %40 : vector<1x8x1xf32> to vector<8x1xf32>
    %42 = vector.shape_cast %39 : vector<8x1xf32> to vector<1x8x1xf32>
    tpu.vector_store %arg7[%c1, %c0_23, %c0_24], %42 {strides = array<i32>} : memref<2x8x1xf32, #tpu.memory_space<vmem>>, vector<1x8x1xf32>,
    return
  }
  func.func @transform_0(%arg0: i32) -> (i32, i32) {
    %c0_i32 = arith.constant 0 : i32
    %c0_i32_0 = arith.constant 0 : i32
    %c0_i32_1 = arith.constant 0 : i32
    return %c0_i32, %c0_i32_0 : i32, i32
  }
  func.func @transform_1(%arg0: i32) -> (i32, i32) {
    %c0_i32 = arith.constant 0 : i32
    %c0_i32_0 = arith.constant 0 : i32
    %c0_i32_1 = arith.constant 0 : i32
    return %c0_i32, %c0_i32_0 : i32, i32
  }
  func.func @transform_2(%arg0: i32) -> (i32, i32) {
    %c0_i32 = arith.constant 0 : i32
    %c0_i32_0 = arith.constant 0 : i32
    %c0_i32_1 = arith.constant 0 : i32
    return %c0_i32, %c0_i32_0 : i32, i32
  }
  func.func @transform_3(%arg0: i32) -> (i32, i32) {
    %c0_i32 = arith.constant 0 : i32
    %c0_i32_0 = arith.constant 0 : i32
    %c0_i32_1 = arith.constant 0 : i32
    return %c0_i32, %c0_i32_0 : i32, i32
  }
  func.func @transform_4(%arg0: i32) -> (i32, i32) {
    %c0_i32 = arith.constant 0 : i32
    %c0_i32_0 = arith.constant 0 : i32
    %c0_i32_1 = arith.constant 0 : i32
    return %c0_i32, %c0_i32_0 : i32, i32
  }
  func.func @transform_5(%arg0: i32) -> (i32, i32) {
    %c0_i32 = arith.constant 0 : i32
    %c0_i32_0 = arith.constant 0 : i32
    %c0_i32_1 = arith.constant 0 : i32
    return %c0_i32, %c0_i32_0 : i32, i32
  }
  func.func @transform_6(%arg0: i32) -> (i32, i32, i32) {
    %c0_i32 = arith.constant 0 : i32
    %c0_i32_0 = arith.constant 0 : i32
    %c0_i32_1 = arith.constant 0 : i32
    %c0_i32_2 = arith.constant 0 : i32
    return %c0_i32, %c0_i32_0, %c0_i32_1 : i32, i32, i32
  }
}

module attributes {stable_mosaic.version = 11 : i64} {
  func.func @_se_tail_kernel(%arg0: i32, %arg1: memref<8x128xf32, #tpu.memory_space<vmem>>, %arg2: memref<8x1xf32, #tpu.memory_space<vmem>>, %arg3: memref<8x1xf32, #tpu.memory_space<vmem>>, %arg4: memref<2x8x1xf32, #tpu.memory_space<vmem>>, %arg5: memref<8x128xf32, #tpu.memory_space<vmem>>, %arg6: memref<8x1xf32, #tpu.memory_space<vmem>>, %arg7: memref<8x1xf32, #tpu.memory_space<vmem>>, %arg8: memref<8x128xbf16, #tpu.memory_space<vmem>>) attributes {dimension_semantics = [#tpu.dimension_semantics<arbitrary>], iteration_bounds = array<i64: 1>, scalar_prefetch = 0 : i64, scratch_operands = 0 : i64, tpu.core_type = #tpu.core_type<tc>, window_params = [{pipeline_mode = #tpu.pipeline_mode<synchronous>, transform_indices = @transform_0, window_bounds = array<i64: 8, 128>}, {pipeline_mode = #tpu.pipeline_mode<synchronous>, transform_indices = @transform_1, window_bounds = array<i64: 8, 1>}, {pipeline_mode = #tpu.pipeline_mode<synchronous>, transform_indices = @transform_2, window_bounds = array<i64: 8, 1>}, {pipeline_mode = #tpu.pipeline_mode<synchronous>, transform_indices = @transform_3, window_bounds = array<i64: 2, 8, 1>}, {pipeline_mode = #tpu.pipeline_mode<synchronous>, transform_indices = @transform_4, window_bounds = array<i64: 8, 128>}, {pipeline_mode = #tpu.pipeline_mode<synchronous>, transform_indices = @transform_5, window_bounds = array<i64: 8, 1>}, {pipeline_mode = #tpu.pipeline_mode<synchronous>, transform_indices = @transform_6, window_bounds = array<i64: 8, 1>}, {pipeline_mode = #tpu.pipeline_mode<synchronous>, transform_indices = @transform_7, window_bounds = array<i64: 8, 128>}]} {
    %c0 = arith.constant 0 : index
    %c0_0 = arith.constant 0 : index
    %0 = vector.load %arg1[%c0, %c0_0] : memref<8x128xf32, #tpu.memory_space<vmem>>, vector<8x128xf32>
    %1 = tpu.iota {dimensions = array<i32: 1>} : vector<8x128xi32>
    %cst = arith.constant 0.000000e+00 : f32
    %2 = vector.broadcast %cst : f32 to vector<8x128xf32>
    %c0_i32 = arith.constant 0 : i32
    %3 = vector.broadcast %c0_i32 : i32 to vector<8x128xi32>
    %4 = arith.cmpi sge, %1, %3 : vector<8x128xi32>
    %c64_i32 = arith.constant 64 : i32
    %5 = vector.broadcast %c64_i32 : i32 to vector<8x128xi32>
    %6 = arith.cmpi slt, %1, %5 : vector<8x128xi32>
    %7 = arith.andi %4, %6 : vector<8x128xi1>
    %c0_1 = arith.constant 0 : index
    %c0_2 = arith.constant 0 : index
    %c0_3 = arith.constant 0 : index
    %8 = vector.load %arg4[%c0_1, %c0_2, %c0_3] : memref<2x8x1xf32, #tpu.memory_space<vmem>>, vector<1x8x1xf32>
    %9 = vector.shape_cast %8 : vector<1x8x1xf32> to vector<8x1xf32>
    %10 = vector.shape_cast %9 : vector<8x1xf32> to vector<8x1xf32>
    %11 = vector.broadcast %10 : vector<8x1xf32> to vector<8x128xf32>
    %12 = arith.select %7, %11, %2 : vector<8x128xi1>, vector<8x128xf32>
    %c64_i32_4 = arith.constant 64 : i32
    %13 = vector.broadcast %c64_i32_4 : i32 to vector<8x128xi32>
    %14 = arith.cmpi sge, %1, %13 : vector<8x128xi32>
    %c128_i32 = arith.constant 128 : i32
    %15 = vector.broadcast %c128_i32 : i32 to vector<8x128xi32>
    %16 = arith.cmpi slt, %1, %15 : vector<8x128xi32>
    %17 = arith.andi %14, %16 : vector<8x128xi1>
    %c1 = arith.constant 1 : index
    %c0_5 = arith.constant 0 : index
    %c0_6 = arith.constant 0 : index
    %18 = vector.load %arg4[%c1, %c0_5, %c0_6] : memref<2x8x1xf32, #tpu.memory_space<vmem>>, vector<1x8x1xf32>
    %19 = vector.shape_cast %18 : vector<1x8x1xf32> to vector<8x1xf32>
    %20 = vector.shape_cast %19 : vector<8x1xf32> to vector<8x1xf32>
    %21 = vector.broadcast %20 : vector<8x1xf32> to vector<8x128xf32>
    %22 = arith.select %17, %21, %12 : vector<8x128xi1>, vector<8x128xf32>
    %c0_7 = arith.constant 0 : index
    %c0_8 = arith.constant 0 : index
    %23 = vector.load %arg2[%c0_7, %c0_8] : memref<8x1xf32, #tpu.memory_space<vmem>>, vector<8x1xf32>
    %24 = vector.broadcast %23 : vector<8x1xf32> to vector<8x128xf32>
    %25 = arith.mulf %0, %24 : vector<8x128xf32>
    %c0_9 = arith.constant 0 : index
    %c0_10 = arith.constant 0 : index
    %26 = vector.load %arg3[%c0_9, %c0_10] : memref<8x1xf32, #tpu.memory_space<vmem>>, vector<8x1xf32>
    %27 = vector.broadcast %26 : vector<8x1xf32> to vector<8x128xf32>
    %28 = arith.addf %25, %27 : vector<8x128xf32>
    %29 = arith.mulf %28, %22 : vector<8x128xf32>
    %c0_11 = arith.constant 0 : index
    %c0_12 = arith.constant 0 : index
    %30 = vector.load %arg5[%c0_11, %c0_12] : memref<8x128xf32, #tpu.memory_space<vmem>>, vector<8x128xf32>
    %31 = arith.addf %29, %30 : vector<8x128xf32>
    %cst_13 = arith.constant 0.000000e+00 : f32
    %32 = vector.broadcast %cst_13 : f32 to vector<8x128xf32>
    %33 = arith.cmpf oge, %31, %32 : vector<8x128xf32>
    %cst_14 = arith.constant 0.00999999977 : f32
    %34 = vector.broadcast %cst_14 : f32 to vector<8x128xf32>
    %35 = arith.mulf %34, %31 : vector<8x128xf32>
    %36 = arith.select %33, %31, %35 : vector<8x128xi1>, vector<8x128xf32>
    %cst_15 = arith.constant dense<0.000000e+00> : vector<8xf32>
    %37 = vector.multi_reduction <add>, %36, %cst_15 [1] : vector<8x128xf32> to vector<8xf32>
    %38 = vector.shape_cast %37 : vector<8xf32> to vector<8x1xf32>
    %cst_16 = arith.constant 7.812500e-03 : f32
    %39 = vector.broadcast %cst_16 : f32 to vector<8x1xf32>
    %40 = arith.mulf %38, %39 : vector<8x1xf32>
    %41 = arith.mulf %36, %36 : vector<8x128xf32>
    %cst_17 = arith.constant dense<0.000000e+00> : vector<8xf32>
    %42 = vector.multi_reduction <add>, %41, %cst_17 [1] : vector<8x128xf32> to vector<8xf32>
    %43 = vector.shape_cast %42 : vector<8xf32> to vector<8x1xf32>
    %cst_18 = arith.constant 7.812500e-03 : f32
    %44 = vector.broadcast %cst_18 : f32 to vector<8x1xf32>
    %45 = arith.mulf %43, %44 : vector<8x1xf32>
    %46 = arith.mulf %40, %40 : vector<8x1xf32>
    %47 = arith.subf %45, %46 : vector<8x1xf32>
    %cst_19 = arith.constant 0.000000e+00 : f32
    %48 = vector.broadcast %cst_19 : f32 to vector<8x1xf32>
    %49 = arith.maximumf %47, %48 : vector<8x1xf32>
    %c0_20 = arith.constant 0 : index
    %c0_21 = arith.constant 0 : index
    %50 = vector.load %arg6[%c0_20, %c0_21] : memref<8x1xf32, #tpu.memory_space<vmem>>, vector<8x1xf32>
    %cst_22 = arith.constant 9.99999974E-6 : f32
    %51 = vector.broadcast %cst_22 : f32 to vector<8x1xf32>
    %52 = arith.addf %49, %51 : vector<8x1xf32>
    %53 = math.rsqrt %52 : vector<8x1xf32>
    %54 = arith.mulf %50, %53 : vector<8x1xf32>
    %c0_23 = arith.constant 0 : index
    %c0_24 = arith.constant 0 : index
    %55 = vector.load %arg7[%c0_23, %c0_24] : memref<8x1xf32, #tpu.memory_space<vmem>>, vector<8x1xf32>
    %56 = arith.mulf %40, %54 : vector<8x1xf32>
    %57 = arith.subf %55, %56 : vector<8x1xf32>
    %58 = vector.broadcast %54 : vector<8x1xf32> to vector<8x128xf32>
    %59 = arith.mulf %36, %58 : vector<8x128xf32>
    %60 = vector.broadcast %57 : vector<8x1xf32> to vector<8x128xf32>
    %61 = arith.addf %59, %60 : vector<8x128xf32>
    %cst_25 = arith.constant 0.000000e+00 : f32
    %62 = vector.broadcast %cst_25 : f32 to vector<8x128xf32>
    %63 = arith.cmpf oge, %61, %62 : vector<8x128xf32>
    %cst_26 = arith.constant 0.00999999977 : f32
    %64 = vector.broadcast %cst_26 : f32 to vector<8x128xf32>
    %65 = arith.mulf %64, %61 : vector<8x128xf32>
    %66 = arith.select %63, %61, %65 : vector<8x128xi1>, vector<8x128xf32>
    %67 = arith.truncf %66 : vector<8x128xf32> to vector<8x128xbf16>
    %c0_27 = arith.constant 0 : index
    %c0_28 = arith.constant 0 : index
    %68 = vector.load %arg8[%c0_27, %c0_28] : memref<8x128xbf16, #tpu.memory_space<vmem>>, vector<8x128xbf16>
    tpu.vector_store %arg8[%c0_27, %c0_28], %67 {strides = array<i32>} : memref<8x128xbf16, #tpu.memory_space<vmem>>, vector<8x128xbf16>,
    return
  }
  func.func @transform_0(%arg0: i32) -> (i32, i32) {
    %c0_i32 = arith.constant 0 : i32
    %c0_i32_0 = arith.constant 0 : i32
    %c0_i32_1 = arith.constant 0 : i32
    return %c0_i32, %c0_i32_0 : i32, i32
  }
  func.func @transform_1(%arg0: i32) -> (i32, i32) {
    %c0_i32 = arith.constant 0 : i32
    %c0_i32_0 = arith.constant 0 : i32
    %c0_i32_1 = arith.constant 0 : i32
    return %c0_i32, %c0_i32_0 : i32, i32
  }
  func.func @transform_2(%arg0: i32) -> (i32, i32) {
    %c0_i32 = arith.constant 0 : i32
    %c0_i32_0 = arith.constant 0 : i32
    %c0_i32_1 = arith.constant 0 : i32
    return %c0_i32, %c0_i32_0 : i32, i32
  }
  func.func @transform_3(%arg0: i32) -> (i32, i32, i32) {
    %c0_i32 = arith.constant 0 : i32
    %c0_i32_0 = arith.constant 0 : i32
    %c0_i32_1 = arith.constant 0 : i32
    %c0_i32_2 = arith.constant 0 : i32
    return %c0_i32, %c0_i32_0, %c0_i32_1 : i32, i32, i32
  }
  func.func @transform_4(%arg0: i32) -> (i32, i32) {
    %c0_i32 = arith.constant 0 : i32
    %c0_i32_0 = arith.constant 0 : i32
    %c0_i32_1 = arith.constant 0 : i32
    return %c0_i32, %c0_i32_0 : i32, i32
  }
  func.func @transform_5(%arg0: i32) -> (i32, i32) {
    %c0_i32 = arith.constant 0 : i32
    %c0_i32_0 = arith.constant 0 : i32
    %c0_i32_1 = arith.constant 0 : i32
    return %c0_i32, %c0_i32_0 : i32, i32
  }
  func.func @transform_6(%arg0: i32) -> (i32, i32) {
    %c0_i32 = arith.constant 0 : i32
    %c0_i32_0 = arith.constant 0 : i32
    %c0_i32_1 = arith.constant 0 : i32
    return %c0_i32, %c0_i32_0 : i32, i32
  }
  func.func @transform_7(%arg0: i32) -> (i32, i32) {
    %c0_i32 = arith.constant 0 : i32
    %c0_i32_0 = arith.constant 0 : i32
    %c0_i32_1 = arith.constant 0 : i32
    return %c0_i32, %c0_i32_0 : i32, i32
  }
}

module attributes {stable_mosaic.version = 11 : i64} {
  func.func @_conv_kernel(%arg0: i32, %arg1: memref<32x216xbf16, #tpu.memory_space<vmem>>, %arg2: memref<216x128xbf16, #tpu.memory_space<vmem>>, %arg3: memref<32x1xf32, #tpu.memory_space<vmem>>, %arg4: memref<32x128xf32, #tpu.memory_space<vmem>>) attributes {dimension_semantics = [#tpu.dimension_semantics<arbitrary>], iteration_bounds = array<i64: 1>, scalar_prefetch = 0 : i64, scratch_operands = 0 : i64, tpu.core_type = #tpu.core_type<tc>, window_params = [{pipeline_mode = #tpu.pipeline_mode<synchronous>, transform_indices = @transform_0, window_bounds = array<i64: 32, 216>}, {pipeline_mode = #tpu.pipeline_mode<synchronous>, transform_indices = @transform_1, window_bounds = array<i64: 216, 128>}, {pipeline_mode = #tpu.pipeline_mode<synchronous>, transform_indices = @transform_2, window_bounds = array<i64: 32, 1>}, {pipeline_mode = #tpu.pipeline_mode<synchronous>, transform_indices = @transform_3, window_bounds = array<i64: 32, 128>}]} {
    %c0 = arith.constant 0 : index
    %c0_0 = arith.constant 0 : index
    %0 = vector.load %arg1[%c0, %c0_0] : memref<32x216xbf16, #tpu.memory_space<vmem>>, vector<32x216xbf16>
    %c0_1 = arith.constant 0 : index
    %c0_2 = arith.constant 0 : index
    %1 = vector.load %arg2[%c0_1, %c0_2] : memref<216x128xbf16, #tpu.memory_space<vmem>>, vector<216x128xbf16>
    %cst = arith.constant dense<0.000000e+00> : vector<32x128xf32>
    %2 = tpu.matmul %0, %1, %cst {dimension_numbers = #tpu.dot_dimension_numbers<[1], [0], [0], [1], [0, 0, 1, 1], [], []>} : vector<32x216xbf16>, vector<216x128xbf16>, vector<32x128xf32> -> vector<32x128xf32>
    %c0_3 = arith.constant 0 : index
    %c0_4 = arith.constant 0 : index
    %3 = vector.load %arg3[%c0_3, %c0_4] : memref<32x1xf32, #tpu.memory_space<vmem>>, vector<32x1xf32>
    %4 = vector.broadcast %3 : vector<32x1xf32> to vector<32x128xf32>
    %5 = arith.addf %2, %4 : vector<32x128xf32>
    %c0_5 = arith.constant 0 : index
    %c0_6 = arith.constant 0 : index
    %6 = vector.load %arg4[%c0_5, %c0_6] : memref<32x128xf32, #tpu.memory_space<vmem>>, vector<32x128xf32>
    tpu.vector_store %arg4[%c0_5, %c0_6], %5 {strides = array<i32>} : memref<32x128xf32, #tpu.memory_space<vmem>>, vector<32x128xf32>,
    return
  }
  func.func @transform_0(%arg0: i32) -> (i32, i32) {
    %c0_i32 = arith.constant 0 : i32
    %c0_i32_0 = arith.constant 0 : i32
    %c0_i32_1 = arith.constant 0 : i32
    return %c0_i32, %c0_i32_0 : i32, i32
  }
  func.func @transform_1(%arg0: i32) -> (i32, i32) {
    %c0_i32 = arith.constant 0 : i32
    %c0_i32_0 = arith.constant 0 : i32
    %c0_i32_1 = arith.constant 0 : i32
    return %c0_i32, %c0_i32_0 : i32, i32
  }
  func.func @transform_2(%arg0: i32) -> (i32, i32) {
    %c0_i32 = arith.constant 0 : i32
    %c0_i32_0 = arith.constant 0 : i32
    %c0_i32_1 = arith.constant 0 : i32
    return %c0_i32, %c0_i32_0 : i32, i32
  }
  func.func @transform_3(%arg0: i32) -> (i32, i32) {
    %c0_i32 = arith.constant 0 : i32
    %c0_i32_0 = arith.constant 0 : i32
    %c0_i32_1 = arith.constant 0 : i32
    return %c0_i32, %c0_i32_0 : i32, i32
  }
}

module attributes {stable_mosaic.version = 11 : i64} {
  func.func @_conv_bn_act_kernel(%arg0: i32, %arg1: memref<4x108xbf16, #tpu.memory_space<vmem>>, %arg2: memref<108x1024xbf16, #tpu.memory_space<vmem>>, %arg3: memref<4x1xf32, #tpu.memory_space<vmem>>, %arg4: memref<4x1xf32, #tpu.memory_space<vmem>>, %arg5: memref<4x1xf32, #tpu.memory_space<vmem>>, %arg6: memref<4x1024xbf16, #tpu.memory_space<vmem>>) attributes {dimension_semantics = [#tpu.dimension_semantics<arbitrary>], iteration_bounds = array<i64: 1>, scalar_prefetch = 0 : i64, scratch_operands = 0 : i64, tpu.core_type = #tpu.core_type<tc>, window_params = [{pipeline_mode = #tpu.pipeline_mode<synchronous>, transform_indices = @transform_0, window_bounds = array<i64: 4, 108>}, {pipeline_mode = #tpu.pipeline_mode<synchronous>, transform_indices = @transform_1, window_bounds = array<i64: 108, 1024>}, {pipeline_mode = #tpu.pipeline_mode<synchronous>, transform_indices = @transform_2, window_bounds = array<i64: 4, 1>}, {pipeline_mode = #tpu.pipeline_mode<synchronous>, transform_indices = @transform_3, window_bounds = array<i64: 4, 1>}, {pipeline_mode = #tpu.pipeline_mode<synchronous>, transform_indices = @transform_4, window_bounds = array<i64: 4, 1>}, {pipeline_mode = #tpu.pipeline_mode<synchronous>, transform_indices = @transform_5, window_bounds = array<i64: 4, 1024>}]} {
    %c0 = arith.constant 0 : index
    %c0_0 = arith.constant 0 : index
    %0 = vector.load %arg1[%c0, %c0_0] : memref<4x108xbf16, #tpu.memory_space<vmem>>, vector<4x108xbf16>
    %c0_1 = arith.constant 0 : index
    %c0_2 = arith.constant 0 : index
    %1 = vector.load %arg2[%c0_1, %c0_2] : memref<108x1024xbf16, #tpu.memory_space<vmem>>, vector<108x1024xbf16>
    %cst = arith.constant dense<0.000000e+00> : vector<4x1024xf32>
    %2 = tpu.matmul %0, %1, %cst {dimension_numbers = #tpu.dot_dimension_numbers<[1], [0], [0], [1], [0, 0, 1, 1], [], []>} : vector<4x108xbf16>, vector<108x1024xbf16>, vector<4x1024xf32> -> vector<4x1024xf32>
    %c0_3 = arith.constant 0 : index
    %c0_4 = arith.constant 0 : index
    %3 = vector.load %arg3[%c0_3, %c0_4] : memref<4x1xf32, #tpu.memory_space<vmem>>, vector<4x1xf32>
    %4 = vector.broadcast %3 : vector<4x1xf32> to vector<4x1024xf32>
    %5 = arith.addf %2, %4 : vector<4x1024xf32>
    %cst_5 = arith.constant dense<0.000000e+00> : vector<4xf32>
    %6 = vector.multi_reduction <add>, %5, %cst_5 [1] : vector<4x1024xf32> to vector<4xf32>
    %7 = vector.shape_cast %6 : vector<4xf32> to vector<4x1xf32>
    %8 = arith.mulf %5, %5 : vector<4x1024xf32>
    %cst_6 = arith.constant dense<0.000000e+00> : vector<4xf32>
    %9 = vector.multi_reduction <add>, %8, %cst_6 [1] : vector<4x1024xf32> to vector<4xf32>
    %10 = vector.shape_cast %9 : vector<4xf32> to vector<4x1xf32>
    %cst_7 = arith.constant 9.765625E-4 : f32
    %11 = vector.broadcast %cst_7 : f32 to vector<4x1xf32>
    %12 = arith.mulf %7, %11 : vector<4x1xf32>
    %cst_8 = arith.constant 9.765625E-4 : f32
    %13 = vector.broadcast %cst_8 : f32 to vector<4x1xf32>
    %14 = arith.mulf %10, %13 : vector<4x1xf32>
    %15 = arith.mulf %12, %12 : vector<4x1xf32>
    %16 = arith.subf %14, %15 : vector<4x1xf32>
    %cst_9 = arith.constant 0.000000e+00 : f32
    %17 = vector.broadcast %cst_9 : f32 to vector<4x1xf32>
    %18 = arith.maximumf %16, %17 : vector<4x1xf32>
    %c0_10 = arith.constant 0 : index
    %c0_11 = arith.constant 0 : index
    %19 = vector.load %arg4[%c0_10, %c0_11] : memref<4x1xf32, #tpu.memory_space<vmem>>, vector<4x1xf32>
    %cst_12 = arith.constant 9.99999974E-6 : f32
    %20 = vector.broadcast %cst_12 : f32 to vector<4x1xf32>
    %21 = arith.addf %18, %20 : vector<4x1xf32>
    %22 = math.rsqrt %21 : vector<4x1xf32>
    %23 = arith.mulf %19, %22 : vector<4x1xf32>
    %c0_13 = arith.constant 0 : index
    %c0_14 = arith.constant 0 : index
    %24 = vector.load %arg5[%c0_13, %c0_14] : memref<4x1xf32, #tpu.memory_space<vmem>>, vector<4x1xf32>
    %25 = arith.mulf %12, %23 : vector<4x1xf32>
    %26 = arith.subf %24, %25 : vector<4x1xf32>
    %27 = vector.broadcast %23 : vector<4x1xf32> to vector<4x1024xf32>
    %28 = arith.mulf %5, %27 : vector<4x1024xf32>
    %29 = vector.broadcast %26 : vector<4x1xf32> to vector<4x1024xf32>
    %30 = arith.addf %28, %29 : vector<4x1024xf32>
    %cst_15 = arith.constant 0.000000e+00 : f32
    %31 = vector.broadcast %cst_15 : f32 to vector<4x1024xf32>
    %32 = arith.cmpf oge, %30, %31 : vector<4x1024xf32>
    %cst_16 = arith.constant 0.00999999977 : f32
    %33 = vector.broadcast %cst_16 : f32 to vector<4x1024xf32>
    %34 = arith.mulf %33, %30 : vector<4x1024xf32>
    %35 = arith.select %32, %30, %34 : vector<4x1024xi1>, vector<4x1024xf32>
    %36 = arith.truncf %35 : vector<4x1024xf32> to vector<4x1024xbf16>
    %c0_17 = arith.constant 0 : index
    %c0_18 = arith.constant 0 : index
    %37 = vector.load %arg6[%c0_17, %c0_18] : memref<4x1024xbf16, #tpu.memory_space<vmem>>, vector<4x1024xbf16>
    tpu.vector_store %arg6[%c0_17, %c0_18], %36 {strides = array<i32>} : memref<4x1024xbf16, #tpu.memory_space<vmem>>, vector<4x1024xbf16>,
    return
  }
  func.func @transform_0(%arg0: i32) -> (i32, i32) {
    %c0_i32 = arith.constant 0 : i32
    %c0_i32_0 = arith.constant 0 : i32
    %c0_i32_1 = arith.constant 0 : i32
    return %c0_i32, %c0_i32_0 : i32, i32
  }
  func.func @transform_1(%arg0: i32) -> (i32, i32) {
    %c0_i32 = arith.constant 0 : i32
    %c0_i32_0 = arith.constant 0 : i32
    %c0_i32_1 = arith.constant 0 : i32
    return %c0_i32, %c0_i32_0 : i32, i32
  }
  func.func @transform_2(%arg0: i32) -> (i32, i32) {
    %c0_i32 = arith.constant 0 : i32
    %c0_i32_0 = arith.constant 0 : i32
    %c0_i32_1 = arith.constant 0 : i32
    return %c0_i32, %c0_i32_0 : i32, i32
  }
  func.func @transform_3(%arg0: i32) -> (i32, i32) {
    %c0_i32 = arith.constant 0 : i32
    %c0_i32_0 = arith.constant 0 : i32
    %c0_i32_1 = arith.constant 0 : i32
    return %c0_i32, %c0_i32_0 : i32, i32
  }
  func.func @transform_4(%arg0: i32) -> (i32, i32) {
    %c0_i32 = arith.constant 0 : i32
    %c0_i32_0 = arith.constant 0 : i32
    %c0_i32_1 = arith.constant 0 : i32
    return %c0_i32, %c0_i32_0 : i32, i32
  }
  func.func @transform_5(%arg0: i32) -> (i32, i32) {
    %c0_i32 = arith.constant 0 : i32
    %c0_i32_0 = arith.constant 0 : i32
    %c0_i32_1 = arith.constant 0 : i32
    return %c0_i32, %c0_i32_0 : i32, i32
  }
}

module attributes {stable_mosaic.version = 11 : i64} {
  func.func @_conv_stats_pool_kernel(%arg0: i32, %arg1: memref<4x108xbf16, #tpu.memory_space<vmem>>, %arg2: memref<108x1024xbf16, #tpu.memory_space<vmem>>, %arg3: memref<4x1xf32, #tpu.memory_space<vmem>>, %arg4: memref<4x1024xf32, #tpu.memory_space<vmem>>, %arg5: memref<4x1xf32, #tpu.memory_space<vmem>>, %arg6: memref<4x1xf32, #tpu.memory_space<vmem>>, %arg7: memref<2x4x1xf32, #tpu.memory_space<vmem>>) attributes {dimension_semantics = [#tpu.dimension_semantics<arbitrary>], iteration_bounds = array<i64: 1>, scalar_prefetch = 0 : i64, scratch_operands = 0 : i64, tpu.core_type = #tpu.core_type<tc>, window_params = [{pipeline_mode = #tpu.pipeline_mode<synchronous>, transform_indices = @transform_0, window_bounds = array<i64: 4, 108>}, {pipeline_mode = #tpu.pipeline_mode<synchronous>, transform_indices = @transform_1, window_bounds = array<i64: 108, 1024>}, {pipeline_mode = #tpu.pipeline_mode<synchronous>, transform_indices = @transform_2, window_bounds = array<i64: 4, 1>}, {pipeline_mode = #tpu.pipeline_mode<synchronous>, transform_indices = @transform_3, window_bounds = array<i64: 4, 1024>}, {pipeline_mode = #tpu.pipeline_mode<synchronous>, transform_indices = @transform_4, window_bounds = array<i64: 4, 1>}, {pipeline_mode = #tpu.pipeline_mode<synchronous>, transform_indices = @transform_5, window_bounds = array<i64: 4, 1>}, {pipeline_mode = #tpu.pipeline_mode<synchronous>, transform_indices = @transform_6, window_bounds = array<i64: 2, 4, 1>}]} {
    %c0 = arith.constant 0 : index
    %c0_0 = arith.constant 0 : index
    %0 = vector.load %arg1[%c0, %c0_0] : memref<4x108xbf16, #tpu.memory_space<vmem>>, vector<4x108xbf16>
    %c0_1 = arith.constant 0 : index
    %c0_2 = arith.constant 0 : index
    %1 = vector.load %arg2[%c0_1, %c0_2] : memref<108x1024xbf16, #tpu.memory_space<vmem>>, vector<108x1024xbf16>
    %cst = arith.constant dense<0.000000e+00> : vector<4x1024xf32>
    %2 = tpu.matmul %0, %1, %cst {dimension_numbers = #tpu.dot_dimension_numbers<[1], [0], [0], [1], [0, 0, 1, 1], [], []>} : vector<4x108xbf16>, vector<108x1024xbf16>, vector<4x1024xf32> -> vector<4x1024xf32>
    %c0_3 = arith.constant 0 : index
    %c0_4 = arith.constant 0 : index
    %3 = vector.load %arg3[%c0_3, %c0_4] : memref<4x1xf32, #tpu.memory_space<vmem>>, vector<4x1xf32>
    %4 = vector.broadcast %3 : vector<4x1xf32> to vector<4x1024xf32>
    %5 = arith.addf %2, %4 : vector<4x1024xf32>
    %c0_5 = arith.constant 0 : index
    %c0_6 = arith.constant 0 : index
    %6 = vector.load %arg4[%c0_5, %c0_6] : memref<4x1024xf32, #tpu.memory_space<vmem>>, vector<4x1024xf32>
    tpu.vector_store %arg4[%c0_5, %c0_6], %5 {strides = array<i32>} : memref<4x1024xf32, #tpu.memory_space<vmem>>, vector<4x1024xf32>,
    %cst_7 = arith.constant dense<0.000000e+00> : vector<4xf32>
    %7 = vector.multi_reduction <add>, %5, %cst_7 [1] : vector<4x1024xf32> to vector<4xf32>
    %8 = vector.shape_cast %7 : vector<4xf32> to vector<4x1xf32>
    %c0_8 = arith.constant 0 : index
    %c0_9 = arith.constant 0 : index
    %9 = vector.load %arg5[%c0_8, %c0_9] : memref<4x1xf32, #tpu.memory_space<vmem>>, vector<4x1xf32>
    tpu.vector_store %arg5[%c0_8, %c0_9], %8 {strides = array<i32>} : memref<4x1xf32, #tpu.memory_space<vmem>>, vector<4x1xf32>,
    %10 = arith.mulf %5, %5 : vector<4x1024xf32>
    %cst_10 = arith.constant dense<0.000000e+00> : vector<4xf32>
    %11 = vector.multi_reduction <add>, %10, %cst_10 [1] : vector<4x1024xf32> to vector<4xf32>
    %12 = vector.shape_cast %11 : vector<4xf32> to vector<4x1xf32>
    %c0_11 = arith.constant 0 : index
    %c0_12 = arith.constant 0 : index
    %13 = vector.load %arg6[%c0_11, %c0_12] : memref<4x1xf32, #tpu.memory_space<vmem>>, vector<4x1xf32>
    tpu.vector_store %arg6[%c0_11, %c0_12], %12 {strides = array<i32>} : memref<4x1xf32, #tpu.memory_space<vmem>>, vector<4x1xf32>,
    %14 = tpu.iota {dimensions = array<i32: 1>} : vector<4x1024xi32>
    %c0_i32 = arith.constant 0 : i32
    %15 = vector.broadcast %c0_i32 : i32 to vector<4x1024xi32>
    %16 = arith.cmpi sge, %14, %15 : vector<4x1024xi32>
    %c512_i32 = arith.constant 512 : i32
    %17 = vector.broadcast %c512_i32 : i32 to vector<4x1024xi32>
    %18 = arith.cmpi slt, %14, %17 : vector<4x1024xi32>
    %19 = arith.andi %16, %18 : vector<4x1024xi1>
    %cst_13 = arith.constant 0.000000e+00 : f32
    %20 = vector.broadcast %cst_13 : f32 to vector<4x1024xf32>
    %21 = arith.select %19, %5, %20 : vector<4x1024xi1>, vector<4x1024xf32>
    %cst_14 = arith.constant dense<0.000000e+00> : vector<4xf32>
    %22 = vector.multi_reduction <add>, %21, %cst_14 [1] : vector<4x1024xf32> to vector<4xf32>
    %23 = vector.shape_cast %22 : vector<4xf32> to vector<4x1xf32>
    %cst_15 = arith.constant 0.001953125 : f32
    %24 = vector.broadcast %cst_15 : f32 to vector<4x1xf32>
    %25 = arith.mulf %23, %24 : vector<4x1xf32>
    %c0_16 = arith.constant 0 : index
    %c0_17 = arith.constant 0 : index
    %c0_18 = arith.constant 0 : index
    %26 = vector.load %arg7[%c0_16, %c0_17, %c0_18] : memref<2x4x1xf32, #tpu.memory_space<vmem>>, vector<1x4x1xf32>
    %27 = vector.shape_cast %26 : vector<1x4x1xf32> to vector<4x1xf32>
    %28 = vector.shape_cast %25 : vector<4x1xf32> to vector<1x4x1xf32>
    tpu.vector_store %arg7[%c0_16, %c0_17, %c0_18], %28 {strides = array<i32>} : memref<2x4x1xf32, #tpu.memory_space<vmem>>, vector<1x4x1xf32>,
    %c512_i32_19 = arith.constant 512 : i32
    %29 = vector.broadcast %c512_i32_19 : i32 to vector<4x1024xi32>
    %30 = arith.cmpi sge, %14, %29 : vector<4x1024xi32>
    %c1024_i32 = arith.constant 1024 : i32
    %31 = vector.broadcast %c1024_i32 : i32 to vector<4x1024xi32>
    %32 = arith.cmpi slt, %14, %31 : vector<4x1024xi32>
    %33 = arith.andi %30, %32 : vector<4x1024xi1>
    %cst_20 = arith.constant 0.000000e+00 : f32
    %34 = vector.broadcast %cst_20 : f32 to vector<4x1024xf32>
    %35 = arith.select %33, %5, %34 : vector<4x1024xi1>, vector<4x1024xf32>
    %cst_21 = arith.constant dense<0.000000e+00> : vector<4xf32>
    %36 = vector.multi_reduction <add>, %35, %cst_21 [1] : vector<4x1024xf32> to vector<4xf32>
    %37 = vector.shape_cast %36 : vector<4xf32> to vector<4x1xf32>
    %cst_22 = arith.constant 0.001953125 : f32
    %38 = vector.broadcast %cst_22 : f32 to vector<4x1xf32>
    %39 = arith.mulf %37, %38 : vector<4x1xf32>
    %c1 = arith.constant 1 : index
    %c0_23 = arith.constant 0 : index
    %c0_24 = arith.constant 0 : index
    %40 = vector.load %arg7[%c1, %c0_23, %c0_24] : memref<2x4x1xf32, #tpu.memory_space<vmem>>, vector<1x4x1xf32>
    %41 = vector.shape_cast %40 : vector<1x4x1xf32> to vector<4x1xf32>
    %42 = vector.shape_cast %39 : vector<4x1xf32> to vector<1x4x1xf32>
    tpu.vector_store %arg7[%c1, %c0_23, %c0_24], %42 {strides = array<i32>} : memref<2x4x1xf32, #tpu.memory_space<vmem>>, vector<1x4x1xf32>,
    return
  }
  func.func @transform_0(%arg0: i32) -> (i32, i32) {
    %c0_i32 = arith.constant 0 : i32
    %c0_i32_0 = arith.constant 0 : i32
    %c0_i32_1 = arith.constant 0 : i32
    return %c0_i32, %c0_i32_0 : i32, i32
  }
  func.func @transform_1(%arg0: i32) -> (i32, i32) {
    %c0_i32 = arith.constant 0 : i32
    %c0_i32_0 = arith.constant 0 : i32
    %c0_i32_1 = arith.constant 0 : i32
    return %c0_i32, %c0_i32_0 : i32, i32
  }
  func.func @transform_2(%arg0: i32) -> (i32, i32) {
    %c0_i32 = arith.constant 0 : i32
    %c0_i32_0 = arith.constant 0 : i32
    %c0_i32_1 = arith.constant 0 : i32
    return %c0_i32, %c0_i32_0 : i32, i32
  }
  func.func @transform_3(%arg0: i32) -> (i32, i32) {
    %c0_i32 = arith.constant 0 : i32
    %c0_i32_0 = arith.constant 0 : i32
    %c0_i32_1 = arith.constant 0 : i32
    return %c0_i32, %c0_i32_0 : i32, i32
  }
  func.func @transform_4(%arg0: i32) -> (i32, i32) {
    %c0_i32 = arith.constant 0 : i32
    %c0_i32_0 = arith.constant 0 : i32
    %c0_i32_1 = arith.constant 0 : i32
    return %c0_i32, %c0_i32_0 : i32, i32
  }
  func.func @transform_5(%arg0: i32) -> (i32, i32) {
    %c0_i32 = arith.constant 0 : i32
    %c0_i32_0 = arith.constant 0 : i32
    %c0_i32_1 = arith.constant 0 : i32
    return %c0_i32, %c0_i32_0 : i32, i32
  }
  func.func @transform_6(%arg0: i32) -> (i32, i32, i32) {
    %c0_i32 = arith.constant 0 : i32
    %c0_i32_0 = arith.constant 0 : i32
    %c0_i32_1 = arith.constant 0 : i32
    %c0_i32_2 = arith.constant 0 : i32
    return %c0_i32, %c0_i32_0, %c0_i32_1 : i32, i32, i32
  }
}

module attributes {stable_mosaic.version = 11 : i64} {
  func.func @_se_tail_kernel(%arg0: i32, %arg1: memref<4x1024xf32, #tpu.memory_space<vmem>>, %arg2: memref<4x1xf32, #tpu.memory_space<vmem>>, %arg3: memref<4x1xf32, #tpu.memory_space<vmem>>, %arg4: memref<2x4x1xf32, #tpu.memory_space<vmem>>, %arg5: memref<4x1024xf32, #tpu.memory_space<vmem>>, %arg6: memref<4x1xf32, #tpu.memory_space<vmem>>, %arg7: memref<4x1xf32, #tpu.memory_space<vmem>>, %arg8: memref<4x1024xbf16, #tpu.memory_space<vmem>>) attributes {dimension_semantics = [#tpu.dimension_semantics<arbitrary>], iteration_bounds = array<i64: 1>, scalar_prefetch = 0 : i64, scratch_operands = 0 : i64, tpu.core_type = #tpu.core_type<tc>, window_params = [{pipeline_mode = #tpu.pipeline_mode<synchronous>, transform_indices = @transform_0, window_bounds = array<i64: 4, 1024>}, {pipeline_mode = #tpu.pipeline_mode<synchronous>, transform_indices = @transform_1, window_bounds = array<i64: 4, 1>}, {pipeline_mode = #tpu.pipeline_mode<synchronous>, transform_indices = @transform_2, window_bounds = array<i64: 4, 1>}, {pipeline_mode = #tpu.pipeline_mode<synchronous>, transform_indices = @transform_3, window_bounds = array<i64: 2, 4, 1>}, {pipeline_mode = #tpu.pipeline_mode<synchronous>, transform_indices = @transform_4, window_bounds = array<i64: 4, 1024>}, {pipeline_mode = #tpu.pipeline_mode<synchronous>, transform_indices = @transform_5, window_bounds = array<i64: 4, 1>}, {pipeline_mode = #tpu.pipeline_mode<synchronous>, transform_indices = @transform_6, window_bounds = array<i64: 4, 1>}, {pipeline_mode = #tpu.pipeline_mode<synchronous>, transform_indices = @transform_7, window_bounds = array<i64: 4, 1024>}]} {
    %c0 = arith.constant 0 : index
    %c0_0 = arith.constant 0 : index
    %0 = vector.load %arg1[%c0, %c0_0] : memref<4x1024xf32, #tpu.memory_space<vmem>>, vector<4x1024xf32>
    %1 = tpu.iota {dimensions = array<i32: 1>} : vector<4x1024xi32>
    %cst = arith.constant 0.000000e+00 : f32
    %2 = vector.broadcast %cst : f32 to vector<4x1024xf32>
    %c0_i32 = arith.constant 0 : i32
    %3 = vector.broadcast %c0_i32 : i32 to vector<4x1024xi32>
    %4 = arith.cmpi sge, %1, %3 : vector<4x1024xi32>
    %c512_i32 = arith.constant 512 : i32
    %5 = vector.broadcast %c512_i32 : i32 to vector<4x1024xi32>
    %6 = arith.cmpi slt, %1, %5 : vector<4x1024xi32>
    %7 = arith.andi %4, %6 : vector<4x1024xi1>
    %c0_1 = arith.constant 0 : index
    %c0_2 = arith.constant 0 : index
    %c0_3 = arith.constant 0 : index
    %8 = vector.load %arg4[%c0_1, %c0_2, %c0_3] : memref<2x4x1xf32, #tpu.memory_space<vmem>>, vector<1x4x1xf32>
    %9 = vector.shape_cast %8 : vector<1x4x1xf32> to vector<4x1xf32>
    %10 = vector.shape_cast %9 : vector<4x1xf32> to vector<4x1xf32>
    %11 = vector.broadcast %10 : vector<4x1xf32> to vector<4x1024xf32>
    %12 = arith.select %7, %11, %2 : vector<4x1024xi1>, vector<4x1024xf32>
    %c512_i32_4 = arith.constant 512 : i32
    %13 = vector.broadcast %c512_i32_4 : i32 to vector<4x1024xi32>
    %14 = arith.cmpi sge, %1, %13 : vector<4x1024xi32>
    %c1024_i32 = arith.constant 1024 : i32
    %15 = vector.broadcast %c1024_i32 : i32 to vector<4x1024xi32>
    %16 = arith.cmpi slt, %1, %15 : vector<4x1024xi32>
    %17 = arith.andi %14, %16 : vector<4x1024xi1>
    %c1 = arith.constant 1 : index
    %c0_5 = arith.constant 0 : index
    %c0_6 = arith.constant 0 : index
    %18 = vector.load %arg4[%c1, %c0_5, %c0_6] : memref<2x4x1xf32, #tpu.memory_space<vmem>>, vector<1x4x1xf32>
    %19 = vector.shape_cast %18 : vector<1x4x1xf32> to vector<4x1xf32>
    %20 = vector.shape_cast %19 : vector<4x1xf32> to vector<4x1xf32>
    %21 = vector.broadcast %20 : vector<4x1xf32> to vector<4x1024xf32>
    %22 = arith.select %17, %21, %12 : vector<4x1024xi1>, vector<4x1024xf32>
    %c0_7 = arith.constant 0 : index
    %c0_8 = arith.constant 0 : index
    %23 = vector.load %arg2[%c0_7, %c0_8] : memref<4x1xf32, #tpu.memory_space<vmem>>, vector<4x1xf32>
    %24 = vector.broadcast %23 : vector<4x1xf32> to vector<4x1024xf32>
    %25 = arith.mulf %0, %24 : vector<4x1024xf32>
    %c0_9 = arith.constant 0 : index
    %c0_10 = arith.constant 0 : index
    %26 = vector.load %arg3[%c0_9, %c0_10] : memref<4x1xf32, #tpu.memory_space<vmem>>, vector<4x1xf32>
    %27 = vector.broadcast %26 : vector<4x1xf32> to vector<4x1024xf32>
    %28 = arith.addf %25, %27 : vector<4x1024xf32>
    %29 = arith.mulf %28, %22 : vector<4x1024xf32>
    %c0_11 = arith.constant 0 : index
    %c0_12 = arith.constant 0 : index
    %30 = vector.load %arg5[%c0_11, %c0_12] : memref<4x1024xf32, #tpu.memory_space<vmem>>, vector<4x1024xf32>
    %31 = arith.addf %29, %30 : vector<4x1024xf32>
    %cst_13 = arith.constant 0.000000e+00 : f32
    %32 = vector.broadcast %cst_13 : f32 to vector<4x1024xf32>
    %33 = arith.cmpf oge, %31, %32 : vector<4x1024xf32>
    %cst_14 = arith.constant 0.00999999977 : f32
    %34 = vector.broadcast %cst_14 : f32 to vector<4x1024xf32>
    %35 = arith.mulf %34, %31 : vector<4x1024xf32>
    %36 = arith.select %33, %31, %35 : vector<4x1024xi1>, vector<4x1024xf32>
    %cst_15 = arith.constant dense<0.000000e+00> : vector<4xf32>
    %37 = vector.multi_reduction <add>, %36, %cst_15 [1] : vector<4x1024xf32> to vector<4xf32>
    %38 = vector.shape_cast %37 : vector<4xf32> to vector<4x1xf32>
    %cst_16 = arith.constant 9.765625E-4 : f32
    %39 = vector.broadcast %cst_16 : f32 to vector<4x1xf32>
    %40 = arith.mulf %38, %39 : vector<4x1xf32>
    %41 = arith.mulf %36, %36 : vector<4x1024xf32>
    %cst_17 = arith.constant dense<0.000000e+00> : vector<4xf32>
    %42 = vector.multi_reduction <add>, %41, %cst_17 [1] : vector<4x1024xf32> to vector<4xf32>
    %43 = vector.shape_cast %42 : vector<4xf32> to vector<4x1xf32>
    %cst_18 = arith.constant 9.765625E-4 : f32
    %44 = vector.broadcast %cst_18 : f32 to vector<4x1xf32>
    %45 = arith.mulf %43, %44 : vector<4x1xf32>
    %46 = arith.mulf %40, %40 : vector<4x1xf32>
    %47 = arith.subf %45, %46 : vector<4x1xf32>
    %cst_19 = arith.constant 0.000000e+00 : f32
    %48 = vector.broadcast %cst_19 : f32 to vector<4x1xf32>
    %49 = arith.maximumf %47, %48 : vector<4x1xf32>
    %c0_20 = arith.constant 0 : index
    %c0_21 = arith.constant 0 : index
    %50 = vector.load %arg6[%c0_20, %c0_21] : memref<4x1xf32, #tpu.memory_space<vmem>>, vector<4x1xf32>
    %cst_22 = arith.constant 9.99999974E-6 : f32
    %51 = vector.broadcast %cst_22 : f32 to vector<4x1xf32>
    %52 = arith.addf %49, %51 : vector<4x1xf32>
    %53 = math.rsqrt %52 : vector<4x1xf32>
    %54 = arith.mulf %50, %53 : vector<4x1xf32>
    %c0_23 = arith.constant 0 : index
    %c0_24 = arith.constant 0 : index
    %55 = vector.load %arg7[%c0_23, %c0_24] : memref<4x1xf32, #tpu.memory_space<vmem>>, vector<4x1xf32>
    %56 = arith.mulf %40, %54 : vector<4x1xf32>
    %57 = arith.subf %55, %56 : vector<4x1xf32>
    %58 = vector.broadcast %54 : vector<4x1xf32> to vector<4x1024xf32>
    %59 = arith.mulf %36, %58 : vector<4x1024xf32>
    %60 = vector.broadcast %57 : vector<4x1xf32> to vector<4x1024xf32>
    %61 = arith.addf %59, %60 : vector<4x1024xf32>
    %cst_25 = arith.constant 0.000000e+00 : f32
    %62 = vector.broadcast %cst_25 : f32 to vector<4x1024xf32>
    %63 = arith.cmpf oge, %61, %62 : vector<4x1024xf32>
    %cst_26 = arith.constant 0.00999999977 : f32
    %64 = vector.broadcast %cst_26 : f32 to vector<4x1024xf32>
    %65 = arith.mulf %64, %61 : vector<4x1024xf32>
    %66 = arith.select %63, %61, %65 : vector<4x1024xi1>, vector<4x1024xf32>
    %67 = arith.truncf %66 : vector<4x1024xf32> to vector<4x1024xbf16>
    %c0_27 = arith.constant 0 : index
    %c0_28 = arith.constant 0 : index
    %68 = vector.load %arg8[%c0_27, %c0_28] : memref<4x1024xbf16, #tpu.memory_space<vmem>>, vector<4x1024xbf16>
    tpu.vector_store %arg8[%c0_27, %c0_28], %67 {strides = array<i32>} : memref<4x1024xbf16, #tpu.memory_space<vmem>>, vector<4x1024xbf16>,
    return
  }
  func.func @transform_0(%arg0: i32) -> (i32, i32) {
    %c0_i32 = arith.constant 0 : i32
    %c0_i32_0 = arith.constant 0 : i32
    %c0_i32_1 = arith.constant 0 : i32
    return %c0_i32, %c0_i32_0 : i32, i32
  }
  func.func @transform_1(%arg0: i32) -> (i32, i32) {
    %c0_i32 = arith.constant 0 : i32
    %c0_i32_0 = arith.constant 0 : i32
    %c0_i32_1 = arith.constant 0 : i32
    return %c0_i32, %c0_i32_0 : i32, i32
  }
  func.func @transform_2(%arg0: i32) -> (i32, i32) {
    %c0_i32 = arith.constant 0 : i32
    %c0_i32_0 = arith.constant 0 : i32
    %c0_i32_1 = arith.constant 0 : i32
    return %c0_i32, %c0_i32_0 : i32, i32
  }
  func.func @transform_3(%arg0: i32) -> (i32, i32, i32) {
    %c0_i32 = arith.constant 0 : i32
    %c0_i32_0 = arith.constant 0 : i32
    %c0_i32_1 = arith.constant 0 : i32
    %c0_i32_2 = arith.constant 0 : i32
    return %c0_i32, %c0_i32_0, %c0_i32_1 : i32, i32, i32
  }
  func.func @transform_4(%arg0: i32) -> (i32, i32) {
    %c0_i32 = arith.constant 0 : i32
    %c0_i32_0 = arith.constant 0 : i32
    %c0_i32_1 = arith.constant 0 : i32
    return %c0_i32, %c0_i32_0 : i32, i32
  }
  func.func @transform_5(%arg0: i32) -> (i32, i32) {
    %c0_i32 = arith.constant 0 : i32
    %c0_i32_0 = arith.constant 0 : i32
    %c0_i32_1 = arith.constant 0 : i32
    return %c0_i32, %c0_i32_0 : i32, i32
  }
  func.func @transform_6(%arg0: i32) -> (i32, i32) {
    %c0_i32 = arith.constant 0 : i32
    %c0_i32_0 = arith.constant 0 : i32
    %c0_i32_1 = arith.constant 0 : i32
    return %c0_i32, %c0_i32_0 : i32, i32
  }
  func.func @transform_7(%arg0: i32) -> (i32, i32) {
    %c0_i32 = arith.constant 0 : i32
    %c0_i32_0 = arith.constant 0 : i32
    %c0_i32_1 = arith.constant 0 : i32
    return %c0_i32, %c0_i32_0 : i32, i32
  }
}

module attributes {stable_mosaic.version = 11 : i64} {
  func.func @_conv_bn_act_kernel(%arg0: i32, %arg1: memref<8x108xbf16, #tpu.memory_space<vmem>>, %arg2: memref<108x1024xbf16, #tpu.memory_space<vmem>>, %arg3: memref<1x1xf32, #tpu.memory_space<vmem>>, %arg4: memref<1x1xf32, #tpu.memory_space<vmem>>, %arg5: memref<1x1xf32, #tpu.memory_space<vmem>>, %arg6: memref<8x1024xf32, #tpu.memory_space<vmem>>) attributes {dimension_semantics = [#tpu.dimension_semantics<arbitrary>], iteration_bounds = array<i64: 1>, scalar_prefetch = 0 : i64, scratch_operands = 0 : i64, tpu.core_type = #tpu.core_type<tc>, window_params = [{pipeline_mode = #tpu.pipeline_mode<synchronous>, transform_indices = @transform_0, window_bounds = array<i64: 8, 108>}, {pipeline_mode = #tpu.pipeline_mode<synchronous>, transform_indices = @transform_1, window_bounds = array<i64: 108, 1024>}, {pipeline_mode = #tpu.pipeline_mode<synchronous>, transform_indices = @transform_2, window_bounds = array<i64: 1, 1>}, {pipeline_mode = #tpu.pipeline_mode<synchronous>, transform_indices = @transform_3, window_bounds = array<i64: 1, 1>}, {pipeline_mode = #tpu.pipeline_mode<synchronous>, transform_indices = @transform_4, window_bounds = array<i64: 1, 1>}, {pipeline_mode = #tpu.pipeline_mode<synchronous>, transform_indices = @transform_5, window_bounds = array<i64: 8, 1024>}]} {
    %c0 = arith.constant 0 : index
    %c0_0 = arith.constant 0 : index
    %0 = vector.load %arg1[%c0, %c0_0] : memref<8x108xbf16, #tpu.memory_space<vmem>>, vector<8x108xbf16>
    %c0_1 = arith.constant 0 : index
    %c0_2 = arith.constant 0 : index
    %1 = vector.load %arg2[%c0_1, %c0_2] : memref<108x1024xbf16, #tpu.memory_space<vmem>>, vector<108x1024xbf16>
    %cst = arith.constant dense<0.000000e+00> : vector<8x1024xf32>
    %2 = tpu.matmul %0, %1, %cst {dimension_numbers = #tpu.dot_dimension_numbers<[1], [0], [0], [1], [0, 0, 1, 1], [], []>} : vector<8x108xbf16>, vector<108x1024xbf16>, vector<8x1024xf32> -> vector<8x1024xf32>
    %c0_3 = arith.constant 0 : index
    %c0_4 = arith.constant 0 : index
    %3 = vector.load %arg3[%c0_3, %c0_4] : memref<1x1xf32, #tpu.memory_space<vmem>>, vector<1x1xf32>
    %4 = vector.broadcast %3 : vector<1x1xf32> to vector<8x1024xf32>
    %5 = arith.addf %2, %4 : vector<8x1024xf32>
    %cst_5 = arith.constant dense<0.000000e+00> : vector<8xf32>
    %6 = vector.multi_reduction <add>, %5, %cst_5 [1] : vector<8x1024xf32> to vector<8xf32>
    %7 = vector.shape_cast %6 : vector<8xf32> to vector<8x1xf32>
    %cst_6 = arith.constant dense<0.000000e+00> : vector<1xf32>
    %8 = vector.multi_reduction <add>, %7, %cst_6 [0] : vector<8x1xf32> to vector<1xf32>
    %9 = vector.shape_cast %8 : vector<1xf32> to vector<1x1xf32>
    %10 = arith.mulf %5, %5 : vector<8x1024xf32>
    %cst_7 = arith.constant dense<0.000000e+00> : vector<8xf32>
    %11 = vector.multi_reduction <add>, %10, %cst_7 [1] : vector<8x1024xf32> to vector<8xf32>
    %12 = vector.shape_cast %11 : vector<8xf32> to vector<8x1xf32>
    %cst_8 = arith.constant dense<0.000000e+00> : vector<1xf32>
    %13 = vector.multi_reduction <add>, %12, %cst_8 [0] : vector<8x1xf32> to vector<1xf32>
    %14 = vector.shape_cast %13 : vector<1xf32> to vector<1x1xf32>
    %cst_9 = arith.constant 1.22070313E-4 : f32
    %15 = vector.broadcast %cst_9 : f32 to vector<1x1xf32>
    %16 = arith.mulf %9, %15 : vector<1x1xf32>
    %cst_10 = arith.constant 1.22070313E-4 : f32
    %17 = vector.broadcast %cst_10 : f32 to vector<1x1xf32>
    %18 = arith.mulf %14, %17 : vector<1x1xf32>
    %19 = arith.mulf %16, %16 : vector<1x1xf32>
    %20 = arith.subf %18, %19 : vector<1x1xf32>
    %cst_11 = arith.constant 0.000000e+00 : f32
    %21 = vector.broadcast %cst_11 : f32 to vector<1x1xf32>
    %22 = arith.maximumf %20, %21 : vector<1x1xf32>
    %c0_12 = arith.constant 0 : index
    %c0_13 = arith.constant 0 : index
    %23 = vector.load %arg4[%c0_12, %c0_13] : memref<1x1xf32, #tpu.memory_space<vmem>>, vector<1x1xf32>
    %cst_14 = arith.constant 9.99999974E-6 : f32
    %24 = vector.broadcast %cst_14 : f32 to vector<1x1xf32>
    %25 = arith.addf %22, %24 : vector<1x1xf32>
    %26 = math.rsqrt %25 : vector<1x1xf32>
    %27 = arith.mulf %23, %26 : vector<1x1xf32>
    %c0_15 = arith.constant 0 : index
    %c0_16 = arith.constant 0 : index
    %28 = vector.load %arg5[%c0_15, %c0_16] : memref<1x1xf32, #tpu.memory_space<vmem>>, vector<1x1xf32>
    %29 = arith.mulf %16, %27 : vector<1x1xf32>
    %30 = arith.subf %28, %29 : vector<1x1xf32>
    %31 = vector.broadcast %27 : vector<1x1xf32> to vector<8x1024xf32>
    %32 = arith.mulf %5, %31 : vector<8x1024xf32>
    %33 = vector.broadcast %30 : vector<1x1xf32> to vector<8x1024xf32>
    %34 = arith.addf %32, %33 : vector<8x1024xf32>
    %35 = math.tanh %34 : vector<8x1024xf32>
    %c0_17 = arith.constant 0 : index
    %c0_18 = arith.constant 0 : index
    %36 = vector.load %arg6[%c0_17, %c0_18] : memref<8x1024xf32, #tpu.memory_space<vmem>>, vector<8x1024xf32>
    tpu.vector_store %arg6[%c0_17, %c0_18], %35 {strides = array<i32>} : memref<8x1024xf32, #tpu.memory_space<vmem>>, vector<8x1024xf32>,
    return
  }
  func.func @transform_0(%arg0: i32) -> (i32, i32) {
    %c0_i32 = arith.constant 0 : i32
    %c0_i32_0 = arith.constant 0 : i32
    %c0_i32_1 = arith.constant 0 : i32
    return %c0_i32, %c0_i32_0 : i32, i32
  }
  func.func @transform_1(%arg0: i32) -> (i32, i32) {
    %c0_i32 = arith.constant 0 : i32
    %c0_i32_0 = arith.constant 0 : i32
    %c0_i32_1 = arith.constant 0 : i32
    return %c0_i32, %c0_i32_0 : i32, i32
  }
  func.func @transform_2(%arg0: i32) -> (i32, i32) {
    %c0_i32 = arith.constant 0 : i32
    %c0_i32_0 = arith.constant 0 : i32
    %c0_i32_1 = arith.constant 0 : i32
    return %c0_i32, %c0_i32_0 : i32, i32
  }
  func.func @transform_3(%arg0: i32) -> (i32, i32) {
    %c0_i32 = arith.constant 0 : i32
    %c0_i32_0 = arith.constant 0 : i32
    %c0_i32_1 = arith.constant 0 : i32
    return %c0_i32, %c0_i32_0 : i32, i32
  }
  func.func @transform_4(%arg0: i32) -> (i32, i32) {
    %c0_i32 = arith.constant 0 : i32
    %c0_i32_0 = arith.constant 0 : i32
    %c0_i32_1 = arith.constant 0 : i32
    return %c0_i32, %c0_i32_0 : i32, i32
  }
  func.func @transform_5(%arg0: i32) -> (i32, i32) {
    %c0_i32 = arith.constant 0 : i32
    %c0_i32_0 = arith.constant 0 : i32
    %c0_i32_1 = arith.constant 0 : i32
    return %c0_i32, %c0_i32_0 : i32, i32
  }
}

</mosaic_0001>

<llo_original>
// kernel: tile.8
$region0: #{tile.8}
  #allocation2 [shape = 's32[1]{0}', space=sflag, size = 0x4, scoped, tag = 'scoped memory for tile.8']
  %s0 = inlined_call_operand.hbm [shape: f32[4], index: 0, kind: input, shape index: {}]
  %s1 = inlined_call_operand.vmem [shape: f32[8,4], index: 1, kind: output, shape index: {}]
  $region1: #{tile.8} parent=0
    #allocation0 [shape = 'u8[512]{0}', space=vmem, size = 0x400, scoped, tag = 'operand span for operand 0']
    #allocation1 [shape = 's32[1]{0}', space=sflag, size = 0x4, scoped, tag = 'scoped memory for tile.8']
    %2 = vsyncpa [#allocation1], 0
    // Predicated region
    $region2: #{tile.8} parent=1 // pred_check
      _
    $region3: #{tile.8} parent=1 // pred_check_branch
      %4 = sbr.rel (0) target = $region5
    $region4: #{tile.8} parent=1 // pred_region
      %s6 = ssub.s32 16, 16
      %7 = vsyncadd [#allocation1], %s6
      %s9 = sshll.u32 [#allocation0], 4
      %s10 = int_to_ptr.vmem [resolvable:$true] %s9
      %12 = dma.hbm_to_vmem [thread:$0]  %s0, 16, %s10, [#allocation1]
    $region5: #{tile.8} parent=1 // pred_fallthru
      _
    // Predicated region
    $region6: #{tile.8} parent=1 // pred_check
      _
    $region7: #{tile.8} parent=1 // pred_check_branch
      %14 = sbr.rel (0) target = $region9
    $region8: #{tile.8} parent=1 // pred_region
      %15 = dma.done [#allocation1], 16
    $region9: #{tile.8} parent=1 // pred_fallthru
      _
    %v16 = vld [vmem:[#allocation0] ss:$0 sm:$0xff]
    %17 = vst [vmem:[%s1] sm:$0xff] %v16
    %18 = vsyncpa [#allocation1], 1

// kernel: tile.0
$region0: #{tile.0}
  %s0 = inlined_call_operand.vmem [shape: f32[8,4], index: 0, kind: input, shape index: {}]
  %s1 = inlined_call_operand.vmem [shape: f32[32,1], index: 1, kind: output, shape index: {}]
  %v2 = vld [vmem:[%s0] sm:$0xff]
  %vm3 = vcmask 7168
  %4 = vst.msk [vmem:[%s1] ss:$4 sm:$0xff] %vm3, %v2
  %v5 = vld [vmem:[%s0] sm:$0xff]
  %6 = vrot.lane.b32.xlu0 %v5, 127
  %v7 = vpop.permute.xlu0 %6
  %vm8 = vcmask 7168
  %s9 = scalar_lea.vmem %s1, 1
  %10 = vst.msk [vmem:[%s9] ss:$4 sm:$0xff] %vm8, %v7
  %v11 = vld [vmem:[%s0] sm:$0xff]
  %12 = vrot.lane.b32.xlu0 %v11, 126
  %v13 = vpop.permute.xlu0 %12
  %vm14 = vcmask 7168
  %s15 = scalar_lea.vmem %s1, 2
  %16 = vst.msk [vmem:[%s15] ss:$4 sm:$0xff] %vm14, %v13
  %v17 = vld [vmem:[%s0] sm:$0xff]
  %18 = vrot.lane.b32.xlu0 %v17, 125
  %v19 = vpop.permute.xlu0 %18
  %vm20 = vcmask 7168
  %s21 = scalar_lea.vmem %s1, 3
  %22 = vst.msk [vmem:[%s21] ss:$4 sm:$0xff] %vm20, %v19

// kernel: svs_decoder_forward.17
$region0: #{svs_decoder_forward.17}
  #allocation0 [shape = 'u32[]', space=smem, size = 0x4, offset = 0x4, fixed_abs, tag = 'smem constant byte address 0x4 - core index']
  #allocation1 [shape = 'u32[144,128]{1,0:T(1,128)}', space=vmem, size = 0x12000, scoped, tag = 'internal scratch']
  %s0 = inlined_call_operand.vmem [shape: bf16[32,1], index: 0, kind: input, shape index: {}]
  %s1 = inlined_call_operand.vmem [shape: bf16[1,128], index: 1, kind: input, shape index: {}]
  %s2 = inlined_call_operand.vmem [shape: f32[32,1], index: 2, kind: input, shape index: {}]
  %s3 = inlined_call_operand.vmem [shape: f32[32,128], index: 3, kind: output, shape index: {}]
  %s4 = sld [smem:[#allocation0]]
  $region22: #{svs_decoder_forward.17} parent=0
    _
  %s6 = ssub.s32 1, %s4
  %s7 = scalar_select 0, %s6, %s4
  // Predicated region
  $region2: #{svs_decoder_forward.17} parent=0 // pred_check
    _
  $region3: #{svs_decoder_forward.17} parent=0 // pred_check_branch
    %9 = sbr.rel (0) target = $region5
  $region4: #{svs_decoder_forward.17} parent=0 // pred_region
    _
  $region5: #{svs_decoder_forward.17} parent=0 // pred_fallthru
    _
  // Predicated region
  $region6: #{svs_decoder_forward.17} parent=0 // pred_check
    _
  $region7: #{svs_decoder_forward.17} parent=0 // pred_check_branch
    %11 = sbr.rel (0) target = $region9
  $region8: #{svs_decoder_forward.17} parent=0 // pred_region
    _
  $region9: #{svs_decoder_forward.17} parent=0 // pred_fallthru
    _
  // Predicated region
  $region10: #{svs_decoder_forward.17} parent=0 // pred_check
    _
  $region11: #{svs_decoder_forward.17} parent=0 // pred_check_branch
    %13 = sbr.rel (0) target = $region13
  $region12: #{svs_decoder_forward.17} parent=0 // pred_region
    _
  $region13: #{svs_decoder_forward.17} parent=0 // pred_fallthru
    _
  %v14 = vld [vmem:[%s0] sm:$0xf]
  %v15 = vld [vmem:[%s0 + $0x4] sm:$0xf]
  %v16 = vld [vmem:[%s0 + $0x8] sm:$0xf]
  %v17 = vld [vmem:[%s0 + $0xc] sm:$0xf]
  %v18 = vld [vmem:[%s1] sm:$0x1]
  %v19 = vunpack.c.l.bf16 %v14
  %v20 = vunpack.c.l.bf16 %v15
  %v21 = vunpack.c.l.bf16 %v16
  %v22 = vunpack.c.l.bf16 %v17
  %v23 = vunpack.c.l.bf16 %v18
  %25 = vset.pattern.permute.xlu0 0
  %26 = vperm.xlu0 %25, %v19
  %v27 = vpop.permute.xlu0 %26
  %30 = vset.pattern.permute.xlu0 0
  %31 = vperm.xlu0 %30, %v20
  %v32 = vpop.permute.xlu0 %31
  %35 = vset.pattern.permute.xlu0 0
  %36 = vperm.xlu0 %35, %v21
  %v37 = vpop.permute.xlu0 %36
  %40 = vset.pattern.permute.xlu0 0
  %41 = vperm.xlu0 %40, %v22
  %v42 = vpop.permute.xlu0 %41
  %v44 = vlaneseq
  %v45 = vshrl.u32 %v44, 7
  %v46 = vsub.s32 0, %v45
  %v47 = vrot.slane %v23, %v46
  %v48 = vmul.f32 %v27, %v47
  %v49 = vmul.f32 %v32, %v47
  %v50 = vmul.f32 %v37, %v47
  %v51 = vmul.f32 %v42, %v47
  %v52 = vld [vmem:[%s2] sm:$0xff]
  %v53 = vld [vmem:[%s2 + $0x8] sm:$0xff]
  %v54 = vld [vmem:[%s2 + $0x10] sm:$0xff]
  %v55 = vld [vmem:[%s2 + $0x18] sm:$0xff]
  %57 = vset.pattern.permute.xlu0 0
  %58 = vperm.xlu0 %57, %v52
  %v59 = vpop.permute.xlu0 %58
  %62 = vset.pattern.permute.xlu0 0
  %63 = vperm.xlu0 %62, %v53
  %v64 = vpop.permute.xlu0 %63
  %67 = vset.pattern.permute.xlu0 0
  %68 = vperm.xlu0 %67, %v54
  %v69 = vpop.permute.xlu0 %68
  %72 = vset.pattern.permute.xlu0 0
  %73 = vperm.xlu0 %72, %v55
  %v74 = vpop.permute.xlu0 %73
  %v76 = vadd.f32 %v48, %v59
  %v77 = vadd.f32 %v49, %v64
  %v78 = vadd.f32 %v50, %v69
  %v79 = vadd.f32 %v51, %v74
  %80 = vst [vmem:[%s3] sm:$0xff] %v76
  %81 = vst [vmem:[%s3 + $0x8] sm:$0xff] %v77
  %82 = vst [vmem:[%s3 + $0x10] sm:$0xff] %v78
  %83 = vst [vmem:[%s3 + $0x18] sm:$0xff] %v79
  // Predicated region
  $region14: #{svs_decoder_forward.17} parent=0 // pred_check
    _
  $region15: #{svs_decoder_forward.17} parent=0 // pred_check_branch
    %85 = sbr.rel (0) target = $region17
  $region16: #{svs_decoder_forward.17} parent=0 // pred_region
    _
  $region17: #{svs_decoder_forward.17} parent=0 // pred_fallthru
    _
  // Predicated region
  $region18: #{svs_decoder_forward.17} parent=0 // pred_check
    _
  $region19: #{svs_decoder_forward.17} parent=0 // pred_check_branch
    %87 = sbr.rel (0) target = $region21
  $region20: #{svs_decoder_forward.17} parent=0 // pred_region
    _
  $region21: #{svs_decoder_forward.17} parent=0 // pred_fallthru
    _

// kernel: svs_decoder_forward.18
$region0: #{svs_decoder_forward.18}
  #allocation0 [shape = 'u32[]', space=smem, size = 0x4, offset = 0x4, fixed_abs, tag = 'smem constant byte address 0x4 - core index']
  #allocation1 [shape = 'u32[144,128]{1,0:T(1,128)}', space=vmem, size = 0x12000, scoped, tag = 'internal scratch']
  %s0 = inlined_call_operand.vmem [shape: bf16[32,864], index: 0, kind: input, shape index: {}]
  %s1 = inlined_call_operand.vmem [shape: bf16[864,128], index: 1, kind: input, shape index: {}]
  %s2 = inlined_call_operand.vmem [shape: f32[32,1], index: 2, kind: input, shape index: {}]
  %s3 = inlined_call_operand.vmem [shape: f32[32,1], index: 3, kind: input, shape index: {}]
  %s4 = inlined_call_operand.vmem [shape: f32[32,1], index: 4, kind: input, shape index: {}]
  %s5 = inlined_call_operand.vmem [shape: bf16[32,128], index: 5, kind: output, shape index: {}]
  %s6 = sld [smem:[#allocation0]]
  $region30: #{svs_decoder_forward.18} parent=0
    _
  %s8 = ssub.s32 1, %s6
  %s9 = scalar_select 0, %s8, %s6
  // Predicated region
  $region2: #{svs_decoder_forward.18} parent=0 // pred_check
    _
  $region3: #{svs_decoder_forward.18} parent=0 // pred_check_branch
    %11 = sbr.rel (0) target = $region5
  $region4: #{svs_decoder_forward.18} parent=0 // pred_region
    _
  $region5: #{svs_decoder_forward.18} parent=0 // pred_fallthru
    _
  // Predicated region
  $region6: #{svs_decoder_forward.18} parent=0 // pred_check
    _
  $region7: #{svs_decoder_forward.18} parent=0 // pred_check_branch
    %13 = sbr.rel (0) target = $region9
  $region8: #{svs_decoder_forward.18} parent=0 // pred_region
    _
  $region9: #{svs_decoder_forward.18} parent=0 // pred_fallthru
    _
  // Predicated region
  $region10: #{svs_decoder_forward.18} parent=0 // pred_check
    _
  $region11: #{svs_decoder_forward.18} parent=0 // pred_check_branch
    %15 = sbr.rel (0) target = $region13
  $region12: #{svs_decoder_forward.18} parent=0 // pred_region
    _
  $region13: #{svs_decoder_forward.18} parent=0 // pred_fallthru
    _
  // Predicated region
  $region14: #{svs_decoder_forward.18} parent=0 // pred_check
    _
  $region15: #{svs_decoder_forward.18} parent=0 // pred_check_branch
    %17 = sbr.rel (0) target = $region17
  $region16: #{svs_decoder_forward.18} parent=0 // pred_region
    _
  $region17: #{svs_decoder_forward.18} parent=0 // pred_fallthru
    _
  // Predicated region
  $region18: #{svs_decoder_forward.18} parent=0 // pred_check
    _
  $region19: #{svs_decoder_forward.18} parent=0 // pred_check_branch
    %19 = sbr.rel (0) target = $region21
  $region20: #{svs_decoder_forward.18} parent=0 // pred_region
    _
  $region21: #{svs_decoder_forward.18} parent=0 // pred_fallthru
    _
  %v21 = vld [vmem:[%s0] sm:$0xff]
  %v22 = vld [vmem:[%s0 + $0x8] sm:$0xff]
  %v23 = vld [vmem:[%s0 + $0x10] sm:$0xff]
  %v24 = vld [vmem:[%s0 + $0x18] sm:$0xf]
  %v25 = vld [vmem:[%s0 + $0x1c] sm:$0xff]
  %v26 = vld [vmem:[%s0 + $0x24] sm:$0xff]
  %v27 = vld [vmem:[%s0 + $0x2c] sm:$0xff]
  %v28 = vld [vmem:[%s0 + $0x34] sm:$0xf]
  %v29 = vld [vmem:[%s0 + $0x38] sm:$0xff]
  %v30 = vld [vmem:[%s0 + $0x40] sm:$0xff]
  %v31 = vld [vmem:[%s0 + $0x48] sm:$0xff]
  %v32 = vld [vmem:[%s0 + $0x50] sm:$0xf]
  %v33 = vld [vmem:[%s0 + $0x54] sm:$0xff]
  %v34 = vld [vmem:[%s0 + $0x5c] sm:$0xff]
  %v35 = vld [vmem:[%s0 + $0x64] sm:$0xff]
  %v36 = vld [vmem:[%s0 + $0x6c] sm:$0xf]
  %v37 = vld [vmem:[%s1] sm:$0xf]
  %v38 = vld [vmem:[%s1 + $0x4] sm:$0xf]
  %v39 = vld [vmem:[%s1 + $0x8] sm:$0xf]
  %v40 = vld [vmem:[%s1 + $0xc] sm:$0xf]
  %v41 = vld [vmem:[%s1 + $0x10] sm:$0xf]
  %v42 = vld [vmem:[%s1 + $0x14] sm:$0xf]
  %v43 = vld [vmem:[%s1 + $0x18] sm:$0xf]
  %v44 = vld [vmem:[%s1 + $0x1c] sm:$0xf]
  %v45 = vld [vmem:[%s1 + $0x20] sm:$0xf]
  %v46 = vld [vmem:[%s1 + $0x24] sm:$0xf]
  %v47 = vld [vmem:[%s1 + $0x28] sm:$0xf]
  %v48 = vld [vmem:[%s1 + $0x2c] sm:$0xf]
  %v49 = vld [vmem:[%s1 + $0x30] sm:$0xf]
  %v50 = vld [vmem:[%s1 + $0x34] sm:$0xf]
  %v51 = vld [vmem:[%s1 + $0x38] sm:$0xf]
  %v52 = vld [vmem:[%s1 + $0x3c] sm:$0xf]
  %v53 = vld [vmem:[%s1 + $0x40] sm:$0xf]
  %v54 = vld [vmem:[%s1 + $0x44] sm:$0xf]
  %v55 = vld [vmem:[%s1 + $0x48] sm:$0xf]
  %v56 = vld [vmem:[%s1 + $0x4c] sm:$0xf]
  %v57 = vld [vmem:[%s1 + $0x50] sm:$0xf]
  %v58 = vld [vmem:[%s1 + $0x54] sm:$0xf]
  %v59 = vld [vmem:[%s1 + $0x58] sm:$0xf]
  %v60 = vld [vmem:[%s1 + $0x5c] sm:$0xf]
  %v61 = vld [vmem:[%s1 + $0x60] sm:$0xf]
  %v62 = vld [vmem:[%s1 + $0x64] sm:$0xf]
  %v63 = vld [vmem:[%s1 + $0x68] sm:$0xf]
  %v64 = vld [vmem:[%s1 + $0x6c] sm:$0xf]
  %v65 = vld [vmem:[%s1 + $0x70] sm:$0xf]
  %v66 = vld [vmem:[%s1 + $0x74] sm:$0xf]
  %v67 = vld [vmem:[%s1 + $0x78] sm:$0xf]
  %v68 = vld [vmem:[%s1 + $0x7c] sm:$0xf]
  %v69 = vld [vmem:[%s1 + $0x80] sm:$0xf]
  %v70 = vld [vmem:[%s1 + $0x84] sm:$0xf]
  %v71 = vld [vmem:[%s1 + $0x88] sm:$0xf]
  %v72 = vld [vmem:[%s1 + $0x8c] sm:$0xf]
  %v73 = vld [vmem:[%s1 + $0x90] sm:$0xf]
  %v74 = vld [vmem:[%s1 + $0x94] sm:$0xf]
  %v75 = vld [vmem:[%s1 + $0x98] sm:$0xf]
  %v76 = vld [vmem:[%s1 + $0x9c] sm:$0xf]
  %v77 = vld [vmem:[%s1 + $0xa0] sm:$0xf]
  %v78 = vld [vmem:[%s1 + $0xa4] sm:$0xf]
  %v79 = vld [vmem:[%s1 + $0xa8] sm:$0xf]
  %v80 = vld [vmem:[%s1 + $0xac] sm:$0xf]
  %v81 = vld [vmem:[%s1 + $0xb0] sm:$0xf]
  %v82 = vld [vmem:[%s1 + $0xb4] sm:$0xf]
  %v83 = vld [vmem:[%s1 + $0xb8] sm:$0xf]
  %v84 = vld [vmem:[%s1 + $0xbc] sm:$0xf]
  %v85 = vld [vmem:[%s1 + $0xc0] sm:$0xf]
  %v86 = vld [vmem:[%s1 + $0xc4] sm:$0xf]
  %v87 = vld [vmem:[%s1 + $0xc8] sm:$0xf]
  %v88 = vld [vmem:[%s1 + $0xcc] sm:$0xf]
  %v89 = vld [vmem:[%s1 + $0xd0] sm:$0xf]
  %v90 = vld [vmem:[%s1 + $0xd4] sm:$0xf]
  %v91 = vld [vmem:[%s1 + $0xd8] sm:$0xf]
  %v92 = vld [vmem:[%s1 + $0xdc] sm:$0xf]
  %v93 = vld [vmem:[%s1 + $0xe0] sm:$0xf]
  %v94 = vld [vmem:[%s1 + $0xe4] sm:$0xf]
  %v95 = vld [vmem:[%s1 + $0xe8] sm:$0xf]
  %v96 = vld [vmem:[%s1 + $0xec] sm:$0xf]
  %v97 = vld [vmem:[%s1 + $0xf0] sm:$0xf]
  %v98 = vld [vmem:[%s1 + $0xf4] sm:$0xf]
  %v99 = vld [vmem:[%s1 + $0xf8] sm:$0xf]
  %v100 = vld [vmem:[%s1 + $0xfc] sm:$0xf]
  %v101 = vld [vmem:[%s1 + $0x100] sm:$0xf]
  %v102 = vld [vmem:[%s1 + $0x104] sm:$0xf]
  %v103 = vld [vmem:[%s1 + $0x108] sm:$0xf]
  %v104 = vld [vmem:[%s1 + $0x10c] sm:$0xf]
  %v105 = vld [vmem:[%s1 + $0x110] sm:$0xf]
  %v106 = vld [vmem:[%s1 + $0x114] sm:$0xf]
  %v107 = vld [vmem:[%s1 + $0x118] sm:$0xf]
  %v108 = vld [vmem:[%s1 + $0x11c] sm:$0xf]
  %v109 = vld [vmem:[%s1 + $0x120] sm:$0xf]
  %v110 = vld [vmem:[%s1 + $0x124] sm:$0xf]
  %v111 = vld [vmem:[%s1 + $0x128] sm:$0xf]
  %v112 = vld [vmem:[%s1 + $0x12c] sm:$0xf]
  %v113 = vld [vmem:[%s1 + $0x130] sm:$0xf]
  %v114 = vld [vmem:[%s1 + $0x134] sm:$0xf]
  %v115 = vld [vmem:[%s1 + $0x138] sm:$0xf]
  %v116 = vld [vmem:[%s1 + $0x13c] sm:$0xf]
  %v117 = vld [vmem:[%s1 + $0x140] sm:$0xf]
  %v118 = vld [vmem:[%s1 + $0x144] sm:$0xf]
  %v119 = vld [vmem:[%s1 + $0x148] sm:$0xf]
  %v120 = vld [vmem:[%s1 + $0x14c] sm:$0xf]
  %v121 = vld [vmem:[%s1 + $0x150] sm:$0xf]
  %v122 = vld [vmem:[%s1 + $0x154] sm:$0xf]
  %v123 = vld [vmem:[%s1 + $0x158] sm:$0xf]
  %v124 = vld [vmem:[%s1 + $0x15c] sm:$0xf]
  %v125 = vld [vmem:[%s1 + $0x160] sm:$0xf]
  %v126 = vld [vmem:[%s1 + $0x164] sm:$0xf]
  %v127 = vld [vmem:[%s1 + $0x168] sm:$0xf]
  %v128 = vld [vmem:[%s1 + $0x16c] sm:$0xf]
  %v129 = vld [vmem:[%s1 + $0x170] sm:$0xf]
  %v130 = vld [vmem:[%s1 + $0x174] sm:$0xf]
  %v131 = vld [vmem:[%s1 + $0x178] sm:$0xf]
  %v132 = vld [vmem:[%s1 + $0x17c] sm:$0xf]
  %v133 = vld [vmem:[%s1 + $0x180] sm:$0xf]
  %v134 = vld [vmem:[%s1 + $0x184] sm:$0xf]
  %v135 = vld [vmem:[%s1 + $0x188] sm:$0xf]
  %v136 = vld [vmem:[%s1 + $0x18c] sm:$0xf]
  %v137 = vld [vmem:[%s1 + $0x190] sm:$0xf]
  %v138 = vld [vmem:[%s1 + $0x194] sm:$0xf]
  %v139 = vld [vmem:[%s1 + $0x198] sm:$0xf]
  %v140 = vld [vmem:[%s1 + $0x19c] sm:$0xf]
  %v141 = vld [vmem:[%s1 + $0x1a0] sm:$0xf]
  %v142 = vld [vmem:[%s1 + $0x1a4] sm:$0xf]
  %v143 = vld [vmem:[%s1 + $0x1a8] sm:$0xf]
  %v144 = vld [vmem:[%s1 + $0x1ac] sm:$0xf]
  %v145 = vld [vmem:[%s2] sm:$0xff]
  %v146 = vld [vmem:[%s2 + $0x8] sm:$0xff]
  %v147 = vld [vmem:[%s2 + $0x10] sm:$0xff]
  %v148 = vld [vmem:[%s2 + $0x18] sm:$0xff]
  %150 = vset.pattern.permute.xlu0 0
  %151 = vperm.xlu0 %150, %v145
  %v152 = vpop.permute.xlu0 %151
  %155 = vset.pattern.permute.xlu0 0
  %156 = vperm.xlu0 %155, %v146
  %v157 = vpop.permute.xlu0 %156
  %160 = vset.pattern.permute.xlu0 0
  %161 = vperm.xlu0 %160, %v147
  %v162 = vpop.permute.xlu0 %161
  %165 = vset.pattern.permute.xlu0 0
  %166 = vperm.xlu0 %165, %v148
  %v167 = vpop.permute.xlu0 %166
  %v185 = vunpack.c.l.b16 %v21
  %v186 = vunpack.c.h.b16 %v21
  %v187 = vunpack.c.l.b16 %v22
  %v188 = vunpack.c.h.b16 %v22
  %v189 = vunpack.c.l.b16 %v23
  %v190 = vunpack.c.h.b16 %v23
  %v191 = vunpack.c.l.b16 %v24
  %v192 = vunpack.c.l.b16 %v25
  %v193 = vunpack.c.h.b16 %v25
  %v194 = vunpack.c.l.b16 %v26
  %v195 = vunpack.c.h.b16 %v26
  %v196 = vunpack.c.l.b16 %v27
  %v197 = vunpack.c.h.b16 %v27
  %v198 = vunpack.c.l.b16 %v28
  %v199 = vunpack.c.l.b16 %v29
  %v200 = vunpack.c.h.b16 %v29
  %v201 = vunpack.c.l.b16 %v30
  %v202 = vunpack.c.h.b16 %v30
  %v203 = vunpack.c.l.b16 %v31
  %v204 = vunpack.c.h.b16 %v31
  %v205 = vunpack.c.l.b16 %v32
  %v206 = vunpack.c.l.b16 %v33
  %v207 = vunpack.c.h.b16 %v33
  %v208 = vunpack.c.l.b16 %v34
  %v209 = vunpack.c.h.b16 %v34
  %v210 = vunpack.c.l.b16 %v35
  %v211 = vunpack.c.h.b16 %v35
  %v212 = vunpack.c.l.b16 %v36
  %v213 = vpack.c.b16 %v192, %v185
  %v214 = vpack.c.b16 %v193, %v186
  %v215 = vpack.c.b16 %v194, %v187
  %v216 = vpack.c.b16 %v195, %v188
  %v217 = vpack.c.b16 %v196, %v189
  %v218 = vpack.c.b16 %v197, %v190
  %v219 = vpack.c.b16 %v198, %v191
  %v220 = vpack.c.b16 %v206, %v199
  %v221 = vpack.c.b16 %v207, %v200
  %v222 = vpack.c.b16 %v208, %v201
  %v223 = vpack.c.b16 %v209, %v202
  %v224 = vpack.c.b16 %v210, %v203
  %v225 = vpack.c.b16 %v211, %v204
  %v226 = vpack.c.b16 %v212, %v205
  %v347 = vunpack.c.l.b16 %v37
  %v348 = vunpack.c.l.b16 %v38
  %v349 = vunpack.c.l.b16 %v39
  %v350 = vunpack.c.l.b16 %v40
  %v351 = vunpack.c.l.b16 %v41
  %v352 = vunpack.c.l.b16 %v42
  %v353 = vunpack.c.l.b16 %v43
  %v354 = vunpack.c.l.b16 %v44
  %v355 = vunpack.c.l.b16 %v45
  %v356 = vunpack.c.l.b16 %v46
  %v357 = vunpack.c.l.b16 %v47
  %v358 = vunpack.c.l.b16 %v48
  %v359 = vunpack.c.l.b16 %v49
  %v360 = vunpack.c.l.b16 %v50
  %v361 = vunpack.c.l.b16 %v51
  %v362 = vunpack.c.l.b16 %v52
  %v363 = vunpack.c.l.b16 %v53
  %v364 = vunpack.c.l.b16 %v54
  %v365 = vunpack.c.l.b16 %v55
  %v366 = vunpack.c.l.b16 %v56
  %v367 = vunpack.c.l.b16 %v57
  %v368 = vunpack.c.l.b16 %v58
  %v369 = vunpack.c.l.b16 %v59
  %v370 = vunpack.c.l.b16 %v60
  %v371 = vunpack.c.l.b16 %v61
  %v372 = vunpack.c.l.b16 %v62
  %v373 = vunpack.c.l.b16 %v63
  %v374 = vunpack.c.l.b16 %v64
  %v375 = vunpack.c.l.b16 %v65
  %v376 = vunpack.c.l.b16 %v66
  %v377 = vunpack.c.l.b16 %v67
  %v378 = vunpack.c.l.b16 %v68
  %v379 = vunpack.c.l.b16 %v69
  %v380 = vunpack.c.l.b16 %v70
  %v381 = vunpack.c.l.b16 %v71
  %v382 = vunpack.c.l.b16 %v72
  %v383 = vunpack.c.l.b16 %v73
  %v384 = vunpack.c.l.b16 %v74
  %v385 = vunpack.c.l.b16 %v75
  %v386 = vunpack.c.l.b16 %v76
  %v387 = vunpack.c.l.b16 %v77
  %v388 = vunpack.c.l.b16 %v78
  %v389 = vunpack.c.l.b16 %v79
  %v390 = vunpack.c.l.b16 %v80
  %v391 = vunpack.c.l.b16 %v81
  %v392 = vunpack.c.l.b16 %v82
  %v393 = vunpack.c.l.b16 %v83
  %v394 = vunpack.c.l.b16 %v84
  %v395 = vunpack.c.l.b16 %v85
  %v396 = vunpack.c.l.b16 %v86
  %v397 = vunpack.c.l.b16 %v87
  %v398 = vunpack.c.l.b16 %v88
  %v399 = vunpack.c.l.b16 %v89
  %v400 = vunpack.c.l.b16 %v90
  %v401 = vunpack.c.l.b16 %v91
  %v402 = vunpack.c.l.b16 %v92
  %v403 = vunpack.c.l.b16 %v93
  %v404 = vunpack.c.l.b16 %v94
  %v405 = vunpack.c.l.b16 %v95
  %v406 = vunpack.c.l.b16 %v96
  %v407 = vunpack.c.l.b16 %v97
  %v408 = vunpack.c.l.b16 %v98
  %v409 = vunpack.c.l.b16 %v99
  %v410 = vunpack.c.l.b16 %v100
  %v411 = vunpack.c.l.b16 %v101
  %v412 = vunpack.c.l.b16 %v102
  %v413 = vunpack.c.l.b16 %v103
  %v414 = vunpack.c.l.b16 %v104
  %v415 = vunpack.c.l.b16 %v105
  %v416 = vunpack.c.l.b16 %v106
  %v417 = vunpack.c.l.b16 %v107
  %v418 = vunpack.c.l.b16 %v108
  %v419 = vunpack.c.l.b16 %v109
  %v420 = vunpack.c.l.b16 %v110
  %v421 = vunpack.c.l.b16 %v111
  %v422 = vunpack.c.l.b16 %v112
  %v423 = vunpack.c.l.b16 %v113
  %v424 = vunpack.c.l.b16 %v114
  %v425 = vunpack.c.l.b16 %v115
  %v426 = vunpack.c.l.b16 %v116
  %v427 = vunpack.c.l.b16 %v117
  %v428 = vunpack.c.l.b16 %v118
  %v429 = vunpack.c.l.b16 %v119
  %v430 = vunpack.c.l.b16 %v120
  %v431 = vunpack.c.l.b16 %v121
  %v432 = vunpack.c.l.b16 %v122
  %v433 = vunpack.c.l.b16 %v123
  %v434 = vunpack.c.l.b16 %v124
  %v435 = vunpack.c.l.b16 %v125
  %v436 = vunpack.c.l.b16 %v126
  %v437 = vunpack.c.l.b16 %v127
  %v438 = vunpack.c.l.b16 %v128
  %v439 = vunpack.c.l.b16 %v129
  %v440 = vunpack.c.l.b16 %v130
  %v441 = vunpack.c.l.b16 %v131
  %v442 = vunpack.c.l.b16 %v132
  %v443 = vunpack.c.l.b16 %v133
  %v444 = vunpack.c.l.b16 %v134
  %v445 = vunpack.c.l.b16 %v135
  %v446 = vunpack.c.l.b16 %v136
  %v447 = vunpack.c.l.b16 %v137
  %v448 = vunpack.c.l.b16 %v138
  %v449 = vunpack.c.l.b16 %v139
  %v450 = vunpack.c.l.b16 %v140
  %v451 = vunpack.c.l.b16 %v141
  %v452 = vunpack.c.l.b16 %v142
  %v453 = vunpack.c.l.b16 %v143
  %v454 = vunpack.c.l.b16 %v144
  %v455 = vpack.c.b16 %v348, %v347
  %v456 = vpack.c.b16 %v350, %v349
  %v457 = vpack.c.b16 %v352, %v351
  %v458 = vpack.c.b16 %v354, %v353
  %v459 = vpack.c.b16 %v356, %v355
  %v460 = vpack.c.b16 %v358, %v357
  %v461 = vpack.c.b16 %v360, %v359
  %v462 = vpack.c.b16 %v362, %v361
  %v463 = vpack.c.b16 %v364, %v363
  %v464 = vpack.c.b16 %v366, %v365
  %v465 = vpack.c.b16 %v368, %v367
  %v466 = vpack.c.b16 %v370, %v369
  %v467 = vpack.c.b16 %v372, %v371
  %v468 = vpack.c.b16 %v374, %v373
  %v469 = vpack.c.b16 %v376, %v375
  %v470 = vpack.c.b16 %v378, %v377
  %v471 = vpack.c.b16 %v380, %v379
  %v472 = vpack.c.b16 %v382, %v381
  %v473 = vpack.c.b16 %v384, %v383
  %v474 = vpack.c.b16 %v386, %v385
  %v475 = vpack.c.b16 %v388, %v387
  %v476 = vpack.c.b16 %v390, %v389
  %v477 = vpack.c.b16 %v392, %v391
  %v478 = vpack.c.b16 %v394, %v393
  %v479 = vpack.c.b16 %v396, %v395
  %v480 = vpack.c.b16 %v398, %v397
  %v481 = vpack.c.b16 %v400, %v399
  %v482 = vpack.c.b16 %v402, %v401
  %v483 = vpack.c.b16 %v404, %v403
  %v484 = vpack.c.b16 %v406, %v405
  %v485 = vpack.c.b16 %v408, %v407
  %v486 = vpack.c.b16 %v410, %v409
  %v487 = vpack.c.b16 %v412, %v411
  %v488 = vpack.c.b16 %v414, %v413
  %v489 = vpack.c.b16 %v416, %v415
  %v490 = vpack.c.b16 %v418, %v417
  %v491 = vpack.c.b16 %v420, %v419
  %v492 = vpack.c.b16 %v422, %v421
  %v493 = vpack.c.b16 %v424, %v423
  %v494 = vpack.c.b16 %v426, %v425
  %v495 = vpack.c.b16 %v428, %v427
  %v496 = vpack.c.b16 %v430, %v429
  %v497 = vpack.c.b16 %v432, %v431
  %v498 = vpack.c.b16 %v434, %v433
  %v499 = vpack.c.b16 %v436, %v435
  %v500 = vpack.c.b16 %v438, %v437
  %v501 = vpack.c.b16 %v440, %v439
  %v502 = vpack.c.b16 %v442, %v441
  %v503 = vpack.c.b16 %v444, %v443
  %v504 = vpack.c.b16 %v446, %v445
  %v505 = vpack.c.b16 %v448, %v447
  %v506 = vpack.c.b16 %v450, %v449
  %v507 = vpack.c.b16 %v452, %v451
  %v508 = vpack.c.b16 %v454, %v453
  %vm563 = vcmask 785408
  %v565 = vsel %vm563, %v219, 0
  %v568 = vsel %vm563, %v226, 0
  %570 = vmatprep.subr.bf16.mxu0 0
  %571 = vmatpush1.bf16.msra.mxu0 %v462
  %572 = vmatprep.subr.bf16.mxu0 0
  %573 = vmatpush1.bf16.msra.mxu0 %v461
  %574 = vmatprep.subr.bf16.mxu0 0
  %575 = vmatpush1.bf16.msra.mxu0 %v460
  %576 = vmatprep.subr.bf16.mxu0 0
  %577 = vmatpush1.bf16.msra.mxu0 %v459
  %578 = vmatprep.subr.bf16.mxu0 0
  %579 = vmatpush1.bf16.msra.mxu0 %v458
  %580 = vmatprep.subr.bf16.mxu0 0
  %581 = vmatpush1.bf16.msra.mxu0 %v457
  %582 = vmatprep.subr.bf16.mxu0 0
  %583 = vmatpush1.bf16.msra.mxu0 %v456
  %584 = vmatprep.subr.bf16.mxu0 0
  %585 = vmatpush1.bf16.msra.mxu0 %v455
  %586 = vmatprep.subr.bf16.mxu0 0
  %587 = vmatpush2.bf16.msra.mxu0 %v470
  %588 = vmatprep.subr.bf16.mxu0 0
  %589 = vmatpush2.bf16.msra.mxu0 %v469
  %590 = vmatprep.subr.bf16.mxu0 0
  %591 = vmatpush2.bf16.msra.mxu0 %v468
  %592 = vmatprep.subr.bf16.mxu0 0
  %593 = vmatpush2.bf16.msra.mxu0 %v467
  %594 = vmatprep.subr.bf16.mxu0 0
  %595 = vmatpush2.bf16.msra.mxu0 %v466
  %596 = vmatprep.subr.bf16.mxu0 0
  %597 = vmatpush2.bf16.msra.mxu0 %v465
  %598 = vmatprep.subr.bf16.mxu0 0
  %599 = vmatpush2.bf16.msra.mxu0 %v464
  %600 = vmatprep.subr.bf16.mxu0 0
  %601 = vmatpush2.bf16.msra.mxu0 %v463
  %602 = vmatprep.mubr.bf16.mxu0 %v214
  %603 = vmatmul.mubr.bf16.gmra.mxu0 %v213
  %v604 = vpop.f32.mrf.mxu0
  %v605 = vadd.f32 %v152, %v604
  %v606 = vpop.f32.mrf.mxu0
  %v607 = vpop.f32.mrf.mxu0
  %v608 = vadd.f32 %v157, %v607
  %v609 = vpop.f32.mrf.mxu0
  %610 = vmatprep.mubr.bf16.mxu0 %v221
  %611 = vmatmul.mubr.bf16.gmra.mxu0 %v220
  %v612 = vpop.f32.mrf.mxu0
  %v613 = vadd.f32 %v162, %v612
  %v614 = vpop.f32.mrf.mxu0
  %v615 = vpop.f32.mrf.mxu0
  %v616 = vadd.f32 %v167, %v615
  %v617 = vpop.f32.mrf.mxu0
  %618 = vdwg.mxu0
  %619 = vmatprep.subr.bf16.mxu0 0
  %620 = vmatpush1.bf16.msra.mxu0 %v478
  %621 = vmatprep.subr.bf16.mxu0 0
  %622 = vmatpush1.bf16.msra.mxu0 %v477
  %623 = vmatprep.subr.bf16.mxu0 0
  %624 = vmatpush1.bf16.msra.mxu0 %v476
  %625 = vmatprep.subr.bf16.mxu0 0
  %626 = vmatpush1.bf16.msra.mxu0 %v475
  %627 = vmatprep.subr.bf16.mxu0 0
  %628 = vmatpush1.bf16.msra.mxu0 %v474
  %629 = vmatprep.subr.bf16.mxu0 0
  %630 = vmatpush1.bf16.msra.mxu0 %v473
  %631 = vmatprep.subr.bf16.mxu0 0
  %632 = vmatpush1.bf16.msra.mxu0 %v472
  %633 = vmatprep.subr.bf16.mxu0 0
  %634 = vmatpush1.bf16.msra.mxu0 %v471
  %635 = vmatprep.subr.bf16.mxu0 0
  %636 = vmatpush2.bf16.msra.mxu0 %v486
  %637 = vmatprep.subr.bf16.mxu0 0
  %638 = vmatpush2.bf16.msra.mxu0 %v485
  %639 = vmatprep.subr.bf16.mxu0 0
  %640 = vmatpush2.bf16.msra.mxu0 %v484
  %641 = vmatprep.subr.bf16.mxu0 0
  %642 = vmatpush2.bf16.msra.mxu0 %v483
  %643 = vmatprep.subr.bf16.mxu0 0
  %644 = vmatpush2.bf16.msra.mxu0 %v482
  %645 = vmatprep.subr.bf16.mxu0 0
  %646 = vmatpush2.bf16.msra.mxu0 %v481
  %647 = vmatprep.subr.bf16.mxu0 0
  %648 = vmatpush2.bf16.msra.mxu0 %v480
  %649 = vmatprep.subr.bf16.mxu0 0
  %650 = vmatpush2.bf16.msra.mxu0 %v479
  %651 = vmatprep.mubr.bf16.mxu0 %v216
  %652 = vmatmul.mubr.bf16.gmra.mxu0 %v215
  %v653 = vpop.f32.mrf.mxu0
  %v654 = vadd.f32 %v605, %v653
  %v655 = vpop.f32.mrf.mxu0
  %v656 = vpop.f32.mrf.mxu0
  %v657 = vadd.f32 %v608, %v656
  %v658 = vpop.f32.mrf.mxu0
  %659 = vmatprep.mubr.bf16.mxu0 %v223
  %660 = vmatmul.mubr.bf16.gmra.mxu0 %v222
  %v661 = vpop.f32.mrf.mxu0
  %v662 = vadd.f32 %v613, %v661
  %v663 = vpop.f32.mrf.mxu0
  %v664 = vpop.f32.mrf.mxu0
  %v665 = vadd.f32 %v616, %v664
  %v666 = vpop.f32.mrf.mxu0
  %667 = vdwg.mxu0
  %668 = vmatprep.subr.bf16.mxu0 0
  %669 = vmatpush1.bf16.msra.mxu0 %v494
  %670 = vmatprep.subr.bf16.mxu0 0
  %671 = vmatpush1.bf16.msra.mxu0 %v493
  %672 = vmatprep.subr.bf16.mxu0 0
  %673 = vmatpush1.bf16.msra.mxu0 %v492
  %674 = vmatprep.subr.bf16.mxu0 0
  %675 = vmatpush1.bf16.msra.mxu0 %v491
  %676 = vmatprep.subr.bf16.mxu0 0
  %677 = vmatpush1.bf16.msra.mxu0 %v490
  %678 = vmatprep.subr.bf16.mxu0 0
  %679 = vmatpush1.bf16.msra.mxu0 %v489
  %680 = vmatprep.subr.bf16.mxu0 0
  %681 = vmatpush1.bf16.msra.mxu0 %v488
  %682 = vmatprep.subr.bf16.mxu0 0
  %683 = vmatpush1.bf16.msra.mxu0 %v487
  %684 = vmatprep.subr.bf16.mxu0 0
  %685 = vmatpush2.bf16.msra.mxu0 %v502
  %686 = vmatprep.subr.bf16.mxu0 0
  %687 = vmatpush2.bf16.msra.mxu0 %v501
  %688 = vmatprep.subr.bf16.mxu0 0
  %689 = vmatpush2.bf16.msra.mxu0 %v500
  %690 = vmatprep.subr.bf16.mxu0 0
  %691 = vmatpush2.bf16.msra.mxu0 %v499
  %692 = vmatprep.subr.bf16.mxu0 0
  %693 = vmatpush2.bf16.msra.mxu0 %v498
  %694 = vmatprep.subr.bf16.mxu0 0
  %695 = vmatpush2.bf16.msra.mxu0 %v497
  %696 = vmatprep.subr.bf16.mxu0 0
  %697 = vmatpush2.bf16.msra.mxu0 %v496
  %698 = vmatprep.subr.bf16.mxu0 0
  %699 = vmatpush2.bf16.msra.mxu0 %v495
  %700 = vmatprep.mubr.bf16.mxu0 %v218
  %701 = vmatmul.mubr.bf16.gmra.mxu0 %v217
  %v702 = vpop.f32.mrf.mxu0
  %v703 = vadd.f32 %v654, %v702
  %v704 = vpop.f32.mrf.mxu0
  %v705 = vpop.f32.mrf.mxu0
  %v706 = vadd.f32 %v657, %v705
  %v707 = vpop.f32.mrf.mxu0
  %708 = vmatprep.mubr.bf16.mxu0 %v225
  %709 = vmatmul.mubr.bf16.gmra.mxu0 %v224
  %v710 = vpop.f32.mrf.mxu0
  %v711 = vadd.f32 %v662, %v710
  %v712 = vpop.f32.mrf.mxu0
  %v713 = vpop.f32.mrf.mxu0
  %v714 = vadd.f32 %v665, %v713
  %v715 = vpop.f32.mrf.mxu0
  %716 = vdwg.mxu0
  %717 = vmatprep.subr.bf16.mxu0 0
  %718 = vmatpush1.bf16.msra.mxu0 0
  %719 = vmatprep.subr.bf16.mxu0 0
  %720 = vmatpush1.bf16.msra.mxu0 0
  %721 = vmatprep.subr.bf16.mxu0 0
  %722 = vmatpush1.bf16.msra.mxu0 %v508
  %723 = vmatprep.subr.bf16.mxu0 0
  %724 = vmatpush1.bf16.msra.mxu0 %v507
  %725 = vmatprep.subr.bf16.mxu0 0
  %726 = vmatpush1.bf16.msra.mxu0 %v506
  %727 = vmatprep.subr.bf16.mxu0 0
  %728 = vmatpush1.bf16.msra.mxu0 %v505
  %729 = vmatprep.subr.bf16.mxu0 0
  %730 = vmatpush1.bf16.msra.mxu0 %v504
  %731 = vmatprep.subr.bf16.mxu0 0
  %732 = vmatpush1.bf16.msra.mxu0 %v503
  %733 = vmatprep.subr.bf16.mxu0 0
  %734 = vmatpush2.bf16.msra.mxu0 0
  %735 = vmatprep.subr.bf16.mxu0 0
  %736 = vmatpush2.bf16.msra.mxu0 0
  %737 = vmatprep.subr.bf16.mxu0 0
  %738 = vmatpush2.bf16.msra.mxu0 0
  %739 = vmatprep.subr.bf16.mxu0 0
  %740 = vmatpush2.bf16.msra.mxu0 0
  %741 = vmatprep.subr.bf16.mxu0 0
  %742 = vmatpush2.bf16.msra.mxu0 0
  %743 = vmatprep.subr.bf16.mxu0 0
  %744 = vmatpush2.bf16.msra.mxu0 0
  %745 = vmatprep.subr.bf16.mxu0 0
  %746 = vmatpush2.bf16.msra.mxu0 0
  %747 = vmatprep.subr.bf16.mxu0 0
  %748 = vmatpush2.bf16.msra.mxu0 0
  %749 = vmatprep.mubr.bf16.mxu0 0
  %750 = vmatmul.mubr.bf16.gmra.mxu0 %v565
  %v751 = vpop.f32.mrf.mxu0
  %v752 = vadd.f32 %v703, %v751
  %v753 = vpop.f32.mrf.mxu0
  %v754 = vpop.f32.mrf.mxu0
  %v755 = vadd.f32 %v706, %v754
  %v756 = vpop.f32.mrf.mxu0
  %757 = vmatprep.mubr.bf16.mxu0 0
  %758 = vmatmul.mubr.bf16.gmra.mxu0 %v568
  %v759 = vpop.f32.mrf.mxu0
  %v760 = vadd.f32 %v711, %v759
  %v761 = vpop.f32.mrf.mxu0
  %v762 = vpop.f32.mrf.mxu0
  %v763 = vadd.f32 %v714, %v762
  %v764 = vpop.f32.mrf.mxu0
  %765 = vdwg.mxu0
  %766 = vadd.xlane.f32.xlu0 %v752
  %v767 = vpop.xlane.xlu0 %766
  %768 = vadd.xlane.f32.xlu0 %v755
  %v769 = vpop.xlane.xlu0 %768
  %770 = vadd.xlane.f32.xlu0 %v760
  %v771 = vpop.xlane.xlu0 %770
  %772 = vadd.xlane.f32.xlu0 %v763
  %v773 = vpop.xlane.xlu0 %772
  %v774 = vmul.f32 %v752, %v752
  %v775 = vmul.f32 %v755, %v755
  %v776 = vmul.f32 %v760, %v760
  %v777 = vmul.f32 %v763, %v763
  %778 = vadd.xlane.f32.xlu0 %v774
  %v779 = vpop.xlane.xlu0 %778
  %780 = vadd.xlane.f32.xlu0 %v775
  %v781 = vpop.xlane.xlu0 %780
  %782 = vadd.xlane.f32.xlu0 %v776
  %v783 = vpop.xlane.xlu0 %782
  %784 = vadd.xlane.f32.xlu0 %v777
  %v785 = vpop.xlane.xlu0 %784
  %v786 = vmul.f32 %v767, 0.0078125
  %v787 = vmul.f32 %v769, 0.0078125
  %v788 = vmul.f32 %v771, 0.0078125
  %v789 = vmul.f32 %v773, 0.0078125
  %v790 = vmul.f32 %v779, 0.0078125
  %v791 = vmul.f32 %v781, 0.0078125
  %v792 = vmul.f32 %v783, 0.0078125
  %v793 = vmul.f32 %v785, 0.0078125
  %v794 = vmul.f32 %v786, %v786
  %v795 = vmul.f32 %v787, %v787
  %v796 = vmul.f32 %v788, %v788
  %v797 = vmul.f32 %v789, %v789
  %v798 = vsub.f32 %v790, %v794
  %v799 = vsub.f32 %v791, %v795
  %v800 = vsub.f32 %v792, %v796
  %v801 = vsub.f32 %v793, %v797
  %v802 = vmax.f32 %v798, 0.0
  %v803 = vmax.f32 %v799, 0.0
  %v804 = vmax.f32 %v800, 0.0
  %v805 = vmax.f32 %v801, 0.0
  %v806 = vld [vmem:[%s3] sm:$0xff]
  %v807 = vld [vmem:[%s3 + $0x8] sm:$0xff]
  %v808 = vld [vmem:[%s3 + $0x10] sm:$0xff]
  %v809 = vld [vmem:[%s3 + $0x18] sm:$0xff]
  %v810 = vadd.f32 %v802, 1e-05
  %v811 = vadd.f32 %v803, 1e-05
  %v812 = vadd.f32 %v804, 1e-05
  %v813 = vadd.f32 %v805, 1e-05
  %v814 = vrsqrt.pop %v810
  %v815 = vrsqrt.pop %v811
  %v816 = vrsqrt.pop %v812
  %v817 = vrsqrt.pop %v813
  %v818 = vmul.f32 %v806, %v814
  %v819 = vmul.f32 %v807, %v815
  %v820 = vmul.f32 %v808, %v816
  %v821 = vmul.f32 %v809, %v817
  %v822 = vld [vmem:[%s4] sm:$0xff]
  %v823 = vld [vmem:[%s4 + $0x8] sm:$0xff]
  %v824 = vld [vmem:[%s4 + $0x10] sm:$0xff]
  %v825 = vld [vmem:[%s4 + $0x18] sm:$0xff]
  %v826 = vmul.f32 %v786, %v818
  %v827 = vmul.f32 %v787, %v819
  %v828 = vmul.f32 %v788, %v820
  %v829 = vmul.f32 %v789, %v821
  %v830 = vsub.f32 %v822, %v826
  %v831 = vsub.f32 %v823, %v827
  %v832 = vsub.f32 %v824, %v828
  %v833 = vsub.f32 %v825, %v829
  %835 = vset.pattern.permute.xlu0 0
  %836 = vperm.xlu0 %835, %v818
  %v837 = vpop.permute.xlu0 %836
  %840 = vset.pattern.permute.xlu0 0
  %841 = vperm.xlu0 %840, %v819
  %v842 = vpop.permute.xlu0 %841
  %845 = vset.pattern.permute.xlu0 0
  %846 = vperm.xlu0 %845, %v820
  %v847 = vpop.permute.xlu0 %846
  %850 = vset.pattern.permute.xlu0 0
  %851 = vperm.xlu0 %850, %v821
  %v852 = vpop.permute.xlu0 %851
  %v854 = vmul.f32 %v752, %v837
  %v855 = vmul.f32 %v755, %v842
  %v856 = vmul.f32 %v760, %v847
  %v857 = vmul.f32 %v763, %v852
  %859 = vset.pattern.permute.xlu0 0
  %860 = vperm.xlu0 %859, %v830
  %v861 = vpop.permute.xlu0 %860
  %864 = vset.pattern.permute.xlu0 0
  %865 = vperm.xlu0 %864, %v831
  %v866 = vpop.permute.xlu0 %865
  %869 = vset.pattern.permute.xlu0 0
  %870 = vperm.xlu0 %869, %v832
  %v871 = vpop.permute.xlu0 %870
  %874 = vset.pattern.permute.xlu0 0
  %875 = vperm.xlu0 %874, %v833
  %v876 = vpop.permute.xlu0 %875
  %v878 = vadd.f32 %v854, %v861
  %v879 = vadd.f32 %v855, %v866
  %v880 = vadd.f32 %v856, %v871
  %v881 = vadd.f32 %v857, %v876
  %vm882 = vcmp.ge.f32.partialorder %v878, 0.0
  %vm883 = vcmp.ge.f32.partialorder %v879, 0.0
  %vm884 = vcmp.ge.f32.partialorder %v880, 0.0
  %vm885 = vcmp.ge.f32.partialorder %v881, 0.0
  %v886 = vmul.f32 %v878, 0.01
  %v887 = vmul.f32 %v879, 0.01
  %v888 = vmul.f32 %v880, 0.01
  %v889 = vmul.f32 %v881, 0.01
  %v890 = vsel %vm882, %v878, %v886
  %v891 = vsel %vm883, %v879, %v887
  %v892 = vsel %vm884, %v880, %v888
  %v893 = vsel %vm885, %v881, %v889
  %v894 = vpack.c.bf16 %v891, %v890
  %v895 = vpack.c.bf16 %v893, %v892
  %v898 = vunpack.c.l.b16 %v894
  %v899 = vunpack.c.h.b16 %v894
  %v900 = vunpack.c.l.b16 %v895
  %v901 = vunpack.c.h.b16 %v895
  %v902 = vpack.c.b16 %v898, %v898
  %v903 = vpack.c.b16 %v899, %v899
  %v904 = vpack.c.b16 %v900, %v900
  %v905 = vpack.c.b16 %v901, %v901
  %910 = vst [vmem:[%s5] sm:$0xf] %v902
  %911 = vst [vmem:[%s5 + $0x4] sm:$0xf] %v903
  %912 = vst [vmem:[%s5 + $0x8] sm:$0xf] %v904
  %913 = vst [vmem:[%s5 + $0xc] sm:$0xf] %v905
  // Predicated region
  $region22: #{svs_decoder_forward.18} parent=0 // pred_check
    _
  $region23: #{svs_decoder_forward.18} parent=0 // pred_check_branch
    %915 = sbr.rel (0) target = $region25
  $region24: #{svs_decoder_forward.18} parent=0 // pred_region
    _
  $region25: #{svs_decoder_forward.18} parent=0 // pred_fallthru
    _
  // Predicated region
  $region26: #{svs_decoder_forward.18} parent=0 // pred_check
    _
  $region27: #{svs_decoder_forward.18} parent=0 // pred_check_branch
    %917 = sbr.rel (0) target = $region29
  $region28: #{svs_decoder_forward.18} parent=0 // pred_region
    _
  $region29: #{svs_decoder_forward.18} parent=0 // pred_fallthru
    _

// kernel: svs_decoder_forward.19
$region0: #{svs_decoder_forward.19}
  #allocation0 [shape = 'u32[]', space=smem, size = 0x4, offset = 0x4, fixed_abs, tag = 'smem constant byte address 0x4 - core index']
  #allocation1 [shape = 'u32[144,128]{1,0:T(1,128)}', space=vmem, size = 0x12000, scoped, tag = 'internal scratch']
  %s0 = inlined_call_operand.vmem [shape: bf16[32,864], index: 0, kind: input, shape index: {}]
  %s1 = inlined_call_operand.vmem [shape: bf16[864,128], index: 1, kind: input, shape index: {}]
  %s2 = inlined_call_operand.vmem [shape: f32[32,1], index: 2, kind: input, shape index: {}]
  %s3 = inlined_call_operand.vmem [shape: f32[32,128], index: 3, kind: output, shape index: {0}]
  %s4 = inlined_call_operand.vmem [shape: f32[32,1], index: 4, kind: output, shape index: {1}]
  %s5 = inlined_call_operand.vmem [shape: f32[32,1], index: 5, kind: output, shape index: {2}]
  %s6 = inlined_call_operand.vmem [shape: f32[2,32,1], index: 6, kind: output, shape index: {3}]
  %7 = xla_tuple %s3, %s4, %s5, %s6
  %s8 = sld [smem:[#allocation0]]
  $region46: #{svs_decoder_forward.19} parent=0
    _
  %s10 = ssub.s32 1, %s8
  %s11 = scalar_select 0, %s10, %s8
  // Predicated region
  $region2: #{svs_decoder_forward.19} parent=0 // pred_check
    _
  $region3: #{svs_decoder_forward.19} parent=0 // pred_check_branch
    %13 = sbr.rel (0) target = $region5
  $region4: #{svs_decoder_forward.19} parent=0 // pred_region
    _
  $region5: #{svs_decoder_forward.19} parent=0 // pred_fallthru
    _
  // Predicated region
  $region6: #{svs_decoder_forward.19} parent=0 // pred_check
    _
  $region7: #{svs_decoder_forward.19} parent=0 // pred_check_branch
    %15 = sbr.rel (0) target = $region9
  $region8: #{svs_decoder_forward.19} parent=0 // pred_region
    _
  $region9: #{svs_decoder_forward.19} parent=0 // pred_fallthru
    _
  // Predicated region
  $region10: #{svs_decoder_forward.19} parent=0 // pred_check
    _
  $region11: #{svs_decoder_forward.19} parent=0 // pred_check_branch
    %17 = sbr.rel (0) target = $region13
  $region12: #{svs_decoder_forward.19} parent=0 // pred_region
    _
  $region13: #{svs_decoder_forward.19} parent=0 // pred_fallthru
    _
  %v19 = vld [vmem:[%s0] sm:$0xff]
  %v20 = vld [vmem:[%s0 + $0x8] sm:$0xff]
  %v21 = vld [vmem:[%s0 + $0x10] sm:$0xff]
  %v22 = vld [vmem:[%s0 + $0x18] sm:$0xf]
  %v23 = vld [vmem:[%s0 + $0x1c] sm:$0xff]
  %v24 = vld [vmem:[%s0 + $0x24] sm:$0xff]
  %v25 = vld [vmem:[%s0 + $0x2c] sm:$0xff]
  %v26 = vld [vmem:[%s0 + $0x34] sm:$0xf]
  %v27 = vld [vmem:[%s0 + $0x38] sm:$0xff]
  %v28 = vld [vmem:[%s0 + $0x40] sm:$0xff]
  %v29 = vld [vmem:[%s0 + $0x48] sm:$0xff]
  %v30 = vld [vmem:[%s0 + $0x50] sm:$0xf]
  %v31 = vld [vmem:[%s0 + $0x54] sm:$0xff]
  %v32 = vld [vmem:[%s0 + $0x5c] sm:$0xff]
  %v33 = vld [vmem:[%s0 + $0x64] sm:$0xff]
  %v34 = vld [vmem:[%s0 + $0x6c] sm:$0xf]
  %v35 = vld [vmem:[%s1] sm:$0xf]
  %v36 = vld [vmem:[%s1 + $0x4] sm:$0xf]
  %v37 = vld [vmem:[%s1 + $0x8] sm:$0xf]
  %v38 = vld [vmem:[%s1 + $0xc] sm:$0xf]
  %v39 = vld [vmem:[%s1 + $0x10] sm:$0xf]
  %v40 = vld [vmem:[%s1 + $0x14] sm:$0xf]
  %v41 = vld [vmem:[%s1 + $0x18] sm:$0xf]
  %v42 = vld [vmem:[%s1 + $0x1c] sm:$0xf]
  %v43 = vld [vmem:[%s1 + $0x20] sm:$0xf]
  %v44 = vld [vmem:[%s1 + $0x24] sm:$0xf]
  %v45 = vld [vmem:[%s1 + $0x28] sm:$0xf]
  %v46 = vld [vmem:[%s1 + $0x2c] sm:$0xf]
  %v47 = vld [vmem:[%s1 + $0x30] sm:$0xf]
  %v48 = vld [vmem:[%s1 + $0x34] sm:$0xf]
  %v49 = vld [vmem:[%s1 + $0x38] sm:$0xf]
  %v50 = vld [vmem:[%s1 + $0x3c] sm:$0xf]
  %v51 = vld [vmem:[%s1 + $0x40] sm:$0xf]
  %v52 = vld [vmem:[%s1 + $0x44] sm:$0xf]
  %v53 = vld [vmem:[%s1 + $0x48] sm:$0xf]
  %v54 = vld [vmem:[%s1 + $0x4c] sm:$0xf]
  %v55 = vld [vmem:[%s1 + $0x50] sm:$0xf]
  %v56 = vld [vmem:[%s1 + $0x54] sm:$0xf]
  %v57 = vld [vmem:[%s1 + $0x58] sm:$0xf]
  %v58 = vld [vmem:[%s1 + $0x5c] sm:$0xf]
  %v59 = vld [vmem:[%s1 + $0x60] sm:$0xf]
  %v60 = vld [vmem:[%s1 + $0x64] sm:$0xf]
  %v61 = vld [vmem:[%s1 + $0x68] sm:$0xf]
  %v62 = vld [vmem:[%s1 + $0x6c] sm:$0xf]
  %v63 = vld [vmem:[%s1 + $0x70] sm:$0xf]
  %v64 = vld [vmem:[%s1 + $0x74] sm:$0xf]
  %v65 = vld [vmem:[%s1 + $0x78] sm:$0xf]
  %v66 = vld [vmem:[%s1 + $0x7c] sm:$0xf]
  %v67 = vld [vmem:[%s1 + $0x80] sm:$0xf]
  %v68 = vld [vmem:[%s1 + $0x84] sm:$0xf]
  %v69 = vld [vmem:[%s1 + $0x88] sm:$0xf]
  %v70 = vld [vmem:[%s1 + $0x8c] sm:$0xf]
  %v71 = vld [vmem:[%s1 + $0x90] sm:$0xf]
  %v72 = vld [vmem:[%s1 + $0x94] sm:$0xf]
  %v73 = vld [vmem:[%s1 + $0x98] sm:$0xf]
  %v74 = vld [vmem:[%s1 + $0x9c] sm:$0xf]
  %v75 = vld [vmem:[%s1 + $0xa0] sm:$0xf]
  %v76 = vld [vmem:[%s1 + $0xa4] sm:$0xf]
  %v77 = vld [vmem:[%s1 + $0xa8] sm:$0xf]
  %v78 = vld [vmem:[%s1 + $0xac] sm:$0xf]
  %v79 = vld [vmem:[%s1 + $0xb0] sm:$0xf]
  %v80 = vld [vmem:[%s1 + $0xb4] sm:$0xf]
  %v81 = vld [vmem:[%s1 + $0xb8] sm:$0xf]
  %v82 = vld [vmem:[%s1 + $0xbc] sm:$0xf]
  %v83 = vld [vmem:[%s1 + $0xc0] sm:$0xf]
  %v84 = vld [vmem:[%s1 + $0xc4] sm:$0xf]
  %v85 = vld [vmem:[%s1 + $0xc8] sm:$0xf]
  %v86 = vld [vmem:[%s1 + $0xcc] sm:$0xf]
  %v87 = vld [vmem:[%s1 + $0xd0] sm:$0xf]
  %v88 = vld [vmem:[%s1 + $0xd4] sm:$0xf]
  %v89 = vld [vmem:[%s1 + $0xd8] sm:$0xf]
  %v90 = vld [vmem:[%s1 + $0xdc] sm:$0xf]
  %v91 = vld [vmem:[%s1 + $0xe0] sm:$0xf]
  %v92 = vld [vmem:[%s1 + $0xe4] sm:$0xf]
  %v93 = vld [vmem:[%s1 + $0xe8] sm:$0xf]
  %v94 = vld [vmem:[%s1 + $0xec] sm:$0xf]
  %v95 = vld [vmem:[%s1 + $0xf0] sm:$0xf]
  %v96 = vld [vmem:[%s1 + $0xf4] sm:$0xf]
  %v97 = vld [vmem:[%s1 + $0xf8] sm:$0xf]
  %v98 = vld [vmem:[%s1 + $0xfc] sm:$0xf]
  %v99 = vld [vmem:[%s1 + $0x100] sm:$0xf]
  %v100 = vld [vmem:[%s1 + $0x104] sm:$0xf]
  %v101 = vld [vmem:[%s1 + $0x108] sm:$0xf]
  %v102 = vld [vmem:[%s1 + $0x10c] sm:$0xf]
  %v103 = vld [vmem:[%s1 + $0x110] sm:$0xf]
  %v104 = vld [vmem:[%s1 + $0x114] sm:$0xf]
  %v105 = vld [vmem:[%s1 + $0x118] sm:$0xf]
  %v106 = vld [vmem:[%s1 + $0x11c] sm:$0xf]
  %v107 = vld [vmem:[%s1 + $0x120] sm:$0xf]
  %v108 = vld [vmem:[%s1 + $0x124] sm:$0xf]
  %v109 = vld [vmem:[%s1 + $0x128] sm:$0xf]
  %v110 = vld [vmem:[%s1 + $0x12c] sm:$0xf]
  %v111 = vld [vmem:[%s1 + $0x130] sm:$0xf]
  %v112 = vld [vmem:[%s1 + $0x134] sm:$0xf]
  %v113 = vld [vmem:[%s1 + $0x138] sm:$0xf]
  %v114 = vld [vmem:[%s1 + $0x13c] sm:$0xf]
  %v115 = vld [vmem:[%s1 + $0x140] sm:$0xf]
  %v116 = vld [vmem:[%s1 + $0x144] sm:$0xf]
  %v117 = vld [vmem:[%s1 + $0x148] sm:$0xf]
  %v118 = vld [vmem:[%s1 + $0x14c] sm:$0xf]
  %v119 = vld [vmem:[%s1 + $0x150] sm:$0xf]
  %v120 = vld [vmem:[%s1 + $0x154] sm:$0xf]
  %v121 = vld [vmem:[%s1 + $0x158] sm:$0xf]
  %v122 = vld [vmem:[%s1 + $0x15c] sm:$0xf]
  %v123 = vld [vmem:[%s1 + $0x160] sm:$0xf]
  %v124 = vld [vmem:[%s1 + $0x164] sm:$0xf]
  %v125 = vld [vmem:[%s1 + $0x168] sm:$0xf]
  %v126 = vld [vmem:[%s1 + $0x16c] sm:$0xf]
  %v127 = vld [vmem:[%s1 + $0x170] sm:$0xf]
  %v128 = vld [vmem:[%s1 + $0x174] sm:$0xf]
  %v129 = vld [vmem:[%s1 + $0x178] sm:$0xf]
  %v130 = vld [vmem:[%s1 + $0x17c] sm:$0xf]
  %v131 = vld [vmem:[%s1 + $0x180] sm:$0xf]
  %v132 = vld [vmem:[%s1 + $0x184] sm:$0xf]
  %v133 = vld [vmem:[%s1 + $0x188] sm:$0xf]
  %v134 = vld [vmem:[%s1 + $0x18c] sm:$0xf]
  %v135 = vld [vmem:[%s1 + $0x190] sm:$0xf]
  %v136 = vld [vmem:[%s1 + $0x194] sm:$0xf]
  %v137 = vld [vmem:[%s1 + $0x198] sm:$0xf]
  %v138 = vld [vmem:[%s1 + $0x19c] sm:$0xf]
  %v139 = vld [vmem:[%s1 + $0x1a0] sm:$0xf]
  %v140 = vld [vmem:[%s1 + $0x1a4] sm:$0xf]
  %v141 = vld [vmem:[%s1 + $0x1a8] sm:$0xf]
  %v142 = vld [vmem:[%s1 + $0x1ac] sm:$0xf]
  %v143 = vld [vmem:[%s2] sm:$0xff]
  %v144 = vld [vmem:[%s2 + $0x8] sm:$0xff]
  %v145 = vld [vmem:[%s2 + $0x10] sm:$0xff]
  %v146 = vld [vmem:[%s2 + $0x18] sm:$0xff]
  %148 = vset.pattern.permute.xlu0 0
  %149 = vperm.xlu0 %148, %v143
  %v150 = vpop.permute.xlu0 %149
  %153 = vset.pattern.permute.xlu0 0
  %154 = vperm.xlu0 %153, %v144
  %v155 = vpop.permute.xlu0 %154
  %158 = vset.pattern.permute.xlu0 0
  %159 = vperm.xlu0 %158, %v145
  %v160 = vpop.permute.xlu0 %159
  %163 = vset.pattern.permute.xlu0 0
  %164 = vperm.xlu0 %163, %v146
  %v165 = vpop.permute.xlu0 %164
  %v183 = vunpack.c.l.b16 %v19
  %v184 = vunpack.c.h.b16 %v19
  %v185 = vunpack.c.l.b16 %v20
  %v186 = vunpack.c.h.b16 %v20
  %v187 = vunpack.c.l.b16 %v21
  %v188 = vunpack.c.h.b16 %v21
  %v189 = vunpack.c.l.b16 %v22
  %v190 = vunpack.c.l.b16 %v23
  %v191 = vunpack.c.h.b16 %v23
  %v192 = vunpack.c.l.b16 %v24
  %v193 = vunpack.c.h.b16 %v24
  %v194 = vunpack.c.l.b16 %v25
  %v195 = vunpack.c.h.b16 %v25
  %v196 = vunpack.c.l.b16 %v26
  %v197 = vunpack.c.l.b16 %v27
  %v198 = vunpack.c.h.b16 %v27
  %v199 = vunpack.c.l.b16 %v28
  %v200 = vunpack.c.h.b16 %v28
  %v201 = vunpack.c.l.b16 %v29
  %v202 = vunpack.c.h.b16 %v29
  %v203 = vunpack.c.l.b16 %v30
  %v204 = vunpack.c.l.b16 %v31
  %v205 = vunpack.c.h.b16 %v31
  %v206 = vunpack.c.l.b16 %v32
  %v207 = vunpack.c.h.b16 %v32
  %v208 = vunpack.c.l.b16 %v33
  %v209 = vunpack.c.h.b16 %v33
  %v210 = vunpack.c.l.b16 %v34
  %v211 = vpack.c.b16 %v190, %v183
  %v212 = vpack.c.b16 %v191, %v184
  %v213 = vpack.c.b16 %v192, %v185
  %v214 = vpack.c.b16 %v193, %v186
  %v215 = vpack.c.b16 %v194, %v187
  %v216 = vpack.c.b16 %v195, %v188
  %v217 = vpack.c.b16 %v196, %v189
  %v218 = vpack.c.b16 %v204, %v197
  %v219 = vpack.c.b16 %v205, %v198
  %v220 = vpack.c.b16 %v206, %v199
  %v221 = vpack.c.b16 %v207, %v200
  %v222 = vpack.c.b16 %v208, %v201
  %v223 = vpack.c.b16 %v209, %v202
  %v224 = vpack.c.b16 %v210, %v203
  %v345 = vunpack.c.l.b16 %v35
  %v346 = vunpack.c.l.b16 %v36
  %v347 = vunpack.c.l.b16 %v37
  %v348 = vunpack.c.l.b16 %v38
  %v349 = vunpack.c.l.b16 %v39
  %v350 = vunpack.c.l.b16 %v40
  %v351 = vunpack.c.l.b16 %v41
  %v352 = vunpack.c.l.b16 %v42
  %v353 = vunpack.c.l.b16 %v43
  %v354 = vunpack.c.l.b16 %v44
  %v355 = vunpack.c.l.b16 %v45
  %v356 = vunpack.c.l.b16 %v46
  %v357 = vunpack.c.l.b16 %v47
  %v358 = vunpack.c.l.b16 %v48
  %v359 = vunpack.c.l.b16 %v49
  %v360 = vunpack.c.l.b16 %v50
  %v361 = vunpack.c.l.b16 %v51
  %v362 = vunpack.c.l.b16 %v52
  %v363 = vunpack.c.l.b16 %v53
  %v364 = vunpack.c.l.b16 %v54
  %v365 = vunpack.c.l.b16 %v55
  %v366 = vunpack.c.l.b16 %v56
  %v367 = vunpack.c.l.b16 %v57
  %v368 = vunpack.c.l.b16 %v58
  %v369 = vunpack.c.l.b16 %v59
  %v370 = vunpack.c.l.b16 %v60
  %v371 = vunpack.c.l.b16 %v61
  %v372 = vunpack.c.l.b16 %v62
  %v373 = vunpack.c.l.b16 %v63
  %v374 = vunpack.c.l.b16 %v64
  %v375 = vunpack.c.l.b16 %v65
  %v376 = vunpack.c.l.b16 %v66
  %v377 = vunpack.c.l.b16 %v67
  %v378 = vunpack.c.l.b16 %v68
  %v379 = vunpack.c.l.b16 %v69
  %v380 = vunpack.c.l.b16 %v70
  %v381 = vunpack.c.l.b16 %v71
  %v382 = vunpack.c.l.b16 %v72
  %v383 = vunpack.c.l.b16 %v73
  %v384 = vunpack.c.l.b16 %v74
  %v385 = vunpack.c.l.b16 %v75
  %v386 = vunpack.c.l.b16 %v76
  %v387 = vunpack.c.l.b16 %v77
  %v388 = vunpack.c.l.b16 %v78
  %v389 = vunpack.c.l.b16 %v79
  %v390 = vunpack.c.l.b16 %v80
  %v391 = vunpack.c.l.b16 %v81
  %v392 = vunpack.c.l.b16 %v82
  %v393 = vunpack.c.l.b16 %v83
  %v394 = vunpack.c.l.b16 %v84
  %v395 = vunpack.c.l.b16 %v85
  %v396 = vunpack.c.l.b16 %v86
  %v397 = vunpack.c.l.b16 %v87
  %v398 = vunpack.c.l.b16 %v88
  %v399 = vunpack.c.l.b16 %v89
  %v400 = vunpack.c.l.b16 %v90
  %v401 = vunpack.c.l.b16 %v91
  %v402 = vunpack.c.l.b16 %v92
  %v403 = vunpack.c.l.b16 %v93
  %v404 = vunpack.c.l.b16 %v94
  %v405 = vunpack.c.l.b16 %v95
  %v406 = vunpack.c.l.b16 %v96
  %v407 = vunpack.c.l.b16 %v97
  %v408 = vunpack.c.l.b16 %v98
  %v409 = vunpack.c.l.b16 %v99
  %v410 = vunpack.c.l.b16 %v100
  %v411 = vunpack.c.l.b16 %v101
  %v412 = vunpack.c.l.b16 %v102
  %v413 = vunpack.c.l.b16 %v103
  %v414 = vunpack.c.l.b16 %v104
  %v415 = vunpack.c.l.b16 %v105
  %v416 = vunpack.c.l.b16 %v106
  %v417 = vunpack.c.l.b16 %v107
  %v418 = vunpack.c.l.b16 %v108
  %v419 = vunpack.c.l.b16 %v109
  %v420 = vunpack.c.l.b16 %v110
  %v421 = vunpack.c.l.b16 %v111
  %v422 = vunpack.c.l.b16 %v112
  %v423 = vunpack.c.l.b16 %v113
  %v424 = vunpack.c.l.b16 %v114
  %v425 = vunpack.c.l.b16 %v115
  %v426 = vunpack.c.l.b16 %v116
  %v427 = vunpack.c.l.b16 %v117
  %v428 = vunpack.c.l.b16 %v118
  %v429 = vunpack.c.l.b16 %v119
  %v430 = vunpack.c.l.b16 %v120
  %v431 = vunpack.c.l.b16 %v121
  %v432 = vunpack.c.l.b16 %v122
  %v433 = vunpack.c.l.b16 %v123
  %v434 = vunpack.c.l.b16 %v124
  %v435 = vunpack.c.l.b16 %v125
  %v436 = vunpack.c.l.b16 %v126
  %v437 = vunpack.c.l.b16 %v127
  %v438 = vunpack.c.l.b16 %v128
  %v439 = vunpack.c.l.b16 %v129
  %v440 = vunpack.c.l.b16 %v130
  %v441 = vunpack.c.l.b16 %v131
  %v442 = vunpack.c.l.b16 %v132
  %v443 = vunpack.c.l.b16 %v133
  %v444 = vunpack.c.l.b16 %v134
  %v445 = vunpack.c.l.b16 %v135
  %v446 = vunpack.c.l.b16 %v136
  %v447 = vunpack.c.l.b16 %v137
  %v448 = vunpack.c.l.b16 %v138
  %v449 = vunpack.c.l.b16 %v139
  %v450 = vunpack.c.l.b16 %v140
  %v451 = vunpack.c.l.b16 %v141
  %v452 = vunpack.c.l.b16 %v142
  %v453 = vpack.c.b16 %v346, %v345
  %v454 = vpack.c.b16 %v348, %v347
  %v455 = vpack.c.b16 %v350, %v349
  %v456 = vpack.c.b16 %v352, %v351
  %v457 = vpack.c.b16 %v354, %v353
  %v458 = vpack.c.b16 %v356, %v355
  %v459 = vpack.c.b16 %v358, %v357
  %v460 = vpack.c.b16 %v360, %v359
  %v461 = vpack.c.b16 %v362, %v361
  %v462 = vpack.c.b16 %v364, %v363
  %v463 = vpack.c.b16 %v366, %v365
  %v464 = vpack.c.b16 %v368, %v367
  %v465 = vpack.c.b16 %v370, %v369
  %v466 = vpack.c.b16 %v372, %v371
  %v467 = vpack.c.b16 %v374, %v373
  %v468 = vpack.c.b16 %v376, %v375
  %v469 = vpack.c.b16 %v378, %v377
  %v470 = vpack.c.b16 %v380, %v379
  %v471 = vpack.c.b16 %v382, %v381
  %v472 = vpack.c.b16 %v384, %v383
  %v473 = vpack.c.b16 %v386, %v385
  %v474 = vpack.c.b16 %v388, %v387
  %v475 = vpack.c.b16 %v390, %v389
  %v476 = vpack.c.b16 %v392, %v391
  %v477 = vpack.c.b16 %v394, %v393
  %v478 = vpack.c.b16 %v396, %v395
  %v479 = vpack.c.b16 %v398, %v397
  %v480 = vpack.c.b16 %v400, %v399
  %v481 = vpack.c.b16 %v402, %v401
  %v482 = vpack.c.b16 %v404, %v403
  %v483 = vpack.c.b16 %v406, %v405
  %v484 = vpack.c.b16 %v408, %v407
  %v485 = vpack.c.b16 %v410, %v409
  %v486 = vpack.c.b16 %v412, %v411
  %v487 = vpack.c.b16 %v414, %v413
  %v488 = vpack.c.b16 %v416, %v415
  %v489 = vpack.c.b16 %v418, %v417
  %v490 = vpack.c.b16 %v420, %v419
  %v491 = vpack.c.b16 %v422, %v421
  %v492 = vpack.c.b16 %v424, %v423
  %v493 = vpack.c.b16 %v426, %v425
  %v494 = vpack.c.b16 %v428, %v427
  %v495 = vpack.c.b16 %v430, %v429
  %v496 = vpack.c.b16 %v432, %v431
  %v497 = vpack.c.b16 %v434, %v433
  %v498 = vpack.c.b16 %v436, %v435
  %v499 = vpack.c.b16 %v438, %v437
  %v500 = vpack.c.b16 %v440, %v439
  %v501 = vpack.c.b16 %v442, %v441
  %v502 = vpack.c.b16 %v444, %v443
  %v503 = vpack.c.b16 %v446, %v445
  %v504 = vpack.c.b16 %v448, %v447
  %v505 = vpack.c.b16 %v450, %v449
  %v506 = vpack.c.b16 %v452, %v451
  %vm561 = vcmask 785408
  %v563 = vsel %vm561, %v217, 0
  %v566 = vsel %vm561, %v224, 0
  %568 = vmatprep.subr.bf16.mxu0 0
  %569 = vmatpush1.bf16.msra.mxu0 %v460
  %570 = vmatprep.subr.bf16.mxu0 0
  %571 = vmatpush1.bf16.msra.mxu0 %v459
  %572 = vmatprep.subr.bf16.mxu0 0
  %573 = vmatpush1.bf16.msra.mxu0 %v458
  %574 = vmatprep.subr.bf16.mxu0 0
  %575 = vmatpush1.bf16.msra.mxu0 %v457
  %576 = vmatprep.subr.bf16.mxu0 0
  %577 = vmatpush1.bf16.msra.mxu0 %v456
  %578 = vmatprep.subr.bf16.mxu0 0
  %579 = vmatpush1.bf16.msra.mxu0 %v455
  %580 = vmatprep.subr.bf16.mxu0 0
  %581 = vmatpush1.bf16.msra.mxu0 %v454
  %582 = vmatprep.subr.bf16.mxu0 0
  %583 = vmatpush1.bf16.msra.mxu0 %v453
  %584 = vmatprep.subr.bf16.mxu0 0
  %585 = vmatpush2.bf16.msra.mxu0 %v468
  %586 = vmatprep.subr.bf16.mxu0 0
  %587 = vmatpush2.bf16.msra.mxu0 %v467
  %588 = vmatprep.subr.bf16.mxu0 0
  %589 = vmatpush2.bf16.msra.mxu0 %v466
  %590 = vmatprep.subr.bf16.mxu0 0
  %591 = vmatpush2.bf16.msra.mxu0 %v465
  %592 = vmatprep.subr.bf16.mxu0 0
  %593 = vmatpush2.bf16.msra.mxu0 %v464
  %594 = vmatprep.subr.bf16.mxu0 0
  %595 = vmatpush2.bf16.msra.mxu0 %v463
  %596 = vmatprep.subr.bf16.mxu0 0
  %597 = vmatpush2.bf16.msra.mxu0 %v462
  %598 = vmatprep.subr.bf16.mxu0 0
  %599 = vmatpush2.bf16.msra.mxu0 %v461
  %600 = vmatprep.mubr.bf16.mxu0 %v212
  %601 = vmatmul.mubr.bf16.gmra.mxu0 %v211
  %v602 = vpop.f32.mrf.mxu0
  %v603 = vadd.f32 %v150, %v602
  %v604 = vpop.f32.mrf.mxu0
  %v605 = vpop.f32.mrf.mxu0
  %v606 = vadd.f32 %v155, %v605
  %v607 = vpop.f32.mrf.mxu0
  %608 = vmatprep.mubr.bf16.mxu0 %v219
  %609 = vmatmul.mubr.bf16.gmra.mxu0 %v218
  %v610 = vpop.f32.mrf.mxu0
  %v611 = vadd.f32 %v160, %v610
  %v612 = vpop.f32.mrf.mxu0
  %v613 = vpop.f32.mrf.mxu0
  %v614 = vadd.f32 %v165, %v613
  %v615 = vpop.f32.mrf.mxu0
  %616 = vdwg.mxu0
  %617 = vmatprep.subr.bf16.mxu0 0
  %618 = vmatpush1.bf16.msra.mxu0 %v476
  %619 = vmatprep.subr.bf16.mxu0 0
  %620 = vmatpush1.bf16.msra.mxu0 %v475
  %621 = vmatprep.subr.bf16.mxu0 0
  %622 = vmatpush1.bf16.msra.mxu0 %v474
  %623 = vmatprep.subr.bf16.mxu0 0
  %624 = vmatpush1.bf16.msra.mxu0 %v473
  %625 = vmatprep.subr.bf16.mxu0 0
  %626 = vmatpush1.bf16.msra.mxu0 %v472
  %627 = vmatprep.subr.bf16.mxu0 0
  %628 = vmatpush1.bf16.msra.mxu0 %v471
  %629 = vmatprep.subr.bf16.mxu0 0
  %630 = vmatpush1.bf16.msra.mxu0 %v470
  %631 = vmatprep.subr.bf16.mxu0 0
  %632 = vmatpush1.bf16.msra.mxu0 %v469
  %633 = vmatprep.subr.bf16.mxu0 0
  %634 = vmatpush2.bf16.msra.mxu0 %v484
  %635 = vmatprep.subr.bf16.mxu0 0
  %636 = vmatpush2.bf16.msra.mxu0 %v483
  %637 = vmatprep.subr.bf16.mxu0 0
  %638 = vmatpush2.bf16.msra.mxu0 %v482
  %639 = vmatprep.subr.bf16.mxu0 0
  %640 = vmatpush2.bf16.msra.mxu0 %v481
  %641 = vmatprep.subr.bf16.mxu0 0
  %642 = vmatpush2.bf16.msra.mxu0 %v480
  %643 = vmatprep.subr.bf16.mxu0 0
  %644 = vmatpush2.bf16.msra.mxu0 %v479
  %645 = vmatprep.subr.bf16.mxu0 0
  %646 = vmatpush2.bf16.msra.mxu0 %v478
  %647 = vmatprep.subr.bf16.mxu0 0
  %648 = vmatpush2.bf16.msra.mxu0 %v477
  %649 = vmatprep.mubr.bf16.mxu0 %v214
  %650 = vmatmul.mubr.bf16.gmra.mxu0 %v213
  %v651 = vpop.f32.mrf.mxu0
  %v652 = vadd.f32 %v603, %v651
  %v653 = vpop.f32.mrf.mxu0
  %v654 = vpop.f32.mrf.mxu0
  %v655 = vadd.f32 %v606, %v654
  %v656 = vpop.f32.mrf.mxu0
  %657 = vmatprep.mubr.bf16.mxu0 %v221
  %658 = vmatmul.mubr.bf16.gmra.mxu0 %v220
  %v659 = vpop.f32.mrf.mxu0
  %v660 = vadd.f32 %v611, %v659
  %v661 = vpop.f32.mrf.mxu0
  %v662 = vpop.f32.mrf.mxu0
  %v663 = vadd.f32 %v614, %v662
  %v664 = vpop.f32.mrf.mxu0
  %665 = vdwg.mxu0
  %666 = vmatprep.subr.bf16.mxu0 0
  %667 = vmatpush1.bf16.msra.mxu0 %v492
  %668 = vmatprep.subr.bf16.mxu0 0
  %669 = vmatpush1.bf16.msra.mxu0 %v491
  %670 = vmatprep.subr.bf16.mxu0 0
  %671 = vmatpush1.bf16.msra.mxu0 %v490
  %672 = vmatprep.subr.bf16.mxu0 0
  %673 = vmatpush1.bf16.msra.mxu0 %v489
  %674 = vmatprep.subr.bf16.mxu0 0
  %675 = vmatpush1.bf16.msra.mxu0 %v488
  %676 = vmatprep.subr.bf16.mxu0 0
  %677 = vmatpush1.bf16.msra.mxu0 %v487
  %678 = vmatprep.subr.bf16.mxu0 0
  %679 = vmatpush1.bf16.msra.mxu0 %v486
  %680 = vmatprep.subr.bf16.mxu0 0
  %681 = vmatpush1.bf16.msra.mxu0 %v485
  %682 = vmatprep.subr.bf16.mxu0 0
  %683 = vmatpush2.bf16.msra.mxu0 %v500
  %684 = vmatprep.subr.bf16.mxu0 0
  %685 = vmatpush2.bf16.msra.mxu0 %v499
  %686 = vmatprep.subr.bf16.mxu0 0
  %687 = vmatpush2.bf16.msra.mxu0 %v498
  %688 = vmatprep.subr.bf16.mxu0 0
  %689 = vmatpush2.bf16.msra.mxu0 %v497
  %690 = vmatprep.subr.bf16.mxu0 0
  %691 = vmatpush2.bf16.msra.mxu0 %v496
  %692 = vmatprep.subr.bf16.mxu0 0
  %693 = vmatpush2.bf16.msra.mxu0 %v495
  %694 = vmatprep.subr.bf16.mxu0 0
  %695 = vmatpush2.bf16.msra.mxu0 %v494
  %696 = vmatprep.subr.bf16.mxu0 0
  %697 = vmatpush2.bf16.msra.mxu0 %v493
  %698 = vmatprep.mubr.bf16.mxu0 %v216
  %699 = vmatmul.mubr.bf16.gmra.mxu0 %v215
  %v700 = vpop.f32.mrf.mxu0
  %v701 = vadd.f32 %v652, %v700
  %v702 = vpop.f32.mrf.mxu0
  %v703 = vpop.f32.mrf.mxu0
  %v704 = vadd.f32 %v655, %v703
  %v705 = vpop.f32.mrf.mxu0
  %706 = vmatprep.mubr.bf16.mxu0 %v223
  %707 = vmatmul.mubr.bf16.gmra.mxu0 %v222
  %v708 = vpop.f32.mrf.mxu0
  %v709 = vadd.f32 %v660, %v708
  %v710 = vpop.f32.mrf.mxu0
  %v711 = vpop.f32.mrf.mxu0
  %v712 = vadd.f32 %v663, %v711
  %v713 = vpop.f32.mrf.mxu0
  %714 = vdwg.mxu0
  %715 = vmatprep.subr.bf16.mxu0 0
  %716 = vmatpush1.bf16.msra.mxu0 0
  %717 = vmatprep.subr.bf16.mxu0 0
  %718 = vmatpush1.bf16.msra.mxu0 0
  %719 = vmatprep.subr.bf16.mxu0 0
  %720 = vmatpush1.bf16.msra.mxu0 %v506
  %721 = vmatprep.subr.bf16.mxu0 0
  %722 = vmatpush1.bf16.msra.mxu0 %v505
  %723 = vmatprep.subr.bf16.mxu0 0
  %724 = vmatpush1.bf16.msra.mxu0 %v504
  %725 = vmatprep.subr.bf16.mxu0 0
  %726 = vmatpush1.bf16.msra.mxu0 %v503
  %727 = vmatprep.subr.bf16.mxu0 0
  %728 = vmatpush1.bf16.msra.mxu0 %v502
  %729 = vmatprep.subr.bf16.mxu0 0
  %730 = vmatpush1.bf16.msra.mxu0 %v501
  %731 = vmatprep.subr.bf16.mxu0 0
  %732 = vmatpush2.bf16.msra.mxu0 0
  %733 = vmatprep.subr.bf16.mxu0 0
  %734 = vmatpush2.bf16.msra.mxu0 0
  %735 = vmatprep.subr.bf16.mxu0 0
  %736 = vmatpush2.bf16.msra.mxu0 0
  %737 = vmatprep.subr.bf16.mxu0 0
  %738 = vmatpush2.bf16.msra.mxu0 0
  %739 = vmatprep.subr.bf16.mxu0 0
  %740 = vmatpush2.bf16.msra.mxu0 0
  %741 = vmatprep.subr.bf16.mxu0 0
  %742 = vmatpush2.bf16.msra.mxu0 0
  %743 = vmatprep.subr.bf16.mxu0 0
  %744 = vmatpush2.bf16.msra.mxu0 0
  %745 = vmatprep.subr.bf16.mxu0 0
  %746 = vmatpush2.bf16.msra.mxu0 0
  %747 = vmatprep.mubr.bf16.mxu0 0
  %748 = vmatmul.mubr.bf16.gmra.mxu0 %v563
  %v749 = vpop.f32.mrf.mxu0
  %v750 = vadd.f32 %v701, %v749
  %v751 = vpop.f32.mrf.mxu0
  %v752 = vpop.f32.mrf.mxu0
  %v753 = vadd.f32 %v704, %v752
  %v754 = vpop.f32.mrf.mxu0
  %755 = vmatprep.mubr.bf16.mxu0 0
  %756 = vmatmul.mubr.bf16.gmra.mxu0 %v566
  %v757 = vpop.f32.mrf.mxu0
  %v758 = vadd.f32 %v709, %v757
  %v759 = vpop.f32.mrf.mxu0
  %v760 = vpop.f32.mrf.mxu0
  %v761 = vadd.f32 %v712, %v760
  %v762 = vpop.f32.mrf.mxu0
  %763 = vdwg.mxu0
  %764 = vst [vmem:[%s3] sm:$0xff] %v750
  %765 = vst [vmem:[%s3 + $0x8] sm:$0xff] %v753
  %766 = vst [vmem:[%s3 + $0x10] sm:$0xff] %v758
  %767 = vst [vmem:[%s3 + $0x18] sm:$0xff] %v761
  %768 = vadd.xlane.f32.xlu0 %v750
  %v769 = vpop.xlane.xlu0 %768
  %770 = vadd.xlane.f32.xlu0 %v753
  %v771 = vpop.xlane.xlu0 %770
  %772 = vadd.xlane.f32.xlu0 %v758
  %v773 = vpop.xlane.xlu0 %772
  %774 = vadd.xlane.f32.xlu0 %v761
  %v775 = vpop.xlane.xlu0 %774
  %vm776 = vcmask 7168
  %777 = vst.msk [vmem:[%s4] sm:$0xff] %vm776, %v769
  %778 = vst.msk [vmem:[%s4 + $0x8] sm:$0xff] %vm776, %v771
  %779 = vst.msk [vmem:[%s4 + $0x10] sm:$0xff] %vm776, %v773
  %780 = vst.msk [vmem:[%s4 + $0x18] sm:$0xff] %vm776, %v775
  %v781 = vmul.f32 %v750, %v750
  %v782 = vmul.f32 %v753, %v753
  %v783 = vmul.f32 %v758, %v758
  %v784 = vmul.f32 %v761, %v761
  %785 = vadd.xlane.f32.xlu0 %v781
  %v786 = vpop.xlane.xlu0 %785
  %787 = vadd.xlane.f32.xlu0 %v782
  %v788 = vpop.xlane.xlu0 %787
  %789 = vadd.xlane.f32.xlu0 %v783
  %v790 = vpop.xlane.xlu0 %789
  %791 = vadd.xlane.f32.xlu0 %v784
  %v792 = vpop.xlane.xlu0 %791
  %793 = vst.msk [vmem:[%s5] sm:$0xff] %vm776, %v786
  %794 = vst.msk [vmem:[%s5 + $0x8] sm:$0xff] %vm776, %v788
  %795 = vst.msk [vmem:[%s5 + $0x10] sm:$0xff] %vm776, %v790
  %796 = vst.msk [vmem:[%s5 + $0x18] sm:$0xff] %vm776, %v792
  %v797 = vlaneseq
  %v798 = vand.u32 %v797, 127
  %vm799 = vcmp.ge.s32.totalorder %v798, 0
  %vm800 = vcmp.lt.s32.totalorder %v798, 64
  %vm801 = vmand %vm799, %vm800
  %v802 = vsel %vm801, %v750, 0.0
  %v803 = vsel %vm801, %v753, 0.0
  %v804 = vsel %vm801, %v758, 0.0
  %v805 = vsel %vm801, %v761, 0.0
  %806 = vadd.xlane.f32.xlu0 %v802
  %v807 = vpop.xlane.xlu0 %806
  %808 = vadd.xlane.f32.xlu0 %v803
  %v809 = vpop.xlane.xlu0 %808
  %810 = vadd.xlane.f32.xlu0 %v804
  %v811 = vpop.xlane.xlu0 %810
  %812 = vadd.xlane.f32.xlu0 %v805
  %v813 = vpop.xlane.xlu0 %812
  %v814 = vmul.f32 %v807, 0.015625
  %v815 = vmul.f32 %v809, 0.015625
  %v816 = vmul.f32 %v811, 0.015625
  %v817 = vmul.f32 %v813, 0.015625
  %818 = vst.msk [vmem:[%s6] sm:$0xff] %vm776, %v814
  %819 = vst.msk [vmem:[%s6 + $0x8] sm:$0xff] %vm776, %v815
  %820 = vst.msk [vmem:[%s6 + $0x10] sm:$0xff] %vm776, %v816
  %821 = vst.msk [vmem:[%s6 + $0x18] sm:$0xff] %vm776, %v817
  %vm822 = vcmp.ge.s32.totalorder %v798, 64
  %vm823 = vcmp.lt.s32.totalorder %v798, 128
  %vm824 = vmand %vm822, %vm823
  %v825 = vsel %vm824, %v750, 0.0
  %v826 = vsel %vm824, %v753, 0.0
  %v827 = vsel %vm824, %v758, 0.0
  %v828 = vsel %vm824, %v761, 0.0
  %829 = vadd.xlane.f32.xlu0 %v825
  %v830 = vpop.xlane.xlu0 %829
  %831 = vadd.xlane.f32.xlu0 %v826
  %v832 = vpop.xlane.xlu0 %831
  %833 = vadd.xlane.f32.xlu0 %v827
  %v834 = vpop.xlane.xlu0 %833
  %835 = vadd.xlane.f32.xlu0 %v828
  %v836 = vpop.xlane.xlu0 %835
  %v837 = vmul.f32 %v830, 0.015625
  %v838 = vmul.f32 %v832, 0.015625
  %v839 = vmul.f32 %v834, 0.015625
  %v840 = vmul.f32 %v836, 0.015625
  %s841 = scalar_lea.vmem %s6, 32
  %842 = vst.msk [vmem:[%s841] sm:$0xff] %vm776, %v837
  %843 = vst.msk [vmem:[%s841 + $0x8] sm:$0xff] %vm776, %v838
  %844 = vst.msk [vmem:[%s841 + $0x10] sm:$0xff] %vm776, %v839
  %845 = vst.msk [vmem:[%s841 + $0x18] sm:$0xff] %vm776, %v840
  // Predicated region
  $region14: #{svs_decoder_forward.19} parent=0 // pred_check
    _
  $region15: #{svs_decoder_forward.19} parent=0 // pred_check_branch
    %847 = sbr.rel (0) target = $region17
  $region16: #{svs_decoder_forward.19} parent=0 // pred_region
    _
  $region17: #{svs_decoder_forward.19} parent=0 // pred_fallthru
    _
  // Predicated region
  $region18: #{svs_decoder_forward.19} parent=0 // pred_check
    _
  $region19: #{svs_decoder_forward.19} parent=0 // pred_check_branch
    %849 = sbr.rel (0) target = $region21
  $region20: #{svs_decoder_forward.19} parent=0 // pred_region
    _
  $region21: #{svs_decoder_forward.19} parent=0 // pred_fallthru
    _
  // Predicated region
  $region22: #{svs_decoder_forward.19} parent=0 // pred_check
    _
  $region23: #{svs_decoder_forward.19} parent=0 // pred_check_branch
    %851 = sbr.rel (0) target = $region25
  $region24: #{svs_decoder_forward.19} parent=0 // pred_region
    _
  $region25: #{svs_decoder_forward.19} parent=0 // pred_fallthru
    _
  // Predicated region
  $region26: #{svs_decoder_forward.19} parent=0 // pred_check
    _
  $region27: #{svs_decoder_forward.19} parent=0 // pred_check_branch
    %853 = sbr.rel (0) target = $region29
  $region28: #{svs_decoder_forward.19} parent=0 // pred_region
    _
  $region29: #{svs_decoder_forward.19} parent=0 // pred_fallthru
    _
  // Predicated region
  $region30: #{svs_decoder_forward.19} parent=0 // pred_check
    _
  $region31: #{svs_decoder_forward.19} parent=0 // pred_check_branch
    %855 = sbr.rel (0) target = $region33
  $region32: #{svs_decoder_forward.19} parent=0 // pred_region
    _
  $region33: #{svs_decoder_forward.19} parent=0 // pred_fallthru
    _
  // Predicated region
  $region34: #{svs_decoder_forward.19} parent=0 // pred_check
    _
  $region35: #{svs_decoder_forward.19} parent=0 // pred_check_branch
    %857 = sbr.rel (0) target = $region37
  $region36: #{svs_decoder_forward.19} parent=0 // pred_region
    _
  $region37: #{svs_decoder_forward.19} parent=0 // pred_fallthru
    _
  // Predicated region
  $region38: #{svs_decoder_forward.19} parent=0 // pred_check
    _
  $region39: #{svs_decoder_forward.19} parent=0 // pred_check_branch
    %859 = sbr.rel (0) target = $region41
  $region40: #{svs_decoder_forward.19} parent=0 // pred_region
    _
  $region41: #{svs_decoder_forward.19} parent=0 // pred_fallthru
    _
  // Predicated region
  $region42: #{svs_decoder_forward.19} parent=0 // pred_check
    _
  $region43: #{svs_decoder_forward.19} parent=0 // pred_check_branch
    %861 = sbr.rel (0) target = $region45
  $region44: #{svs_decoder_forward.19} parent=0 // pred_region
    _
  $region45: #{svs_decoder_forward.19} parent=0 // pred_fallthru
    _

// kernel: svs_decoder_forward.20
$region0: #{svs_decoder_forward.20}
  #allocation0 [shape = 'u32[]', space=smem, size = 0x4, offset = 0x4, fixed_abs, tag = 'smem constant byte address 0x4 - core index']
  #allocation1 [shape = 'u32[144,128]{1,0:T(1,128)}', space=vmem, size = 0x12000, scoped, tag = 'internal scratch']
  %s0 = inlined_call_operand.vmem [shape: f32[32,128], index: 0, kind: input, shape index: {}]
  %s1 = inlined_call_operand.vmem [shape: f32[32,1], index: 1, kind: input, shape index: {}]
  %s2 = inlined_call_operand.vmem [shape: f32[32,1], index: 2, kind: input, shape index: {}]
  %s3 = inlined_call_operand.vmem [shape: f32[2,32,1], index: 3, kind: input, shape index: {}]
  %s4 = inlined_call_operand.vmem [shape: f32[32,128], index: 4, kind: input, shape index: {}]
  %s5 = inlined_call_operand.vmem [shape: f32[32,1], index: 5, kind: input, shape index: {}]
  %s6 = inlined_call_operand.vmem [shape: f32[32,1], index: 6, kind: input, shape index: {}]
  %s7 = inlined_call_operand.vmem [shape: bf16[32,128], index: 7, kind: output, shape index: {}]
  %s8 = sld [smem:[#allocation0]]
  $region38: #{svs_decoder_forward.20} parent=0
    _
  %s10 = ssub.s32 1, %s8
  %s11 = scalar_select 0, %s10, %s8
  // Predicated region
  $region2: #{svs_decoder_forward.20} parent=0 // pred_check
    _
  $region3: #{svs_decoder_forward.20} parent=0 // pred_check_branch
    %13 = sbr.rel (0) target = $region5
  $region4: #{svs_decoder_forward.20} parent=0 // pred_region
    _
  $region5: #{svs_decoder_forward.20} parent=0 // pred_fallthru
    _
  // Predicated region
  $region6: #{svs_decoder_forward.20} parent=0 // pred_check
    _
  $region7: #{svs_decoder_forward.20} parent=0 // pred_check_branch
    %15 = sbr.rel (0) target = $region9
  $region8: #{svs_decoder_forward.20} parent=0 // pred_region
    _
  $region9: #{svs_decoder_forward.20} parent=0 // pred_fallthru
    _
  // Predicated region
  $region10: #{svs_decoder_forward.20} parent=0 // pred_check
    _
  $region11: #{svs_decoder_forward.20} parent=0 // pred_check_branch
    %17 = sbr.rel (0) target = $region13
  $region12: #{svs_decoder_forward.20} parent=0 // pred_region
    _
  $region13: #{svs_decoder_forward.20} parent=0 // pred_fallthru
    _
  // Predicated region
  $region14: #{svs_decoder_forward.20} parent=0 // pred_check
    _
  $region15: #{svs_decoder_forward.20} parent=0 // pred_check_branch
    %19 = sbr.rel (0) target = $region17
  $region16: #{svs_decoder_forward.20} parent=0 // pred_region
    _
  $region17: #{svs_decoder_forward.20} parent=0 // pred_fallthru
    _
  // Predicated region
  $region18: #{svs_decoder_forward.20} parent=0 // pred_check
    _
  $region19: #{svs_decoder_forward.20} parent=0 // pred_check_branch
    %21 = sbr.rel (0) target = $region21
  $region20: #{svs_decoder_forward.20} parent=0 // pred_region
    _
  $region21: #{svs_decoder_forward.20} parent=0 // pred_fallthru
    _
  // Predicated region
  $region22: #{svs_decoder_forward.20} parent=0 // pred_check
    _
  $region23: #{svs_decoder_forward.20} parent=0 // pred_check_branch
    %23 = sbr.rel (0) target = $region25
  $region24: #{svs_decoder_forward.20} parent=0 // pred_region
    _
  $region25: #{svs_decoder_forward.20} parent=0 // pred_fallthru
    _
  // Predicated region
  $region26: #{svs_decoder_forward.20} parent=0 // pred_check
    _
  $region27: #{svs_decoder_forward.20} parent=0 // pred_check_branch
    %25 = sbr.rel (0) target = $region29
  $region28: #{svs_decoder_forward.20} parent=0 // pred_region
    _
  $region29: #{svs_decoder_forward.20} parent=0 // pred_fallthru
    _
  %v26 = vld [vmem:[%s0] sm:$0xff]
  %v27 = vld [vmem:[%s0 + $0x8] sm:$0xff]
  %v28 = vld [vmem:[%s0 + $0x10] sm:$0xff]
  %v29 = vld [vmem:[%s0 + $0x18] sm:$0xff]
  %v30 = vlaneseq
  %v31 = vand.u32 %v30, 127
  %vm32 = vcmp.ge.s32.totalorder %v31, 0
  %vm33 = vcmp.lt.s32.totalorder %v31, 64
  %vm34 = vmand %vm32, %vm33
  %v35 = vld [vmem:[%s3] sm:$0xff]
  %v36 = vld [vmem:[%s3 + $0x8] sm:$0xff]
  %v37 = vld [vmem:[%s3 + $0x10] sm:$0xff]
  %v38 = vld [vmem:[%s3 + $0x18] sm:$0xff]
  %40 = vset.pattern.permute.xlu0 0
  %41 = vperm.xlu0 %40, %v35
  %v42 = vpop.permute.xlu0 %41
  %45 = vset.pattern.permute.xlu0 0
  %46 = vperm.xlu0 %45, %v36
  %v47 = vpop.permute.xlu0 %46
  %50 = vset.pattern.permute.xlu0 0
  %51 = vperm.xlu0 %50, %v37
  %v52 = vpop.permute.xlu0 %51
  %55 = vset.pattern.permute.xlu0 0
  %56 = vperm.xlu0 %55, %v38
  %v57 = vpop.permute.xlu0 %56
  %v59 = vsel %vm34, %v42, 0.0
  %v60 = vsel %vm34, %v47, 0.0
  %v61 = vsel %vm34, %v52, 0.0
  %v62 = vsel %vm34, %v57, 0.0
  %vm63 = vcmp.ge.s32.totalorder %v31, 64
  %vm64 = vcmp.lt.s32.totalorder %v31, 128
  %vm65 = vmand %vm63, %vm64
  %s66 = scalar_lea.vmem %s3, 32
  %v67 = vld [vmem:[%s66] sm:$0xff]
  %v68 = vld [vmem:[%s66 + $0x8] sm:$0xff]
  %v69 = vld [vmem:[%s66 + $0x10] sm:$0xff]
  %v70 = vld [vmem:[%s66 + $0x18] sm:$0xff]
  %72 = vset.pattern.permute.xlu0 0
  %73 = vperm.xlu0 %72, %v67
  %v74 = vpop.permute.xlu0 %73
  %77 = vset.pattern.permute.xlu0 0
  %78 = vperm.xlu0 %77, %v68
  %v79 = vpop.permute.xlu0 %78
  %82 = vset.pattern.permute.xlu0 0
  %83 = vperm.xlu0 %82, %v69
  %v84 = vpop.permute.xlu0 %83
  %87 = vset.pattern.permute.xlu0 0
  %88 = vperm.xlu0 %87, %v70
  %v89 = vpop.permute.xlu0 %88
  %v91 = vsel %vm65, %v74, %v59
  %v92 = vsel %vm65, %v79, %v60
  %v93 = vsel %vm65, %v84, %v61
  %v94 = vsel %vm65, %v89, %v62
  %v95 = vld [vmem:[%s1] sm:$0xff]
  %v96 = vld [vmem:[%s1 + $0x8] sm:$0xff]
  %v97 = vld [vmem:[%s1 + $0x10] sm:$0xff]
  %v98 = vld [vmem:[%s1 + $0x18] sm:$0xff]
  %100 = vset.pattern.permute.xlu0 0
  %101 = vperm.xlu0 %100, %v95
  %v102 = vpop.permute.xlu0 %101
  %105 = vset.pattern.permute.xlu0 0
  %106 = vperm.xlu0 %105, %v96
  %v107 = vpop.permute.xlu0 %106
  %110 = vset.pattern.permute.xlu0 0
  %111 = vperm.xlu0 %110, %v97
  %v112 = vpop.permute.xlu0 %111
  %115 = vset.pattern.permute.xlu0 0
  %116 = vperm.xlu0 %115, %v98
  %v117 = vpop.permute.xlu0 %116
  %v119 = vmul.f32 %v26, %v102
  %v120 = vmul.f32 %v27, %v107
  %v121 = vmul.f32 %v28, %v112
  %v122 = vmul.f32 %v29, %v117
  %v123 = vld [vmem:[%s2] sm:$0xff]
  %v124 = vld [vmem:[%s2 + $0x8] sm:$0xff]
  %v125 = vld [vmem:[%s2 + $0x10] sm:$0xff]
  %v126 = vld [vmem:[%s2 + $0x18] sm:$0xff]
  %128 = vset.pattern.permute.xlu0 0
  %129 = vperm.xlu0 %128, %v123
  %v130 = vpop.permute.xlu0 %129
  %133 = vset.pattern.permute.xlu0 0
  %134 = vperm.xlu0 %133, %v124
  %v135 = vpop.permute.xlu0 %134
  %138 = vset.pattern.permute.xlu0 0
  %139 = vperm.xlu0 %138, %v125
  %v140 = vpop.permute.xlu0 %139
  %143 = vset.pattern.permute.xlu0 0
  %144 = vperm.xlu0 %143, %v126
  %v145 = vpop.permute.xlu0 %144
  %v147 = vadd.f32 %v119, %v130
  %v148 = vadd.f32 %v120, %v135
  %v149 = vadd.f32 %v121, %v140
  %v150 = vadd.f32 %v122, %v145
  %v151 = vmul.f32 %v147, %v91
  %v152 = vmul.f32 %v148, %v92
  %v153 = vmul.f32 %v149, %v93
  %v154 = vmul.f32 %v150, %v94
  %v155 = vld [vmem:[%s4] sm:$0xff]
  %v156 = vld [vmem:[%s4 + $0x8] sm:$0xff]
  %v157 = vld [vmem:[%s4 + $0x10] sm:$0xff]
  %v158 = vld [vmem:[%s4 + $0x18] sm:$0xff]
  %v159 = vadd.f32 %v151, %v155
  %v160 = vadd.f32 %v152, %v156
  %v161 = vadd.f32 %v153, %v157
  %v162 = vadd.f32 %v154, %v158
  %vm163 = vcmp.ge.f32.partialorder %v159, 0.0
  %vm164 = vcmp.ge.f32.partialorder %v160, 0.0
  %vm165 = vcmp.ge.f32.partialorder %v161, 0.0
  %vm166 = vcmp.ge.f32.partialorder %v162, 0.0
  %v167 = vmul.f32 %v159, 0.01
  %v168 = vmul.f32 %v160, 0.01
  %v169 = vmul.f32 %v161, 0.01
  %v170 = vmul.f32 %v162, 0.01
  %v171 = vsel %vm163, %v159, %v167
  %v172 = vsel %vm164, %v160, %v168
  %v173 = vsel %vm165, %v161, %v169
  %v174 = vsel %vm166, %v162, %v170
  %175 = vadd.xlane.f32.xlu0 %v171
  %v176 = vpop.xlane.xlu0 %175
  %177 = vadd.xlane.f32.xlu0 %v172
  %v178 = vpop.xlane.xlu0 %177
  %179 = vadd.xlane.f32.xlu0 %v173
  %v180 = vpop.xlane.xlu0 %179
  %181 = vadd.xlane.f32.xlu0 %v174
  %v182 = vpop.xlane.xlu0 %181
  %v183 = vmul.f32 %v176, 0.0078125
  %v184 = vmul.f32 %v178, 0.0078125
  %v185 = vmul.f32 %v180, 0.0078125
  %v186 = vmul.f32 %v182, 0.0078125
  %v187 = vmul.f32 %v171, %v171
  %v188 = vmul.f32 %v172, %v172
  %v189 = vmul.f32 %v173, %v173
  %v190 = vmul.f32 %v174, %v174
  %191 = vadd.xlane.f32.xlu0 %v187
  %v192 = vpop.xlane.xlu0 %191
  %193 = vadd.xlane.f32.xlu0 %v188
  %v194 = vpop.xlane.xlu0 %193
  %195 = vadd.xlane.f32.xlu0 %v189
  %v196 = vpop.xlane.xlu0 %195
  %197 = vadd.xlane.f32.xlu0 %v190
  %v198 = vpop.xlane.xlu0 %197
  %v199 = vmul.f32 %v192, 0.0078125
  %v200 = vmul.f32 %v194, 0.0078125
  %v201 = vmul.f32 %v196, 0.0078125
  %v202 = vmul.f32 %v198, 0.0078125
  %v203 = vmul.f32 %v183, %v183
  %v204 = vmul.f32 %v184, %v184
  %v205 = vmul.f32 %v185, %v185
  %v206 = vmul.f32 %v186, %v186
  %v207 = vsub.f32 %v199, %v203
  %v208 = vsub.f32 %v200, %v204
  %v209 = vsub.f32 %v201, %v205
  %v210 = vsub.f32 %v202, %v206
  %v211 = vmax.f32 %v207, 0.0
  %v212 = vmax.f32 %v208, 0.0
  %v213 = vmax.f32 %v209, 0.0
  %v214 = vmax.f32 %v210, 0.0
  %v215 = vld [vmem:[%s5] sm:$0xff]
  %v216 = vld [vmem:[%s5 + $0x8] sm:$0xff]
  %v217 = vld [vmem:[%s5 + $0x10] sm:$0xff]
  %v218 = vld [vmem:[%s5 + $0x18] sm:$0xff]
  %v219 = vadd.f32 %v211, 1e-05
  %v220 = vadd.f32 %v212, 1e-05
  %v221 = vadd.f32 %v213, 1e-05
  %v222 = vadd.f32 %v214, 1e-05
  %v223 = vrsqrt.pop %v219
  %v224 = vrsqrt.pop %v220
  %v225 = vrsqrt.pop %v221
  %v226 = vrsqrt.pop %v222
  %v227 = vmul.f32 %v215, %v223
  %v228 = vmul.f32 %v216, %v224
  %v229 = vmul.f32 %v217, %v225
  %v230 = vmul.f32 %v218, %v226
  %v231 = vld [vmem:[%s6] sm:$0xff]
  %v232 = vld [vmem:[%s6 + $0x8] sm:$0xff]
  %v233 = vld [vmem:[%s6 + $0x10] sm:$0xff]
  %v234 = vld [vmem:[%s6 + $0x18] sm:$0xff]
  %v235 = vmul.f32 %v183, %v227
  %v236 = vmul.f32 %v184, %v228
  %v237 = vmul.f32 %v185, %v229
  %v238 = vmul.f32 %v186, %v230
  %v239 = vsub.f32 %v231, %v235
  %v240 = vsub.f32 %v232, %v236
  %v241 = vsub.f32 %v233, %v237
  %v242 = vsub.f32 %v234, %v238
  %244 = vset.pattern.permute.xlu0 0
  %245 = vperm.xlu0 %244, %v227
  %v246 = vpop.permute.xlu0 %245
  %249 = vset.pattern.permute.xlu0 0
  %250 = vperm.xlu0 %249, %v228
  %v251 = vpop.permute.xlu0 %250
  %254 = vset.pattern.permute.xlu0 0
  %255 = vperm.xlu0 %254, %v229
  %v256 = vpop.permute.xlu0 %255
  %259 = vset.pattern.permute.xlu0 0
  %260 = vperm.xlu0 %259, %v230
  %v261 = vpop.permute.xlu0 %260
  %v263 = vmul.f32 %v171, %v246
  %v264 = vmul.f32 %v172, %v251
  %v265 = vmul.f32 %v173, %v256
  %v266 = vmul.f32 %v174, %v261
  %268 = vset.pattern.permute.xlu0 0
  %269 = vperm.xlu0 %268, %v239
  %v270 = vpop.permute.xlu0 %269
  %273 = vset.pattern.permute.xlu0 0
  %274 = vperm.xlu0 %273, %v240
  %v275 = vpop.permute.xlu0 %274
  %278 = vset.pattern.permute.xlu0 0
  %279 = vperm.xlu0 %278, %v241
  %v280 = vpop.permute.xlu0 %279
  %283 = vset.pattern.permute.xlu0 0
  %284 = vperm.xlu0 %283, %v242
  %v285 = vpop.permute.xlu0 %284
  %v287 = vadd.f32 %v263, %v270
  %v288 = vadd.f32 %v264, %v275
  %v289 = vadd.f32 %v265, %v280
  %v290 = vadd.f32 %v266, %v285
  %vm291 = vcmp.ge.f32.partialorder %v287, 0.0
  %vm292 = vcmp.ge.f32.partialorder %v288, 0.0
  %vm293 = vcmp.ge.f32.partialorder %v289, 0.0
  %vm294 = vcmp.ge.f32.partialorder %v290, 0.0
  %v295 = vmul.f32 %v287, 0.01
  %v296 = vmul.f32 %v288, 0.01
  %v297 = vmul.f32 %v289, 0.01
  %v298 = vmul.f32 %v290, 0.01
  %v299 = vsel %vm291, %v287, %v295
  %v300 = vsel %vm292, %v288, %v296
  %v301 = vsel %vm293, %v289, %v297
  %v302 = vsel %vm294, %v290, %v298
  %v303 = vpack.c.bf16 %v300, %v299
  %v304 = vpack.c.bf16 %v302, %v301
  %v307 = vunpack.c.l.b16 %v303
  %v308 = vunpack.c.h.b16 %v303
  %v309 = vunpack.c.l.b16 %v304
  %v310 = vunpack.c.h.b16 %v304
  %v311 = vpack.c.b16 %v307, %v307
  %v312 = vpack.c.b16 %v308, %v308
  %v313 = vpack.c.b16 %v309, %v309
  %v314 = vpack.c.b16 %v310, %v310
  %319 = vst [vmem:[%s7] sm:$0xf] %v311
  %320 = vst [vmem:[%s7 + $0x4] sm:$0xf] %v312
  %321 = vst [vmem:[%s7 + $0x8] sm:$0xf] %v313
  %322 = vst [vmem:[%s7 + $0xc] sm:$0xf] %v314
  // Predicated region
  $region30: #{svs_decoder_forward.20} parent=0 // pred_check
    _
  $region31: #{svs_decoder_forward.20} parent=0 // pred_check_branch
    %324 = sbr.rel (0) target = $region33
  $region32: #{svs_decoder_forward.20} parent=0 // pred_region
    _
  $region33: #{svs_decoder_forward.20} parent=0 // pred_fallthru
    _
  // Predicated region
  $region34: #{svs_decoder_forward.20} parent=0 // pred_check
    _
  $region35: #{svs_decoder_forward.20} parent=0 // pred_check_branch
    %326 = sbr.rel (0) target = $region37
  $region36: #{svs_decoder_forward.20} parent=0 // pred_region
    _
  $region37: #{svs_decoder_forward.20} parent=0 // pred_fallthru
    _

// kernel: svs_decoder_forward.21
$region0: #{svs_decoder_forward.21}
  #allocation0 [shape = 'u32[]', space=smem, size = 0x4, offset = 0x4, fixed_abs, tag = 'smem constant byte address 0x4 - core index']
  #allocation1 [shape = 'u32[144,128]{1,0:T(1,128)}', space=vmem, size = 0x12000, scoped, tag = 'internal scratch']
  %s0 = inlined_call_operand.vmem [shape: bf16[16,864], index: 0, kind: input, shape index: {}]
  %s1 = inlined_call_operand.vmem [shape: bf16[864,128], index: 1, kind: input, shape index: {}]
  %s2 = inlined_call_operand.vmem [shape: f32[16,1], index: 2, kind: input, shape index: {}]
  %s3 = inlined_call_operand.vmem [shape: f32[16,128], index: 3, kind: output, shape index: {}]
  %s4 = sld [smem:[#allocation0]]
  $region22: #{svs_decoder_forward.21} parent=0
    _
  %s6 = ssub.s32 1, %s4
  %s7 = scalar_select 0, %s6, %s4
  // Predicated region
  $region2: #{svs_decoder_forward.21} parent=0 // pred_check
    _
  $region3: #{svs_decoder_forward.21} parent=0 // pred_check_branch
    %9 = sbr.rel (0) target = $region5
  $region4: #{svs_decoder_forward.21} parent=0 // pred_region
    _
  $region5: #{svs_decoder_forward.21} parent=0 // pred_fallthru
    _
  // Predicated region
  $region6: #{svs_decoder_forward.21} parent=0 // pred_check
    _
  $region7: #{svs_decoder_forward.21} parent=0 // pred_check_branch
    %11 = sbr.rel (0) target = $region9
  $region8: #{svs_decoder_forward.21} parent=0 // pred_region
    _
  $region9: #{svs_decoder_forward.21} parent=0 // pred_fallthru
    _
  // Predicated region
  $region10: #{svs_decoder_forward.21} parent=0 // pred_check
    _
  $region11: #{svs_decoder_forward.21} parent=0 // pred_check_branch
    %13 = sbr.rel (0) target = $region13
  $region12: #{svs_decoder_forward.21} parent=0 // pred_region
    _
  $region13: #{svs_decoder_forward.21} parent=0 // pred_fallthru
    _
  %v15 = vld [vmem:[%s0] sm:$0xff]
  %v16 = vld [vmem:[%s0 + $0x8] sm:$0xff]
  %v17 = vld [vmem:[%s0 + $0x10] sm:$0xff]
  %v18 = vld [vmem:[%s0 + $0x18] sm:$0xf]
  %v19 = vld [vmem:[%s0 + $0x1c] sm:$0xff]
  %v20 = vld [vmem:[%s0 + $0x24] sm:$0xff]
  %v21 = vld [vmem:[%s0 + $0x2c] sm:$0xff]
  %v22 = vld [vmem:[%s0 + $0x34] sm:$0xf]
  %v23 = vld [vmem:[%s1] sm:$0xf]
  %v24 = vld [vmem:[%s1 + $0x4] sm:$0xf]
  %v25 = vld [vmem:[%s1 + $0x8] sm:$0xf]
  %v26 = vld [vmem:[%s1 + $0xc] sm:$0xf]
  %v27 = vld [vmem:[%s1 + $0x10] sm:$0xf]
  %v28 = vld [vmem:[%s1 + $0x14] sm:$0xf]
  %v29 = vld [vmem:[%s1 + $0x18] sm:$0xf]
  %v30 = vld [vmem:[%s1 + $0x1c] sm:$0xf]
  %v31 = vld [vmem:[%s1 + $0x20] sm:$0xf]
  %v32 = vld [vmem:[%s1 + $0x24] sm:$0xf]
  %v33 = vld [vmem:[%s1 + $0x28] sm:$0xf]
  %v34 = vld [vmem:[%s1 + $0x2c] sm:$0xf]
  %v35 = vld [vmem:[%s1 + $0x30] sm:$0xf]
  %v36 = vld [vmem:[%s1 + $0x34] sm:$0xf]
  %v37 = vld [vmem:[%s1 + $0x38] sm:$0xf]
  %v38 = vld [vmem:[%s1 + $0x3c] sm:$0xf]
  %v39 = vld [vmem:[%s1 + $0x40] sm:$0xf]
  %v40 = vld [vmem:[%s1 + $0x44] sm:$0xf]
  %v41 = vld [vmem:[%s1 + $0x48] sm:$0xf]
  %v42 = vld [vmem:[%s1 + $0x4c] sm:$0xf]
  %v43 = vld [vmem:[%s1 + $0x50] sm:$0xf]
  %v44 = vld [vmem:[%s1 + $0x54] sm:$0xf]
  %v45 = vld [vmem:[%s1 + $0x58] sm:$0xf]
  %v46 = vld [vmem:[%s1 + $0x5c] sm:$0xf]
  %v47 = vld [vmem:[%s1 + $0x60] sm:$0xf]
  %v48 = vld [vmem:[%s1 + $0x64] sm:$0xf]
  %v49 = vld [vmem:[%s1 + $0x68] sm:$0xf]
  %v50 = vld [vmem:[%s1 + $0x6c] sm:$0xf]
  %v51 = vld [vmem:[%s1 + $0x70] sm:$0xf]
  %v52 = vld [vmem:[%s1 + $0x74] sm:$0xf]
  %v53 = vld [vmem:[%s1 + $0x78] sm:$0xf]
  %v54 = vld [vmem:[%s1 + $0x7c] sm:$0xf]
  %v55 = vld [vmem:[%s1 + $0x80] sm:$0xf]
  %v56 = vld [vmem:[%s1 + $0x84] sm:$0xf]
  %v57 = vld [vmem:[%s1 + $0x88] sm:$0xf]
  %v58 = vld [vmem:[%s1 + $0x8c] sm:$0xf]
  %v59 = vld [vmem:[%s1 + $0x90] sm:$0xf]
  %v60 = vld [vmem:[%s1 + $0x94] sm:$0xf]
  %v61 = vld [vmem:[%s1 + $0x98] sm:$0xf]
  %v62 = vld [vmem:[%s1 + $0x9c] sm:$0xf]
  %v63 = vld [vmem:[%s1 + $0xa0] sm:$0xf]
  %v64 = vld [vmem:[%s1 + $0xa4] sm:$0xf]
  %v65 = vld [vmem:[%s1 + $0xa8] sm:$0xf]
  %v66 = vld [vmem:[%s1 + $0xac] sm:$0xf]
  %v67 = vld [vmem:[%s1 + $0xb0] sm:$0xf]
  %v68 = vld [vmem:[%s1 + $0xb4] sm:$0xf]
  %v69 = vld [vmem:[%s1 + $0xb8] sm:$0xf]
  %v70 = vld [vmem:[%s1 + $0xbc] sm:$0xf]
  %v71 = vld [vmem:[%s1 + $0xc0] sm:$0xf]
  %v72 = vld [vmem:[%s1 + $0xc4] sm:$0xf]
  %v73 = vld [vmem:[%s1 + $0xc8] sm:$0xf]
  %v74 = vld [vmem:[%s1 + $0xcc] sm:$0xf]
  %v75 = vld [vmem:[%s1 + $0xd0] sm:$0xf]
  %v76 = vld [vmem:[%s1 + $0xd4] sm:$0xf]
  %v77 = vld [vmem:[%s1 + $0xd8] sm:$0xf]
  %v78 = vld [vmem:[%s1 + $0xdc] sm:$0xf]
  %v79 = vld [vmem:[%s1 + $0xe0] sm:$0xf]
  %v80 = vld [vmem:[%s1 + $0xe4] sm:$0xf]
  %v81 = vld [vmem:[%s1 + $0xe8] sm:$0xf]
  %v82 = vld [vmem:[%s1 + $0xec] sm:$0xf]
  %v83 = vld [vmem:[%s1 + $0xf0] sm:$0xf]
  %v84 = vld [vmem:[%s1 + $0xf4] sm:$0xf]
  %v85 = vld [vmem:[%s1 + $0xf8] sm:$0xf]
  %v86 = vld [vmem:[%s1 + $0xfc] sm:$0xf]
  %v87 = vld [vmem:[%s1 + $0x100] sm:$0xf]
  %v88 = vld [vmem:[%s1 + $0x104] sm:$0xf]
  %v89 = vld [vmem:[%s1 + $0x108] sm:$0xf]
  %v90 = vld [vmem:[%s1 + $0x10c] sm:$0xf]
  %v91 = vld [vmem:[%s1 + $0x110] sm:$0xf]
  %v92 = vld [vmem:[%s1 + $0x114] sm:$0xf]
  %v93 = vld [vmem:[%s1 + $0x118] sm:$0xf]
  %v94 = vld [vmem:[%s1 + $0x11c] sm:$0xf]
  %v95 = vld [vmem:[%s1 + $0x120] sm:$0xf]
  %v96 = vld [vmem:[%s1 + $0x124] sm:$0xf]
  %v97 = vld [vmem:[%s1 + $0x128] sm:$0xf]
  %v98 = vld [vmem:[%s1 + $0x12c] sm:$0xf]
  %v99 = vld [vmem:[%s1 + $0x130] sm:$0xf]
  %v100 = vld [vmem:[%s1 + $0x134] sm:$0xf]
  %v101 = vld [vmem:[%s1 + $0x138] sm:$0xf]
  %v102 = vld [vmem:[%s1 + $0x13c] sm:$0xf]
  %v103 = vld [vmem:[%s1 + $0x140] sm:$0xf]
  %v104 = vld [vmem:[%s1 + $0x144] sm:$0xf]
  %v105 = vld [vmem:[%s1 + $0x148] sm:$0xf]
  %v106 = vld [vmem:[%s1 + $0x14c] sm:$0xf]
  %v107 = vld [vmem:[%s1 + $0x150] sm:$0xf]
  %v108 = vld [vmem:[%s1 + $0x154] sm:$0xf]
  %v109 = vld [vmem:[%s1 + $0x158] sm:$0xf]
  %v110 = vld [vmem:[%s1 + $0x15c] sm:$0xf]
  %v111 = vld [vmem:[%s1 + $0x160] sm:$0xf]
  %v112 = vld [vmem:[%s1 + $0x164] sm:$0xf]
  %v113 = vld [vmem:[%s1 + $0x168] sm:$0xf]
  %v114 = vld [vmem:[%s1 + $0x16c] sm:$0xf]
  %v115 = vld [vmem:[%s1 + $0x170] sm:$0xf]
  %v116 = vld [vmem:[%s1 + $0x174] sm:$0xf]
  %v117 = vld [vmem:[%s1 + $0x178] sm:$0xf]
  %v118 = vld [vmem:[%s1 + $0x17c] sm:$0xf]
  %v119 = vld [vmem:[%s1 + $0x180] sm:$0xf]
  %v120 = vld [vmem:[%s1 + $0x184] sm:$0xf]
  %v121 = vld [vmem:[%s1 + $0x188] sm:$0xf]
  %v122 = vld [vmem:[%s1 + $0x18c] sm:$0xf]
  %v123 = vld [vmem:[%s1 + $0x190] sm:$0xf]
  %v124 = vld [vmem:[%s1 + $0x194] sm:$0xf]
  %v125 = vld [vmem:[%s1 + $0x198] sm:$0xf]
  %v126 = vld [vmem:[%s1 + $0x19c] sm:$0xf]
  %v127 = vld [vmem:[%s1 + $0x1a0] sm:$0xf]
  %v128 = vld [vmem:[%s1 + $0x1a4] sm:$0xf]
  %v129 = vld [vmem:[%s1 + $0x1a8] sm:$0xf]
  %v130 = vld [vmem:[%s1 + $0x1ac] sm:$0xf]
  %v131 = vld [vmem:[%s2] sm:$0xff]
  %v132 = vld [vmem:[%s2 + $0x8] sm:$0xff]
  %134 = vset.pattern.permute.xlu0 0
  %135 = vperm.xlu0 %134, %v131
  %v136 = vpop.permute.xlu0 %135
  %139 = vset.pattern.permute.xlu0 0
  %140 = vperm.xlu0 %139, %v132
  %v141 = vpop.permute.xlu0 %140
  %v151 = vunpack.c.l.b16 %v15
  %v152 = vunpack.c.h.b16 %v15
  %v153 = vunpack.c.l.b16 %v16
  %v154 = vunpack.c.h.b16 %v16
  %v155 = vunpack.c.l.b16 %v17
  %v156 = vunpack.c.h.b16 %v17
  %v157 = vunpack.c.l.b16 %v18
  %v158 = vunpack.c.l.b16 %v19
  %v159 = vunpack.c.h.b16 %v19
  %v160 = vunpack.c.l.b16 %v20
  %v161 = vunpack.c.h.b16 %v20
  %v162 = vunpack.c.l.b16 %v21
  %v163 = vunpack.c.h.b16 %v21
  %v164 = vunpack.c.l.b16 %v22
  %v165 = vpack.c.b16 %v158, %v151
  %v166 = vpack.c.b16 %v159, %v152
  %v167 = vpack.c.b16 %v160, %v153
  %v168 = vpack.c.b16 %v161, %v154
  %v169 = vpack.c.b16 %v162, %v155
  %v170 = vpack.c.b16 %v163, %v156
  %v171 = vpack.c.b16 %v164, %v157
  %v286 = vunpack.c.l.b16 %v23
  %v287 = vunpack.c.l.b16 %v24
  %v288 = vunpack.c.l.b16 %v25
  %v289 = vunpack.c.l.b16 %v26
  %v290 = vunpack.c.l.b16 %v27
  %v291 = vunpack.c.l.b16 %v28
  %v292 = vunpack.c.l.b16 %v29
  %v293 = vunpack.c.l.b16 %v30
  %v294 = vunpack.c.l.b16 %v31
  %v295 = vunpack.c.l.b16 %v32
  %v296 = vunpack.c.l.b16 %v33
  %v297 = vunpack.c.l.b16 %v34
  %v298 = vunpack.c.l.b16 %v35
  %v299 = vunpack.c.l.b16 %v36
  %v300 = vunpack.c.l.b16 %v37
  %v301 = vunpack.c.l.b16 %v38
  %v302 = vunpack.c.l.b16 %v39
  %v303 = vunpack.c.l.b16 %v40
  %v304 = vunpack.c.l.b16 %v41
  %v305 = vunpack.c.l.b16 %v42
  %v306 = vunpack.c.l.b16 %v43
  %v307 = vunpack.c.l.b16 %v44
  %v308 = vunpack.c.l.b16 %v45
  %v309 = vunpack.c.l.b16 %v46
  %v310 = vunpack.c.l.b16 %v47
  %v311 = vunpack.c.l.b16 %v48
  %v312 = vunpack.c.l.b16 %v49
  %v313 = vunpack.c.l.b16 %v50
  %v314 = vunpack.c.l.b16 %v51
  %v315 = vunpack.c.l.b16 %v52
  %v316 = vunpack.c.l.b16 %v53
  %v317 = vunpack.c.l.b16 %v54
  %v318 = vunpack.c.l.b16 %v55
  %v319 = vunpack.c.l.b16 %v56
  %v320 = vunpack.c.l.b16 %v57
  %v321 = vunpack.c.l.b16 %v58
  %v322 = vunpack.c.l.b16 %v59
  %v323 = vunpack.c.l.b16 %v60
  %v324 = vunpack.c.l.b16 %v61
  %v325 = vunpack.c.l.b16 %v62
  %v326 = vunpack.c.l.b16 %v63
  %v327 = vunpack.c.l.b16 %v64
  %v328 = vunpack.c.l.b16 %v65
  %v329 = vunpack.c.l.b16 %v66
  %v330 = vunpack.c.l.b16 %v67
  %v331 = vunpack.c.l.b16 %v68
  %v332 = vunpack.c.l.b16 %v69
  %v333 = vunpack.c.l.b16 %v70
  %v334 = vunpack.c.l.b16 %v71
  %v335 = vunpack.c.l.b16 %v72
  %v336 = vunpack.c.l.b16 %v73
  %v337 = vunpack.c.l.b16 %v74
  %v338 = vunpack.c.l.b16 %v75
  %v339 = vunpack.c.l.b16 %v76
  %v340 = vunpack.c.l.b16 %v77
  %v341 = vunpack.c.l.b16 %v78
  %v342 = vunpack.c.l.b16 %v79
  %v343 = vunpack.c.l.b16 %v80
  %v344 = vunpack.c.l.b16 %v81
  %v345 = vunpack.c.l.b16 %v82
  %v346 = vunpack.c.l.b16 %v83
  %v347 = vunpack.c.l.b16 %v84
  %v348 = vunpack.c.l.b16 %v85
  %v349 = vunpack.c.l.b16 %v86
  %v350 = vunpack.c.l.b16 %v87
  %v351 = vunpack.c.l.b16 %v88
  %v352 = vunpack.c.l.b16 %v89
  %v353 = vunpack.c.l.b16 %v90
  %v354 = vunpack.c.l.b16 %v91
  %v355 = vunpack.c.l.b16 %v92
  %v356 = vunpack.c.l.b16 %v93
  %v357 = vunpack.c.l.b16 %v94
  %v358 = vunpack.c.l.b16 %v95
  %v359 = vunpack.c.l.b16 %v96
  %v360 = vunpack.c.l.b16 %v97
  %v361 = vunpack.c.l.b16 %v98
  %v362 = vunpack.c.l.b16 %v99
  %v363 = vunpack.c.l.b16 %v100
  %v364 = vunpack.c.l.b16 %v101
  %v365 = vunpack.c.l.b16 %v102
  %v366 = vunpack.c.l.b16 %v103
  %v367 = vunpack.c.l.b16 %v104
  %v368 = vunpack.c.l.b16 %v105
  %v369 = vunpack.c.l.b16 %v106
  %v370 = vunpack.c.l.b16 %v107
  %v371 = vunpack.c.l.b16 %v108
  %v372 = vunpack.c.l.b16 %v109
  %v373 = vunpack.c.l.b16 %v110
  %v374 = vunpack.c.l.b16 %v111
  %v375 = vunpack.c.l.b16 %v112
  %v376 = vunpack.c.l.b16 %v113
  %v377 = vunpack.c.l.b16 %v114
  %v378 = vunpack.c.l.b16 %v115
  %v379 = vunpack.c.l.b16 %v116
  %v380 = vunpack.c.l.b16 %v117
  %v381 = vunpack.c.l.b16 %v118
  %v382 = vunpack.c.l.b16 %v119
  %v383 = vunpack.c.l.b16 %v120
  %v384 = vunpack.c.l.b16 %v121
  %v385 = vunpack.c.l.b16 %v122
  %v386 = vunpack.c.l.b16 %v123
  %v387 = vunpack.c.l.b16 %v124
  %v388 = vunpack.c.l.b16 %v125
  %v389 = vunpack.c.l.b16 %v126
  %v390 = vunpack.c.l.b16 %v127
  %v391 = vunpack.c.l.b16 %v128
  %v392 = vunpack.c.l.b16 %v129
  %v393 = vunpack.c.l.b16 %v130
  %v394 = vpack.c.b16 %v287, %v286
  %v395 = vpack.c.b16 %v289, %v288
  %v396 = vpack.c.b16 %v291, %v290
  %v397 = vpack.c.b16 %v293, %v292
  %v398 = vpack.c.b16 %v295, %v294
  %v399 = vpack.c.b16 %v297, %v296
  %v400 = vpack.c.b16 %v299, %v298
  %v401 = vpack.c.b16 %v301, %v300
  %v402 = vpack.c.b16 %v303, %v302
  %v403 = vpack.c.b16 %v305, %v304
  %v404 = vpack.c.b16 %v307, %v306
  %v405 = vpack.c.b16 %v309, %v308
  %v406 = vpack.c.b16 %v311, %v310
  %v407 = vpack.c.b16 %v313, %v312
  %v408 = vpack.c.b16 %v315, %v314
  %v409 = vpack.c.b16 %v317, %v316
  %v410 = vpack.c.b16 %v319, %v318
  %v411 = vpack.c.b16 %v321, %v320
  %v412 = vpack.c.b16 %v323, %v322
  %v413 = vpack.c.b16 %v325, %v324
  %v414 = vpack.c.b16 %v327, %v326
  %v415 = vpack.c.b16 %v329, %v328
  %v416 = vpack.c.b16 %v331, %v330
  %v417 = vpack.c.b16 %v333, %v332
  %v418 = vpack.c.b16 %v335, %v334
  %v419 = vpack.c.b16 %v337, %v336
  %v420 = vpack.c.b16 %v339, %v338
  %v421 = vpack.c.b16 %v341, %v340
  %v422 = vpack.c.b16 %v343, %v342
  %v423 = vpack.c.b16 %v345, %v344
  %v424 = vpack.c.b16 %v347, %v346
  %v425 = vpack.c.b16 %v349, %v348
  %v426 = vpack.c.b16 %v351, %v350
  %v427 = vpack.c.b16 %v353, %v352
  %v428 = vpack.c.b16 %v355, %v354
  %v429 = vpack.c.b16 %v357, %v356
  %v430 = vpack.c.b16 %v359, %v358
  %v431 = vpack.c.b16 %v361, %v360
  %v432 = vpack.c.b16 %v363, %v362
  %v433 = vpack.c.b16 %v365, %v364
  %v434 = vpack.c.b16 %v367, %v366
  %v435 = vpack.c.b16 %v369, %v368
  %v436 = vpack.c.b16 %v371, %v370
  %v437 = vpack.c.b16 %v373, %v372
  %v438 = vpack.c.b16 %v375, %v374
  %v439 = vpack.c.b16 %v377, %v376
  %v440 = vpack.c.b16 %v379, %v378
  %v441 = vpack.c.b16 %v381, %v380
  %v442 = vpack.c.b16 %v383, %v382
  %v443 = vpack.c.b16 %v385, %v384
  %v444 = vpack.c.b16 %v387, %v386
  %v445 = vpack.c.b16 %v389, %v388
  %v446 = vpack.c.b16 %v391, %v390
  %v447 = vpack.c.b16 %v393, %v392
  %vm502 = vcmask 785408
  %v504 = vsel %vm502, %v171, 0
  %506 = vmatprep.subr.bf16.mxu0 0
  %507 = vmatpush1.bf16.msra.mxu0 %v401
  %508 = vmatprep.subr.bf16.mxu0 0
  %509 = vmatpush1.bf16.msra.mxu0 %v400
  %510 = vmatprep.subr.bf16.mxu0 0
  %511 = vmatpush1.bf16.msra.mxu0 %v399
  %512 = vmatprep.subr.bf16.mxu0 0
  %513 = vmatpush1.bf16.msra.mxu0 %v398
  %514 = vmatprep.subr.bf16.mxu0 0
  %515 = vmatpush1.bf16.msra.mxu0 %v397
  %516 = vmatprep.subr.bf16.mxu0 0
  %517 = vmatpush1.bf16.msra.mxu0 %v396
  %518 = vmatprep.subr.bf16.mxu0 0
  %519 = vmatpush1.bf16.msra.mxu0 %v395
  %520 = vmatprep.subr.bf16.mxu0 0
  %521 = vmatpush1.bf16.msra.mxu0 %v394
  %522 = vmatprep.subr.bf16.mxu0 0
  %523 = vmatpush2.bf16.msra.mxu0 %v409
  %524 = vmatprep.subr.bf16.mxu0 0
  %525 = vmatpush2.bf16.msra.mxu0 %v408
  %526 = vmatprep.subr.bf16.mxu0 0
  %527 = vmatpush2.bf16.msra.mxu0 %v407
  %528 = vmatprep.subr.bf16.mxu0 0
  %529 = vmatpush2.bf16.msra.mxu0 %v406
  %530 = vmatprep.subr.bf16.mxu0 0
  %531 = vmatpush2.bf16.msra.mxu0 %v405
  %532 = vmatprep.subr.bf16.mxu0 0
  %533 = vmatpush2.bf16.msra.mxu0 %v404
  %534 = vmatprep.subr.bf16.mxu0 0
  %535 = vmatpush2.bf16.msra.mxu0 %v403
  %536 = vmatprep.subr.bf16.mxu0 0
  %537 = vmatpush2.bf16.msra.mxu0 %v402
  %538 = vmatprep.mubr.bf16.mxu0 %v166
  %539 = vmatmul.mubr.bf16.gmra.mxu0 %v165
  %v540 = vpop.f32.mrf.mxu0
  %v541 = vadd.f32 %v136, %v540
  %v542 = vpop.f32.mrf.mxu0
  %v543 = vpop.f32.mrf.mxu0
  %v544 = vadd.f32 %v141, %v543
  %v545 = vpop.f32.mrf.mxu0
  %546 = vdwg.mxu0
  %547 = vmatprep.subr.bf16.mxu0 0
  %548 = vmatpush1.bf16.msra.mxu0 %v417
  %549 = vmatprep.subr.bf16.mxu0 0
  %550 = vmatpush1.bf16.msra.mxu0 %v416
  %551 = vmatprep.subr.bf16.mxu0 0
  %552 = vmatpush1.bf16.msra.mxu0 %v415
  %553 = vmatprep.subr.bf16.mxu0 0
  %554 = vmatpush1.bf16.msra.mxu0 %v414
  %555 = vmatprep.subr.bf16.mxu0 0
  %556 = vmatpush1.bf16.msra.mxu0 %v413
  %557 = vmatprep.subr.bf16.mxu0 0
  %558 = vmatpush1.bf16.msra.mxu0 %v412
  %559 = vmatprep.subr.bf16.mxu0 0
  %560 = vmatpush1.bf16.msra.mxu0 %v411
  %561 = vmatprep.subr.bf16.mxu0 0
  %562 = vmatpush1.bf16.msra.mxu0 %v410
  %563 = vmatprep.subr.bf16.mxu0 0
  %564 = vmatpush2.bf16.msra.mxu0 %v425
  %565 = vmatprep.subr.bf16.mxu0 0
  %566 = vmatpush2.bf16.msra.mxu0 %v424
  %567 = vmatprep.subr.bf16.mxu0 0
  %568 = vmatpush2.bf16.msra.mxu0 %v423
  %569 = vmatprep.subr.bf16.mxu0 0
  %570 = vmatpush2.bf16.msra.mxu0 %v422
  %571 = vmatprep.subr.bf16.mxu0 0
  %572 = vmatpush2.bf16.msra.mxu0 %v421
  %573 = vmatprep.subr.bf16.mxu0 0
  %574 = vmatpush2.bf16.msra.mxu0 %v420
  %575 = vmatprep.subr.bf16.mxu0 0
  %576 = vmatpush2.bf16.msra.mxu0 %v419
  %577 = vmatprep.subr.bf16.mxu0 0
  %578 = vmatpush2.bf16.msra.mxu0 %v418
  %579 = vmatprep.mubr.bf16.mxu0 %v168
  %580 = vmatmul.mubr.bf16.gmra.mxu0 %v167
  %v581 = vpop.f32.mrf.mxu0
  %v582 = vadd.f32 %v541, %v581
  %v583 = vpop.f32.mrf.mxu0
  %v584 = vpop.f32.mrf.mxu0
  %v585 = vadd.f32 %v544, %v584
  %v586 = vpop.f32.mrf.mxu0
  %587 = vdwg.mxu0
  %588 = vmatprep.subr.bf16.mxu0 0
  %589 = vmatpush1.bf16.msra.mxu0 %v433
  %590 = vmatprep.subr.bf16.mxu0 0
  %591 = vmatpush1.bf16.msra.mxu0 %v432
  %592 = vmatprep.subr.bf16.mxu0 0
  %593 = vmatpush1.bf16.msra.mxu0 %v431
  %594 = vmatprep.subr.bf16.mxu0 0
  %595 = vmatpush1.bf16.msra.mxu0 %v430
  %596 = vmatprep.subr.bf16.mxu0 0
  %597 = vmatpush1.bf16.msra.mxu0 %v429
  %598 = vmatprep.subr.bf16.mxu0 0
  %599 = vmatpush1.bf16.msra.mxu0 %v428
  %600 = vmatprep.subr.bf16.mxu0 0
  %601 = vmatpush1.bf16.msra.mxu0 %v427
  %602 = vmatprep.subr.bf16.mxu0 0
  %603 = vmatpush1.bf16.msra.mxu0 %v426
  %604 = vmatprep.subr.bf16.mxu0 0
  %605 = vmatpush2.bf16.msra.mxu0 %v441
  %606 = vmatprep.subr.bf16.mxu0 0
  %607 = vmatpush2.bf16.msra.mxu0 %v440
  %608 = vmatprep.subr.bf16.mxu0 0
  %609 = vmatpush2.bf16.msra.mxu0 %v439
  %610 = vmatprep.subr.bf16.mxu0 0
  %611 = vmatpush2.bf16.msra.mxu0 %v438
  %612 = vmatprep.subr.bf16.mxu0 0
  %613 = vmatpush2.bf16.msra.mxu0 %v437
  %614 = vmatprep.subr.bf16.mxu0 0
  %615 = vmatpush2.bf16.msra.mxu0 %v436
  %616 = vmatprep.subr.bf16.mxu0 0
  %617 = vmatpush2.bf16.msra.mxu0 %v435
  %618 = vmatprep.subr.bf16.mxu0 0
  %619 = vmatpush2.bf16.msra.mxu0 %v434
  %620 = vmatprep.mubr.bf16.mxu0 %v170
  %621 = vmatmul.mubr.bf16.gmra.mxu0 %v169
  %v622 = vpop.f32.mrf.mxu0
  %v623 = vadd.f32 %v582, %v622
  %v624 = vpop.f32.mrf.mxu0
  %v625 = vpop.f32.mrf.mxu0
  %v626 = vadd.f32 %v585, %v625
  %v627 = vpop.f32.mrf.mxu0
  %628 = vdwg.mxu0
  %629 = vmatprep.subr.bf16.mxu0 0
  %630 = vmatpush1.bf16.msra.mxu0 0
  %631 = vmatprep.subr.bf16.mxu0 0
  %632 = vmatpush1.bf16.msra.mxu0 0
  %633 = vmatprep.subr.bf16.mxu0 0
  %634 = vmatpush1.bf16.msra.mxu0 %v447
  %635 = vmatprep.subr.bf16.mxu0 0
  %636 = vmatpush1.bf16.msra.mxu0 %v446
  %637 = vmatprep.subr.bf16.mxu0 0
  %638 = vmatpush1.bf16.msra.mxu0 %v445
  %639 = vmatprep.subr.bf16.mxu0 0
  %640 = vmatpush1.bf16.msra.mxu0 %v444
  %641 = vmatprep.subr.bf16.mxu0 0
  %642 = vmatpush1.bf16.msra.mxu0 %v443
  %643 = vmatprep.subr.bf16.mxu0 0
  %644 = vmatpush1.bf16.msra.mxu0 %v442
  %645 = vmatprep.subr.bf16.mxu0 0
  %646 = vmatpush2.bf16.msra.mxu0 0
  %647 = vmatprep.subr.bf16.mxu0 0
  %648 = vmatpush2.bf16.msra.mxu0 0
  %649 = vmatprep.subr.bf16.mxu0 0
  %650 = vmatpush2.bf16.msra.mxu0 0
  %651 = vmatprep.subr.bf16.mxu0 0
  %652 = vmatpush2.bf16.msra.mxu0 0
  %653 = vmatprep.subr.bf16.mxu0 0
  %654 = vmatpush2.bf16.msra.mxu0 0
  %655 = vmatprep.subr.bf16.mxu0 0
  %656 = vmatpush2.bf16.msra.mxu0 0
  %657 = vmatprep.subr.bf16.mxu0 0
  %658 = vmatpush2.bf16.msra.mxu0 0
  %659 = vmatprep.subr.bf16.mxu0 0
  %660 = vmatpush2.bf16.msra.mxu0 0
  %661 = vmatprep.mubr.bf16.mxu0 0
  %662 = vmatmul.mubr.bf16.gmra.mxu0 %v504
  %v663 = vpop.f32.mrf.mxu0
  %v664 = vadd.f32 %v623, %v663
  %v665 = vpop.f32.mrf.mxu0
  %v666 = vpop.f32.mrf.mxu0
  %v667 = vadd.f32 %v626, %v666
  %v668 = vpop.f32.mrf.mxu0
  %669 = vdwg.mxu0
  %670 = vst [vmem:[%s3] sm:$0xff] %v664
  %671 = vst [vmem:[%s3 + $0x8] sm:$0xff] %v667
  // Predicated region
  $region14: #{svs_decoder_forward.21} parent=0 // pred_check
    _
  $region15: #{svs_decoder_forward.21} parent=0 // pred_check_branch
    %673 = sbr.rel (0) target = $region17
  $region16: #{svs_decoder_forward.21} parent=0 // pred_region
    _
  $region17: #{svs_decoder_forward.21} parent=0 // pred_fallthru
    _
  // Predicated region
  $region18: #{svs_decoder_forward.21} parent=0 // pred_check
    _
  $region19: #{svs_decoder_forward.21} parent=0 // pred_check_branch
    %675 = sbr.rel (0) target = $region21
  $region20: #{svs_decoder_forward.21} parent=0 // pred_region
    _
  $region21: #{svs_decoder_forward.21} parent=0 // pred_fallthru
    _

// kernel: svs_decoder_forward.22
$region0: #{svs_decoder_forward.22}
  #allocation0 [shape = 'u32[]', space=smem, size = 0x4, offset = 0x4, fixed_abs, tag = 'smem constant byte address 0x4 - core index']
  #allocation1 [shape = 'u32[144,128]{1,0:T(1,128)}', space=vmem, size = 0x12000, scoped, tag = 'internal scratch']
  %s0 = inlined_call_operand.vmem [shape: bf16[16,432], index: 0, kind: input, shape index: {}]
  %s1 = inlined_call_operand.vmem [shape: bf16[432,128], index: 1, kind: input, shape index: {}]
  %s2 = inlined_call_operand.vmem [shape: f32[16,1], index: 2, kind: input, shape index: {}]
  %s3 = inlined_call_operand.vmem [shape: f32[16,1], index: 3, kind: input, shape index: {}]
  %s4 = inlined_call_operand.vmem [shape: f32[16,1], index: 4, kind: input, shape index: {}]
  %s5 = inlined_call_operand.vmem [shape: bf16[16,128], index: 5, kind: output, shape index: {}]
  %s6 = sld [smem:[#allocation0]]
  $region30: #{svs_decoder_forward.22} parent=0
    _
  %s8 = ssub.s32 1, %s6
  %s9 = scalar_select 0, %s8, %s6
  // Predicated region
  $region2: #{svs_decoder_forward.22} parent=0 // pred_check
    _
  $region3: #{svs_decoder_forward.22} parent=0 // pred_check_branch
    %11 = sbr.rel (0) target = $region5
  $region4: #{svs_decoder_forward.22} parent=0 // pred_region
    _
  $region5: #{svs_decoder_forward.22} parent=0 // pred_fallthru
    _
  // Predicated region
  $region6: #{svs_decoder_forward.22} parent=0 // pred_check
    _
  $region7: #{svs_decoder_forward.22} parent=0 // pred_check_branch
    %13 = sbr.rel (0) target = $region9
  $region8: #{svs_decoder_forward.22} parent=0 // pred_region
    _
  $region9: #{svs_decoder_forward.22} parent=0 // pred_fallthru
    _
  // Predicated region
  $region10: #{svs_decoder_forward.22} parent=0 // pred_check
    _
  $region11: #{svs_decoder_forward.22} parent=0 // pred_check_branch
    %15 = sbr.rel (0) target = $region13
  $region12: #{svs_decoder_forward.22} parent=0 // pred_region
    _
  $region13: #{svs_decoder_forward.22} parent=0 // pred_fallthru
    _
  // Predicated region
  $region14: #{svs_decoder_forward.22} parent=0 // pred_check
    _
  $region15: #{svs_decoder_forward.22} parent=0 // pred_check_branch
    %17 = sbr.rel (0) target = $region17
  $region16: #{svs_decoder_forward.22} parent=0 // pred_region
    _
  $region17: #{svs_decoder_forward.22} parent=0 // pred_fallthru
    _
  // Predicated region
  $region18: #{svs_decoder_forward.22} parent=0 // pred_check
    _
  $region19: #{svs_decoder_forward.22} parent=0 // pred_check_branch
    %19 = sbr.rel (0) target = $region21
  $region20: #{svs_decoder_forward.22} parent=0 // pred_region
    _
  $region21: #{svs_decoder_forward.22} parent=0 // pred_fallthru
    _
  %v21 = vld [vmem:[%s0] sm:$0xff]
  %v22 = vld [vmem:[%s0 + $0x8] sm:$0xff]
  %v23 = vld [vmem:[%s0 + $0x10] sm:$0xff]
  %v24 = vld [vmem:[%s0 + $0x18] sm:$0xff]
  %v25 = vld [vmem:[%s1] sm:$0xf]
  %v26 = vld [vmem:[%s1 + $0x4] sm:$0xf]
  %v27 = vld [vmem:[%s1 + $0x8] sm:$0xf]
  %v28 = vld [vmem:[%s1 + $0xc] sm:$0xf]
  %v29 = vld [vmem:[%s1 + $0x10] sm:$0xf]
  %v30 = vld [vmem:[%s1 + $0x14] sm:$0xf]
  %v31 = vld [vmem:[%s1 + $0x18] sm:$0xf]
  %v32 = vld [vmem:[%s1 + $0x1c] sm:$0xf]
  %v33 = vld [vmem:[%s1 + $0x20] sm:$0xf]
  %v34 = vld [vmem:[%s1 + $0x24] sm:$0xf]
  %v35 = vld [vmem:[%s1 + $0x28] sm:$0xf]
  %v36 = vld [vmem:[%s1 + $0x2c] sm:$0xf]
  %v37 = vld [vmem:[%s1 + $0x30] sm:$0xf]
  %v38 = vld [vmem:[%s1 + $0x34] sm:$0xf]
  %v39 = vld [vmem:[%s1 + $0x38] sm:$0xf]
  %v40 = vld [vmem:[%s1 + $0x3c] sm:$0xf]
  %v41 = vld [vmem:[%s1 + $0x40] sm:$0xf]
  %v42 = vld [vmem:[%s1 + $0x44] sm:$0xf]
  %v43 = vld [vmem:[%s1 + $0x48] sm:$0xf]
  %v44 = vld [vmem:[%s1 + $0x4c] sm:$0xf]
  %v45 = vld [vmem:[%s1 + $0x50] sm:$0xf]
  %v46 = vld [vmem:[%s1 + $0x54] sm:$0xf]
  %v47 = vld [vmem:[%s1 + $0x58] sm:$0xf]
  %v48 = vld [vmem:[%s1 + $0x5c] sm:$0xf]
  %v49 = vld [vmem:[%s1 + $0x60] sm:$0xf]
  %v50 = vld [vmem:[%s1 + $0x64] sm:$0xf]
  %v51 = vld [vmem:[%s1 + $0x68] sm:$0xf]
  %v52 = vld [vmem:[%s1 + $0x6c] sm:$0xf]
  %v53 = vld [vmem:[%s1 + $0x70] sm:$0xf]
  %v54 = vld [vmem:[%s1 + $0x74] sm:$0xf]
  %v55 = vld [vmem:[%s1 + $0x78] sm:$0xf]
  %v56 = vld [vmem:[%s1 + $0x7c] sm:$0xf]
  %v57 = vld [vmem:[%s1 + $0x80] sm:$0xf]
  %v58 = vld [vmem:[%s1 + $0x84] sm:$0xf]
  %v59 = vld [vmem:[%s1 + $0x88] sm:$0xf]
  %v60 = vld [vmem:[%s1 + $0x8c] sm:$0xf]
  %v61 = vld [vmem:[%s1 + $0x90] sm:$0xf]
  %v62 = vld [vmem:[%s1 + $0x94] sm:$0xf]
  %v63 = vld [vmem:[%s1 + $0x98] sm:$0xf]
  %v64 = vld [vmem:[%s1 + $0x9c] sm:$0xf]
  %v65 = vld [vmem:[%s1 + $0xa0] sm:$0xf]
  %v66 = vld [vmem:[%s1 + $0xa4] sm:$0xf]
  %v67 = vld [vmem:[%s1 + $0xa8] sm:$0xf]
  %v68 = vld [vmem:[%s1 + $0xac] sm:$0xf]
  %v69 = vld [vmem:[%s1 + $0xb0] sm:$0xf]
  %v70 = vld [vmem:[%s1 + $0xb4] sm:$0xf]
  %v71 = vld [vmem:[%s1 + $0xb8] sm:$0xf]
  %v72 = vld [vmem:[%s1 + $0xbc] sm:$0xf]
  %v73 = vld [vmem:[%s1 + $0xc0] sm:$0xf]
  %v74 = vld [vmem:[%s1 + $0xc4] sm:$0xf]
  %v75 = vld [vmem:[%s1 + $0xc8] sm:$0xf]
  %v76 = vld [vmem:[%s1 + $0xcc] sm:$0xf]
  %v77 = vld [vmem:[%s1 + $0xd0] sm:$0xf]
  %v78 = vld [vmem:[%s1 + $0xd4] sm:$0xf]
  %v79 = vld [vmem:[%s2] sm:$0xff]
  %v80 = vld [vmem:[%s2 + $0x8] sm:$0xff]
  %82 = vset.pattern.permute.xlu0 0
  %83 = vperm.xlu0 %82, %v79
  %v84 = vpop.permute.xlu0 %83
  %87 = vset.pattern.permute.xlu0 0
  %88 = vperm.xlu0 %87, %v80
  %v89 = vpop.permute.xlu0 %88
  %v95 = vunpack.c.l.b16 %v21
  %v96 = vunpack.c.h.b16 %v21
  %v97 = vunpack.c.l.b16 %v22
  %v98 = vunpack.c.h.b16 %v22
  %v99 = vunpack.c.l.b16 %v23
  %v100 = vunpack.c.h.b16 %v23
  %v101 = vunpack.c.l.b16 %v24
  %v102 = vunpack.c.h.b16 %v24
  %v103 = vpack.c.b16 %v99, %v95
  %v104 = vpack.c.b16 %v100, %v96
  %v105 = vpack.c.b16 %v101, %v97
  %v106 = vpack.c.b16 %v102, %v98
  %v164 = vunpack.c.l.b16 %v25
  %v165 = vunpack.c.l.b16 %v26
  %v166 = vunpack.c.l.b16 %v27
  %v167 = vunpack.c.l.b16 %v28
  %v168 = vunpack.c.l.b16 %v29
  %v169 = vunpack.c.l.b16 %v30
  %v170 = vunpack.c.l.b16 %v31
  %v171 = vunpack.c.l.b16 %v32
  %v172 = vunpack.c.l.b16 %v33
  %v173 = vunpack.c.l.b16 %v34
  %v174 = vunpack.c.l.b16 %v35
  %v175 = vunpack.c.l.b16 %v36
  %v176 = vunpack.c.l.b16 %v37
  %v177 = vunpack.c.l.b16 %v38
  %v178 = vunpack.c.l.b16 %v39
  %v179 = vunpack.c.l.b16 %v40
  %v180 = vunpack.c.l.b16 %v41
  %v181 = vunpack.c.l.b16 %v42
  %v182 = vunpack.c.l.b16 %v43
  %v183 = vunpack.c.l.b16 %v44
  %v184 = vunpack.c.l.b16 %v45
  %v185 = vunpack.c.l.b16 %v46
  %v186 = vunpack.c.l.b16 %v47
  %v187 = vunpack.c.l.b16 %v48
  %v188 = vunpack.c.l.b16 %v49
  %v189 = vunpack.c.l.b16 %v50
  %v190 = vunpack.c.l.b16 %v51
  %v191 = vunpack.c.l.b16 %v52
  %v192 = vunpack.c.l.b16 %v53
  %v193 = vunpack.c.l.b16 %v54
  %v194 = vunpack.c.l.b16 %v55
  %v195 = vunpack.c.l.b16 %v56
  %v196 = vunpack.c.l.b16 %v57
  %v197 = vunpack.c.l.b16 %v58
  %v198 = vunpack.c.l.b16 %v59
  %v199 = vunpack.c.l.b16 %v60
  %v200 = vunpack.c.l.b16 %v61
  %v201 = vunpack.c.l.b16 %v62
  %v202 = vunpack.c.l.b16 %v63
  %v203 = vunpack.c.l.b16 %v64
  %v204 = vunpack.c.l.b16 %v65
  %v205 = vunpack.c.l.b16 %v66
  %v206 = vunpack.c.l.b16 %v67
  %v207 = vunpack.c.l.b16 %v68
  %v208 = vunpack.c.l.b16 %v69
  %v209 = vunpack.c.l.b16 %v70
  %v210 = vunpack.c.l.b16 %v71
  %v211 = vunpack.c.l.b16 %v72
  %v212 = vunpack.c.l.b16 %v73
  %v213 = vunpack.c.l.b16 %v74
  %v214 = vunpack.c.l.b16 %v75
  %v215 = vunpack.c.l.b16 %v76
  %v216 = vunpack.c.l.b16 %v77
  %v217 = vunpack.c.l.b16 %v78
  %v218 = vpack.c.b16 %v165, %v164
  %v219 = vpack.c.b16 %v167, %v166
  %v220 = vpack.c.b16 %v169, %v168
  %v221 = vpack.c.b16 %v171, %v170
  %v222 = vpack.c.b16 %v173, %v172
  %v223 = vpack.c.b16 %v175, %v174
  %v224 = vpack.c.b16 %v177, %v176
  %v225 = vpack.c.b16 %v179, %v178
  %v226 = vpack.c.b16 %v181, %v180
  %v227 = vpack.c.b16 %v183, %v182
  %v228 = vpack.c.b16 %v185, %v184
  %v229 = vpack.c.b16 %v187, %v186
  %v230 = vpack.c.b16 %v189, %v188
  %v231 = vpack.c.b16 %v191, %v190
  %v232 = vpack.c.b16 %v193, %v192
  %v233 = vpack.c.b16 %v195, %v194
  %v234 = vpack.c.b16 %v197, %v196
  %v235 = vpack.c.b16 %v199, %v198
  %v236 = vpack.c.b16 %v201, %v200
  %v237 = vpack.c.b16 %v203, %v202
  %v238 = vpack.c.b16 %v205, %v204
  %v239 = vpack.c.b16 %v207, %v206
  %v240 = vpack.c.b16 %v209, %v208
  %v241 = vpack.c.b16 %v211, %v210
  %v242 = vpack.c.b16 %v213, %v212
  %v243 = vpack.c.b16 %v215, %v214
  %v244 = vpack.c.b16 %v217, %v216
  %vm272 = vcmask 392192
  %v274 = vsel %vm272, %v106, 0
  %276 = vmatprep.subr.bf16.mxu0 0
  %277 = vmatpush1.bf16.msra.mxu0 %v225
  %278 = vmatprep.subr.bf16.mxu0 0
  %279 = vmatpush1.bf16.msra.mxu0 %v224
  %280 = vmatprep.subr.bf16.mxu0 0
  %281 = vmatpush1.bf16.msra.mxu0 %v223
  %282 = vmatprep.subr.bf16.mxu0 0
  %283 = vmatpush1.bf16.msra.mxu0 %v222
  %284 = vmatprep.subr.bf16.mxu0 0
  %285 = vmatpush1.bf16.msra.mxu0 %v221
  %286 = vmatprep.subr.bf16.mxu0 0
  %287 = vmatpush1.bf16.msra.mxu0 %v220
  %288 = vmatprep.subr.bf16.mxu0 0
  %289 = vmatpush1.bf16.msra.mxu0 %v219
  %290 = vmatprep.subr.bf16.mxu0 0
  %291 = vmatpush1.bf16.msra.mxu0 %v218
  %292 = vmatprep.subr.bf16.mxu0 0
  %293 = vmatpush2.bf16.msra.mxu0 %v233
  %294 = vmatprep.subr.bf16.mxu0 0
  %295 = vmatpush2.bf16.msra.mxu0 %v232
  %296 = vmatprep.subr.bf16.mxu0 0
  %297 = vmatpush2.bf16.msra.mxu0 %v231
  %298 = vmatprep.subr.bf16.mxu0 0
  %299 = vmatpush2.bf16.msra.mxu0 %v230
  %300 = vmatprep.subr.bf16.mxu0 0
  %301 = vmatpush2.bf16.msra.mxu0 %v229
  %302 = vmatprep.subr.bf16.mxu0 0
  %303 = vmatpush2.bf16.msra.mxu0 %v228
  %304 = vmatprep.subr.bf16.mxu0 0
  %305 = vmatpush2.bf16.msra.mxu0 %v227
  %306 = vmatprep.subr.bf16.mxu0 0
  %307 = vmatpush2.bf16.msra.mxu0 %v226
  %308 = vmatprep.mubr.bf16.mxu0 %v104
  %309 = vmatmul.mubr.bf16.gmra.mxu0 %v103
  %v310 = vpop.f32.mrf.mxu0
  %v311 = vadd.f32 %v84, %v310
  %v312 = vpop.f32.mrf.mxu0
  %v313 = vpop.f32.mrf.mxu0
  %v314 = vadd.f32 %v89, %v313
  %v315 = vpop.f32.mrf.mxu0
  %316 = vdwg.mxu0
  %317 = vmatprep.subr.bf16.mxu0 0
  %318 = vmatpush1.bf16.msra.mxu0 %v241
  %319 = vmatprep.subr.bf16.mxu0 0
  %320 = vmatpush1.bf16.msra.mxu0 %v240
  %321 = vmatprep.subr.bf16.mxu0 0
  %322 = vmatpush1.bf16.msra.mxu0 %v239
  %323 = vmatprep.subr.bf16.mxu0 0
  %324 = vmatpush1.bf16.msra.mxu0 %v238
  %325 = vmatprep.subr.bf16.mxu0 0
  %326 = vmatpush1.bf16.msra.mxu0 %v237
  %327 = vmatprep.subr.bf16.mxu0 0
  %328 = vmatpush1.bf16.msra.mxu0 %v236
  %329 = vmatprep.subr.bf16.mxu0 0
  %330 = vmatpush1.bf16.msra.mxu0 %v235
  %331 = vmatprep.subr.bf16.mxu0 0
  %332 = vmatpush1.bf16.msra.mxu0 %v234
  %333 = vmatprep.subr.bf16.mxu0 0
  %334 = vmatpush2.bf16.msra.mxu0 0
  %335 = vmatprep.subr.bf16.mxu0 0
  %336 = vmatpush2.bf16.msra.mxu0 0
  %337 = vmatprep.subr.bf16.mxu0 0
  %338 = vmatpush2.bf16.msra.mxu0 0
  %339 = vmatprep.subr.bf16.mxu0 0
  %340 = vmatpush2.bf16.msra.mxu0 0
  %341 = vmatprep.subr.bf16.mxu0 0
  %342 = vmatpush2.bf16.msra.mxu0 0
  %343 = vmatprep.subr.bf16.mxu0 0
  %344 = vmatpush2.bf16.msra.mxu0 %v244
  %345 = vmatprep.subr.bf16.mxu0 0
  %346 = vmatpush2.bf16.msra.mxu0 %v243
  %347 = vmatprep.subr.bf16.mxu0 0
  %348 = vmatpush2.bf16.msra.mxu0 %v242
  %349 = vmatprep.mubr.bf16.mxu0 %v274
  %350 = vmatmul.mubr.bf16.gmra.mxu0 %v105
  %v351 = vpop.f32.mrf.mxu0
  %v352 = vadd.f32 %v311, %v351
  %v353 = vpop.f32.mrf.mxu0
  %v354 = vpop.f32.mrf.mxu0
  %v355 = vadd.f32 %v314, %v354
  %v356 = vpop.f32.mrf.mxu0
  %357 = vdwg.mxu0
  %358 = vadd.xlane.f32.xlu0 %v352
  %v359 = vpop.xlane.xlu0 %358
  %360 = vadd.xlane.f32.xlu0 %v355
  %v361 = vpop.xlane.xlu0 %360
  %v362 = vmul.f32 %v352, %v352
  %v363 = vmul.f32 %v355, %v355
  %364 = vadd.xlane.f32.xlu0 %v362
  %v365 = vpop.xlane.xlu0 %364
  %366 = vadd.xlane.f32.xlu0 %v363
  %v367 = vpop.xlane.xlu0 %366
  %v368 = vmul.f32 %v359, 0.0078125
  %v369 = vmul.f32 %v361, 0.0078125
  %v370 = vmul.f32 %v365, 0.0078125
  %v371 = vmul.f32 %v367, 0.0078125
  %v372 = vmul.f32 %v368, %v368
  %v373 = vmul.f32 %v369, %v369
  %v374 = vsub.f32 %v370, %v372
  %v375 = vsub.f32 %v371, %v373
  %v376 = vmax.f32 %v374, 0.0
  %v377 = vmax.f32 %v375, 0.0
  %v378 = vld [vmem:[%s3] sm:$0xff]
  %v379 = vld [vmem:[%s3 + $0x8] sm:$0xff]
  %v380 = vadd.f32 %v376, 1e-05
  %v381 = vadd.f32 %v377, 1e-05
  %v382 = vrsqrt.pop %v380
  %v383 = vrsqrt.pop %v381
  %v384 = vmul.f32 %v378, %v382
  %v385 = vmul.f32 %v379, %v383
  %v386 = vld [vmem:[%s4] sm:$0xff]
  %v387 = vld [vmem:[%s4 + $0x8] sm:$0xff]
  %v388 = vmul.f32 %v368, %v384
  %v389 = vmul.f32 %v369, %v385
  %v390 = vsub.f32 %v386, %v388
  %v391 = vsub.f32 %v387, %v389
  %393 = vset.pattern.permute.xlu0 0
  %394 = vperm.xlu0 %393, %v384
  %v395 = vpop.permute.xlu0 %394
  %398 = vset.pattern.permute.xlu0 0
  %399 = vperm.xlu0 %398, %v385
  %v400 = vpop.permute.xlu0 %399
  %v402 = vmul.f32 %v352, %v395
  %v403 = vmul.f32 %v355, %v400
  %405 = vset.pattern.permute.xlu0 0
  %406 = vperm.xlu0 %405, %v390
  %v407 = vpop.permute.xlu0 %406
  %410 = vset.pattern.permute.xlu0 0
  %411 = vperm.xlu0 %410, %v391
  %v412 = vpop.permute.xlu0 %411
  %v414 = vadd.f32 %v402, %v407
  %v415 = vadd.f32 %v403, %v412
  %vm416 = vcmp.ge.f32.partialorder %v414, 0.0
  %vm417 = vcmp.ge.f32.partialorder %v415, 0.0
  %v418 = vmul.f32 %v414, 0.01
  %v419 = vmul.f32 %v415, 0.01
  %v420 = vsel %vm416, %v414, %v418
  %v421 = vsel %vm417, %v415, %v419
  %v422 = vpack.c.bf16 %v421, %v420
  %v424 = vunpack.c.l.b16 %v422
  %v425 = vunpack.c.h.b16 %v422
  %v426 = vpack.c.b16 %v424, %v424
  %v427 = vpack.c.b16 %v425, %v425
  %430 = vst [vmem:[%s5] sm:$0xf] %v426
  %431 = vst [vmem:[%s5 + $0x4] sm:$0xf] %v427
  // Predicated region
  $region22: #{svs_decoder_forward.22} parent=0 // pred_check
    _
  $region23: #{svs_decoder_forward.22} parent=0 // pred_check_branch
    %433 = sbr.rel (0) target = $region25
  $region24: #{svs_decoder_forward.22} parent=0 // pred_region
    _
  $region25: #{svs_decoder_forward.22} parent=0 // pred_fallthru
    _
  // Predicated region
  $region26: #{svs_decoder_forward.22} parent=0 // pred_check
    _
  $region27: #{svs_decoder_forward.22} parent=0 // pred_check_branch
    %435 = sbr.rel (0) target = $region29
  $region28: #{svs_decoder_forward.22} parent=0 // pred_region
    _
  $region29: #{svs_decoder_forward.22} parent=0 // pred_fallthru
    _

// kernel: svs_decoder_forward.23
$region0: #{svs_decoder_forward.23}
  #allocation0 [shape = 'u32[]', space=smem, size = 0x4, offset = 0x4, fixed_abs, tag = 'smem constant byte address 0x4 - core index']
  #allocation1 [shape = 'u32[144,128]{1,0:T(1,128)}', space=vmem, size = 0x12000, scoped, tag = 'internal scratch']
  %s0 = inlined_call_operand.vmem [shape: bf16[16,432], index: 0, kind: input, shape index: {}]
  %s1 = inlined_call_operand.vmem [shape: bf16[432,128], index: 1, kind: input, shape index: {}]
  %s2 = inlined_call_operand.vmem [shape: f32[16,1], index: 2, kind: input, shape index: {}]
  %s3 = inlined_call_operand.vmem [shape: f32[16,128], index: 3, kind: output, shape index: {0}]
  %s4 = inlined_call_operand.vmem [shape: f32[16,1], index: 4, kind: output, shape index: {1}]
  %s5 = inlined_call_operand.vmem [shape: f32[16,1], index: 5, kind: output, shape index: {2}]
  %s6 = inlined_call_operand.vmem [shape: f32[2,16,1], index: 6, kind: output, shape index: {3}]
  %7 = xla_tuple %s3, %s4, %s5, %s6
  %s8 = sld [smem:[#allocation0]]
  $region46: #{svs_decoder_forward.23} parent=0
    _
  %s10 = ssub.s32 1, %s8
  %s11 = scalar_select 0, %s10, %s8
  // Predicated region
  $region2: #{svs_decoder_forward.23} parent=0 // pred_check
    _
  $region3: #{svs_decoder_forward.23} parent=0 // pred_check_branch
    %13 = sbr.rel (0) target = $region5
  $region4: #{svs_decoder_forward.23} parent=0 // pred_region
    _
  $region5: #{svs_decoder_forward.23} parent=0 // pred_fallthru
    _
  // Predicated region
  $region6: #{svs_decoder_forward.23} parent=0 // pred_check
    _
  $region7: #{svs_decoder_forward.23} parent=0 // pred_check_branch
    %15 = sbr.rel (0) target = $region9
  $region8: #{svs_decoder_forward.23} parent=0 // pred_region
    _
  $region9: #{svs_decoder_forward.23} parent=0 // pred_fallthru
    _
  // Predicated region
  $region10: #{svs_decoder_forward.23} parent=0 // pred_check
    _
  $region11: #{svs_decoder_forward.23} parent=0 // pred_check_branch
    %17 = sbr.rel (0) target = $region13
  $region12: #{svs_decoder_forward.23} parent=0 // pred_region
    _
  $region13: #{svs_decoder_forward.23} parent=0 // pred_fallthru
    _
  %v19 = vld [vmem:[%s0] sm:$0xff]
  %v20 = vld [vmem:[%s0 + $0x8] sm:$0xff]
  %v21 = vld [vmem:[%s0 + $0x10] sm:$0xff]
  %v22 = vld [vmem:[%s0 + $0x18] sm:$0xff]
  %v23 = vld [vmem:[%s1] sm:$0xf]
  %v24 = vld [vmem:[%s1 + $0x4] sm:$0xf]
  %v25 = vld [vmem:[%s1 + $0x8] sm:$0xf]
  %v26 = vld [vmem:[%s1 + $0xc] sm:$0xf]
  %v27 = vld [vmem:[%s1 + $0x10] sm:$0xf]
  %v28 = vld [vmem:[%s1 + $0x14] sm:$0xf]
  %v29 = vld [vmem:[%s1 + $0x18] sm:$0xf]
  %v30 = vld [vmem:[%s1 + $0x1c] sm:$0xf]
  %v31 = vld [vmem:[%s1 + $0x20] sm:$0xf]
  %v32 = vld [vmem:[%s1 + $0x24] sm:$0xf]
  %v33 = vld [vmem:[%s1 + $0x28] sm:$0xf]
  %v34 = vld [vmem:[%s1 + $0x2c] sm:$0xf]
  %v35 = vld [vmem:[%s1 + $0x30] sm:$0xf]
  %v36 = vld [vmem:[%s1 + $0x34] sm:$0xf]
  %v37 = vld [vmem:[%s1 + $0x38] sm:$0xf]
  %v38 = vld [vmem:[%s1 + $0x3c] sm:$0xf]
  %v39 = vld [vmem:[%s1 + $0x40] sm:$0xf]
  %v40 = vld [vmem:[%s1 + $0x44] sm:$0xf]
  %v41 = vld [vmem:[%s1 + $0x48] sm:$0xf]
  %v42 = vld [vmem:[%s1 + $0x4c] sm:$0xf]
  %v43 = vld [vmem:[%s1 + $0x50] sm:$0xf]
  %v44 = vld [vmem:[%s1 + $0x54] sm:$0xf]
  %v45 = vld [vmem:[%s1 + $0x58] sm:$0xf]
  %v46 = vld [vmem:[%s1 + $0x5c] sm:$0xf]
  %v47 = vld [vmem:[%s1 + $0x60] sm:$0xf]
  %v48 = vld [vmem:[%s1 + $0x64] sm:$0xf]
  %v49 = vld [vmem:[%s1 + $0x68] sm:$0xf]
  %v50 = vld [vmem:[%s1 + $0x6c] sm:$0xf]
  %v51 = vld [vmem:[%s1 + $0x70] sm:$0xf]
  %v52 = vld [vmem:[%s1 + $0x74] sm:$0xf]
  %v53 = vld [vmem:[%s1 + $0x78] sm:$0xf]
  %v54 = vld [vmem:[%s1 + $0x7c] sm:$0xf]
  %v55 = vld [vmem:[%s1 + $0x80] sm:$0xf]
  %v56 = vld [vmem:[%s1 + $0x84] sm:$0xf]
  %v57 = vld [vmem:[%s1 + $0x88] sm:$0xf]
  %v58 = vld [vmem:[%s1 + $0x8c] sm:$0xf]
  %v59 = vld [vmem:[%s1 + $0x90] sm:$0xf]
  %v60 = vld [vmem:[%s1 + $0x94] sm:$0xf]
  %v61 = vld [vmem:[%s1 + $0x98] sm:$0xf]
  %v62 = vld [vmem:[%s1 + $0x9c] sm:$0xf]
  %v63 = vld [vmem:[%s1 + $0xa0] sm:$0xf]
  %v64 = vld [vmem:[%s1 + $0xa4] sm:$0xf]
  %v65 = vld [vmem:[%s1 + $0xa8] sm:$0xf]
  %v66 = vld [vmem:[%s1 + $0xac] sm:$0xf]
  %v67 = vld [vmem:[%s1 + $0xb0] sm:$0xf]
  %v68 = vld [vmem:[%s1 + $0xb4] sm:$0xf]
  %v69 = vld [vmem:[%s1 + $0xb8] sm:$0xf]
  %v70 = vld [vmem:[%s1 + $0xbc] sm:$0xf]
  %v71 = vld [vmem:[%s1 + $0xc0] sm:$0xf]
  %v72 = vld [vmem:[%s1 + $0xc4] sm:$0xf]
  %v73 = vld [vmem:[%s1 + $0xc8] sm:$0xf]
  %v74 = vld [vmem:[%s1 + $0xcc] sm:$0xf]
  %v75 = vld [vmem:[%s1 + $0xd0] sm:$0xf]
  %v76 = vld [vmem:[%s1 + $0xd4] sm:$0xf]
  %v77 = vld [vmem:[%s2] sm:$0xff]
  %v78 = vld [vmem:[%s2 + $0x8] sm:$0xff]
  %80 = vset.pattern.permute.xlu0 0
  %81 = vperm.xlu0 %80, %v77
  %v82 = vpop.permute.xlu0 %81
  %85 = vset.pattern.permute.xlu0 0
  %86 = vperm.xlu0 %85, %v78
  %v87 = vpop.permute.xlu0 %86
  %v93 = vunpack.c.l.b16 %v19
  %v94 = vunpack.c.h.b16 %v19
  %v95 = vunpack.c.l.b16 %v20
  %v96 = vunpack.c.h.b16 %v20
  %v97 = vunpack.c.l.b16 %v21
  %v98 = vunpack.c.h.b16 %v21
  %v99 = vunpack.c.l.b16 %v22
  %v100 = vunpack.c.h.b16 %v22
  %v101 = vpack.c.b16 %v97, %v93
  %v102 = vpack.c.b16 %v98, %v94
  %v103 = vpack.c.b16 %v99, %v95
  %v104 = vpack.c.b16 %v100, %v96
  %v162 = vunpack.c.l.b16 %v23
  %v163 = vunpack.c.l.b16 %v24
  %v164 = vunpack.c.l.b16 %v25
  %v165 = vunpack.c.l.b16 %v26
  %v166 = vunpack.c.l.b16 %v27
  %v167 = vunpack.c.l.b16 %v28
  %v168 = vunpack.c.l.b16 %v29
  %v169 = vunpack.c.l.b16 %v30
  %v170 = vunpack.c.l.b16 %v31
  %v171 = vunpack.c.l.b16 %v32
  %v172 = vunpack.c.l.b16 %v33
  %v173 = vunpack.c.l.b16 %v34
  %v174 = vunpack.c.l.b16 %v35
  %v175 = vunpack.c.l.b16 %v36
  %v176 = vunpack.c.l.b16 %v37
  %v177 = vunpack.c.l.b16 %v38
  %v178 = vunpack.c.l.b16 %v39
  %v179 = vunpack.c.l.b16 %v40
  %v180 = vunpack.c.l.b16 %v41
  %v181 = vunpack.c.l.b16 %v42
  %v182 = vunpack.c.l.b16 %v43
  %v183 = vunpack.c.l.b16 %v44
  %v184 = vunpack.c.l.b16 %v45
  %v185 = vunpack.c.l.b16 %v46
  %v186 = vunpack.c.l.b16 %v47
  %v187 = vunpack.c.l.b16 %v48
  %v188 = vunpack.c.l.b16 %v49
  %v189 = vunpack.c.l.b16 %v50
  %v190 = vunpack.c.l.b16 %v51
  %v191 = vunpack.c.l.b16 %v52
  %v192 = vunpack.c.l.b16 %v53
  %v193 = vunpack.c.l.b16 %v54
  %v194 = vunpack.c.l.b16 %v55
  %v195 = vunpack.c.l.b16 %v56
  %v196 = vunpack.c.l.b16 %v57
  %v197 = vunpack.c.l.b16 %v58
  %v198 = vunpack.c.l.b16 %v59
  %v199 = vunpack.c.l.b16 %v60
  %v200 = vunpack.c.l.b16 %v61
  %v201 = vunpack.c.l.b16 %v62
  %v202 = vunpack.c.l.b16 %v63
  %v203 = vunpack.c.l.b16 %v64
  %v204 = vunpack.c.l.b16 %v65
  %v205 = vunpack.c.l.b16 %v66
  %v206 = vunpack.c.l.b16 %v67
  %v207 = vunpack.c.l.b16 %v68
  %v208 = vunpack.c.l.b16 %v69
  %v209 = vunpack.c.l.b16 %v70
  %v210 = vunpack.c.l.b16 %v71
  %v211 = vunpack.c.l.b16 %v72
  %v212 = vunpack.c.l.b16 %v73
  %v213 = vunpack.c.l.b16 %v74
  %v214 = vunpack.c.l.b16 %v75
  %v215 = vunpack.c.l.b16 %v76
  %v216 = vpack.c.b16 %v163, %v162
  %v217 = vpack.c.b16 %v165, %v164
  %v218 = vpack.c.b16 %v167, %v166
  %v219 = vpack.c.b16 %v169, %v168
  %v220 = vpack.c.b16 %v171, %v170
  %v221 = vpack.c.b16 %v173, %v172
  %v222 = vpack.c.b16 %v175, %v174
  %v223 = vpack.c.b16 %v177, %v176
  %v224 = vpack.c.b16 %v179, %v178
  %v225 = vpack.c.b16 %v181, %v180
  %v226 = vpack.c.b16 %v183, %v182
  %v227 = vpack.c.b16 %v185, %v184
  %v228 = vpack.c.b16 %v187, %v186
  %v229 = vpack.c.b16 %v189, %v188
  %v230 = vpack.c.b16 %v191, %v190
  %v231 = vpack.c.b16 %v193, %v192
  %v232 = vpack.c.b16 %v195, %v194
  %v233 = vpack.c.b16 %v197, %v196
  %v234 = vpack.c.b16 %v199, %v198
  %v235 = vpack.c.b16 %v201, %v200
  %v236 = vpack.c.b16 %v203, %v202
  %v237 = vpack.c.b16 %v205, %v204
  %v238 = vpack.c.b16 %v207, %v206
  %v239 = vpack.c.b16 %v209, %v208
  %v240 = vpack.c.b16 %v211, %v210
  %v241 = vpack.c.b16 %v213, %v212
  %v242 = vpack.c.b16 %v215, %v214
  %vm270 = vcmask 392192
  %v272 = vsel %vm270, %v104, 0
  %274 = vmatprep.subr.bf16.mxu0 0
  %275 = vmatpush1.bf16.msra.mxu0 %v223
  %276 = vmatprep.subr.bf16.mxu0 0
  %277 = vmatpush1.bf16.msra.mxu0 %v222
  %278 = vmatprep.subr.bf16.mxu0 0
  %279 = vmatpush1.bf16.msra.mxu0 %v221
  %280 = vmatprep.subr.bf16.mxu0 0
  %281 = vmatpush1.bf16.msra.mxu0 %v220
  %282 = vmatprep.subr.bf16.mxu0 0
  %283 = vmatpush1.bf16.msra.mxu0 %v219
  %284 = vmatprep.subr.bf16.mxu0 0
  %285 = vmatpush1.bf16.msra.mxu0 %v218
  %286 = vmatprep.subr.bf16.mxu0 0
  %287 = vmatpush1.bf16.msra.mxu0 %v217
  %288 = vmatprep.subr.bf16.mxu0 0
  %289 = vmatpush1.bf16.msra.mxu0 %v216
  %290 = vmatprep.subr.bf16.mxu0 0
  %291 = vmatpush2.bf16.msra.mxu0 %v231
  %292 = vmatprep.subr.bf16.mxu0 0
  %293 = vmatpush2.bf16.msra.mxu0 %v230
  %294 = vmatprep.subr.bf16.mxu0 0
  %295 = vmatpush2.bf16.msra.mxu0 %v229
  %296 = vmatprep.subr.bf16.mxu0 0
  %297 = vmatpush2.bf16.msra.mxu0 %v228
  %298 = vmatprep.subr.bf16.mxu0 0
  %299 = vmatpush2.bf16.msra.mxu0 %v227
  %300 = vmatprep.subr.bf16.mxu0 0
  %301 = vmatpush2.bf16.msra.mxu0 %v226
  %302 = vmatprep.subr.bf16.mxu0 0
  %303 = vmatpush2.bf16.msra.mxu0 %v225
  %304 = vmatprep.subr.bf16.mxu0 0
  %305 = vmatpush2.bf16.msra.mxu0 %v224
  %306 = vmatprep.mubr.bf16.mxu0 %v102
  %307 = vmatmul.mubr.bf16.gmra.mxu0 %v101
  %v308 = vpop.f32.mrf.mxu0
  %v309 = vadd.f32 %v82, %v308
  %v310 = vpop.f32.mrf.mxu0
  %v311 = vpop.f32.mrf.mxu0
  %v312 = vadd.f32 %v87, %v311
  %v313 = vpop.f32.mrf.mxu0
  %314 = vdwg.mxu0
  %315 = vmatprep.subr.bf16.mxu0 0
  %316 = vmatpush1.bf16.msra.mxu0 %v239
  %317 = vmatprep.subr.bf16.mxu0 0
  %318 = vmatpush1.bf16.msra.mxu0 %v238
  %319 = vmatprep.subr.bf16.mxu0 0
  %320 = vmatpush1.bf16.msra.mxu0 %v237
  %321 = vmatprep.subr.bf16.mxu0 0
  %322 = vmatpush1.bf16.msra.mxu0 %v236
  %323 = vmatprep.subr.bf16.mxu0 0
  %324 = vmatpush1.bf16.msra.mxu0 %v235
  %325 = vmatprep.subr.bf16.mxu0 0
  %326 = vmatpush1.bf16.msra.mxu0 %v234
  %327 = vmatprep.subr.bf16.mxu0 0
  %328 = vmatpush1.bf16.msra.mxu0 %v233
  %329 = vmatprep.subr.bf16.mxu0 0
  %330 = vmatpush1.bf16.msra.mxu0 %v232
  %331 = vmatprep.subr.bf16.mxu0 0
  %332 = vmatpush2.bf16.msra.mxu0 0
  %333 = vmatprep.subr.bf16.mxu0 0
  %334 = vmatpush2.bf16.msra.mxu0 0
  %335 = vmatprep.subr.bf16.mxu0 0
  %336 = vmatpush2.bf16.msra.mxu0 0
  %337 = vmatprep.subr.bf16.mxu0 0
  %338 = vmatpush2.bf16.msra.mxu0 0
  %339 = vmatprep.subr.bf16.mxu0 0
  %340 = vmatpush2.bf16.msra.mxu0 0
  %341 = vmatprep.subr.bf16.mxu0 0
  %342 = vmatpush2.bf16.msra.mxu0 %v242
  %343 = vmatprep.subr.bf16.mxu0 0
  %344 = vmatpush2.bf16.msra.mxu0 %v241
  %345 = vmatprep.subr.bf16.mxu0 0
  %346 = vmatpush2.bf16.msra.mxu0 %v240
  %347 = vmatprep.mubr.bf16.mxu0 %v272
  %348 = vmatmul.mubr.bf16.gmra.mxu0 %v103
  %v349 = vpop.f32.mrf.mxu0
  %v350 = vadd.f32 %v309, %v349
  %v351 = vpop.f32.mrf.mxu0
  %v352 = vpop.f32.mrf.mxu0
  %v353 = vadd.f32 %v312, %v352
  %v354 = vpop.f32.mrf.mxu0
  %355 = vdwg.mxu0
  %356 = vst [vmem:[%s3] sm:$0xff] %v350
  %357 = vst [vmem:[%s3 + $0x8] sm:$0xff] %v353
  %358 = vadd.xlane.f32.xlu0 %v350
  %v359 = vpop.xlane.xlu0 %358
  %360 = vadd.xlane.f32.xlu0 %v353
  %v361 = vpop.xlane.xlu0 %360
  %vm362 = vcmask 7168
  %363 = vst.msk [vmem:[%s4] sm:$0xff] %vm362, %v359
  %364 = vst.msk [vmem:[%s4 + $0x8] sm:$0xff] %vm362, %v361
  %v365 = vmul.f32 %v350, %v350
  %v366 = vmul.f32 %v353, %v353
  %367 = vadd.xlane.f32.xlu0 %v365
  %v368 = vpop.xlane.xlu0 %367
  %369 = vadd.xlane.f32.xlu0 %v366
  %v370 = vpop.xlane.xlu0 %369
  %371 = vst.msk [vmem:[%s5] sm:$0xff] %vm362, %v368
  %372 = vst.msk [vmem:[%s5 + $0x8] sm:$0xff] %vm362, %v370
  %v373 = vlaneseq
  %v374 = vand.u32 %v373, 127
  %vm375 = vcmp.ge.s32.totalorder %v374, 0
  %vm376 = vcmp.lt.s32.totalorder %v374, 64
  %vm377 = vmand %vm375, %vm376
  %v378 = vsel %vm377, %v350, 0.0
  %v379 = vsel %vm377, %v353, 0.0
  %380 = vadd.xlane.f32.xlu0 %v378
  %v381 = vpop.xlane.xlu0 %380
  %382 = vadd.xlane.f32.xlu0 %v379
  %v383 = vpop.xlane.xlu0 %382
  %v384 = vmul.f32 %v381, 0.015625
  %v385 = vmul.f32 %v383, 0.015625
  %386 = vst.msk [vmem:[%s6] sm:$0xff] %vm362, %v384
  %387 = vst.msk [vmem:[%s6 + $0x8] sm:$0xff] %vm362, %v385
  %vm388 = vcmp.ge.s32.totalorder %v374, 64
  %vm389 = vcmp.lt.s32.totalorder %v374, 128
  %vm390 = vmand %vm388, %vm389
  %v391 = vsel %vm390, %v350, 0.0
  %v392 = vsel %vm390, %v353, 0.0
  %393 = vadd.xlane.f32.xlu0 %v391
  %v394 = vpop.xlane.xlu0 %393
  %395 = vadd.xlane.f32.xlu0 %v392
  %v396 = vpop.xlane.xlu0 %395
  %v397 = vmul.f32 %v394, 0.015625
  %v398 = vmul.f32 %v396, 0.015625
  %s399 = scalar_lea.vmem %s6, 16
  %400 = vst.msk [vmem:[%s399] sm:$0xff] %vm362, %v397
  %401 = vst.msk [vmem:[%s399 + $0x8] sm:$0xff] %vm362, %v398
  // Predicated region
  $region14: #{svs_decoder_forward.23} parent=0 // pred_check
    _
  $region15: #{svs_decoder_forward.23} parent=0 // pred_check_branch
    %403 = sbr.rel (0) target = $region17
  $region16: #{svs_decoder_forward.23} parent=0 // pred_region
    _
  $region17: #{svs_decoder_forward.23} parent=0 // pred_fallthru
    _
  // Predicated region
  $region18: #{svs_decoder_forward.23} parent=0 // pred_check
    _
  $region19: #{svs_decoder_forward.23} parent=0 // pred_check_branch
    %405 = sbr.rel (0) target = $region21
  $region20: #{svs_decoder_forward.23} parent=0 // pred_region
    _
  $region21: #{svs_decoder_forward.23} parent=0 // pred_fallthru
    _
  // Predicated region
  $region22: #{svs_decoder_forward.23} parent=0 // pred_check
    _
  $region23: #{svs_decoder_forward.23} parent=0 // pred_check_branch
    %407 = sbr.rel (0) target = $region25
  $region24: #{svs_decoder_forward.23} parent=0 // pred_region
    _
  $region25: #{svs_decoder_forward.23} parent=0 // pred_fallthru
    _
  // Predicated region
  $region26: #{svs_decoder_forward.23} parent=0 // pred_check
    _
  $region27: #{svs_decoder_forward.23} parent=0 // pred_check_branch
    %409 = sbr.rel (0) target = $region29
  $region28: #{svs_decoder_forward.23} parent=0 // pred_region
    _
  $region29: #{svs_decoder_forward.23} parent=0 // pred_fallthru
    _
  // Predicated region
  $region30: #{svs_decoder_forward.23} parent=0 // pred_check
    _
  $region31: #{svs_decoder_forward.23} parent=0 // pred_check_branch
    %411 = sbr.rel (0) target = $region33
  $region32: #{svs_decoder_forward.23} parent=0 // pred_region
    _
  $region33: #{svs_decoder_forward.23} parent=0 // pred_fallthru
    _
  // Predicated region
  $region34: #{svs_decoder_forward.23} parent=0 // pred_check
    _
  $region35: #{svs_decoder_forward.23} parent=0 // pred_check_branch
    %413 = sbr.rel (0) target = $region37
  $region36: #{svs_decoder_forward.23} parent=0 // pred_region
    _
  $region37: #{svs_decoder_forward.23} parent=0 // pred_fallthru
    _
  // Predicated region
  $region38: #{svs_decoder_forward.23} parent=0 // pred_check
    _
  $region39: #{svs_decoder_forward.23} parent=0 // pred_check_branch
    %415 = sbr.rel (0) target = $region41
  $region40: #{svs_decoder_forward.23} parent=0 // pred_region
    _
  $region41: #{svs_decoder_forward.23} parent=0 // pred_fallthru
    _
  // Predicated region
  $region42: #{svs_decoder_forward.23} parent=0 // pred_check
    _
  $region43: #{svs_decoder_forward.23} parent=0 // pred_check_branch
    %417 = sbr.rel (0) target = $region45
  $region44: #{svs_decoder_forward.23} parent=0 // pred_region
    _
  $region45: #{svs_decoder_forward.23} parent=0 // pred_fallthru
    _

// kernel: svs_decoder_forward.24
$region0: #{svs_decoder_forward.24}
  #allocation0 [shape = 'u32[]', space=smem, size = 0x4, offset = 0x4, fixed_abs, tag = 'smem constant byte address 0x4 - core index']
  #allocation1 [shape = 'u32[144,128]{1,0:T(1,128)}', space=vmem, size = 0x12000, scoped, tag = 'internal scratch']
  %s0 = inlined_call_operand.vmem [shape: f32[16,128], index: 0, kind: input, shape index: {}]
  %s1 = inlined_call_operand.vmem [shape: f32[16,1], index: 1, kind: input, shape index: {}]
  %s2 = inlined_call_operand.vmem [shape: f32[16,1], index: 2, kind: input, shape index: {}]
  %s3 = inlined_call_operand.vmem [shape: f32[2,16,1], index: 3, kind: input, shape index: {}]
  %s4 = inlined_call_operand.vmem [shape: f32[16,128], index: 4, kind: input, shape index: {}]
  %s5 = inlined_call_operand.vmem [shape: f32[16,1], index: 5, kind: input, shape index: {}]
  %s6 = inlined_call_operand.vmem [shape: f32[16,1], index: 6, kind: input, shape index: {}]
  %s7 = inlined_call_operand.vmem [shape: bf16[16,128], index: 7, kind: output, shape index: {}]
  %s8 = sld [smem:[#allocation0]]
  $region38: #{svs_decoder_forward.24} parent=0
    _
  %s10 = ssub.s32 1, %s8
  %s11 = scalar_select 0, %s10, %s8
  // Predicated region
  $region2: #{svs_decoder_forward.24} parent=0 // pred_check
    _
  $region3: #{svs_decoder_forward.24} parent=0 // pred_check_branch
    %13 = sbr.rel (0) target = $region5
  $region4: #{svs_decoder_forward.24} parent=0 // pred_region
    _
  $region5: #{svs_decoder_forward.24} parent=0 // pred_fallthru
    _
  // Predicated region
  $region6: #{svs_decoder_forward.24} parent=0 // pred_check
    _
  $region7: #{svs_decoder_forward.24} parent=0 // pred_check_branch
    %15 = sbr.rel (0) target = $region9
  $region8: #{svs_decoder_forward.24} parent=0 // pred_region
    _
  $region9: #{svs_decoder_forward.24} parent=0 // pred_fallthru
    _
  // Predicated region
  $region10: #{svs_decoder_forward.24} parent=0 // pred_check
    _
  $region11: #{svs_decoder_forward.24} parent=0 // pred_check_branch
    %17 = sbr.rel (0) target = $region13
  $region12: #{svs_decoder_forward.24} parent=0 // pred_region
    _
  $region13: #{svs_decoder_forward.24} parent=0 // pred_fallthru
    _
  // Predicated region
  $region14: #{svs_decoder_forward.24} parent=0 // pred_check
    _
  $region15: #{svs_decoder_forward.24} parent=0 // pred_check_branch
    %19 = sbr.rel (0) target = $region17
  $region16: #{svs_decoder_forward.24} parent=0 // pred_region
    _
  $region17: #{svs_decoder_forward.24} parent=0 // pred_fallthru
    _
  // Predicated region
  $region18: #{svs_decoder_forward.24} parent=0 // pred_check
    _
  $region19: #{svs_decoder_forward.24} parent=0 // pred_check_branch
    %21 = sbr.rel (0) target = $region21
  $region20: #{svs_decoder_forward.24} parent=0 // pred_region
    _
  $region21: #{svs_decoder_forward.24} parent=0 // pred_fallthru
    _
  // Predicated region
  $region22: #{svs_decoder_forward.24} parent=0 // pred_check
    _
  $region23: #{svs_decoder_forward.24} parent=0 // pred_check_branch
    %23 = sbr.rel (0) target = $region25
  $region24: #{svs_decoder_forward.24} parent=0 // pred_region
    _
  $region25: #{svs_decoder_forward.24} parent=0 // pred_fallthru
    _
  // Predicated region
  $region26: #{svs_decoder_forward.24} parent=0 // pred_check
    _
  $region27: #{svs_decoder_forward.24} parent=0 // pred_check_branch
    %25 = sbr.rel (0) target = $region29
  $region28: #{svs_decoder_forward.24} parent=0 // pred_region
    _
  $region29: #{svs_decoder_forward.24} parent=0 // pred_fallthru
    _
  %v26 = vld [vmem:[%s0] sm:$0xff]
  %v27 = vld [vmem:[%s0 + $0x8] sm:$0xff]
  %v28 = vlaneseq
  %v29 = vand.u32 %v28, 127
  %vm30 = vcmp.ge.s32.totalorder %v29, 0
  %vm31 = vcmp.lt.s32.totalorder %v29, 64
  %vm32 = vmand %vm30, %vm31
  %v33 = vld [vmem:[%s3] sm:$0xff]
  %v34 = vld [vmem:[%s3 + $0x8] sm:$0xff]
  %36 = vset.pattern.permute.xlu0 0
  %37 = vperm.xlu0 %36, %v33
  %v38 = vpop.permute.xlu0 %37
  %41 = vset.pattern.permute.xlu0 0
  %42 = vperm.xlu0 %41, %v34
  %v43 = vpop.permute.xlu0 %42
  %v45 = vsel %vm32, %v38, 0.0
  %v46 = vsel %vm32, %v43, 0.0
  %vm47 = vcmp.ge.s32.totalorder %v29, 64
  %vm48 = vcmp.lt.s32.totalorder %v29, 128
  %vm49 = vmand %vm47, %vm48
  %s50 = scalar_lea.vmem %s3, 16
  %v51 = vld [vmem:[%s50] sm:$0xff]
  %v52 = vld [vmem:[%s50 + $0x8] sm:$0xff]
  %54 = vset.pattern.permute.xlu0 0
  %55 = vperm.xlu0 %54, %v51
  %v56 = vpop.permute.xlu0 %55
  %59 = vset.pattern.permute.xlu0 0
  %60 = vperm.xlu0 %59, %v52
  %v61 = vpop.permute.xlu0 %60
  %v63 = vsel %vm49, %v56, %v45
  %v64 = vsel %vm49, %v61, %v46
  %v65 = vld [vmem:[%s1] sm:$0xff]
  %v66 = vld [vmem:[%s1 + $0x8] sm:$0xff]
  %68 = vset.pattern.permute.xlu0 0
  %69 = vperm.xlu0 %68, %v65
  %v70 = vpop.permute.xlu0 %69
  %73 = vset.pattern.permute.xlu0 0
  %74 = vperm.xlu0 %73, %v66
  %v75 = vpop.permute.xlu0 %74
  %v77 = vmul.f32 %v26, %v70
  %v78 = vmul.f32 %v27, %v75
  %v79 = vld [vmem:[%s2] sm:$0xff]
  %v80 = vld [vmem:[%s2 + $0x8] sm:$0xff]
  %82 = vset.pattern.permute.xlu0 0
  %83 = vperm.xlu0 %82, %v79
  %v84 = vpop.permute.xlu0 %83
  %87 = vset.pattern.permute.xlu0 0
  %88 = vperm.xlu0 %87, %v80
  %v89 = vpop.permute.xlu0 %88
  %v91 = vadd.f32 %v77, %v84
  %v92 = vadd.f32 %v78, %v89
  %v93 = vmul.f32 %v91, %v63
  %v94 = vmul.f32 %v92, %v64
  %v95 = vld [vmem:[%s4] sm:$0xff]
  %v96 = vld [vmem:[%s4 + $0x8] sm:$0xff]
  %v97 = vadd.f32 %v93, %v95
  %v98 = vadd.f32 %v94, %v96
  %vm99 = vcmp.ge.f32.partialorder %v97, 0.0
  %vm100 = vcmp.ge.f32.partialorder %v98, 0.0
  %v101 = vmul.f32 %v97, 0.01
  %v102 = vmul.f32 %v98, 0.01
  %v103 = vsel %vm99, %v97, %v101
  %v104 = vsel %vm100, %v98, %v102
  %105 = vadd.xlane.f32.xlu0 %v103
  %v106 = vpop.xlane.xlu0 %105
  %107 = vadd.xlane.f32.xlu0 %v104
  %v108 = vpop.xlane.xlu0 %107
  %v109 = vmul.f32 %v106, 0.0078125
  %v110 = vmul.f32 %v108, 0.0078125
  %v111 = vmul.f32 %v103, %v103
  %v112 = vmul.f32 %v104, %v104
  %113 = vadd.xlane.f32.xlu0 %v111
  %v114 = vpop.xlane.xlu0 %113
  %115 = vadd.xlane.f32.xlu0 %v112
  %v116 = vpop.xlane.xlu0 %115
  %v117 = vmul.f32 %v114, 0.0078125
  %v118 = vmul.f32 %v116, 0.0078125
  %v119 = vmul.f32 %v109, %v109
  %v120 = vmul.f32 %v110, %v110
  %v121 = vsub.f32 %v117, %v119
  %v122 = vsub.f32 %v118, %v120
  %v123 = vmax.f32 %v121, 0.0
  %v124 = vmax.f32 %v122, 0.0
  %v125 = vld [vmem:[%s5] sm:$0xff]
  %v126 = vld [vmem:[%s5 + $0x8] sm:$0xff]
  %v127 = vadd.f32 %v123, 1e-05
  %v128 = vadd.f32 %v124, 1e-05
  %v129 = vrsqrt.pop %v127
  %v130 = vrsqrt.pop %v128
  %v131 = vmul.f32 %v125, %v129
  %v132 = vmul.f32 %v126, %v130
  %v133 = vld [vmem:[%s6] sm:$0xff]
  %v134 = vld [vmem:[%s6 + $0x8] sm:$0xff]
  %v135 = vmul.f32 %v109, %v131
  %v136 = vmul.f32 %v110, %v132
  %v137 = vsub.f32 %v133, %v135
  %v138 = vsub.f32 %v134, %v136
  %140 = vset.pattern.permute.xlu0 0
  %141 = vperm.xlu0 %140, %v131
  %v142 = vpop.permute.xlu0 %141
  %145 = vset.pattern.permute.xlu0 0
  %146 = vperm.xlu0 %145, %v132
  %v147 = vpop.permute.xlu0 %146
  %v149 = vmul.f32 %v103, %v142
  %v150 = vmul.f32 %v104, %v147
  %152 = vset.pattern.permute.xlu0 0
  %153 = vperm.xlu0 %152, %v137
  %v154 = vpop.permute.xlu0 %153
  %157 = vset.pattern.permute.xlu0 0
  %158 = vperm.xlu0 %157, %v138
  %v159 = vpop.permute.xlu0 %158
  %v161 = vadd.f32 %v149, %v154
  %v162 = vadd.f32 %v150, %v159
  %vm163 = vcmp.ge.f32.partialorder %v161, 0.0
  %vm164 = vcmp.ge.f32.partialorder %v162, 0.0
  %v165 = vmul.f32 %v161, 0.01
  %v166 = vmul.f32 %v162, 0.01
  %v167 = vsel %vm163, %v161, %v165
  %v168 = vsel %vm164, %v162, %v166
  %v169 = vpack.c.bf16 %v168, %v167
  %v171 = vunpack.c.l.b16 %v169
  %v172 = vunpack.c.h.b16 %v169
  %v173 = vpack.c.b16 %v171, %v171
  %v174 = vpack.c.b16 %v172, %v172
  %177 = vst [vmem:[%s7] sm:$0xf] %v173
  %178 = vst [vmem:[%s7 + $0x4] sm:$0xf] %v174
  // Predicated region
  $region30: #{svs_decoder_forward.24} parent=0 // pred_check
    _
  $region31: #{svs_decoder_forward.24} parent=0 // pred_check_branch
    %180 = sbr.rel (0) target = $region33
  $region32: #{svs_decoder_forward.24} parent=0 // pred_region
    _
  $region33: #{svs_decoder_forward.24} parent=0 // pred_fallthru
    _
  // Predicated region
  $region34: #{svs_decoder_forward.24} parent=0 // pred_check
    _
  $region35: #{svs_decoder_forward.24} parent=0 // pred_check_branch
    %182 = sbr.rel (0) target = $region37
  $region36: #{svs_decoder_forward.24} parent=0 // pred_region
    _
  $region37: #{svs_decoder_forward.24} parent=0 // pred_fallthru
    _

// kernel: svs_decoder_forward.25
$region0: #{svs_decoder_forward.25}
  #allocation0 [shape = 'u32[]', space=smem, size = 0x4, offset = 0x4, fixed_abs, tag = 'smem constant byte address 0x4 - core index']
  #allocation1 [shape = 'u32[144,128]{1,0:T(1,128)}', space=vmem, size = 0x12000, scoped, tag = 'internal scratch']
  %s0 = inlined_call_operand.vmem [shape: bf16[8,432], index: 0, kind: input, shape index: {}]
  %s1 = inlined_call_operand.vmem [shape: bf16[432,128], index: 1, kind: input, shape index: {}]
  %s2 = inlined_call_operand.vmem [shape: f32[8,1], index: 2, kind: input, shape index: {}]
  %s3 = inlined_call_operand.vmem [shape: f32[8,128], index: 3, kind: output, shape index: {}]
  %s4 = sld [smem:[#allocation0]]
  $region22: #{svs_decoder_forward.25} parent=0
    _
  %s6 = ssub.s32 1, %s4
  %s7 = scalar_select 0, %s6, %s4
  // Predicated region
  $region2: #{svs_decoder_forward.25} parent=0 // pred_check
    _
  $region3: #{svs_decoder_forward.25} parent=0 // pred_check_branch
    %9 = sbr.rel (0) target = $region5
  $region4: #{svs_decoder_forward.25} parent=0 // pred_region
    _
  $region5: #{svs_decoder_forward.25} parent=0 // pred_fallthru
    _
  // Predicated region
  $region6: #{svs_decoder_forward.25} parent=0 // pred_check
    _
  $region7: #{svs_decoder_forward.25} parent=0 // pred_check_branch
    %11 = sbr.rel (0) target = $region9
  $region8: #{svs_decoder_forward.25} parent=0 // pred_region
    _
  $region9: #{svs_decoder_forward.25} parent=0 // pred_fallthru
    _
  // Predicated region
  $region10: #{svs_decoder_forward.25} parent=0 // pred_check
    _
  $region11: #{svs_decoder_forward.25} parent=0 // pred_check_branch
    %13 = sbr.rel (0) target = $region13
  $region12: #{svs_decoder_forward.25} parent=0 // pred_region
    _
  $region13: #{svs_decoder_forward.25} parent=0 // pred_fallthru
    _
  %v15 = vld [vmem:[%s0] sm:$0xff]
  %v16 = vld [vmem:[%s0 + $0x8] sm:$0xff]
  %v17 = vld [vmem:[%s1] sm:$0xf]
  %v18 = vld [vmem:[%s1 + $0x4] sm:$0xf]
  %v19 = vld [vmem:[%s1 + $0x8] sm:$0xf]
  %v20 = vld [vmem:[%s1 + $0xc] sm:$0xf]
  %v21 = vld [vmem:[%s1 + $0x10] sm:$0xf]
  %v22 = vld [vmem:[%s1 + $0x14] sm:$0xf]
  %v23 = vld [vmem:[%s1 + $0x18] sm:$0xf]
  %v24 = vld [vmem:[%s1 + $0x1c] sm:$0xf]
  %v25 = vld [vmem:[%s1 + $0x20] sm:$0xf]
  %v26 = vld [vmem:[%s1 + $0x24] sm:$0xf]
  %v27 = vld [vmem:[%s1 + $0x28] sm:$0xf]
  %v28 = vld [vmem:[%s1 + $0x2c] sm:$0xf]
  %v29 = vld [vmem:[%s1 + $0x30] sm:$0xf]
  %v30 = vld [vmem:[%s1 + $0x34] sm:$0xf]
  %v31 = vld [vmem:[%s1 + $0x38] sm:$0xf]
  %v32 = vld [vmem:[%s1 + $0x3c] sm:$0xf]
  %v33 = vld [vmem:[%s1 + $0x40] sm:$0xf]
  %v34 = vld [vmem:[%s1 + $0x44] sm:$0xf]
  %v35 = vld [vmem:[%s1 + $0x48] sm:$0xf]
  %v36 = vld [vmem:[%s1 + $0x4c] sm:$0xf]
  %v37 = vld [vmem:[%s1 + $0x50] sm:$0xf]
  %v38 = vld [vmem:[%s1 + $0x54] sm:$0xf]
  %v39 = vld [vmem:[%s1 + $0x58] sm:$0xf]
  %v40 = vld [vmem:[%s1 + $0x5c] sm:$0xf]
  %v41 = vld [vmem:[%s1 + $0x60] sm:$0xf]
  %v42 = vld [vmem:[%s1 + $0x64] sm:$0xf]
  %v43 = vld [vmem:[%s1 + $0x68] sm:$0xf]
  %v44 = vld [vmem:[%s1 + $0x6c] sm:$0xf]
  %v45 = vld [vmem:[%s1 + $0x70] sm:$0xf]
  %v46 = vld [vmem:[%s1 + $0x74] sm:$0xf]
  %v47 = vld [vmem:[%s1 + $0x78] sm:$0xf]
  %v48 = vld [vmem:[%s1 + $0x7c] sm:$0xf]
  %v49 = vld [vmem:[%s1 + $0x80] sm:$0xf]
  %v50 = vld [vmem:[%s1 + $0x84] sm:$0xf]
  %v51 = vld [vmem:[%s1 + $0x88] sm:$0xf]
  %v52 = vld [vmem:[%s1 + $0x8c] sm:$0xf]
  %v53 = vld [vmem:[%s1 + $0x90] sm:$0xf]
  %v54 = vld [vmem:[%s1 + $0x94] sm:$0xf]
  %v55 = vld [vmem:[%s1 + $0x98] sm:$0xf]
  %v56 = vld [vmem:[%s1 + $0x9c] sm:$0xf]
  %v57 = vld [vmem:[%s1 + $0xa0] sm:$0xf]
  %v58 = vld [vmem:[%s1 + $0xa4] sm:$0xf]
  %v59 = vld [vmem:[%s1 + $0xa8] sm:$0xf]
  %v60 = vld [vmem:[%s1 + $0xac] sm:$0xf]
  %v61 = vld [vmem:[%s1 + $0xb0] sm:$0xf]
  %v62 = vld [vmem:[%s1 + $0xb4] sm:$0xf]
  %v63 = vld [vmem:[%s1 + $0xb8] sm:$0xf]
  %v64 = vld [vmem:[%s1 + $0xbc] sm:$0xf]
  %v65 = vld [vmem:[%s1 + $0xc0] sm:$0xf]
  %v66 = vld [vmem:[%s1 + $0xc4] sm:$0xf]
  %v67 = vld [vmem:[%s1 + $0xc8] sm:$0xf]
  %v68 = vld [vmem:[%s1 + $0xcc] sm:$0xf]
  %v69 = vld [vmem:[%s1 + $0xd0] sm:$0xf]
  %v70 = vld [vmem:[%s1 + $0xd4] sm:$0xf]
  %v71 = vld [vmem:[%s2] sm:$0xff]
  %73 = vset.pattern.permute.xlu0 0
  %74 = vperm.xlu0 %73, %v71
  %v75 = vpop.permute.xlu0 %74
  %v79 = vunpack.c.l.b16 %v15
  %v80 = vunpack.c.h.b16 %v15
  %v81 = vunpack.c.l.b16 %v16
  %v82 = vunpack.c.h.b16 %v16
  %v83 = vpack.c.b16 %v79, %v79
  %v84 = vpack.c.b16 %v80, %v80
  %v85 = vpack.c.b16 %v81, %v81
  %v86 = vpack.c.b16 %v82, %v82
  %v144 = vunpack.c.l.b16 %v17
  %v145 = vunpack.c.l.b16 %v18
  %v146 = vunpack.c.l.b16 %v19
  %v147 = vunpack.c.l.b16 %v20
  %v148 = vunpack.c.l.b16 %v21
  %v149 = vunpack.c.l.b16 %v22
  %v150 = vunpack.c.l.b16 %v23
  %v151 = vunpack.c.l.b16 %v24
  %v152 = vunpack.c.l.b16 %v25
  %v153 = vunpack.c.l.b16 %v26
  %v154 = vunpack.c.l.b16 %v27
  %v155 = vunpack.c.l.b16 %v28
  %v156 = vunpack.c.l.b16 %v29
  %v157 = vunpack.c.l.b16 %v30
  %v158 = vunpack.c.l.b16 %v31
  %v159 = vunpack.c.l.b16 %v32
  %v160 = vunpack.c.l.b16 %v33
  %v161 = vunpack.c.l.b16 %v34
  %v162 = vunpack.c.l.b16 %v35
  %v163 = vunpack.c.l.b16 %v36
  %v164 = vunpack.c.l.b16 %v37
  %v165 = vunpack.c.l.b16 %v38
  %v166 = vunpack.c.l.b16 %v39
  %v167 = vunpack.c.l.b16 %v40
  %v168 = vunpack.c.l.b16 %v41
  %v169 = vunpack.c.l.b16 %v42
  %v170 = vunpack.c.l.b16 %v43
  %v171 = vunpack.c.l.b16 %v44
  %v172 = vunpack.c.l.b16 %v45
  %v173 = vunpack.c.l.b16 %v46
  %v174 = vunpack.c.l.b16 %v47
  %v175 = vunpack.c.l.b16 %v48
  %v176 = vunpack.c.l.b16 %v49
  %v177 = vunpack.c.l.b16 %v50
  %v178 = vunpack.c.l.b16 %v51
  %v179 = vunpack.c.l.b16 %v52
  %v180 = vunpack.c.l.b16 %v53
  %v181 = vunpack.c.l.b16 %v54
  %v182 = vunpack.c.l.b16 %v55
  %v183 = vunpack.c.l.b16 %v56
  %v184 = vunpack.c.l.b16 %v57
  %v185 = vunpack.c.l.b16 %v58
  %v186 = vunpack.c.l.b16 %v59
  %v187 = vunpack.c.l.b16 %v60
  %v188 = vunpack.c.l.b16 %v61
  %v189 = vunpack.c.l.b16 %v62
  %v190 = vunpack.c.l.b16 %v63
  %v191 = vunpack.c.l.b16 %v64
  %v192 = vunpack.c.l.b16 %v65
  %v193 = vunpack.c.l.b16 %v66
  %v194 = vunpack.c.l.b16 %v67
  %v195 = vunpack.c.l.b16 %v68
  %v196 = vunpack.c.l.b16 %v69
  %v197 = vunpack.c.l.b16 %v70
  %v198 = vpack.c.b16 %v145, %v144
  %v199 = vpack.c.b16 %v147, %v146
  %v200 = vpack.c.b16 %v149, %v148
  %v201 = vpack.c.b16 %v151, %v150
  %v202 = vpack.c.b16 %v153, %v152
  %v203 = vpack.c.b16 %v155, %v154
  %v204 = vpack.c.b16 %v157, %v156
  %v205 = vpack.c.b16 %v159, %v158
  %v206 = vpack.c.b16 %v161, %v160
  %v207 = vpack.c.b16 %v163, %v162
  %v208 = vpack.c.b16 %v165, %v164
  %v209 = vpack.c.b16 %v167, %v166
  %v210 = vpack.c.b16 %v169, %v168
  %v211 = vpack.c.b16 %v171, %v170
  %v212 = vpack.c.b16 %v173, %v172
  %v213 = vpack.c.b16 %v175, %v174
  %v214 = vpack.c.b16 %v177, %v176
  %v215 = vpack.c.b16 %v179, %v178
  %v216 = vpack.c.b16 %v181, %v180
  %v217 = vpack.c.b16 %v183, %v182
  %v218 = vpack.c.b16 %v185, %v184
  %v219 = vpack.c.b16 %v187, %v186
  %v220 = vpack.c.b16 %v189, %v188
  %v221 = vpack.c.b16 %v191, %v190
  %v222 = vpack.c.b16 %v193, %v192
  %v223 = vpack.c.b16 %v195, %v194
  %v224 = vpack.c.b16 %v197, %v196
  %vm252 = vcmask 392192
  %v254 = vsel %vm252, %v86, 0
  %256 = vmatprep.subr.bf16.mxu0 0
  %257 = vmatpush1.bf16.msra.mxu0 %v205
  %258 = vmatprep.subr.bf16.mxu0 0
  %259 = vmatpush1.bf16.msra.mxu0 %v204
  %260 = vmatprep.subr.bf16.mxu0 0
  %261 = vmatpush1.bf16.msra.mxu0 %v203
  %262 = vmatprep.subr.bf16.mxu0 0
  %263 = vmatpush1.bf16.msra.mxu0 %v202
  %264 = vmatprep.subr.bf16.mxu0 0
  %265 = vmatpush1.bf16.msra.mxu0 %v201
  %266 = vmatprep.subr.bf16.mxu0 0
  %267 = vmatpush1.bf16.msra.mxu0 %v200
  %268 = vmatprep.subr.bf16.mxu0 0
  %269 = vmatpush1.bf16.msra.mxu0 %v199
  %270 = vmatprep.subr.bf16.mxu0 0
  %271 = vmatpush1.bf16.msra.mxu0 %v198
  %272 = vmatprep.subr.bf16.mxu0 0
  %273 = vmatpush2.bf16.msra.mxu0 %v213
  %274 = vmatprep.subr.bf16.mxu0 0
  %275 = vmatpush2.bf16.msra.mxu0 %v212
  %276 = vmatprep.subr.bf16.mxu0 0
  %277 = vmatpush2.bf16.msra.mxu0 %v211
  %278 = vmatprep.subr.bf16.mxu0 0
  %279 = vmatpush2.bf16.msra.mxu0 %v210
  %280 = vmatprep.subr.bf16.mxu0 0
  %281 = vmatpush2.bf16.msra.mxu0 %v209
  %282 = vmatprep.subr.bf16.mxu0 0
  %283 = vmatpush2.bf16.msra.mxu0 %v208
  %284 = vmatprep.subr.bf16.mxu0 0
  %285 = vmatpush2.bf16.msra.mxu0 %v207
  %286 = vmatprep.subr.bf16.mxu0 0
  %287 = vmatpush2.bf16.msra.mxu0 %v206
  %288 = vmatprep.mubr.bf16.mxu0 %v84
  %289 = vmatmul.mubr.bf16.gmra.mxu0 %v83
  %v290 = vpop.f32.mrf.mxu0
  %v291 = vadd.f32 %v75, %v290
  %v292 = vpop.f32.mrf.mxu0
  %v293 = vpop.f32.mrf.mxu0
  %v294 = vpop.f32.mrf.mxu0
  %295 = vdwg.mxu0
  %296 = vmatprep.subr.bf16.mxu0 0
  %297 = vmatpush1.bf16.msra.mxu0 %v221
  %298 = vmatprep.subr.bf16.mxu0 0
  %299 = vmatpush1.bf16.msra.mxu0 %v220
  %300 = vmatprep.subr.bf16.mxu0 0
  %301 = vmatpush1.bf16.msra.mxu0 %v219
  %302 = vmatprep.subr.bf16.mxu0 0
  %303 = vmatpush1.bf16.msra.mxu0 %v218
  %304 = vmatprep.subr.bf16.mxu0 0
  %305 = vmatpush1.bf16.msra.mxu0 %v217
  %306 = vmatprep.subr.bf16.mxu0 0
  %307 = vmatpush1.bf16.msra.mxu0 %v216
  %308 = vmatprep.subr.bf16.mxu0 0
  %309 = vmatpush1.bf16.msra.mxu0 %v215
  %310 = vmatprep.subr.bf16.mxu0 0
  %311 = vmatpush1.bf16.msra.mxu0 %v214
  %312 = vmatprep.subr.bf16.mxu0 0
  %313 = vmatpush2.bf16.msra.mxu0 0
  %314 = vmatprep.subr.bf16.mxu0 0
  %315 = vmatpush2.bf16.msra.mxu0 0
  %316 = vmatprep.subr.bf16.mxu0 0
  %317 = vmatpush2.bf16.msra.mxu0 0
  %318 = vmatprep.subr.bf16.mxu0 0
  %319 = vmatpush2.bf16.msra.mxu0 0
  %320 = vmatprep.subr.bf16.mxu0 0
  %321 = vmatpush2.bf16.msra.mxu0 0
  %322 = vmatprep.subr.bf16.mxu0 0
  %323 = vmatpush2.bf16.msra.mxu0 %v224
  %324 = vmatprep.subr.bf16.mxu0 0
  %325 = vmatpush2.bf16.msra.mxu0 %v223
  %326 = vmatprep.subr.bf16.mxu0 0
  %327 = vmatpush2.bf16.msra.mxu0 %v222
  %328 = vmatprep.mubr.bf16.mxu0 %v254
  %329 = vmatmul.mubr.bf16.gmra.mxu0 %v85
  %v330 = vpop.f32.mrf.mxu0
  %v331 = vadd.f32 %v291, %v330
  %v332 = vpop.f32.mrf.mxu0
  %v333 = vpop.f32.mrf.mxu0
  %v334 = vpop.f32.mrf.mxu0
  %335 = vdwg.mxu0
  %336 = vst [vmem:[%s3] sm:$0xff] %v331
  // Predicated region
  $region14: #{svs_decoder_forward.25} parent=0 // pred_check
    _
  $region15: #{svs_decoder_forward.25} parent=0 // pred_check_branch
    %338 = sbr.rel (0) target = $region17
  $region16: #{svs_decoder_forward.25} parent=0 // pred_region
    _
  $region17: #{svs_decoder_forward.25} parent=0 // pred_fallthru
    _
  // Predicated region
  $region18: #{svs_decoder_forward.25} parent=0 // pred_check
    _
  $region19: #{svs_decoder_forward.25} parent=0 // pred_check_branch
    %340 = sbr.rel (0) target = $region21
  $region20: #{svs_decoder_forward.25} parent=0 // pred_region
    _
  $region21: #{svs_decoder_forward.25} parent=0 // pred_fallthru
    _

// kernel: svs_decoder_forward.26
$region0: #{svs_decoder_forward.26}
  #allocation0 [shape = 'u32[]', space=smem, size = 0x4, offset = 0x4, fixed_abs, tag = 'smem constant byte address 0x4 - core index']
  #allocation1 [shape = 'u32[144,128]{1,0:T(1,128)}', space=vmem, size = 0x12000, scoped, tag = 'internal scratch']
  %s0 = inlined_call_operand.vmem [shape: bf16[8,216], index: 0, kind: input, shape index: {}]
  %s1 = inlined_call_operand.vmem [shape: bf16[216,128], index: 1, kind: input, shape index: {}]
  %s2 = inlined_call_operand.vmem [shape: f32[8,1], index: 2, kind: input, shape index: {}]
  %s3 = inlined_call_operand.vmem [shape: f32[8,1], index: 3, kind: input, shape index: {}]
  %s4 = inlined_call_operand.vmem [shape: f32[8,1], index: 4, kind: input, shape index: {}]
  %s5 = inlined_call_operand.vmem [shape: bf16[8,128], index: 5, kind: output, shape index: {}]
  %s6 = sld [smem:[#allocation0]]
  $region30: #{svs_decoder_forward.26} parent=0
    _
  %s8 = ssub.s32 1, %s6
  %s9 = scalar_select 0, %s8, %s6
  // Predicated region
  $region2: #{svs_decoder_forward.26} parent=0 // pred_check
    _
  $region3: #{svs_decoder_forward.26} parent=0 // pred_check_branch
    %11 = sbr.rel (0) target = $region5
  $region4: #{svs_decoder_forward.26} parent=0 // pred_region
    _
  $region5: #{svs_decoder_forward.26} parent=0 // pred_fallthru
    _
  // Predicated region
  $region6: #{svs_decoder_forward.26} parent=0 // pred_check
    _
  $region7: #{svs_decoder_forward.26} parent=0 // pred_check_branch
    %13 = sbr.rel (0) target = $region9
  $region8: #{svs_decoder_forward.26} parent=0 // pred_region
    _
  $region9: #{svs_decoder_forward.26} parent=0 // pred_fallthru
    _
  // Predicated region
  $region10: #{svs_decoder_forward.26} parent=0 // pred_check
    _
  $region11: #{svs_decoder_forward.26} parent=0 // pred_check_branch
    %15 = sbr.rel (0) target = $region13
  $region12: #{svs_decoder_forward.26} parent=0 // pred_region
    _
  $region13: #{svs_decoder_forward.26} parent=0 // pred_fallthru
    _
  // Predicated region
  $region14: #{svs_decoder_forward.26} parent=0 // pred_check
    _
  $region15: #{svs_decoder_forward.26} parent=0 // pred_check_branch
    %17 = sbr.rel (0) target = $region17
  $region16: #{svs_decoder_forward.26} parent=0 // pred_region
    _
  $region17: #{svs_decoder_forward.26} parent=0 // pred_fallthru
    _
  // Predicated region
  $region18: #{svs_decoder_forward.26} parent=0 // pred_check
    _
  $region19: #{svs_decoder_forward.26} parent=0 // pred_check_branch
    %19 = sbr.rel (0) target = $region21
  $region20: #{svs_decoder_forward.26} parent=0 // pred_region
    _
  $region21: #{svs_decoder_forward.26} parent=0 // pred_fallthru
    _
  %v21 = vld [vmem:[%s0] sm:$0xff]
  %v22 = vld [vmem:[%s1] sm:$0xf]
  %v23 = vld [vmem:[%s1 + $0x4] sm:$0xf]
  %v24 = vld [vmem:[%s1 + $0x8] sm:$0xf]
  %v25 = vld [vmem:[%s1 + $0xc] sm:$0xf]
  %v26 = vld [vmem:[%s1 + $0x10] sm:$0xf]
  %v27 = vld [vmem:[%s1 + $0x14] sm:$0xf]
  %v28 = vld [vmem:[%s1 + $0x18] sm:$0xf]
  %v29 = vld [vmem:[%s1 + $0x1c] sm:$0xf]
  %v30 = vld [vmem:[%s1 + $0x20] sm:$0xf]
  %v31 = vld [vmem:[%s1 + $0x24] sm:$0xf]
  %v32 = vld [vmem:[%s1 + $0x28] sm:$0xf]
  %v33 = vld [vmem:[%s1 + $0x2c] sm:$0xf]
  %v34 = vld [vmem:[%s1 + $0x30] sm:$0xf]
  %v35 = vld [vmem:[%s1 + $0x34] sm:$0xf]
  %v36 = vld [vmem:[%s1 + $0x38] sm:$0xf]
  %v37 = vld [vmem:[%s1 + $0x3c] sm:$0xf]
  %v38 = vld [vmem:[%s1 + $0x40] sm:$0xf]
  %v39 = vld [vmem:[%s1 + $0x44] sm:$0xf]
  %v40 = vld [vmem:[%s1 + $0x48] sm:$0xf]
  %v41 = vld [vmem:[%s1 + $0x4c] sm:$0xf]
  %v42 = vld [vmem:[%s1 + $0x50] sm:$0xf]
  %v43 = vld [vmem:[%s1 + $0x54] sm:$0xf]
  %v44 = vld [vmem:[%s1 + $0x58] sm:$0xf]
  %v45 = vld [vmem:[%s1 + $0x5c] sm:$0xf]
  %v46 = vld [vmem:[%s1 + $0x60] sm:$0xf]
  %v47 = vld [vmem:[%s1 + $0x64] sm:$0xf]
  %v48 = vld [vmem:[%s1 + $0x68] sm:$0xf]
  %v49 = vld [vmem:[%s2] sm:$0xff]
  %51 = vset.pattern.permute.xlu0 0
  %52 = vperm.xlu0 %51, %v49
  %v53 = vpop.permute.xlu0 %52
  %v56 = vunpack.c.l.b16 %v21
  %v57 = vunpack.c.h.b16 %v21
  %v58 = vpack.c.b16 %v56, %v56
  %v59 = vpack.c.b16 %v57, %v57
  %v88 = vunpack.c.l.b16 %v22
  %v89 = vunpack.c.l.b16 %v23
  %v90 = vunpack.c.l.b16 %v24
  %v91 = vunpack.c.l.b16 %v25
  %v92 = vunpack.c.l.b16 %v26
  %v93 = vunpack.c.l.b16 %v27
  %v94 = vunpack.c.l.b16 %v28
  %v95 = vunpack.c.l.b16 %v29
  %v96 = vunpack.c.l.b16 %v30
  %v97 = vunpack.c.l.b16 %v31
  %v98 = vunpack.c.l.b16 %v32
  %v99 = vunpack.c.l.b16 %v33
  %v100 = vunpack.c.l.b16 %v34
  %v101 = vunpack.c.l.b16 %v35
  %v102 = vunpack.c.l.b16 %v36
  %v103 = vunpack.c.l.b16 %v37
  %v104 = vunpack.c.l.b16 %v38
  %v105 = vunpack.c.l.b16 %v39
  %v106 = vunpack.c.l.b16 %v40
  %v107 = vunpack.c.l.b16 %v41
  %v108 = vunpack.c.l.b16 %v42
  %v109 = vunpack.c.l.b16 %v43
  %v110 = vunpack.c.l.b16 %v44
  %v111 = vunpack.c.l.b16 %v45
  %v112 = vunpack.c.l.b16 %v46
  %v113 = vunpack.c.l.b16 %v47
  %v114 = vunpack.c.l.b16 %v48
  %v115 = vpack.c.b16 %v89, %v88
  %v116 = vpack.c.b16 %v91, %v90
  %v117 = vpack.c.b16 %v93, %v92
  %v118 = vpack.c.b16 %v95, %v94
  %v119 = vpack.c.b16 %v97, %v96
  %v120 = vpack.c.b16 %v99, %v98
  %v121 = vpack.c.b16 %v101, %v100
  %v122 = vpack.c.b16 %v103, %v102
  %v123 = vpack.c.b16 %v105, %v104
  %v124 = vpack.c.b16 %v107, %v106
  %v125 = vpack.c.b16 %v109, %v108
  %v126 = vpack.c.b16 %v111, %v110
  %v127 = vpack.c.b16 %v113, %v112
  %v128 = vpack.c.b16 %v114, %v114
  %vm142 = vcmask 719872
  %v144 = vsel %vm142, %v59, 0
  %vm146 = vcmask 1043456
  %v148 = vsel %vm146, %v128, 0
  %150 = vmatprep.subr.bf16.mxu0 0
  %151 = vmatpush1.bf16.msra.mxu0 %v122
  %152 = vmatprep.subr.bf16.mxu0 0
  %153 = vmatpush1.bf16.msra.mxu0 %v121
  %154 = vmatprep.subr.bf16.mxu0 0
  %155 = vmatpush1.bf16.msra.mxu0 %v120
  %156 = vmatprep.subr.bf16.mxu0 0
  %157 = vmatpush1.bf16.msra.mxu0 %v119
  %158 = vmatprep.subr.bf16.mxu0 0
  %159 = vmatpush1.bf16.msra.mxu0 %v118
  %160 = vmatprep.subr.bf16.mxu0 0
  %161 = vmatpush1.bf16.msra.mxu0 %v117
  %162 = vmatprep.subr.bf16.mxu0 0
  %163 = vmatpush1.bf16.msra.mxu0 %v116
  %164 = vmatprep.subr.bf16.mxu0 0
  %165 = vmatpush1.bf16.msra.mxu0 %v115
  %166 = vmatprep.subr.bf16.mxu0 0
  %167 = vmatpush2.bf16.msra.mxu0 0
  %168 = vmatprep.subr.bf16.mxu0 0
  %169 = vmatpush2.bf16.msra.mxu0 0
  %170 = vmatprep.subr.bf16.mxu0 0
  %171 = vmatpush2.bf16.msra.mxu0 %v148
  %172 = vmatprep.subr.bf16.mxu0 0
  %173 = vmatpush2.bf16.msra.mxu0 %v127
  %174 = vmatprep.subr.bf16.mxu0 0
  %175 = vmatpush2.bf16.msra.mxu0 %v126
  %176 = vmatprep.subr.bf16.mxu0 0
  %177 = vmatpush2.bf16.msra.mxu0 %v125
  %178 = vmatprep.subr.bf16.mxu0 0
  %179 = vmatpush2.bf16.msra.mxu0 %v124
  %180 = vmatprep.subr.bf16.mxu0 0
  %181 = vmatpush2.bf16.msra.mxu0 %v123
  %182 = vmatprep.mubr.bf16.mxu0 %v144
  %183 = vmatmul.mubr.bf16.gmra.mxu0 %v58
  %v184 = vpop.f32.mrf.mxu0
  %v185 = vadd.f32 %v53, %v184
  %v186 = vpop.f32.mrf.mxu0
  %v187 = vpop.f32.mrf.mxu0
  %v188 = vpop.f32.mrf.mxu0
  %189 = vdwg.mxu0
  %190 = vadd.xlane.f32.xlu0 %v185
  %v191 = vpop.xlane.xlu0 %190
  %v192 = vmul.f32 %v185, %v185
  %193 = vadd.xlane.f32.xlu0 %v192
  %v194 = vpop.xlane.xlu0 %193
  %v195 = vmul.f32 %v191, 0.0078125
  %v196 = vmul.f32 %v194, 0.0078125
  %v197 = vmul.f32 %v195, %v195
  %v198 = vsub.f32 %v196, %v197
  %v199 = vmax.f32 %v198, 0.0
  %v200 = vld [vmem:[%s3] sm:$0xff]
  %v201 = vadd.f32 %v199, 1e-05
  %v202 = vrsqrt.pop %v201
  %v203 = vmul.f32 %v200, %v202
  %v204 = vld [vmem:[%s4] sm:$0xff]
  %v205 = vmul.f32 %v195, %v203
  %v206 = vsub.f32 %v204, %v205
  %208 = vset.pattern.permute.xlu0 0
  %209 = vperm.xlu0 %208, %v203
  %v210 = vpop.permute.xlu0 %209
  %v212 = vmul.f32 %v185, %v210
  %214 = vset.pattern.permute.xlu0 0
  %215 = vperm.xlu0 %214, %v206
  %v216 = vpop.permute.xlu0 %215
  %v218 = vadd.f32 %v212, %v216
  %vm219 = vcmp.ge.f32.partialorder %v218, 0.0
  %v220 = vmul.f32 %v218, 0.01
  %v221 = vsel %vm219, %v218, %v220
  %v222 = vpack.c.bf16 %v221, %v221
  %223 = vst [vmem:[%s5] sm:$0xf] %v222
  // Predicated region
  $region22: #{svs_decoder_forward.26} parent=0 // pred_check
    _
  $region23: #{svs_decoder_forward.26} parent=0 // pred_check_branch
    %225 = sbr.rel (0) target = $region25
  $region24: #{svs_decoder_forward.26} parent=0 // pred_region
    _
  $region25: #{svs_decoder_forward.26} parent=0 // pred_fallthru
    _
  // Predicated region
  $region26: #{svs_decoder_forward.26} parent=0 // pred_check
    _
  $region27: #{svs_decoder_forward.26} parent=0 // pred_check_branch
    %227 = sbr.rel (0) target = $region29
  $region28: #{svs_decoder_forward.26} parent=0 // pred_region
    _
  $region29: #{svs_decoder_forward.26} parent=0 // pred_fallthru
    _

// kernel: svs_decoder_forward.27
$region0: #{svs_decoder_forward.27}
  #allocation0 [shape = 'u32[]', space=smem, size = 0x4, offset = 0x4, fixed_abs, tag = 'smem constant byte address 0x4 - core index']
  #allocation1 [shape = 'u32[144,128]{1,0:T(1,128)}', space=vmem, size = 0x12000, scoped, tag = 'internal scratch']
  %s0 = inlined_call_operand.vmem [shape: bf16[8,216], index: 0, kind: input, shape index: {}]
  %s1 = inlined_call_operand.vmem [shape: bf16[216,128], index: 1, kind: input, shape index: {}]
  %s2 = inlined_call_operand.vmem [shape: f32[8,1], index: 2, kind: input, shape index: {}]
  %s3 = inlined_call_operand.vmem [shape: f32[8,128], index: 3, kind: output, shape index: {0}]
  %s4 = inlined_call_operand.vmem [shape: f32[8,1], index: 4, kind: output, shape index: {1}]
  %s5 = inlined_call_operand.vmem [shape: f32[8,1], index: 5, kind: output, shape index: {2}]
  %s6 = inlined_call_operand.hbm [shape: f32[2,8,1], index: 6, kind: output, shape index: {3}]
  %7 = xla_tuple %s3, %s4, %s5, %s6
  %s8 = sld [smem:[#allocation0]]
  $region46: #{svs_decoder_forward.27} parent=0
    _
  %s10 = ssub.s32 1, %s8
  %s11 = scalar_select 0, %s10, %s8
  $region1: #{svs_decoder_forward.27} parent=0
    #allocation2 [shape = 'u8[8192]{0}', space=vmem, size = 0x2000, scoped, tag = 'output window, operand 3, single buffered']
    #allocation3 [shape = 's32[1]{0}', space=sflag, size = 0x4, scoped, tag = 'scoped memory for svs_decoder_forward.27']
    %12 = vsyncpa [#allocation3], 0
    // Predicated region
    $region2: #{svs_decoder_forward.27} parent=1 // pred_check
      _
    $region3: #{svs_decoder_forward.27} parent=1 // pred_check_branch
      %14 = sbr.rel (0) target = $region5
    $region4: #{svs_decoder_forward.27} parent=1 // pred_region
      _
    $region5: #{svs_decoder_forward.27} parent=1 // pred_fallthru
      _
    // Predicated region
    $region6: #{svs_decoder_forward.27} parent=1 // pred_check
      _
    $region7: #{svs_decoder_forward.27} parent=1 // pred_check_branch
      %16 = sbr.rel (0) target = $region9
    $region8: #{svs_decoder_forward.27} parent=1 // pred_region
      _
    $region9: #{svs_decoder_forward.27} parent=1 // pred_fallthru
      _
    // Predicated region
    $region10: #{svs_decoder_forward.27} parent=1 // pred_check
      _
    $region11: #{svs_decoder_forward.27} parent=1 // pred_check_branch
      %18 = sbr.rel (0) target = $region13
    $region12: #{svs_decoder_forward.27} parent=1 // pred_region
      _
    $region13: #{svs_decoder_forward.27} parent=1 // pred_fallthru
      _
    %v20 = vld [vmem:[%s0] sm:$0xff]
    %v21 = vld [vmem:[%s1] sm:$0xf]
    %v22 = vld [vmem:[%s1 + $0x4] sm:$0xf]
    %v23 = vld [vmem:[%s1 + $0x8] sm:$0xf]
    %v24 = vld [vmem:[%s1 + $0xc] sm:$0xf]
    %v25 = vld [vmem:[%s1 + $0x10] sm:$0xf]
    %v26 = vld [vmem:[%s1 + $0x14] sm:$0xf]
    %v27 = vld [vmem:[%s1 + $0x18] sm:$0xf]
    %v28 = vld [vmem:[%s1 + $0x1c] sm:$0xf]
    %v29 = vld [vmem:[%s1 + $0x20] sm:$0xf]
    %v30 = vld [vmem:[%s1 + $0x24] sm:$0xf]
    %v31 = vld [vmem:[%s1 + $0x28] sm:$0xf]
    %v32 = vld [vmem:[%s1 + $0x2c] sm:$0xf]
    %v33 = vld [vmem:[%s1 + $0x30] sm:$0xf]
    %v34 = vld [vmem:[%s1 + $0x34] sm:$0xf]
    %v35 = vld [vmem:[%s1 + $0x38] sm:$0xf]
    %v36 = vld [vmem:[%s1 + $0x3c] sm:$0xf]
    %v37 = vld [vmem:[%s1 + $0x40] sm:$0xf]
    %v38 = vld [vmem:[%s1 + $0x44] sm:$0xf]
    %v39 = vld [vmem:[%s1 + $0x48] sm:$0xf]
    %v40 = vld [vmem:[%s1 + $0x4c] sm:$0xf]
    %v41 = vld [vmem:[%s1 + $0x50] sm:$0xf]
    %v42 = vld [vmem:[%s1 + $0x54] sm:$0xf]
    %v43 = vld [vmem:[%s1 + $0x58] sm:$0xf]
    %v44 = vld [vmem:[%s1 + $0x5c] sm:$0xf]
    %v45 = vld [vmem:[%s1 + $0x60] sm:$0xf]
    %v46 = vld [vmem:[%s1 + $0x64] sm:$0xf]
    %v47 = vld [vmem:[%s1 + $0x68] sm:$0xf]
    %v48 = vld [vmem:[%s2] sm:$0xff]
    %50 = vset.pattern.permute.xlu0 0
    %51 = vperm.xlu0 %50, %v48
    %v52 = vpop.permute.xlu0 %51
    %v55 = vunpack.c.l.b16 %v20
    %v56 = vunpack.c.h.b16 %v20
    %v57 = vpack.c.b16 %v55, %v55
    %v58 = vpack.c.b16 %v56, %v56
    %v87 = vunpack.c.l.b16 %v21
    %v88 = vunpack.c.l.b16 %v22
    %v89 = vunpack.c.l.b16 %v23
    %v90 = vunpack.c.l.b16 %v24
    %v91 = vunpack.c.l.b16 %v25
    %v92 = vunpack.c.l.b16 %v26
    %v93 = vunpack.c.l.b16 %v27
    %v94 = vunpack.c.l.b16 %v28
    %v95 = vunpack.c.l.b16 %v29
    %v96 = vunpack.c.l.b16 %v30
    %v97 = vunpack.c.l.b16 %v31
    %v98 = vunpack.c.l.b16 %v32
    %v99 = vunpack.c.l.b16 %v33
    %v100 = vunpack.c.l.b16 %v34
    %v101 = vunpack.c.l.b16 %v35
    %v102 = vunpack.c.l.b16 %v36
    %v103 = vunpack.c.l.b16 %v37
    %v104 = vunpack.c.l.b16 %v38
    %v105 = vunpack.c.l.b16 %v39
    %v106 = vunpack.c.l.b16 %v40
    %v107 = vunpack.c.l.b16 %v41
    %v108 = vunpack.c.l.b16 %v42
    %v109 = vunpack.c.l.b16 %v43
    %v110 = vunpack.c.l.b16 %v44
    %v111 = vunpack.c.l.b16 %v45
    %v112 = vunpack.c.l.b16 %v46
    %v113 = vunpack.c.l.b16 %v47
    %v114 = vpack.c.b16 %v88, %v87
    %v115 = vpack.c.b16 %v90, %v89
    %v116 = vpack.c.b16 %v92, %v91
    %v117 = vpack.c.b16 %v94, %v93
    %v118 = vpack.c.b16 %v96, %v95
    %v119 = vpack.c.b16 %v98, %v97
    %v120 = vpack.c.b16 %v100, %v99
    %v121 = vpack.c.b16 %v102, %v101
    %v122 = vpack.c.b16 %v104, %v103
    %v123 = vpack.c.b16 %v106, %v105
    %v124 = vpack.c.b16 %v108, %v107
    %v125 = vpack.c.b16 %v110, %v109
    %v126 = vpack.c.b16 %v112, %v111
    %v127 = vpack.c.b16 %v113, %v113
    %vm141 = vcmask 719872
    %v143 = vsel %vm141, %v58, 0
    %vm145 = vcmask 1043456
    %v147 = vsel %vm145, %v127, 0
    %149 = vmatprep.subr.bf16.mxu0 0
    %150 = vmatpush1.bf16.msra.mxu0 %v121
    %151 = vmatprep.subr.bf16.mxu0 0
    %152 = vmatpush1.bf16.msra.mxu0 %v120
    %153 = vmatprep.subr.bf16.mxu0 0
    %154 = vmatpush1.bf16.msra.mxu0 %v119
    %155 = vmatprep.subr.bf16.mxu0 0
    %156 = vmatpush1.bf16.msra.mxu0 %v118
    %157 = vmatprep.subr.bf16.mxu0 0
    %158 = vmatpush1.bf16.msra.mxu0 %v117
    %159 = vmatprep.subr.bf16.mxu0 0
    %160 = vmatpush1.bf16.msra.mxu0 %v116
    %161 = vmatprep.subr.bf16.mxu0 0
    %162 = vmatpush1.bf16.msra.mxu0 %v115
    %163 = vmatprep.subr.bf16.mxu0 0
    %164 = vmatpush1.bf16.msra.mxu0 %v114
    %165 = vmatprep.subr.bf16.mxu0 0
    %166 = vmatpush2.bf16.msra.mxu0 0
    %167 = vmatprep.subr.bf16.mxu0 0
    %168 = vmatpush2.bf16.msra.mxu0 0
    %169 = vmatprep.subr.bf16.mxu0 0
    %170 = vmatpush2.bf16.msra.mxu0 %v147
    %171 = vmatprep.subr.bf16.mxu0 0
    %172 = vmatpush2.bf16.msra.mxu0 %v126
    %173 = vmatprep.subr.bf16.mxu0 0
    %174 = vmatpush2.bf16.msra.mxu0 %v125
    %175 = vmatprep.subr.bf16.mxu0 0
    %176 = vmatpush2.bf16.msra.mxu0 %v124
    %177 = vmatprep.subr.bf16.mxu0 0
    %178 = vmatpush2.bf16.msra.mxu0 %v123
    %179 = vmatprep.subr.bf16.mxu0 0
    %180 = vmatpush2.bf16.msra.mxu0 %v122
    %181 = vmatprep.mubr.bf16.mxu0 %v143
    %182 = vmatmul.mubr.bf16.gmra.mxu0 %v57
    %v183 = vpop.f32.mrf.mxu0
    %v184 = vadd.f32 %v52, %v183
    %v185 = vpop.f32.mrf.mxu0
    %v186 = vpop.f32.mrf.mxu0
    %v187 = vpop.f32.mrf.mxu0
    %188 = vdwg.mxu0
    %189 = vst [vmem:[%s3] sm:$0xff] %v184
    %190 = vadd.xlane.f32.xlu0 %v184
    %v191 = vpop.xlane.xlu0 %190
    %vm192 = vcmask 7168
    %193 = vst.msk [vmem:[%s4] sm:$0xff] %vm192, %v191
    %v194 = vmul.f32 %v184, %v184
    %195 = vadd.xlane.f32.xlu0 %v194
    %v196 = vpop.xlane.xlu0 %195
    %197 = vst.msk [vmem:[%s5] sm:$0xff] %vm192, %v196
    %v198 = vlaneseq
    %v199 = vand.u32 %v198, 127
    %vm200 = vcmp.ge.s32.totalorder %v199, 0
    %vm201 = vcmp.lt.s32.totalorder %v199, 64
    %vm202 = vmand %vm200, %vm201
    %v203 = vsel %vm202, %v184, 0.0
    %204 = vadd.xlane.f32.xlu0 %v203
    %v205 = vpop.xlane.xlu0 %204
    %v206 = vmul.f32 %v205, 0.015625
    %207 = vst.msk [vmem:[#allocation2] sm:$0xff] %vm192, %v206
    %vm208 = vcmp.ge.s32.totalorder %v199, 64
    %vm209 = vcmp.lt.s32.totalorder %v199, 128
    %vm210 = vmand %vm208, %vm209
    %v211 = vsel %vm210, %v184, 0.0
    %212 = vadd.xlane.f32.xlu0 %v211
    %v213 = vpop.xlane.xlu0 %212
    %v214 = vmul.f32 %v213, 0.015625
    %s215 = scalar_lea.vmem [#allocation2], 8
    %216 = vst.msk [vmem:[%s215] sm:$0xff] %vm192, %v214
    // Predicated region
    $region14: #{svs_decoder_forward.27} parent=1 // pred_check
      _
    $region15: #{svs_decoder_forward.27} parent=1 // pred_check_branch
      %218 = sbr.rel (0) target = $region17
    $region16: #{svs_decoder_forward.27} parent=1 // pred_region
      _
    $region17: #{svs_decoder_forward.27} parent=1 // pred_fallthru
      _
    // Predicated region
    $region18: #{svs_decoder_forward.27} parent=1 // pred_check
      _
    $region19: #{svs_decoder_forward.27} parent=1 // pred_check_branch
      %220 = sbr.rel (0) target = $region21
    $region20: #{svs_decoder_forward.27} parent=1 // pred_region
      _
    $region21: #{svs_decoder_forward.27} parent=1 // pred_fallthru
      _
    // Predicated region
    $region22: #{svs_decoder_forward.27} parent=1 // pred_check
      _
    $region23: #{svs_decoder_forward.27} parent=1 // pred_check_branch
      %222 = sbr.rel (0) target = $region25
    $region24: #{svs_decoder_forward.27} parent=1 // pred_region
      _
    $region25: #{svs_decoder_forward.27} parent=1 // pred_fallthru
      _
    // Predicated region
    $region26: #{svs_decoder_forward.27} parent=1 // pred_check
      _
    $region27: #{svs_decoder_forward.27} parent=1 // pred_check_branch
      %224 = sbr.rel (0) target = $region29
    $region28: #{svs_decoder_forward.27} parent=1 // pred_region
      %s226 = ssub.s32 256, 256
      %227 = vsyncadd [#allocation3], %s226
      %s228 = sshll.u32 [#allocation2], 4
      %s229 = int_to_ptr.vmem [resolvable:$true] %s228
      %234 = dma.vmem_to_hbm [thread:$0]  %s229, 256, %s6, [#allocation3], 128, 128, 8
    $region29: #{svs_decoder_forward.27} parent=1 // pred_fallthru
      _
    // Predicated region
    $region30: #{svs_decoder_forward.27} parent=1 // pred_check
      _
    $region31: #{svs_decoder_forward.27} parent=1 // pred_check_branch
      %236 = sbr.rel (0) target = $region33
    $region32: #{svs_decoder_forward.27} parent=1 // pred_region
      _
    $region33: #{svs_decoder_forward.27} parent=1 // pred_fallthru
      _
    // Predicated region
    $region34: #{svs_decoder_forward.27} parent=1 // pred_check
      _
    $region35: #{svs_decoder_forward.27} parent=1 // pred_check_branch
      %238 = sbr.rel (0) target = $region37
    $region36: #{svs_decoder_forward.27} parent=1 // pred_region
      _
    $region37: #{svs_decoder_forward.27} parent=1 // pred_fallthru
      _
    // Predicated region
    $region38: #{svs_decoder_forward.27} parent=1 // pred_check
      _
    $region39: #{svs_decoder_forward.27} parent=1 // pred_check_branch
      %240 = sbr.rel (0) target = $region41
    $region40: #{svs_decoder_forward.27} parent=1 // pred_region
      _
    $region41: #{svs_decoder_forward.27} parent=1 // pred_fallthru
      _
    // Predicated region
    $region42: #{svs_decoder_forward.27} parent=1 // pred_check
      _
    $region43: #{svs_decoder_forward.27} parent=1 // pred_check_branch
      %242 = sbr.rel (0) target = $region45
    $region44: #{svs_decoder_forward.27} parent=1 // pred_region
      %243 = dma.done [#allocation3], 256
    $region45: #{svs_decoder_forward.27} parent=1 // pred_fallthru
      _
    %244 = vsyncpa [#allocation3], 1

// kernel: svs_decoder_forward.28
$region0: #{svs_decoder_forward.28}
  #allocation0 [shape = 'u32[]', space=smem, size = 0x4, offset = 0x4, fixed_abs, tag = 'smem constant byte address 0x4 - core index']
  #allocation1 [shape = 'u32[144,128]{1,0:T(1,128)}', space=vmem, size = 0x12000, scoped, tag = 'internal scratch']
  %s0 = inlined_call_operand.vmem [shape: f32[8,128], index: 0, kind: input, shape index: {}]
  %s1 = inlined_call_operand.vmem [shape: f32[8,1], index: 1, kind: input, shape index: {}]
  %s2 = inlined_call_operand.vmem [shape: f32[8,1], index: 2, kind: input, shape index: {}]
  %s3 = inlined_call_operand.vmem [shape: f32[2,8,1], index: 3, kind: input, shape index: {}]
  %s4 = inlined_call_operand.vmem [shape: f32[8,128], index: 4, kind: input, shape index: {}]
  %s5 = inlined_call_operand.vmem [shape: f32[8,1], index: 5, kind: input, shape index: {}]
  %s6 = inlined_call_operand.vmem [shape: f32[8,1], index: 6, kind: input, shape index: {}]
  %s7 = inlined_call_operand.vmem [shape: bf16[8,128], index: 7, kind: output, shape index: {}]
  %s8 = sld [smem:[#allocation0]]
  $region38: #{svs_decoder_forward.28} parent=0
    _
  %s10 = ssub.s32 1, %s8
  %s11 = scalar_select 0, %s10, %s8
  // Predicated region
  $region2: #{svs_decoder_forward.28} parent=0 // pred_check
    _
  $region3: #{svs_decoder_forward.28} parent=0 // pred_check_branch
    %13 = sbr.rel (0) target = $region5
  $region4: #{svs_decoder_forward.28} parent=0 // pred_region
    _
  $region5: #{svs_decoder_forward.28} parent=0 // pred_fallthru
    _
  // Predicated region
  $region6: #{svs_decoder_forward.28} parent=0 // pred_check
    _
  $region7: #{svs_decoder_forward.28} parent=0 // pred_check_branch
    %15 = sbr.rel (0) target = $region9
  $region8: #{svs_decoder_forward.28} parent=0 // pred_region
    _
  $region9: #{svs_decoder_forward.28} parent=0 // pred_fallthru
    _
  // Predicated region
  $region10: #{svs_decoder_forward.28} parent=0 // pred_check
    _
  $region11: #{svs_decoder_forward.28} parent=0 // pred_check_branch
    %17 = sbr.rel (0) target = $region13
  $region12: #{svs_decoder_forward.28} parent=0 // pred_region
    _
  $region13: #{svs_decoder_forward.28} parent=0 // pred_fallthru
    _
  // Predicated region
  $region14: #{svs_decoder_forward.28} parent=0 // pred_check
    _
  $region15: #{svs_decoder_forward.28} parent=0 // pred_check_branch
    %19 = sbr.rel (0) target = $region17
  $region16: #{svs_decoder_forward.28} parent=0 // pred_region
    _
  $region17: #{svs_decoder_forward.28} parent=0 // pred_fallthru
    _
  // Predicated region
  $region18: #{svs_decoder_forward.28} parent=0 // pred_check
    _
  $region19: #{svs_decoder_forward.28} parent=0 // pred_check_branch
    %21 = sbr.rel (0) target = $region21
  $region20: #{svs_decoder_forward.28} parent=0 // pred_region
    _
  $region21: #{svs_decoder_forward.28} parent=0 // pred_fallthru
    _
  // Predicated region
  $region22: #{svs_decoder_forward.28} parent=0 // pred_check
    _
  $region23: #{svs_decoder_forward.28} parent=0 // pred_check_branch
    %23 = sbr.rel (0) target = $region25
  $region24: #{svs_decoder_forward.28} parent=0 // pred_region
    _
  $region25: #{svs_decoder_forward.28} parent=0 // pred_fallthru
    _
  // Predicated region
  $region26: #{svs_decoder_forward.28} parent=0 // pred_check
    _
  $region27: #{svs_decoder_forward.28} parent=0 // pred_check_branch
    %25 = sbr.rel (0) target = $region29
  $region28: #{svs_decoder_forward.28} parent=0 // pred_region
    _
  $region29: #{svs_decoder_forward.28} parent=0 // pred_fallthru
    _
  %v26 = vld [vmem:[%s0] sm:$0xff]
  %v27 = vlaneseq
  %v28 = vand.u32 %v27, 127
  %vm29 = vcmp.ge.s32.totalorder %v28, 0
  %vm30 = vcmp.lt.s32.totalorder %v28, 64
  %vm31 = vmand %vm29, %vm30
  %v32 = vld [vmem:[%s3] sm:$0xff]
  %34 = vset.pattern.permute.xlu0 0
  %35 = vperm.xlu0 %34, %v32
  %v36 = vpop.permute.xlu0 %35
  %v38 = vsel %vm31, %v36, 0.0
  %vm39 = vcmp.ge.s32.totalorder %v28, 64
  %vm40 = vcmp.lt.s32.totalorder %v28, 128
  %vm41 = vmand %vm39, %vm40
  %s42 = scalar_lea.vmem %s3, 8
  %v43 = vld [vmem:[%s42] sm:$0xff]
  %45 = vset.pattern.permute.xlu0 0
  %46 = vperm.xlu0 %45, %v43
  %v47 = vpop.permute.xlu0 %46
  %v49 = vsel %vm41, %v47, %v38
  %v50 = vld [vmem:[%s1] sm:$0xff]
  %52 = vset.pattern.permute.xlu0 0
  %53 = vperm.xlu0 %52, %v50
  %v54 = vpop.permute.xlu0 %53
  %v56 = vmul.f32 %v26, %v54
  %v57 = vld [vmem:[%s2] sm:$0xff]
  %59 = vset.pattern.permute.xlu0 0
  %60 = vperm.xlu0 %59, %v57
  %v61 = vpop.permute.xlu0 %60
  %v63 = vadd.f32 %v56, %v61
  %v64 = vmul.f32 %v63, %v49
  %v65 = vld [vmem:[%s4] sm:$0xff]
  %v66 = vadd.f32 %v64, %v65
  %vm67 = vcmp.ge.f32.partialorder %v66, 0.0
  %v68 = vmul.f32 %v66, 0.01
  %v69 = vsel %vm67, %v66, %v68
  %70 = vadd.xlane.f32.xlu0 %v69
  %v71 = vpop.xlane.xlu0 %70
  %v72 = vmul.f32 %v71, 0.0078125
  %v73 = vmul.f32 %v69, %v69
  %74 = vadd.xlane.f32.xlu0 %v73
  %v75 = vpop.xlane.xlu0 %74
  %v76 = vmul.f32 %v75, 0.0078125
  %v77 = vmul.f32 %v72, %v72
  %v78 = vsub.f32 %v76, %v77
  %v79 = vmax.f32 %v78, 0.0
  %v80 = vld [vmem:[%s5] sm:$0xff]
  %v81 = vadd.f32 %v79, 1e-05
  %v82 = vrsqrt.pop %v81
  %v83 = vmul.f32 %v80, %v82
  %v84 = vld [vmem:[%s6] sm:$0xff]
  %v85 = vmul.f32 %v72, %v83
  %v86 = vsub.f32 %v84, %v85
  %88 = vset.pattern.permute.xlu0 0
  %89 = vperm.xlu0 %88, %v83
  %v90 = vpop.permute.xlu0 %89
  %v92 = vmul.f32 %v69, %v90
  %94 = vset.pattern.permute.xlu0 0
  %95 = vperm.xlu0 %94, %v86
  %v96 = vpop.permute.xlu0 %95
  %v98 = vadd.f32 %v92, %v96
  %vm99 = vcmp.ge.f32.partialorder %v98, 0.0
  %v100 = vmul.f32 %v98, 0.01
  %v101 = vsel %vm99, %v98, %v100
  %v102 = vpack.c.bf16 %v101, %v101
  %103 = vst [vmem:[%s7] sm:$0xf] %v102
  // Predicated region
  $region30: #{svs_decoder_forward.28} parent=0 // pred_check
    _
  $region31: #{svs_decoder_forward.28} parent=0 // pred_check_branch
    %105 = sbr.rel (0) target = $region33
  $region32: #{svs_decoder_forward.28} parent=0 // pred_region
    _
  $region33: #{svs_decoder_forward.28} parent=0 // pred_fallthru
    _
  // Predicated region
  $region34: #{svs_decoder_forward.28} parent=0 // pred_check
    _
  $region35: #{svs_decoder_forward.28} parent=0 // pred_check_branch
    %107 = sbr.rel (0) target = $region37
  $region36: #{svs_decoder_forward.28} parent=0 // pred_region
    _
  $region37: #{svs_decoder_forward.28} parent=0 // pred_fallthru
    _

// kernel: svs_decoder_forward.29
$region0: #{svs_decoder_forward.29}
  #allocation0 [shape = 'u32[]', space=smem, size = 0x4, offset = 0x4, fixed_abs, tag = 'smem constant byte address 0x4 - core index']
  #allocation1 [shape = 'u32[144,128]{1,0:T(1,128)}', space=vmem, size = 0x12000, scoped, tag = 'internal scratch']
  %s0 = inlined_call_operand.vmem [shape: bf16[32,216], index: 0, kind: input, shape index: {}]
  %s1 = inlined_call_operand.vmem [shape: bf16[216,128], index: 1, kind: input, shape index: {}]
  %s2 = inlined_call_operand.vmem [shape: f32[32,1], index: 2, kind: input, shape index: {}]
  %s3 = inlined_call_operand.vmem [shape: f32[32,128], index: 3, kind: output, shape index: {}]
  %s4 = sld [smem:[#allocation0]]
  $region22: #{svs_decoder_forward.29} parent=0
    _
  %s6 = ssub.s32 1, %s4
  %s7 = scalar_select 0, %s6, %s4
  // Predicated region
  $region2: #{svs_decoder_forward.29} parent=0 // pred_check
    _
  $region3: #{svs_decoder_forward.29} parent=0 // pred_check_branch
    %9 = sbr.rel (0) target = $region5
  $region4: #{svs_decoder_forward.29} parent=0 // pred_region
    _
  $region5: #{svs_decoder_forward.29} parent=0 // pred_fallthru
    _
  // Predicated region
  $region6: #{svs_decoder_forward.29} parent=0 // pred_check
    _
  $region7: #{svs_decoder_forward.29} parent=0 // pred_check_branch
    %11 = sbr.rel (0) target = $region9
  $region8: #{svs_decoder_forward.29} parent=0 // pred_region
    _
  $region9: #{svs_decoder_forward.29} parent=0 // pred_fallthru
    _
  // Predicated region
  $region10: #{svs_decoder_forward.29} parent=0 // pred_check
    _
  $region11: #{svs_decoder_forward.29} parent=0 // pred_check_branch
    %13 = sbr.rel (0) target = $region13
  $region12: #{svs_decoder_forward.29} parent=0 // pred_region
    _
  $region13: #{svs_decoder_forward.29} parent=0 // pred_fallthru
    _
  %v15 = vld [vmem:[%s0] sm:$0xff]
  %v16 = vld [vmem:[%s0 + $0x8] sm:$0xff]
  %v17 = vld [vmem:[%s0 + $0x10] sm:$0xff]
  %v18 = vld [vmem:[%s0 + $0x18] sm:$0xff]
  %v19 = vld [vmem:[%s1] sm:$0xf]
  %v20 = vld [vmem:[%s1 + $0x4] sm:$0xf]
  %v21 = vld [vmem:[%s1 + $0x8] sm:$0xf]
  %v22 = vld [vmem:[%s1 + $0xc] sm:$0xf]
  %v23 = vld [vmem:[%s1 + $0x10] sm:$0xf]
  %v24 = vld [vmem:[%s1 + $0x14] sm:$0xf]
  %v25 = vld [vmem:[%s1 + $0x18] sm:$0xf]
  %v26 = vld [vmem:[%s1 + $0x1c] sm:$0xf]
  %v27 = vld [vmem:[%s1 + $0x20] sm:$0xf]
  %v28 = vld [vmem:[%s1 + $0x24] sm:$0xf]
  %v29 = vld [vmem:[%s1 + $0x28] sm:$0xf]
  %v30 = vld [vmem:[%s1 + $0x2c] sm:$0xf]
  %v31 = vld [vmem:[%s1 + $0x30] sm:$0xf]
  %v32 = vld [vmem:[%s1 + $0x34] sm:$0xf]
  %v33 = vld [vmem:[%s1 + $0x38] sm:$0xf]
  %v34 = vld [vmem:[%s1 + $0x3c] sm:$0xf]
  %v35 = vld [vmem:[%s1 + $0x40] sm:$0xf]
  %v36 = vld [vmem:[%s1 + $0x44] sm:$0xf]
  %v37 = vld [vmem:[%s1 + $0x48] sm:$0xf]
  %v38 = vld [vmem:[%s1 + $0x4c] sm:$0xf]
  %v39 = vld [vmem:[%s1 + $0x50] sm:$0xf]
  %v40 = vld [vmem:[%s1 + $0x54] sm:$0xf]
  %v41 = vld [vmem:[%s1 + $0x58] sm:$0xf]
  %v42 = vld [vmem:[%s1 + $0x5c] sm:$0xf]
  %v43 = vld [vmem:[%s1 + $0x60] sm:$0xf]
  %v44 = vld [vmem:[%s1 + $0x64] sm:$0xf]
  %v45 = vld [vmem:[%s1 + $0x68] sm:$0xf]
  %v46 = vld [vmem:[%s2] sm:$0xff]
  %v47 = vld [vmem:[%s2 + $0x8] sm:$0xff]
  %v48 = vld [vmem:[%s2 + $0x10] sm:$0xff]
  %v49 = vld [vmem:[%s2 + $0x18] sm:$0xff]
  %51 = vset.pattern.permute.xlu0 0
  %52 = vperm.xlu0 %51, %v46
  %v53 = vpop.permute.xlu0 %52
  %56 = vset.pattern.permute.xlu0 0
  %57 = vperm.xlu0 %56, %v47
  %v58 = vpop.permute.xlu0 %57
  %61 = vset.pattern.permute.xlu0 0
  %62 = vperm.xlu0 %61, %v48
  %v63 = vpop.permute.xlu0 %62
  %66 = vset.pattern.permute.xlu0 0
  %67 = vperm.xlu0 %66, %v49
  %v68 = vpop.permute.xlu0 %67
  %v74 = vunpack.c.l.b16 %v15
  %v75 = vunpack.c.h.b16 %v15
  %v76 = vunpack.c.l.b16 %v16
  %v77 = vunpack.c.h.b16 %v16
  %v78 = vunpack.c.l.b16 %v17
  %v79 = vunpack.c.h.b16 %v17
  %v80 = vunpack.c.l.b16 %v18
  %v81 = vunpack.c.h.b16 %v18
  %v82 = vpack.c.b16 %v76, %v74
  %v83 = vpack.c.b16 %v77, %v75
  %v84 = vpack.c.b16 %v80, %v78
  %v85 = vpack.c.b16 %v81, %v79
  %v115 = vunpack.c.l.b16 %v19
  %v116 = vunpack.c.l.b16 %v20
  %v117 = vunpack.c.l.b16 %v21
  %v118 = vunpack.c.l.b16 %v22
  %v119 = vunpack.c.l.b16 %v23
  %v120 = vunpack.c.l.b16 %v24
  %v121 = vunpack.c.l.b16 %v25
  %v122 = vunpack.c.l.b16 %v26
  %v123 = vunpack.c.l.b16 %v27
  %v124 = vunpack.c.l.b16 %v28
  %v125 = vunpack.c.l.b16 %v29
  %v126 = vunpack.c.l.b16 %v30
  %v127 = vunpack.c.l.b16 %v31
  %v128 = vunpack.c.l.b16 %v32
  %v129 = vunpack.c.l.b16 %v33
  %v130 = vunpack.c.l.b16 %v34
  %v131 = vunpack.c.l.b16 %v35
  %v132 = vunpack.c.l.b16 %v36
  %v133 = vunpack.c.l.b16 %v37
  %v134 = vunpack.c.l.b16 %v38
  %v135 = vunpack.c.l.b16 %v39
  %v136 = vunpack.c.l.b16 %v40
  %v137 = vunpack.c.l.b16 %v41
  %v138 = vunpack.c.l.b16 %v42
  %v139 = vunpack.c.l.b16 %v43
  %v140 = vunpack.c.l.b16 %v44
  %v141 = vunpack.c.l.b16 %v45
  %v142 = vpack.c.b16 %v116, %v115
  %v143 = vpack.c.b16 %v118, %v117
  %v144 = vpack.c.b16 %v120, %v119
  %v145 = vpack.c.b16 %v122, %v121
  %v146 = vpack.c.b16 %v124, %v123
  %v147 = vpack.c.b16 %v126, %v125
  %v148 = vpack.c.b16 %v128, %v127
  %v149 = vpack.c.b16 %v130, %v129
  %v150 = vpack.c.b16 %v132, %v131
  %v151 = vpack.c.b16 %v134, %v133
  %v152 = vpack.c.b16 %v136, %v135
  %v153 = vpack.c.b16 %v138, %v137
  %v154 = vpack.c.b16 %v140, %v139
  %v155 = vpack.c.b16 %v141, %v141
  %vm169 = vcmask 719872
  %v171 = vsel %vm169, %v83, 0
  %v174 = vsel %vm169, %v85, 0
  %vm176 = vcmask 1043456
  %v178 = vsel %vm176, %v155, 0
  %180 = vmatprep.subr.bf16.mxu0 0
  %181 = vmatpush1.bf16.msra.mxu0 %v149
  %182 = vmatprep.subr.bf16.mxu0 0
  %183 = vmatpush1.bf16.msra.mxu0 %v148
  %184 = vmatprep.subr.bf16.mxu0 0
  %185 = vmatpush1.bf16.msra.mxu0 %v147
  %186 = vmatprep.subr.bf16.mxu0 0
  %187 = vmatpush1.bf16.msra.mxu0 %v146
  %188 = vmatprep.subr.bf16.mxu0 0
  %189 = vmatpush1.bf16.msra.mxu0 %v145
  %190 = vmatprep.subr.bf16.mxu0 0
  %191 = vmatpush1.bf16.msra.mxu0 %v144
  %192 = vmatprep.subr.bf16.mxu0 0
  %193 = vmatpush1.bf16.msra.mxu0 %v143
  %194 = vmatprep.subr.bf16.mxu0 0
  %195 = vmatpush1.bf16.msra.mxu0 %v142
  %196 = vmatprep.subr.bf16.mxu0 0
  %197 = vmatpush2.bf16.msra.mxu0 0
  %198 = vmatprep.subr.bf16.mxu0 0
  %199 = vmatpush2.bf16.msra.mxu0 0
  %200 = vmatprep.subr.bf16.mxu0 0
  %201 = vmatpush2.bf16.msra.mxu0 %v178
  %202 = vmatprep.subr.bf16.mxu0 0
  %203 = vmatpush2.bf16.msra.mxu0 %v154
  %204 = vmatprep.subr.bf16.mxu0 0
  %205 = vmatpush2.bf16.msra.mxu0 %v153
  %206 = vmatprep.subr.bf16.mxu0 0
  %207 = vmatpush2.bf16.msra.mxu0 %v152
  %208 = vmatprep.subr.bf16.mxu0 0
  %209 = vmatpush2.bf16.msra.mxu0 %v151
  %210 = vmatprep.subr.bf16.mxu0 0
  %211 = vmatpush2.bf16.msra.mxu0 %v150
  %212 = vmatprep.mubr.bf16.mxu0 %v171
  %213 = vmatmul.mubr.bf16.gmra.mxu0 %v82
  %v214 = vpop.f32.mrf.mxu0
  %v215 = vadd.f32 %v53, %v214
  %v216 = vpop.f32.mrf.mxu0
  %v217 = vpop.f32.mrf.mxu0
  %v218 = vadd.f32 %v58, %v217
  %v219 = vpop.f32.mrf.mxu0
  %220 = vmatprep.mubr.bf16.mxu0 %v174
  %221 = vmatmul.mubr.bf16.gmra.mxu0 %v84
  %v222 = vpop.f32.mrf.mxu0
  %v223 = vadd.f32 %v63, %v222
  %v224 = vpop.f32.mrf.mxu0
  %v225 = vpop.f32.mrf.mxu0
  %v226 = vadd.f32 %v68, %v225
  %v227 = vpop.f32.mrf.mxu0
  %228 = vdwg.mxu0
  %229 = vst [vmem:[%s3] sm:$0xff] %v215
  %230 = vst [vmem:[%s3 + $0x8] sm:$0xff] %v218
  %231 = vst [vmem:[%s3 + $0x10] sm:$0xff] %v223
  %232 = vst [vmem:[%s3 + $0x18] sm:$0xff] %v226
  // Predicated region
  $region14: #{svs_decoder_forward.29} parent=0 // pred_check
    _
  $region15: #{svs_decoder_forward.29} parent=0 // pred_check_branch
    %234 = sbr.rel (0) target = $region17
  $region16: #{svs_decoder_forward.29} parent=0 // pred_region
    _
  $region17: #{svs_decoder_forward.29} parent=0 // pred_fallthru
    _
  // Predicated region
  $region18: #{svs_decoder_forward.29} parent=0 // pred_check
    _
  $region19: #{svs_decoder_forward.29} parent=0 // pred_check_branch
    %236 = sbr.rel (0) target = $region21
  $region20: #{svs_decoder_forward.29} parent=0 // pred_region
    _
  $region21: #{svs_decoder_forward.29} parent=0 // pred_fallthru
    _

// kernel: svs_decoder_forward.30
$region0: #{svs_decoder_forward.30}
  #allocation0 [shape = 'u32[]', space=smem, size = 0x4, offset = 0x4, fixed_abs, tag = 'smem constant byte address 0x4 - core index']
  #allocation1 [shape = 'u32[144,128]{1,0:T(1,128)}', space=vmem, size = 0x12000, scoped, tag = 'internal scratch']
  %s0 = inlined_call_operand.vmem [shape: bf16[4,108], index: 0, kind: input, shape index: {}]
  %s1 = inlined_call_operand.vmem [shape: bf16[108,1024], index: 1, kind: input, shape index: {}]
  %s2 = inlined_call_operand.vmem [shape: f32[4,1], index: 2, kind: input, shape index: {}]
  %s3 = inlined_call_operand.vmem [shape: f32[4,1], index: 3, kind: input, shape index: {}]
  %s4 = inlined_call_operand.vmem [shape: f32[4,1], index: 4, kind: input, shape index: {}]
  %s5 = inlined_call_operand.vmem [shape: bf16[4,1024], index: 5, kind: output, shape index: {}]
  %s6 = sld [smem:[#allocation0]]
  $region30: #{svs_decoder_forward.30} parent=0
    _
  %s8 = ssub.s32 1, %s6
  %s9 = scalar_select 0, %s8, %s6
  // Predicated region
  $region2: #{svs_decoder_forward.30} parent=0 // pred_check
    _
  $region3: #{svs_decoder_forward.30} parent=0 // pred_check_branch
    %11 = sbr.rel (0) target = $region5
  $region4: #{svs_decoder_forward.30} parent=0 // pred_region
    _
  $region5: #{svs_decoder_forward.30} parent=0 // pred_fallthru
    _
  // Predicated region
  $region6: #{svs_decoder_forward.30} parent=0 // pred_check
    _
  $region7: #{svs_decoder_forward.30} parent=0 // pred_check_branch
    %13 = sbr.rel (0) target = $region9
  $region8: #{svs_decoder_forward.30} parent=0 // pred_region
    _
  $region9: #{svs_decoder_forward.30} parent=0 // pred_fallthru
    _
  // Predicated region
  $region10: #{svs_decoder_forward.30} parent=0 // pred_check
    _
  $region11: #{svs_decoder_forward.30} parent=0 // pred_check_branch
    %15 = sbr.rel (0) target = $region13
  $region12: #{svs_decoder_forward.30} parent=0 // pred_region
    _
  $region13: #{svs_decoder_forward.30} parent=0 // pred_fallthru
    _
  // Predicated region
  $region14: #{svs_decoder_forward.30} parent=0 // pred_check
    _
  $region15: #{svs_decoder_forward.30} parent=0 // pred_check_branch
    %17 = sbr.rel (0) target = $region17
  $region16: #{svs_decoder_forward.30} parent=0 // pred_region
    _
  $region17: #{svs_decoder_forward.30} parent=0 // pred_fallthru
    _
  // Predicated region
  $region18: #{svs_decoder_forward.30} parent=0 // pred_check
    _
  $region19: #{svs_decoder_forward.30} parent=0 // pred_check_branch
    %19 = sbr.rel (0) target = $region21
  $region20: #{svs_decoder_forward.30} parent=0 // pred_region
    _
  $region21: #{svs_decoder_forward.30} parent=0 // pred_fallthru
    _
  %v21 = vld [vmem:[%s0] sm:$0x3]
  %v22 = vld [vmem:[%s1] sm:$0xff]
  %v23 = vld [vmem:[%s1 + $0x8] sm:$0xff]
  %v24 = vld [vmem:[%s1 + $0x10] sm:$0xff]
  %v25 = vld [vmem:[%s1 + $0x18] sm:$0xff]
  %v26 = vld [vmem:[%s1 + $0x20] sm:$0xff]
  %v27 = vld [vmem:[%s1 + $0x28] sm:$0xff]
  %v28 = vld [vmem:[%s1 + $0x30] sm:$0xff]
  %v29 = vld [vmem:[%s1 + $0x38] sm:$0xff]
  %v30 = vld [vmem:[%s1 + $0x40] sm:$0xff]
  %v31 = vld [vmem:[%s1 + $0x48] sm:$0xff]
  %v32 = vld [vmem:[%s1 + $0x50] sm:$0xff]
  %v33 = vld [vmem:[%s1 + $0x58] sm:$0xff]
  %v34 = vld [vmem:[%s1 + $0x60] sm:$0xff]
  %v35 = vld [vmem:[%s1 + $0x68] sm:$0xff]
  %v36 = vld [vmem:[%s1 + $0x70] sm:$0xff]
  %v37 = vld [vmem:[%s1 + $0x78] sm:$0xff]
  %v38 = vld [vmem:[%s1 + $0x80] sm:$0xff]
  %v39 = vld [vmem:[%s1 + $0x88] sm:$0xff]
  %v40 = vld [vmem:[%s1 + $0x90] sm:$0xff]
  %v41 = vld [vmem:[%s1 + $0x98] sm:$0xff]
  %v42 = vld [vmem:[%s1 + $0xa0] sm:$0xff]
  %v43 = vld [vmem:[%s1 + $0xa8] sm:$0xff]
  %v44 = vld [vmem:[%s1 + $0xb0] sm:$0xff]
  %v45 = vld [vmem:[%s1 + $0xb8] sm:$0xff]
  %v46 = vld [vmem:[%s1 + $0xc0] sm:$0xff]
  %v47 = vld [vmem:[%s1 + $0xc8] sm:$0xff]
  %v48 = vld [vmem:[%s1 + $0xd0] sm:$0xff]
  %v49 = vld [vmem:[%s1 + $0xd8] sm:$0xff]
  %v50 = vld [vmem:[%s1 + $0xe0] sm:$0xff]
  %v51 = vld [vmem:[%s1 + $0xe8] sm:$0xff]
  %v52 = vld [vmem:[%s1 + $0xf0] sm:$0xff]
  %v53 = vld [vmem:[%s1 + $0xf8] sm:$0xff]
  %v54 = vld [vmem:[%s1 + $0x100] sm:$0xff]
  %v55 = vld [vmem:[%s1 + $0x108] sm:$0xff]
  %v56 = vld [vmem:[%s1 + $0x110] sm:$0xff]
  %v57 = vld [vmem:[%s1 + $0x118] sm:$0xff]
  %v58 = vld [vmem:[%s1 + $0x120] sm:$0xff]
  %v59 = vld [vmem:[%s1 + $0x128] sm:$0xff]
  %v60 = vld [vmem:[%s1 + $0x130] sm:$0xff]
  %v61 = vld [vmem:[%s1 + $0x138] sm:$0xff]
  %v62 = vld [vmem:[%s1 + $0x140] sm:$0xff]
  %v63 = vld [vmem:[%s1 + $0x148] sm:$0xff]
  %v64 = vld [vmem:[%s1 + $0x150] sm:$0xff]
  %v65 = vld [vmem:[%s1 + $0x158] sm:$0xff]
  %v66 = vld [vmem:[%s1 + $0x160] sm:$0xff]
  %v67 = vld [vmem:[%s1 + $0x168] sm:$0xff]
  %v68 = vld [vmem:[%s1 + $0x170] sm:$0xff]
  %v69 = vld [vmem:[%s1 + $0x178] sm:$0xff]
  %v70 = vld [vmem:[%s1 + $0x180] sm:$0xff]
  %v71 = vld [vmem:[%s1 + $0x188] sm:$0xff]
  %v72 = vld [vmem:[%s1 + $0x190] sm:$0xff]
  %v73 = vld [vmem:[%s1 + $0x198] sm:$0xff]
  %v74 = vld [vmem:[%s1 + $0x1a0] sm:$0x33]
  %v75 = vld [vmem:[%s1 + $0x1a8] sm:$0x33]
  %v76 = vld [vmem:[%s1 + $0x1b0] sm:$0x33]
  %v77 = vld [vmem:[%s1 + $0x1b8] sm:$0x33]
  %v78 = vld [vmem:[%s2] sm:$0xf]
  %80 = vset.pattern.permute.xlu0 0
  %81 = vperm.xlu0 %80, %v78
  %v82 = vpop.permute.xlu0 %81
  %v140 = vunpack.c.l.b16 %v22
  %v141 = vunpack.c.h.b16 %v22
  %v142 = vunpack.c.l.b16 %v23
  %v143 = vunpack.c.h.b16 %v23
  %v144 = vunpack.c.l.b16 %v24
  %v145 = vunpack.c.h.b16 %v24
  %v146 = vunpack.c.l.b16 %v25
  %v147 = vunpack.c.h.b16 %v25
  %v148 = vunpack.c.l.b16 %v26
  %v149 = vunpack.c.h.b16 %v26
  %v150 = vunpack.c.l.b16 %v27
  %v151 = vunpack.c.h.b16 %v27
  %v152 = vunpack.c.l.b16 %v28
  %v153 = vunpack.c.h.b16 %v28
  %v154 = vunpack.c.l.b16 %v29
  %v155 = vunpack.c.h.b16 %v29
  %v156 = vunpack.c.l.b16 %v30
  %v157 = vunpack.c.h.b16 %v30
  %v158 = vunpack.c.l.b16 %v31
  %v159 = vunpack.c.h.b16 %v31
  %v160 = vunpack.c.l.b16 %v32
  %v161 = vunpack.c.h.b16 %v32
  %v162 = vunpack.c.l.b16 %v33
  %v163 = vunpack.c.h.b16 %v33
  %v164 = vunpack.c.l.b16 %v34
  %v165 = vunpack.c.h.b16 %v34
  %v166 = vunpack.c.l.b16 %v35
  %v167 = vunpack.c.h.b16 %v35
  %v168 = vunpack.c.l.b16 %v36
  %v169 = vunpack.c.h.b16 %v36
  %v170 = vunpack.c.l.b16 %v37
  %v171 = vunpack.c.h.b16 %v37
  %v172 = vunpack.c.l.b16 %v38
  %v173 = vunpack.c.h.b16 %v38
  %v174 = vunpack.c.l.b16 %v39
  %v175 = vunpack.c.h.b16 %v39
  %v176 = vunpack.c.l.b16 %v40
  %v177 = vunpack.c.h.b16 %v40
  %v178 = vunpack.c.l.b16 %v41
  %v179 = vunpack.c.h.b16 %v41
  %v180 = vunpack.c.l.b16 %v42
  %v181 = vunpack.c.h.b16 %v42
  %v182 = vunpack.c.l.b16 %v43
  %v183 = vunpack.c.h.b16 %v43
  %v184 = vunpack.c.l.b16 %v44
  %v185 = vunpack.c.h.b16 %v44
  %v186 = vunpack.c.l.b16 %v45
  %v187 = vunpack.c.h.b16 %v45
  %v188 = vunpack.c.l.b16 %v46
  %v189 = vunpack.c.h.b16 %v46
  %v190 = vunpack.c.l.b16 %v47
  %v191 = vunpack.c.h.b16 %v47
  %v192 = vunpack.c.l.b16 %v48
  %v193 = vunpack.c.h.b16 %v48
  %v194 = vunpack.c.l.b16 %v49
  %v195 = vunpack.c.h.b16 %v49
  %v196 = vunpack.c.l.b16 %v50
  %v197 = vunpack.c.h.b16 %v50
  %v198 = vunpack.c.l.b16 %v51
  %v199 = vunpack.c.h.b16 %v51
  %v200 = vunpack.c.l.b16 %v52
  %v201 = vunpack.c.h.b16 %v52
  %v202 = vunpack.c.l.b16 %v53
  %v203 = vunpack.c.h.b16 %v53
  %v204 = vunpack.c.l.b16 %v54
  %v205 = vunpack.c.h.b16 %v54
  %v206 = vunpack.c.l.b16 %v55
  %v207 = vunpack.c.h.b16 %v55
  %v208 = vunpack.c.l.b16 %v56
  %v209 = vunpack.c.h.b16 %v56
  %v210 = vunpack.c.l.b16 %v57
  %v211 = vunpack.c.h.b16 %v57
  %v212 = vunpack.c.l.b16 %v58
  %v213 = vunpack.c.h.b16 %v58
  %v214 = vunpack.c.l.b16 %v59
  %v215 = vunpack.c.h.b16 %v59
  %v216 = vunpack.c.l.b16 %v60
  %v217 = vunpack.c.h.b16 %v60
  %v218 = vunpack.c.l.b16 %v61
  %v219 = vunpack.c.h.b16 %v61
  %v220 = vunpack.c.l.b16 %v62
  %v221 = vunpack.c.h.b16 %v62
  %v222 = vunpack.c.l.b16 %v63
  %v223 = vunpack.c.h.b16 %v63
  %v224 = vunpack.c.l.b16 %v64
  %v225 = vunpack.c.h.b16 %v64
  %v226 = vunpack.c.l.b16 %v65
  %v227 = vunpack.c.h.b16 %v65
  %v228 = vunpack.c.l.b16 %v66
  %v229 = vunpack.c.h.b16 %v66
  %v230 = vunpack.c.l.b16 %v67
  %v231 = vunpack.c.h.b16 %v67
  %v232 = vunpack.c.l.b16 %v68
  %v233 = vunpack.c.h.b16 %v68
  %v234 = vunpack.c.l.b16 %v69
  %v235 = vunpack.c.h.b16 %v69
  %v236 = vunpack.c.l.b16 %v70
  %v237 = vunpack.c.h.b16 %v70
  %v238 = vunpack.c.l.b16 %v71
  %v239 = vunpack.c.h.b16 %v71
  %v240 = vunpack.c.l.b16 %v72
  %v241 = vunpack.c.h.b16 %v72
  %v242 = vunpack.c.l.b16 %v73
  %v243 = vunpack.c.h.b16 %v73
  %v244 = vunpack.c.l.b16 %v74
  %v245 = vunpack.c.h.b16 %v74
  %v246 = vunpack.c.l.b16 %v75
  %v247 = vunpack.c.h.b16 %v75
  %v248 = vunpack.c.l.b16 %v76
  %v249 = vunpack.c.h.b16 %v76
  %v250 = vunpack.c.l.b16 %v77
  %v251 = vunpack.c.h.b16 %v77
  %v252 = vpack.c.b16 %v148, %v140
  %v253 = vpack.c.b16 %v149, %v141
  %v254 = vpack.c.b16 %v150, %v142
  %v255 = vpack.c.b16 %v151, %v143
  %v256 = vpack.c.b16 %v152, %v144
  %v257 = vpack.c.b16 %v153, %v145
  %v258 = vpack.c.b16 %v154, %v146
  %v259 = vpack.c.b16 %v155, %v147
  %v260 = vpack.c.b16 %v164, %v156
  %v261 = vpack.c.b16 %v165, %v157
  %v262 = vpack.c.b16 %v166, %v158
  %v263 = vpack.c.b16 %v167, %v159
  %v264 = vpack.c.b16 %v168, %v160
  %v265 = vpack.c.b16 %v169, %v161
  %v266 = vpack.c.b16 %v170, %v162
  %v267 = vpack.c.b16 %v171, %v163
  %v268 = vpack.c.b16 %v180, %v172
  %v269 = vpack.c.b16 %v181, %v173
  %v270 = vpack.c.b16 %v182, %v174
  %v271 = vpack.c.b16 %v183, %v175
  %v272 = vpack.c.b16 %v184, %v176
  %v273 = vpack.c.b16 %v185, %v177
  %v274 = vpack.c.b16 %v186, %v178
  %v275 = vpack.c.b16 %v187, %v179
  %v276 = vpack.c.b16 %v196, %v188
  %v277 = vpack.c.b16 %v197, %v189
  %v278 = vpack.c.b16 %v198, %v190
  %v279 = vpack.c.b16 %v199, %v191
  %v280 = vpack.c.b16 %v200, %v192
  %v281 = vpack.c.b16 %v201, %v193
  %v282 = vpack.c.b16 %v202, %v194
  %v283 = vpack.c.b16 %v203, %v195
  %v284 = vpack.c.b16 %v212, %v204
  %v285 = vpack.c.b16 %v213, %v205
  %v286 = vpack.c.b16 %v214, %v206
  %v287 = vpack.c.b16 %v215, %v207
  %v288 = vpack.c.b16 %v216, %v208
  %v289 = vpack.c.b16 %v217, %v209
  %v290 = vpack.c.b16 %v218, %v210
  %v291 = vpack.c.b16 %v219, %v211
  %v292 = vpack.c.b16 %v228, %v220
  %v293 = vpack.c.b16 %v229, %v221
  %v294 = vpack.c.b16 %v230, %v222
  %v295 = vpack.c.b16 %v231, %v223
  %v296 = vpack.c.b16 %v232, %v224
  %v297 = vpack.c.b16 %v233, %v225
  %v298 = vpack.c.b16 %v234, %v226
  %v299 = vpack.c.b16 %v235, %v227
  %v300 = vpack.c.b16 %v244, %v236
  %v301 = vpack.c.b16 %v245, %v237
  %v302 = vpack.c.b16 %v246, %v238
  %v303 = vpack.c.b16 %v247, %v239
  %v304 = vpack.c.b16 %v248, %v240
  %v305 = vpack.c.b16 %v249, %v241
  %v306 = vpack.c.b16 %v250, %v242
  %v307 = vpack.c.b16 %v251, %v243
  %vm356 = vcmask 883712
  %v358 = vsel %vm356, %v21, 0
  %vm360 = vcmask 1045504
  %v362 = vsel %vm360, %v300, 0
  %v365 = vsel %vm360, %v301, 0
  %v368 = vsel %vm360, %v302, 0
  %v371 = vsel %vm360, %v303, 0
  %v374 = vsel %vm360, %v304, 0
  %v377 = vsel %vm360, %v305, 0
  %v380 = vsel %vm360, %v306, 0
  %v383 = vsel %vm360, %v307, 0
  %385 = vmatprep.subr.bf16.mxu0 0
  %386 = vmatpush1.bf16.msra.mxu0 0
  %387 = vmatprep.subr.bf16.mxu0 %v365
  %388 = vmatpush1.bf16.msra.mxu0 %v362
  %389 = vmatprep.subr.bf16.mxu0 %v293
  %390 = vmatpush1.bf16.msra.mxu0 %v292
  %391 = vmatprep.subr.bf16.mxu0 %v285
  %392 = vmatpush1.bf16.msra.mxu0 %v284
  %393 = vmatprep.subr.bf16.mxu0 %v277
  %394 = vmatpush1.bf16.msra.mxu0 %v276
  %395 = vmatprep.subr.bf16.mxu0 %v269
  %396 = vmatpush1.bf16.msra.mxu0 %v268
  %397 = vmatprep.subr.bf16.mxu0 %v261
  %398 = vmatpush1.bf16.msra.mxu0 %v260
  %399 = vmatprep.subr.bf16.mxu0 %v253
  %400 = vmatpush1.bf16.msra.mxu0 %v252
  %401 = vmatprep.subr.bf16.mxu0 0
  %402 = vmatpush2.bf16.msra.mxu0 0
  %403 = vmatprep.subr.bf16.mxu0 0
  %404 = vmatpush2.bf16.msra.mxu0 0
  %405 = vmatprep.subr.bf16.mxu0 0
  %406 = vmatpush2.bf16.msra.mxu0 0
  %407 = vmatprep.subr.bf16.mxu0 0
  %408 = vmatpush2.bf16.msra.mxu0 0
  %409 = vmatprep.subr.bf16.mxu0 0
  %410 = vmatpush2.bf16.msra.mxu0 0
  %411 = vmatprep.subr.bf16.mxu0 0
  %412 = vmatpush2.bf16.msra.mxu0 0
  %413 = vmatprep.subr.bf16.mxu0 0
  %414 = vmatpush2.bf16.msra.mxu0 0
  %415 = vmatprep.subr.bf16.mxu0 0
  %416 = vmatpush2.bf16.msra.mxu0 0
  %417 = vmatprep.mubr.bf16.mxu0 0
  %418 = vmatmul.mubr.bf16.gmra.mxu0 %v358
  %v419 = vpop.f32.mrf.mxu0
  %v420 = vadd.f32 %v82, %v419
  %v421 = vpop.f32.mrf.mxu0
  %v422 = vadd.f32 %v82, %v421
  %v423 = vpop.f32.mrf.mxu0
  %v424 = vpop.f32.mrf.mxu0
  %425 = vdwg.mxu0
  %426 = vmatprep.subr.bf16.mxu0 0
  %427 = vmatpush1.bf16.msra.mxu0 0
  %428 = vmatprep.subr.bf16.mxu0 %v371
  %429 = vmatpush1.bf16.msra.mxu0 %v368
  %430 = vmatprep.subr.bf16.mxu0 %v295
  %431 = vmatpush1.bf16.msra.mxu0 %v294
  %432 = vmatprep.subr.bf16.mxu0 %v287
  %433 = vmatpush1.bf16.msra.mxu0 %v286
  %434 = vmatprep.subr.bf16.mxu0 %v279
  %435 = vmatpush1.bf16.msra.mxu0 %v278
  %436 = vmatprep.subr.bf16.mxu0 %v271
  %437 = vmatpush1.bf16.msra.mxu0 %v270
  %438 = vmatprep.subr.bf16.mxu0 %v263
  %439 = vmatpush1.bf16.msra.mxu0 %v262
  %440 = vmatprep.subr.bf16.mxu0 %v255
  %441 = vmatpush1.bf16.msra.mxu0 %v254
  %442 = vmatprep.subr.bf16.mxu0 0
  %443 = vmatpush2.bf16.msra.mxu0 0
  %444 = vmatprep.subr.bf16.mxu0 0
  %445 = vmatpush2.bf16.msra.mxu0 0
  %446 = vmatprep.subr.bf16.mxu0 0
  %447 = vmatpush2.bf16.msra.mxu0 0
  %448 = vmatprep.subr.bf16.mxu0 0
  %449 = vmatpush2.bf16.msra.mxu0 0
  %450 = vmatprep.subr.bf16.mxu0 0
  %451 = vmatpush2.bf16.msra.mxu0 0
  %452 = vmatprep.subr.bf16.mxu0 0
  %453 = vmatpush2.bf16.msra.mxu0 0
  %454 = vmatprep.subr.bf16.mxu0 0
  %455 = vmatpush2.bf16.msra.mxu0 0
  %456 = vmatprep.subr.bf16.mxu0 0
  %457 = vmatpush2.bf16.msra.mxu0 0
  %458 = vmatprep.mubr.bf16.mxu0 0
  %459 = vmatmul.mubr.bf16.gmra.mxu0 %v358
  %v460 = vpop.f32.mrf.mxu0
  %v461 = vadd.f32 %v82, %v460
  %v462 = vpop.f32.mrf.mxu0
  %v463 = vadd.f32 %v82, %v462
  %v464 = vpop.f32.mrf.mxu0
  %v465 = vpop.f32.mrf.mxu0
  %466 = vdwg.mxu0
  %467 = vmatprep.subr.bf16.mxu0 0
  %468 = vmatpush1.bf16.msra.mxu0 0
  %469 = vmatprep.subr.bf16.mxu0 %v377
  %470 = vmatpush1.bf16.msra.mxu0 %v374
  %471 = vmatprep.subr.bf16.mxu0 %v297
  %472 = vmatpush1.bf16.msra.mxu0 %v296
  %473 = vmatprep.subr.bf16.mxu0 %v289
  %474 = vmatpush1.bf16.msra.mxu0 %v288
  %475 = vmatprep.subr.bf16.mxu0 %v281
  %476 = vmatpush1.bf16.msra.mxu0 %v280
  %477 = vmatprep.subr.bf16.mxu0 %v273
  %478 = vmatpush1.bf16.msra.mxu0 %v272
  %479 = vmatprep.subr.bf16.mxu0 %v265
  %480 = vmatpush1.bf16.msra.mxu0 %v264
  %481 = vmatprep.subr.bf16.mxu0 %v257
  %482 = vmatpush1.bf16.msra.mxu0 %v256
  %483 = vmatprep.subr.bf16.mxu0 0
  %484 = vmatpush2.bf16.msra.mxu0 0
  %485 = vmatprep.subr.bf16.mxu0 0
  %486 = vmatpush2.bf16.msra.mxu0 0
  %487 = vmatprep.subr.bf16.mxu0 0
  %488 = vmatpush2.bf16.msra.mxu0 0
  %489 = vmatprep.subr.bf16.mxu0 0
  %490 = vmatpush2.bf16.msra.mxu0 0
  %491 = vmatprep.subr.bf16.mxu0 0
  %492 = vmatpush2.bf16.msra.mxu0 0
  %493 = vmatprep.subr.bf16.mxu0 0
  %494 = vmatpush2.bf16.msra.mxu0 0
  %495 = vmatprep.subr.bf16.mxu0 0
  %496 = vmatpush2.bf16.msra.mxu0 0
  %497 = vmatprep.subr.bf16.mxu0 0
  %498 = vmatpush2.bf16.msra.mxu0 0
  %499 = vmatprep.mubr.bf16.mxu0 0
  %500 = vmatmul.mubr.bf16.gmra.mxu0 %v358
  %v501 = vpop.f32.mrf.mxu0
  %v502 = vadd.f32 %v82, %v501
  %v503 = vpop.f32.mrf.mxu0
  %v504 = vadd.f32 %v82, %v503
  %v505 = vpop.f32.mrf.mxu0
  %v506 = vpop.f32.mrf.mxu0
  %507 = vdwg.mxu0
  %508 = vmatprep.subr.bf16.mxu0 0
  %509 = vmatpush1.bf16.msra.mxu0 0
  %510 = vmatprep.subr.bf16.mxu0 %v383
  %511 = vmatpush1.bf16.msra.mxu0 %v380
  %512 = vmatprep.subr.bf16.mxu0 %v299
  %513 = vmatpush1.bf16.msra.mxu0 %v298
  %514 = vmatprep.subr.bf16.mxu0 %v291
  %515 = vmatpush1.bf16.msra.mxu0 %v290
  %516 = vmatprep.subr.bf16.mxu0 %v283
  %517 = vmatpush1.bf16.msra.mxu0 %v282
  %518 = vmatprep.subr.bf16.mxu0 %v275
  %519 = vmatpush1.bf16.msra.mxu0 %v274
  %520 = vmatprep.subr.bf16.mxu0 %v267
  %521 = vmatpush1.bf16.msra.mxu0 %v266
  %522 = vmatprep.subr.bf16.mxu0 %v259
  %523 = vmatpush1.bf16.msra.mxu0 %v258
  %524 = vmatprep.subr.bf16.mxu0 0
  %525 = vmatpush2.bf16.msra.mxu0 0
  %526 = vmatprep.subr.bf16.mxu0 0
  %527 = vmatpush2.bf16.msra.mxu0 0
  %528 = vmatprep.subr.bf16.mxu0 0
  %529 = vmatpush2.bf16.msra.mxu0 0
  %530 = vmatprep.subr.bf16.mxu0 0
  %531 = vmatpush2.bf16.msra.mxu0 0
  %532 = vmatprep.subr.bf16.mxu0 0
  %533 = vmatpush2.bf16.msra.mxu0 0
  %534 = vmatprep.subr.bf16.mxu0 0
  %535 = vmatpush2.bf16.msra.mxu0 0
  %536 = vmatprep.subr.bf16.mxu0 0
  %537 = vmatpush2.bf16.msra.mxu0 0
  %538 = vmatprep.subr.bf16.mxu0 0
  %539 = vmatpush2.bf16.msra.mxu0 0
  %540 = vmatprep.mubr.bf16.mxu0 0
  %541 = vmatmul.mubr.bf16.gmra.mxu0 %v358
  %v542 = vpop.f32.mrf.mxu0
  %v543 = vadd.f32 %v82, %v542
  %v544 = vpop.f32.mrf.mxu0
  %v545 = vadd.f32 %v82, %v544
  %v546 = vpop.f32.mrf.mxu0
  %v547 = vpop.f32.mrf.mxu0
  %548 = vdwg.mxu0
  %vm549 = vcmask 1043456
  %v550 = vsel %vm549, %v420, 0.0
  %v551 = vsel %vm549, %v422, 0.0
  %v552 = vadd.f32 %v550, %v551
  %v553 = vsel %vm549, %v461, 0.0
  %v554 = vadd.f32 %v552, %v553
  %v555 = vsel %vm549, %v463, 0.0
  %v556 = vadd.f32 %v554, %v555
  %v557 = vsel %vm549, %v502, 0.0
  %v558 = vadd.f32 %v556, %v557
  %v559 = vsel %vm549, %v504, 0.0
  %v560 = vadd.f32 %v558, %v559
  %v561 = vsel %vm549, %v543, 0.0
  %v562 = vadd.f32 %v560, %v561
  %v563 = vsel %vm549, %v545, 0.0
  %v564 = vadd.f32 %v562, %v563
  %565 = vadd.xlane.f32.xlu0 %v564
  %v566 = vpop.xlane.xlu0 %565
  %v567 = vmul.f32 %v420, %v420
  %v568 = vmul.f32 %v422, %v422
  %v569 = vmul.f32 %v461, %v461
  %v570 = vmul.f32 %v463, %v463
  %v571 = vmul.f32 %v502, %v502
  %v572 = vmul.f32 %v504, %v504
  %v573 = vmul.f32 %v543, %v543
  %v574 = vmul.f32 %v545, %v545
  %v575 = vsel %vm549, %v567, 0.0
  %v576 = vsel %vm549, %v568, 0.0
  %v577 = vadd.f32 %v575, %v576
  %v578 = vsel %vm549, %v569, 0.0
  %v579 = vadd.f32 %v577, %v578
  %v580 = vsel %vm549, %v570, 0.0
  %v581 = vadd.f32 %v579, %v580
  %v582 = vsel %vm549, %v571, 0.0
  %v583 = vadd.f32 %v581, %v582
  %v584 = vsel %vm549, %v572, 0.0
  %v585 = vadd.f32 %v583, %v584
  %v586 = vsel %vm549, %v573, 0.0
  %v587 = vadd.f32 %v585, %v586
  %v588 = vsel %vm549, %v574, 0.0
  %v589 = vadd.f32 %v587, %v588
  %590 = vadd.xlane.f32.xlu0 %v589
  %v591 = vpop.xlane.xlu0 %590
  %v592 = vmul.f32 %v566, 0.0009765625
  %v593 = vmul.f32 %v591, 0.0009765625
  %v594 = vmul.f32 %v592, %v592
  %v595 = vsub.f32 %v593, %v594
  %v596 = vmax.f32 %v595, 0.0
  %v597 = vld [vmem:[%s3] sm:$0xf]
  %v598 = vadd.f32 %v596, 1e-05
  %v599 = vrsqrt.pop %v598
  %v600 = vmul.f32 %v597, %v599
  %v601 = vld [vmem:[%s4] sm:$0xf]
  %v602 = vmul.f32 %v592, %v600
  %v603 = vsub.f32 %v601, %v602
  %605 = vset.pattern.permute.xlu0 0
  %606 = vperm.xlu0 %605, %v600
  %v607 = vpop.permute.xlu0 %606
  %v609 = vmul.f32 %v420, %v607
  %v610 = vmul.f32 %v422, %v607
  %v611 = vmul.f32 %v461, %v607
  %v612 = vmul.f32 %v463, %v607
  %v613 = vmul.f32 %v502, %v607
  %v614 = vmul.f32 %v504, %v607
  %v615 = vmul.f32 %v543, %v607
  %v616 = vmul.f32 %v545, %v607
  %618 = vset.pattern.permute.xlu0 0
  %619 = vperm.xlu0 %618, %v603
  %v620 = vpop.permute.xlu0 %619
  %v622 = vadd.f32 %v609, %v620
  %v623 = vadd.f32 %v610, %v620
  %v624 = vadd.f32 %v611, %v620
  %v625 = vadd.f32 %v612, %v620
  %v626 = vadd.f32 %v613, %v620
  %v627 = vadd.f32 %v614, %v620
  %v628 = vadd.f32 %v615, %v620
  %v629 = vadd.f32 %v616, %v620
  %vm630 = vcmp.ge.f32.partialorder %v622, 0.0
  %vm631 = vcmp.ge.f32.partialorder %v623, 0.0
  %vm632 = vcmp.ge.f32.partialorder %v624, 0.0
  %vm633 = vcmp.ge.f32.partialorder %v625, 0.0
  %vm634 = vcmp.ge.f32.partialorder %v626, 0.0
  %vm635 = vcmp.ge.f32.partialorder %v627, 0.0
  %vm636 = vcmp.ge.f32.partialorder %v628, 0.0
  %vm637 = vcmp.ge.f32.partialorder %v629, 0.0
  %v638 = vmul.f32 %v622, 0.01
  %v639 = vmul.f32 %v623, 0.01
  %v640 = vmul.f32 %v624, 0.01
  %v641 = vmul.f32 %v625, 0.01
  %v642 = vmul.f32 %v626, 0.01
  %v643 = vmul.f32 %v627, 0.01
  %v644 = vmul.f32 %v628, 0.01
  %v645 = vmul.f32 %v629, 0.01
  %v646 = vsel %vm630, %v622, %v638
  %v647 = vsel %vm631, %v623, %v639
  %v648 = vsel %vm632, %v624, %v640
  %v649 = vsel %vm633, %v625, %v641
  %v650 = vsel %vm634, %v626, %v642
  %v651 = vsel %vm635, %v627, %v643
  %v652 = vsel %vm636, %v628, %v644
  %v653 = vsel %vm637, %v629, %v645
  %v654 = vpack.c.bf16 %v646, %v646
  %v655 = vpack.c.bf16 %v647, %v647
  %v656 = vpack.c.bf16 %v648, %v648
  %v657 = vpack.c.bf16 %v649, %v649
  %v658 = vpack.c.bf16 %v650, %v650
  %v659 = vpack.c.bf16 %v651, %v651
  %v660 = vpack.c.bf16 %v652, %v652
  %v661 = vpack.c.bf16 %v653, %v653
  %v670 = vcombine.low %v654, %v655
  %v671 = vcombine.low %v656, %v657
  %v673 = vunpack.c.l.s4 1983009808
  %v674 = vunpack.c.0.s8 %v673
  %v675 = vlaneseq
  %v676 = vshrl.u32 %v675, 7
  %v677 = vsub.s32 %v674, %v676
  %v678 = vrot.slane %v670, %v677
  %v680 = vunpack.c.l.s4 1983009808
  %v681 = vunpack.c.0.s8 %v680
  %v682 = vlaneseq
  %v683 = vshrl.u32 %v682, 7
  %v684 = vsub.s32 %v681, %v683
  %v685 = vrot.slane %v671, %v684
  %v686 = vcombine.low %v678, %v685
  %v687 = vcombine.low %v658, %v659
  %v688 = vcombine.low %v660, %v661
  %v690 = vunpack.c.l.s4 1983009808
  %v691 = vunpack.c.0.s8 %v690
  %v692 = vlaneseq
  %v693 = vshrl.u32 %v692, 7
  %v694 = vsub.s32 %v691, %v693
  %v695 = vrot.slane %v687, %v694
  %v697 = vunpack.c.l.s4 1983009808
  %v698 = vunpack.c.0.s8 %v697
  %v699 = vlaneseq
  %v700 = vshrl.u32 %v699, 7
  %v701 = vsub.s32 %v698, %v700
  %v702 = vrot.slane %v688, %v701
  %v703 = vcombine.low %v695, %v702
  %706 = vst [vmem:[%s5] sm:$0xff] %v686
  %707 = vst [vmem:[%s5 + $0x8] sm:$0xff] %v703
  // Predicated region
  $region22: #{svs_decoder_forward.30} parent=0 // pred_check
    _
  $region23: #{svs_decoder_forward.30} parent=0 // pred_check_branch
    %709 = sbr.rel (0) target = $region25
  $region24: #{svs_decoder_forward.30} parent=0 // pred_region
    _
  $region25: #{svs_decoder_forward.30} parent=0 // pred_fallthru
    _
  // Predicated region
  $region26: #{svs_decoder_forward.30} parent=0 // pred_check
    _
  $region27: #{svs_decoder_forward.30} parent=0 // pred_check_branch
    %711 = sbr.rel (0) target = $region29
  $region28: #{svs_decoder_forward.30} parent=0 // pred_region
    _
  $region29: #{svs_decoder_forward.30} parent=0 // pred_fallthru
    _

// kernel: svs_decoder_forward.31
$region0: #{svs_decoder_forward.31}
  #allocation0 [shape = 'u32[]', space=smem, size = 0x4, offset = 0x4, fixed_abs, tag = 'smem constant byte address 0x4 - core index']
  #allocation1 [shape = 'u32[144,128]{1,0:T(1,128)}', space=vmem, size = 0x12000, scoped, tag = 'internal scratch']
  %s0 = inlined_call_operand.vmem [shape: bf16[4,108], index: 0, kind: input, shape index: {}]
  %s1 = inlined_call_operand.vmem [shape: bf16[108,1024], index: 1, kind: input, shape index: {}]
  %s2 = inlined_call_operand.vmem [shape: f32[4,1], index: 2, kind: input, shape index: {}]
  %s3 = inlined_call_operand.vmem [shape: f32[4,1024], index: 3, kind: output, shape index: {0}]
  %s4 = inlined_call_operand.vmem [shape: f32[4,1], index: 4, kind: output, shape index: {1}]
  %s5 = inlined_call_operand.vmem [shape: f32[4,1], index: 5, kind: output, shape index: {2}]
  %s6 = inlined_call_operand.hbm [shape: f32[2,4,1], index: 6, kind: output, shape index: {3}]
  %7 = xla_tuple %s3, %s4, %s5, %s6
  %s8 = sld [smem:[#allocation0]]
  $region46: #{svs_decoder_forward.31} parent=0
    _
  %s10 = ssub.s32 1, %s8
  %s11 = scalar_select 0, %s10, %s8
  $region1: #{svs_decoder_forward.31} parent=0
    #allocation2 [shape = 'u8[4096]{0}', space=vmem, size = 0x1000, scoped, tag = 'output window, operand 3, single buffered']
    #allocation3 [shape = 's32[1]{0}', space=sflag, size = 0x4, scoped, tag = 'scoped memory for svs_decoder_forward.31']
    %12 = vsyncpa [#allocation3], 0
    // Predicated region
    $region2: #{svs_decoder_forward.31} parent=1 // pred_check
      _
    $region3: #{svs_decoder_forward.31} parent=1 // pred_check_branch
      %14 = sbr.rel (0) target = $region5
    $region4: #{svs_decoder_forward.31} parent=1 // pred_region
      _
    $region5: #{svs_decoder_forward.31} parent=1 // pred_fallthru
      _
    // Predicated region
    $region6: #{svs_decoder_forward.31} parent=1 // pred_check
      _
    $region7: #{svs_decoder_forward.31} parent=1 // pred_check_branch
      %16 = sbr.rel (0) target = $region9
    $region8: #{svs_decoder_forward.31} parent=1 // pred_region
      _
    $region9: #{svs_decoder_forward.31} parent=1 // pred_fallthru
      _
    // Predicated region
    $region10: #{svs_decoder_forward.31} parent=1 // pred_check
      _
    $region11: #{svs_decoder_forward.31} parent=1 // pred_check_branch
      %18 = sbr.rel (0) target = $region13
    $region12: #{svs_decoder_forward.31} parent=1 // pred_region
      _
    $region13: #{svs_decoder_forward.31} parent=1 // pred_fallthru
      _
    %v20 = vld [vmem:[%s0] sm:$0x3]
    %v21 = vld [vmem:[%s1] sm:$0xff]
    %v22 = vld [vmem:[%s1 + $0x8] sm:$0xff]
    %v23 = vld [vmem:[%s1 + $0x10] sm:$0xff]
    %v24 = vld [vmem:[%s1 + $0x18] sm:$0xff]
    %v25 = vld [vmem:[%s1 + $0x20] sm:$0xff]
    %v26 = vld [vmem:[%s1 + $0x28] sm:$0xff]
    %v27 = vld [vmem:[%s1 + $0x30] sm:$0xff]
    %v28 = vld [vmem:[%s1 + $0x38] sm:$0xff]
    %v29 = vld [vmem:[%s1 + $0x40] sm:$0xff]
    %v30 = vld [vmem:[%s1 + $0x48] sm:$0xff]
    %v31 = vld [vmem:[%s1 + $0x50] sm:$0xff]
    %v32 = vld [vmem:[%s1 + $0x58] sm:$0xff]
    %v33 = vld [vmem:[%s1 + $0x60] sm:$0xff]
    %v34 = vld [vmem:[%s1 + $0x68] sm:$0xff]
    %v35 = vld [vmem:[%s1 + $0x70] sm:$0xff]
    %v36 = vld [vmem:[%s1 + $0x78] sm:$0xff]
    %v37 = vld [vmem:[%s1 + $0x80] sm:$0xff]
    %v38 = vld [vmem:[%s1 + $0x88] sm:$0xff]
    %v39 = vld [vmem:[%s1 + $0x90] sm:$0xff]
    %v40 = vld [vmem:[%s1 + $0x98] sm:$0xff]
    %v41 = vld [vmem:[%s1 + $0xa0] sm:$0xff]
    %v42 = vld [vmem:[%s1 + $0xa8] sm:$0xff]
    %v43 = vld [vmem:[%s1 + $0xb0] sm:$0xff]
    %v44 = vld [vmem:[%s1 + $0xb8] sm:$0xff]
    %v45 = vld [vmem:[%s1 + $0xc0] sm:$0xff]
    %v46 = vld [vmem:[%s1 + $0xc8] sm:$0xff]
    %v47 = vld [vmem:[%s1 + $0xd0] sm:$0xff]
    %v48 = vld [vmem:[%s1 + $0xd8] sm:$0xff]
    %v49 = vld [vmem:[%s1 + $0xe0] sm:$0xff]
    %v50 = vld [vmem:[%s1 + $0xe8] sm:$0xff]
    %v51 = vld [vmem:[%s1 + $0xf0] sm:$0xff]
    %v52 = vld [vmem:[%s1 + $0xf8] sm:$0xff]
    %v53 = vld [vmem:[%s1 + $0x100] sm:$0xff]
    %v54 = vld [vmem:[%s1 + $0x108] sm:$0xff]
    %v55 = vld [vmem:[%s1 + $0x110] sm:$0xff]
    %v56 = vld [vmem:[%s1 + $0x118] sm:$0xff]
    %v57 = vld [vmem:[%s1 + $0x120] sm:$0xff]
    %v58 = vld [vmem:[%s1 + $0x128] sm:$0xff]
    %v59 = vld [vmem:[%s1 + $0x130] sm:$0xff]
    %v60 = vld [vmem:[%s1 + $0x138] sm:$0xff]
    %v61 = vld [vmem:[%s1 + $0x140] sm:$0xff]
    %v62 = vld [vmem:[%s1 + $0x148] sm:$0xff]
    %v63 = vld [vmem:[%s1 + $0x150] sm:$0xff]
    %v64 = vld [vmem:[%s1 + $0x158] sm:$0xff]
    %v65 = vld [vmem:[%s1 + $0x160] sm:$0xff]
    %v66 = vld [vmem:[%s1 + $0x168] sm:$0xff]
    %v67 = vld [vmem:[%s1 + $0x170] sm:$0xff]
    %v68 = vld [vmem:[%s1 + $0x178] sm:$0xff]
    %v69 = vld [vmem:[%s1 + $0x180] sm:$0xff]
    %v70 = vld [vmem:[%s1 + $0x188] sm:$0xff]
    %v71 = vld [vmem:[%s1 + $0x190] sm:$0xff]
    %v72 = vld [vmem:[%s1 + $0x198] sm:$0xff]
    %v73 = vld [vmem:[%s1 + $0x1a0] sm:$0x33]
    %v74 = vld [vmem:[%s1 + $0x1a8] sm:$0x33]
    %v75 = vld [vmem:[%s1 + $0x1b0] sm:$0x33]
    %v76 = vld [vmem:[%s1 + $0x1b8] sm:$0x33]
    %v77 = vld [vmem:[%s2] sm:$0xf]
    %79 = vset.pattern.permute.xlu0 0
    %80 = vperm.xlu0 %79, %v77
    %v81 = vpop.permute.xlu0 %80
    %v139 = vunpack.c.l.b16 %v21
    %v140 = vunpack.c.h.b16 %v21
    %v141 = vunpack.c.l.b16 %v22
    %v142 = vunpack.c.h.b16 %v22
    %v143 = vunpack.c.l.b16 %v23
    %v144 = vunpack.c.h.b16 %v23
    %v145 = vunpack.c.l.b16 %v24
    %v146 = vunpack.c.h.b16 %v24
    %v147 = vunpack.c.l.b16 %v25
    %v148 = vunpack.c.h.b16 %v25
    %v149 = vunpack.c.l.b16 %v26
    %v150 = vunpack.c.h.b16 %v26
    %v151 = vunpack.c.l.b16 %v27
    %v152 = vunpack.c.h.b16 %v27
    %v153 = vunpack.c.l.b16 %v28
    %v154 = vunpack.c.h.b16 %v28
    %v155 = vunpack.c.l.b16 %v29
    %v156 = vunpack.c.h.b16 %v29
    %v157 = vunpack.c.l.b16 %v30
    %v158 = vunpack.c.h.b16 %v30
    %v159 = vunpack.c.l.b16 %v31
    %v160 = vunpack.c.h.b16 %v31
    %v161 = vunpack.c.l.b16 %v32
    %v162 = vunpack.c.h.b16 %v32
    %v163 = vunpack.c.l.b16 %v33
    %v164 = vunpack.c.h.b16 %v33
    %v165 = vunpack.c.l.b16 %v34
    %v166 = vunpack.c.h.b16 %v34
    %v167 = vunpack.c.l.b16 %v35
    %v168 = vunpack.c.h.b16 %v35
    %v169 = vunpack.c.l.b16 %v36
    %v170 = vunpack.c.h.b16 %v36
    %v171 = vunpack.c.l.b16 %v37
    %v172 = vunpack.c.h.b16 %v37
    %v173 = vunpack.c.l.b16 %v38
    %v174 = vunpack.c.h.b16 %v38
    %v175 = vunpack.c.l.b16 %v39
    %v176 = vunpack.c.h.b16 %v39
    %v177 = vunpack.c.l.b16 %v40
    %v178 = vunpack.c.h.b16 %v40
    %v179 = vunpack.c.l.b16 %v41
    %v180 = vunpack.c.h.b16 %v41
    %v181 = vunpack.c.l.b16 %v42
    %v182 = vunpack.c.h.b16 %v42
    %v183 = vunpack.c.l.b16 %v43
    %v184 = vunpack.c.h.b16 %v43
    %v185 = vunpack.c.l.b16 %v44
    %v186 = vunpack.c.h.b16 %v44
    %v187 = vunpack.c.l.b16 %v45
    %v188 = vunpack.c.h.b16 %v45
    %v189 = vunpack.c.l.b16 %v46
    %v190 = vunpack.c.h.b16 %v46
    %v191 = vunpack.c.l.b16 %v47
    %v192 = vunpack.c.h.b16 %v47
    %v193 = vunpack.c.l.b16 %v48
    %v194 = vunpack.c.h.b16 %v48
    %v195 = vunpack.c.l.b16 %v49
    %v196 = vunpack.c.h.b16 %v49
    %v197 = vunpack.c.l.b16 %v50
    %v198 = vunpack.c.h.b16 %v50
    %v199 = vunpack.c.l.b16 %v51
    %v200 = vunpack.c.h.b16 %v51
    %v201 = vunpack.c.l.b16 %v52
    %v202 = vunpack.c.h.b16 %v52
    %v203 = vunpack.c.l.b16 %v53
    %v204 = vunpack.c.h.b16 %v53
    %v205 = vunpack.c.l.b16 %v54
    %v206 = vunpack.c.h.b16 %v54
    %v207 = vunpack.c.l.b16 %v55
    %v208 = vunpack.c.h.b16 %v55
    %v209 = vunpack.c.l.b16 %v56
    %v210 = vunpack.c.h.b16 %v56
    %v211 = vunpack.c.l.b16 %v57
    %v212 = vunpack.c.h.b16 %v57
    %v213 = vunpack.c.l.b16 %v58
    %v214 = vunpack.c.h.b16 %v58
    %v215 = vunpack.c.l.b16 %v59
    %v216 = vunpack.c.h.b16 %v59
    %v217 = vunpack.c.l.b16 %v60
    %v218 = vunpack.c.h.b16 %v60
    %v219 = vunpack.c.l.b16 %v61
    %v220 = vunpack.c.h.b16 %v61
    %v221 = vunpack.c.l.b16 %v62
    %v222 = vunpack.c.h.b16 %v62
    %v223 = vunpack.c.l.b16 %v63
    %v224 = vunpack.c.h.b16 %v63
    %v225 = vunpack.c.l.b16 %v64
    %v226 = vunpack.c.h.b16 %v64
    %v227 = vunpack.c.l.b16 %v65
    %v228 = vunpack.c.h.b16 %v65
    %v229 = vunpack.c.l.b16 %v66
    %v230 = vunpack.c.h.b16 %v66
    %v231 = vunpack.c.l.b16 %v67
    %v232 = vunpack.c.h.b16 %v67
    %v233 = vunpack.c.l.b16 %v68
    %v234 = vunpack.c.h.b16 %v68
    %v235 = vunpack.c.l.b16 %v69
    %v236 = vunpack.c.h.b16 %v69
    %v237 = vunpack.c.l.b16 %v70
    %v238 = vunpack.c.h.b16 %v70
    %v239 = vunpack.c.l.b16 %v71
    %v240 = vunpack.c.h.b16 %v71
    %v241 = vunpack.c.l.b16 %v72
    %v242 = vunpack.c.h.b16 %v72
    %v243 = vunpack.c.l.b16 %v73
    %v244 = vunpack.c.h.b16 %v73
    %v245 = vunpack.c.l.b16 %v74
    %v246 = vunpack.c.h.b16 %v74
    %v247 = vunpack.c.l.b16 %v75
    %v248 = vunpack.c.h.b16 %v75
    %v249 = vunpack.c.l.b16 %v76
    %v250 = vunpack.c.h.b16 %v76
    %v251 = vpack.c.b16 %v147, %v139
    %v252 = vpack.c.b16 %v148, %v140
    %v253 = vpack.c.b16 %v149, %v141
    %v254 = vpack.c.b16 %v150, %v142
    %v255 = vpack.c.b16 %v151, %v143
    %v256 = vpack.c.b16 %v152, %v144
    %v257 = vpack.c.b16 %v153, %v145
    %v258 = vpack.c.b16 %v154, %v146
    %v259 = vpack.c.b16 %v163, %v155
    %v260 = vpack.c.b16 %v164, %v156
    %v261 = vpack.c.b16 %v165, %v157
    %v262 = vpack.c.b16 %v166, %v158
    %v263 = vpack.c.b16 %v167, %v159
    %v264 = vpack.c.b16 %v168, %v160
    %v265 = vpack.c.b16 %v169, %v161
    %v266 = vpack.c.b16 %v170, %v162
    %v267 = vpack.c.b16 %v179, %v171
    %v268 = vpack.c.b16 %v180, %v172
    %v269 = vpack.c.b16 %v181, %v173
    %v270 = vpack.c.b16 %v182, %v174
    %v271 = vpack.c.b16 %v183, %v175
    %v272 = vpack.c.b16 %v184, %v176
    %v273 = vpack.c.b16 %v185, %v177
    %v274 = vpack.c.b16 %v186, %v178
    %v275 = vpack.c.b16 %v195, %v187
    %v276 = vpack.c.b16 %v196, %v188
    %v277 = vpack.c.b16 %v197, %v189
    %v278 = vpack.c.b16 %v198, %v190
    %v279 = vpack.c.b16 %v199, %v191
    %v280 = vpack.c.b16 %v200, %v192
    %v281 = vpack.c.b16 %v201, %v193
    %v282 = vpack.c.b16 %v202, %v194
    %v283 = vpack.c.b16 %v211, %v203
    %v284 = vpack.c.b16 %v212, %v204
    %v285 = vpack.c.b16 %v213, %v205
    %v286 = vpack.c.b16 %v214, %v206
    %v287 = vpack.c.b16 %v215, %v207
    %v288 = vpack.c.b16 %v216, %v208
    %v289 = vpack.c.b16 %v217, %v209
    %v290 = vpack.c.b16 %v218, %v210
    %v291 = vpack.c.b16 %v227, %v219
    %v292 = vpack.c.b16 %v228, %v220
    %v293 = vpack.c.b16 %v229, %v221
    %v294 = vpack.c.b16 %v230, %v222
    %v295 = vpack.c.b16 %v231, %v223
    %v296 = vpack.c.b16 %v232, %v224
    %v297 = vpack.c.b16 %v233, %v225
    %v298 = vpack.c.b16 %v234, %v226
    %v299 = vpack.c.b16 %v243, %v235
    %v300 = vpack.c.b16 %v244, %v236
    %v301 = vpack.c.b16 %v245, %v237
    %v302 = vpack.c.b16 %v246, %v238
    %v303 = vpack.c.b16 %v247, %v239
    %v304 = vpack.c.b16 %v248, %v240
    %v305 = vpack.c.b16 %v249, %v241
    %v306 = vpack.c.b16 %v250, %v242
    %vm355 = vcmask 883712
    %v357 = vsel %vm355, %v20, 0
    %vm359 = vcmask 1045504
    %v361 = vsel %vm359, %v299, 0
    %v364 = vsel %vm359, %v300, 0
    %v367 = vsel %vm359, %v301, 0
    %v370 = vsel %vm359, %v302, 0
    %v373 = vsel %vm359, %v303, 0
    %v376 = vsel %vm359, %v304, 0
    %v379 = vsel %vm359, %v305, 0
    %v382 = vsel %vm359, %v306, 0
    %384 = vmatprep.subr.bf16.mxu0 0
    %385 = vmatpush1.bf16.msra.mxu0 0
    %386 = vmatprep.subr.bf16.mxu0 %v364
    %387 = vmatpush1.bf16.msra.mxu0 %v361
    %388 = vmatprep.subr.bf16.mxu0 %v292
    %389 = vmatpush1.bf16.msra.mxu0 %v291
    %390 = vmatprep.subr.bf16.mxu0 %v284
    %391 = vmatpush1.bf16.msra.mxu0 %v283
    %392 = vmatprep.subr.bf16.mxu0 %v276
    %393 = vmatpush1.bf16.msra.mxu0 %v275
    %394 = vmatprep.subr.bf16.mxu0 %v268
    %395 = vmatpush1.bf16.msra.mxu0 %v267
    %396 = vmatprep.subr.bf16.mxu0 %v260
    %397 = vmatpush1.bf16.msra.mxu0 %v259
    %398 = vmatprep.subr.bf16.mxu0 %v252
    %399 = vmatpush1.bf16.msra.mxu0 %v251
    %400 = vmatprep.subr.bf16.mxu0 0
    %401 = vmatpush2.bf16.msra.mxu0 0
    %402 = vmatprep.subr.bf16.mxu0 0
    %403 = vmatpush2.bf16.msra.mxu0 0
    %404 = vmatprep.subr.bf16.mxu0 0
    %405 = vmatpush2.bf16.msra.mxu0 0
    %406 = vmatprep.subr.bf16.mxu0 0
    %407 = vmatpush2.bf16.msra.mxu0 0
    %408 = vmatprep.subr.bf16.mxu0 0
    %409 = vmatpush2.bf16.msra.mxu0 0
    %410 = vmatprep.subr.bf16.mxu0 0
    %411 = vmatpush2.bf16.msra.mxu0 0
    %412 = vmatprep.subr.bf16.mxu0 0
    %413 = vmatpush2.bf16.msra.mxu0 0
    %414 = vmatprep.subr.bf16.mxu0 0
    %415 = vmatpush2.bf16.msra.mxu0 0
    %416 = vmatprep.mubr.bf16.mxu0 0
    %417 = vmatmul.mubr.bf16.gmra.mxu0 %v357
    %v418 = vpop.f32.mrf.mxu0
    %v419 = vadd.f32 %v81, %v418
    %v420 = vpop.f32.mrf.mxu0
    %v421 = vadd.f32 %v81, %v420
    %v422 = vpop.f32.mrf.mxu0
    %v423 = vpop.f32.mrf.mxu0
    %424 = vdwg.mxu0
    %425 = vmatprep.subr.bf16.mxu0 0
    %426 = vmatpush1.bf16.msra.mxu0 0
    %427 = vmatprep.subr.bf16.mxu0 %v370
    %428 = vmatpush1.bf16.msra.mxu0 %v367
    %429 = vmatprep.subr.bf16.mxu0 %v294
    %430 = vmatpush1.bf16.msra.mxu0 %v293
    %431 = vmatprep.subr.bf16.mxu0 %v286
    %432 = vmatpush1.bf16.msra.mxu0 %v285
    %433 = vmatprep.subr.bf16.mxu0 %v278
    %434 = vmatpush1.bf16.msra.mxu0 %v277
    %435 = vmatprep.subr.bf16.mxu0 %v270
    %436 = vmatpush1.bf16.msra.mxu0 %v269
    %437 = vmatprep.subr.bf16.mxu0 %v262
    %438 = vmatpush1.bf16.msra.mxu0 %v261
    %439 = vmatprep.subr.bf16.mxu0 %v254
    %440 = vmatpush1.bf16.msra.mxu0 %v253
    %441 = vmatprep.subr.bf16.mxu0 0
    %442 = vmatpush2.bf16.msra.mxu0 0
    %443 = vmatprep.subr.bf16.mxu0 0
    %444 = vmatpush2.bf16.msra.mxu0 0
    %445 = vmatprep.subr.bf16.mxu0 0
    %446 = vmatpush2.bf16.msra.mxu0 0
    %447 = vmatprep.subr.bf16.mxu0 0
    %448 = vmatpush2.bf16.msra.mxu0 0
    %449 = vmatprep.subr.bf16.mxu0 0
    %450 = vmatpush2.bf16.msra.mxu0 0
    %451 = vmatprep.subr.bf16.mxu0 0
    %452 = vmatpush2.bf16.msra.mxu0 0
    %453 = vmatprep.subr.bf16.mxu0 0
    %454 = vmatpush2.bf16.msra.mxu0 0
    %455 = vmatprep.subr.bf16.mxu0 0
    %456 = vmatpush2.bf16.msra.mxu0 0
    %457 = vmatprep.mubr.bf16.mxu0 0
    %458 = vmatmul.mubr.bf16.gmra.mxu0 %v357
    %v459 = vpop.f32.mrf.mxu0
    %v460 = vadd.f32 %v81, %v459
    %v461 = vpop.f32.mrf.mxu0
    %v462 = vadd.f32 %v81, %v461
    %v463 = vpop.f32.mrf.mxu0
    %v464 = vpop.f32.mrf.mxu0
    %465 = vdwg.mxu0
    %466 = vmatprep.subr.bf16.mxu0 0
    %467 = vmatpush1.bf16.msra.mxu0 0
    %468 = vmatprep.subr.bf16.mxu0 %v376
    %469 = vmatpush1.bf16.msra.mxu0 %v373
    %470 = vmatprep.subr.bf16.mxu0 %v296
    %471 = vmatpush1.bf16.msra.mxu0 %v295
    %472 = vmatprep.subr.bf16.mxu0 %v288
    %473 = vmatpush1.bf16.msra.mxu0 %v287
    %474 = vmatprep.subr.bf16.mxu0 %v280
    %475 = vmatpush1.bf16.msra.mxu0 %v279
    %476 = vmatprep.subr.bf16.mxu0 %v272
    %477 = vmatpush1.bf16.msra.mxu0 %v271
    %478 = vmatprep.subr.bf16.mxu0 %v264
    %479 = vmatpush1.bf16.msra.mxu0 %v263
    %480 = vmatprep.subr.bf16.mxu0 %v256
    %481 = vmatpush1.bf16.msra.mxu0 %v255
    %482 = vmatprep.subr.bf16.mxu0 0
    %483 = vmatpush2.bf16.msra.mxu0 0
    %484 = vmatprep.subr.bf16.mxu0 0
    %485 = vmatpush2.bf16.msra.mxu0 0
    %486 = vmatprep.subr.bf16.mxu0 0
    %487 = vmatpush2.bf16.msra.mxu0 0
    %488 = vmatprep.subr.bf16.mxu0 0
    %489 = vmatpush2.bf16.msra.mxu0 0
    %490 = vmatprep.subr.bf16.mxu0 0
    %491 = vmatpush2.bf16.msra.mxu0 0
    %492 = vmatprep.subr.bf16.mxu0 0
    %493 = vmatpush2.bf16.msra.mxu0 0
    %494 = vmatprep.subr.bf16.mxu0 0
    %495 = vmatpush2.bf16.msra.mxu0 0
    %496 = vmatprep.subr.bf16.mxu0 0
    %497 = vmatpush2.bf16.msra.mxu0 0
    %498 = vmatprep.mubr.bf16.mxu0 0
    %499 = vmatmul.mubr.bf16.gmra.mxu0 %v357
    %v500 = vpop.f32.mrf.mxu0
    %v501 = vadd.f32 %v81, %v500
    %v502 = vpop.f32.mrf.mxu0
    %v503 = vadd.f32 %v81, %v502
    %v504 = vpop.f32.mrf.mxu0
    %v505 = vpop.f32.mrf.mxu0
    %506 = vdwg.mxu0
    %507 = vmatprep.subr.bf16.mxu0 0
    %508 = vmatpush1.bf16.msra.mxu0 0
    %509 = vmatprep.subr.bf16.mxu0 %v382
    %510 = vmatpush1.bf16.msra.mxu0 %v379
    %511 = vmatprep.subr.bf16.mxu0 %v298
    %512 = vmatpush1.bf16.msra.mxu0 %v297
    %513 = vmatprep.subr.bf16.mxu0 %v290
    %514 = vmatpush1.bf16.msra.mxu0 %v289
    %515 = vmatprep.subr.bf16.mxu0 %v282
    %516 = vmatpush1.bf16.msra.mxu0 %v281
    %517 = vmatprep.subr.bf16.mxu0 %v274
    %518 = vmatpush1.bf16.msra.mxu0 %v273
    %519 = vmatprep.subr.bf16.mxu0 %v266
    %520 = vmatpush1.bf16.msra.mxu0 %v265
    %521 = vmatprep.subr.bf16.mxu0 %v258
    %522 = vmatpush1.bf16.msra.mxu0 %v257
    %523 = vmatprep.subr.bf16.mxu0 0
    %524 = vmatpush2.bf16.msra.mxu0 0
    %525 = vmatprep.subr.bf16.mxu0 0
    %526 = vmatpush2.bf16.msra.mxu0 0
    %527 = vmatprep.subr.bf16.mxu0 0
    %528 = vmatpush2.bf16.msra.mxu0 0
    %529 = vmatprep.subr.bf16.mxu0 0
    %530 = vmatpush2.bf16.msra.mxu0 0
    %531 = vmatprep.subr.bf16.mxu0 0
    %532 = vmatpush2.bf16.msra.mxu0 0
    %533 = vmatprep.subr.bf16.mxu0 0
    %534 = vmatpush2.bf16.msra.mxu0 0
    %535 = vmatprep.subr.bf16.mxu0 0
    %536 = vmatpush2.bf16.msra.mxu0 0
    %537 = vmatprep.subr.bf16.mxu0 0
    %538 = vmatpush2.bf16.msra.mxu0 0
    %539 = vmatprep.mubr.bf16.mxu0 0
    %540 = vmatmul.mubr.bf16.gmra.mxu0 %v357
    %v541 = vpop.f32.mrf.mxu0
    %v542 = vadd.f32 %v81, %v541
    %v543 = vpop.f32.mrf.mxu0
    %v544 = vadd.f32 %v81, %v543
    %v545 = vpop.f32.mrf.mxu0
    %v546 = vpop.f32.mrf.mxu0
    %547 = vdwg.mxu0
    %v556 = vcombine.low %v419, %v421
    %v557 = vcombine.low %v460, %v462
    %v558 = vcombine.low %v501, %v503
    %v559 = vcombine.low %v542, %v544
    %564 = vst [vmem:[%s3] sm:$0xff] %v556
    %565 = vst [vmem:[%s3 + $0x8] sm:$0xff] %v557
    %566 = vst [vmem:[%s3 + $0x10] sm:$0xff] %v558
    %567 = vst [vmem:[%s3 + $0x18] sm:$0xff] %v559
    %vm568 = vcmask 1043456
    %v569 = vsel %vm568, %v419, 0.0
    %v570 = vsel %vm568, %v421, 0.0
    %v571 = vadd.f32 %v569, %v570
    %v572 = vsel %vm568, %v460, 0.0
    %v573 = vadd.f32 %v571, %v572
    %v574 = vsel %vm568, %v462, 0.0
    %v575 = vadd.f32 %v573, %v574
    %v576 = vsel %vm568, %v501, 0.0
    %v577 = vadd.f32 %v575, %v576
    %v578 = vsel %vm568, %v503, 0.0
    %v579 = vadd.f32 %v577, %v578
    %v580 = vsel %vm568, %v542, 0.0
    %v581 = vadd.f32 %v579, %v580
    %v582 = vsel %vm568, %v544, 0.0
    %v583 = vadd.f32 %v581, %v582
    %584 = vadd.xlane.f32.xlu0 %v583
    %v585 = vpop.xlane.xlu0 %584
    %vm586 = vcmask 3072
    %587 = vst.msk [vmem:[%s4] sm:$0xf] %vm586, %v585
    %v588 = vmul.f32 %v419, %v419
    %v589 = vmul.f32 %v421, %v421
    %v590 = vmul.f32 %v460, %v460
    %v591 = vmul.f32 %v462, %v462
    %v592 = vmul.f32 %v501, %v501
    %v593 = vmul.f32 %v503, %v503
    %v594 = vmul.f32 %v542, %v542
    %v595 = vmul.f32 %v544, %v544
    %v596 = vsel %vm568, %v588, 0.0
    %v597 = vsel %vm568, %v589, 0.0
    %v598 = vadd.f32 %v596, %v597
    %v599 = vsel %vm568, %v590, 0.0
    %v600 = vadd.f32 %v598, %v599
    %v601 = vsel %vm568, %v591, 0.0
    %v602 = vadd.f32 %v600, %v601
    %v603 = vsel %vm568, %v592, 0.0
    %v604 = vadd.f32 %v602, %v603
    %v605 = vsel %vm568, %v593, 0.0
    %v606 = vadd.f32 %v604, %v605
    %v607 = vsel %vm568, %v594, 0.0
    %v608 = vadd.f32 %v606, %v607
    %v609 = vsel %vm568, %v595, 0.0
    %v610 = vadd.f32 %v608, %v609
    %611 = vadd.xlane.f32.xlu0 %v610
    %v612 = vpop.xlane.xlu0 %611
    %613 = vst.msk [vmem:[%s5] sm:$0xf] %vm586, %v612
    %v614 = vlaneseq
    %v615 = vand.u32 %v614, 127
    %v616 = vadd.s32 %v615, 128
    %v617 = vadd.s32 %v615, 256
    %v618 = vadd.s32 %v615, 384
    %v619 = vadd.s32 %v615, 512
    %v620 = vadd.s32 %v615, 640
    %v621 = vadd.s32 %v615, 768
    %v622 = vadd.s32 %v615, 896
    %vm623 = vcmp.ge.s32.totalorder %v615, 0
    %vm624 = vcmp.ge.s32.totalorder %v616, 0
    %vm625 = vcmp.ge.s32.totalorder %v617, 0
    %vm626 = vcmp.ge.s32.totalorder %v618, 0
    %vm627 = vcmp.ge.s32.totalorder %v619, 0
    %vm628 = vcmp.ge.s32.totalorder %v620, 0
    %vm629 = vcmp.ge.s32.totalorder %v621, 0
    %vm630 = vcmp.ge.s32.totalorder %v622, 0
    %vm631 = vcmp.lt.s32.totalorder %v615, 512
    %vm632 = vcmp.lt.s32.totalorder %v616, 512
    %vm633 = vcmp.lt.s32.totalorder %v617, 512
    %vm634 = vcmp.lt.s32.totalorder %v618, 512
    %vm635 = vcmp.lt.s32.totalorder %v619, 512
    %vm636 = vcmp.lt.s32.totalorder %v620, 512
    %vm637 = vcmp.lt.s32.totalorder %v621, 512
    %vm638 = vcmp.lt.s32.totalorder %v622, 512
    %vm639 = vmand %vm623, %vm631
    %vm640 = vmand %vm624, %vm632
    %vm641 = vmand %vm625, %vm633
    %vm642 = vmand %vm626, %vm634
    %vm643 = vmand %vm627, %vm635
    %vm644 = vmand %vm628, %vm636
    %vm645 = vmand %vm629, %vm637
    %vm646 = vmand %vm630, %vm638
    %v647 = vsel %vm639, %v419, 0.0
    %v648 = vsel %vm640, %v421, 0.0
    %v649 = vsel %vm641, %v460, 0.0
    %v650 = vsel %vm642, %v462, 0.0
    %v651 = vsel %vm643, %v501, 0.0
    %v652 = vsel %vm644, %v503, 0.0
    %v653 = vsel %vm645, %v542, 0.0
    %v654 = vsel %vm646, %v544, 0.0
    %v655 = vsel %vm568, %v647, 0.0
    %v656 = vsel %vm568, %v648, 0.0
    %v657 = vadd.f32 %v655, %v656
    %v658 = vsel %vm568, %v649, 0.0
    %v659 = vadd.f32 %v657, %v658
    %v660 = vsel %vm568, %v650, 0.0
    %v661 = vadd.f32 %v659, %v660
    %v662 = vsel %vm568, %v651, 0.0
    %v663 = vadd.f32 %v661, %v662
    %v664 = vsel %vm568, %v652, 0.0
    %v665 = vadd.f32 %v663, %v664
    %v666 = vsel %vm568, %v653, 0.0
    %v667 = vadd.f32 %v665, %v666
    %v668 = vsel %vm568, %v654, 0.0
    %v669 = vadd.f32 %v667, %v668
    %670 = vadd.xlane.f32.xlu0 %v669
    %v671 = vpop.xlane.xlu0 %670
    %v672 = vmul.f32 %v671, 0.001953125
    %673 = vst.msk [vmem:[#allocation2] sm:$0xf] %vm586, %v672
    %vm674 = vcmp.ge.s32.totalorder %v615, 512
    %vm675 = vcmp.ge.s32.totalorder %v616, 512
    %vm676 = vcmp.ge.s32.totalorder %v617, 512
    %vm677 = vcmp.ge.s32.totalorder %v618, 512
    %vm678 = vcmp.ge.s32.totalorder %v619, 512
    %vm679 = vcmp.ge.s32.totalorder %v620, 512
    %vm680 = vcmp.ge.s32.totalorder %v621, 512
    %vm681 = vcmp.ge.s32.totalorder %v622, 512
    %vm682 = vcmp.lt.s32.totalorder %v615, 1024
    %vm683 = vcmp.lt.s32.totalorder %v616, 1024
    %vm684 = vcmp.lt.s32.totalorder %v617, 1024
    %vm685 = vcmp.lt.s32.totalorder %v618, 1024
    %vm686 = vcmp.lt.s32.totalorder %v619, 1024
    %vm687 = vcmp.lt.s32.totalorder %v620, 1024
    %vm688 = vcmp.lt.s32.totalorder %v621, 1024
    %vm689 = vcmp.lt.s32.totalorder %v622, 1024
    %vm690 = vmand %vm674, %vm682
    %vm691 = vmand %vm675, %vm683
    %vm692 = vmand %vm676, %vm684
    %vm693 = vmand %vm677, %vm685
    %vm694 = vmand %vm678, %vm686
    %vm695 = vmand %vm679, %vm687
    %vm696 = vmand %vm680, %vm688
    %vm697 = vmand %vm681, %vm689
    %v698 = vsel %vm690, %v419, 0.0
    %v699 = vsel %vm691, %v421, 0.0
    %v700 = vsel %vm692, %v460, 0.0
    %v701 = vsel %vm693, %v462, 0.0
    %v702 = vsel %vm694, %v501, 0.0
    %v703 = vsel %vm695, %v503, 0.0
    %v704 = vsel %vm696, %v542, 0.0
    %v705 = vsel %vm697, %v544, 0.0
    %v706 = vsel %vm568, %v698, 0.0
    %v707 = vsel %vm568, %v699, 0.0
    %v708 = vadd.f32 %v706, %v707
    %v709 = vsel %vm568, %v700, 0.0
    %v710 = vadd.f32 %v708, %v709
    %v711 = vsel %vm568, %v701, 0.0
    %v712 = vadd.f32 %v710, %v711
    %v713 = vsel %vm568, %v702, 0.0
    %v714 = vadd.f32 %v712, %v713
    %v715 = vsel %vm568, %v703, 0.0
    %v716 = vadd.f32 %v714, %v715
    %v717 = vsel %vm568, %v704, 0.0
    %v718 = vadd.f32 %v716, %v717
    %v719 = vsel %vm568, %v705, 0.0
    %v720 = vadd.f32 %v718, %v719
    %721 = vadd.xlane.f32.xlu0 %v720
    %v722 = vpop.xlane.xlu0 %721
    %v723 = vmul.f32 %v722, 0.001953125
    %s724 = scalar_lea.vmem [#allocation2], 4
    %725 = vst.msk [vmem:[%s724] sm:$0xf] %vm586, %v723
    // Predicated region
    $region14: #{svs_decoder_forward.31} parent=1 // pred_check
      _
    $region15: #{svs_decoder_forward.31} parent=1 // pred_check_branch
      %727 = sbr.rel (0) target = $region17
    $region16: #{svs_decoder_forward.31} parent=1 // pred_region
      _
    $region17: #{svs_decoder_forward.31} parent=1 // pred_fallthru
      _
    // Predicated region
    $region18: #{svs_decoder_forward.31} parent=1 // pred_check
      _
    $region19: #{svs_decoder_forward.31} parent=1 // pred_check_branch
      %729 = sbr.rel (0) target = $region21
    $region20: #{svs_decoder_forward.31} parent=1 // pred_region
      _
    $region21: #{svs_decoder_forward.31} parent=1 // pred_fallthru
      _
    // Predicated region
    $region22: #{svs_decoder_forward.31} parent=1 // pred_check
      _
    $region23: #{svs_decoder_forward.31} parent=1 // pred_check_branch
      %731 = sbr.rel (0) target = $region25
    $region24: #{svs_decoder_forward.31} parent=1 // pred_region
      _
    $region25: #{svs_decoder_forward.31} parent=1 // pred_fallthru
      _
    // Predicated region
    $region26: #{svs_decoder_forward.31} parent=1 // pred_check
      _
    $region27: #{svs_decoder_forward.31} parent=1 // pred_check_branch
      %733 = sbr.rel (0) target = $region29
    $region28: #{svs_decoder_forward.31} parent=1 // pred_region
      %s735 = ssub.s32 128, 128
      %736 = vsyncadd [#allocation3], %s735
      %s737 = sshll.u32 [#allocation2], 4
      %s738 = int_to_ptr.vmem [resolvable:$true] %s737
      %743 = dma.vmem_to_hbm [thread:$0]  %s738, 128, %s6, [#allocation3], 64, 64, 4
    $region29: #{svs_decoder_forward.31} parent=1 // pred_fallthru
      _
    // Predicated region
    $region30: #{svs_decoder_forward.31} parent=1 // pred_check
      _
    $region31: #{svs_decoder_forward.31} parent=1 // pred_check_branch
      %745 = sbr.rel (0) target = $region33
    $region32: #{svs_decoder_forward.31} parent=1 // pred_region
      _
    $region33: #{svs_decoder_forward.31} parent=1 // pred_fallthru
      _
    // Predicated region
    $region34: #{svs_decoder_forward.31} parent=1 // pred_check
      _
    $region35: #{svs_decoder_forward.31} parent=1 // pred_check_branch
      %747 = sbr.rel (0) target = $region37
    $region36: #{svs_decoder_forward.31} parent=1 // pred_region
      _
    $region37: #{svs_decoder_forward.31} parent=1 // pred_fallthru
      _
    // Predicated region
    $region38: #{svs_decoder_forward.31} parent=1 // pred_check
      _
    $region39: #{svs_decoder_forward.31} parent=1 // pred_check_branch
      %749 = sbr.rel (0) target = $region41
    $region40: #{svs_decoder_forward.31} parent=1 // pred_region
      _
    $region41: #{svs_decoder_forward.31} parent=1 // pred_fallthru
      _
    // Predicated region
    $region42: #{svs_decoder_forward.31} parent=1 // pred_check
      _
    $region43: #{svs_decoder_forward.31} parent=1 // pred_check_branch
      %751 = sbr.rel (0) target = $region45
    $region44: #{svs_decoder_forward.31} parent=1 // pred_region
      %752 = dma.done [#allocation3], 128
    $region45: #{svs_decoder_forward.31} parent=1 // pred_fallthru
      _
    %753 = vsyncpa [#allocation3], 1

// kernel: svs_decoder_forward.32
$region0: #{svs_decoder_forward.32}
  #allocation0 [shape = 'u32[]', space=smem, size = 0x4, offset = 0x4, fixed_abs, tag = 'smem constant byte address 0x4 - core index']
  #allocation1 [shape = 'u32[144,128]{1,0:T(1,128)}', space=vmem, size = 0x12000, scoped, tag = 'internal scratch']
  %s0 = inlined_call_operand.vmem [shape: f32[4,1024], index: 0, kind: input, shape index: {}]
  %s1 = inlined_call_operand.vmem [shape: f32[4,1], index: 1, kind: input, shape index: {}]
  %s2 = inlined_call_operand.vmem [shape: f32[4,1], index: 2, kind: input, shape index: {}]
  %s3 = inlined_call_operand.vmem [shape: f32[2,4,1], index: 3, kind: input, shape index: {}]
  %s4 = inlined_call_operand.vmem [shape: f32[4,1024], index: 4, kind: input, shape index: {}]
  %s5 = inlined_call_operand.vmem [shape: f32[4,1], index: 5, kind: input, shape index: {}]
  %s6 = inlined_call_operand.vmem [shape: f32[4,1], index: 6, kind: input, shape index: {}]
  %s7 = inlined_call_operand.vmem [shape: bf16[4,1024], index: 7, kind: output, shape index: {}]
  %s8 = sld [smem:[#allocation0]]
  $region38: #{svs_decoder_forward.32} parent=0
    _
  %s10 = ssub.s32 1, %s8
  %s11 = scalar_select 0, %s10, %s8
  // Predicated region
  $region2: #{svs_decoder_forward.32} parent=0 // pred_check
    _
  $region3: #{svs_decoder_forward.32} parent=0 // pred_check_branch
    %13 = sbr.rel (0) target = $region5
  $region4: #{svs_decoder_forward.32} parent=0 // pred_region
    _
  $region5: #{svs_decoder_forward.32} parent=0 // pred_fallthru
    _
  // Predicated region
  $region6: #{svs_decoder_forward.32} parent=0 // pred_check
    _
  $region7: #{svs_decoder_forward.32} parent=0 // pred_check_branch
    %15 = sbr.rel (0) target = $region9
  $region8: #{svs_decoder_forward.32} parent=0 // pred_region
    _
  $region9: #{svs_decoder_forward.32} parent=0 // pred_fallthru
    _
  // Predicated region
  $region10: #{svs_decoder_forward.32} parent=0 // pred_check
    _
  $region11: #{svs_decoder_forward.32} parent=0 // pred_check_branch
    %17 = sbr.rel (0) target = $region13
  $region12: #{svs_decoder_forward.32} parent=0 // pred_region
    _
  $region13: #{svs_decoder_forward.32} parent=0 // pred_fallthru
    _
  // Predicated region
  $region14: #{svs_decoder_forward.32} parent=0 // pred_check
    _
  $region15: #{svs_decoder_forward.32} parent=0 // pred_check_branch
    %19 = sbr.rel (0) target = $region17
  $region16: #{svs_decoder_forward.32} parent=0 // pred_region
    _
  $region17: #{svs_decoder_forward.32} parent=0 // pred_fallthru
    _
  // Predicated region
  $region18: #{svs_decoder_forward.32} parent=0 // pred_check
    _
  $region19: #{svs_decoder_forward.32} parent=0 // pred_check_branch
    %21 = sbr.rel (0) target = $region21
  $region20: #{svs_decoder_forward.32} parent=0 // pred_region
    _
  $region21: #{svs_decoder_forward.32} parent=0 // pred_fallthru
    _
  // Predicated region
  $region22: #{svs_decoder_forward.32} parent=0 // pred_check
    _
  $region23: #{svs_decoder_forward.32} parent=0 // pred_check_branch
    %23 = sbr.rel (0) target = $region25
  $region24: #{svs_decoder_forward.32} parent=0 // pred_region
    _
  $region25: #{svs_decoder_forward.32} parent=0 // pred_fallthru
    _
  // Predicated region
  $region26: #{svs_decoder_forward.32} parent=0 // pred_check
    _
  $region27: #{svs_decoder_forward.32} parent=0 // pred_check_branch
    %25 = sbr.rel (0) target = $region29
  $region28: #{svs_decoder_forward.32} parent=0 // pred_region
    _
  $region29: #{svs_decoder_forward.32} parent=0 // pred_fallthru
    _
  %v26 = vld [vmem:[%s0] sm:$0xff]
  %v27 = vld [vmem:[%s0 + $0x8] sm:$0xff]
  %v28 = vld [vmem:[%s0 + $0x10] sm:$0xff]
  %v29 = vld [vmem:[%s0 + $0x18] sm:$0xff]
  %v30 = vlaneseq
  %v31 = vand.u32 %v30, 127
  %v32 = vadd.s32 %v31, 128
  %v33 = vadd.s32 %v31, 256
  %v34 = vadd.s32 %v31, 384
  %v35 = vadd.s32 %v31, 512
  %v36 = vadd.s32 %v31, 640
  %v37 = vadd.s32 %v31, 768
  %v38 = vadd.s32 %v31, 896
  %vm39 = vcmp.ge.s32.totalorder %v31, 0
  %vm40 = vcmp.ge.s32.totalorder %v32, 0
  %vm41 = vcmp.ge.s32.totalorder %v33, 0
  %vm42 = vcmp.ge.s32.totalorder %v34, 0
  %vm43 = vcmp.ge.s32.totalorder %v35, 0
  %vm44 = vcmp.ge.s32.totalorder %v36, 0
  %vm45 = vcmp.ge.s32.totalorder %v37, 0
  %vm46 = vcmp.ge.s32.totalorder %v38, 0
  %vm47 = vcmp.lt.s32.totalorder %v31, 512
  %vm48 = vcmp.lt.s32.totalorder %v32, 512
  %vm49 = vcmp.lt.s32.totalorder %v33, 512
  %vm50 = vcmp.lt.s32.totalorder %v34, 512
  %vm51 = vcmp.lt.s32.totalorder %v35, 512
  %vm52 = vcmp.lt.s32.totalorder %v36, 512
  %vm53 = vcmp.lt.s32.totalorder %v37, 512
  %vm54 = vcmp.lt.s32.totalorder %v38, 512
  %vm55 = vmand %vm39, %vm47
  %vm56 = vmand %vm40, %vm48
  %vm57 = vmand %vm41, %vm49
  %vm58 = vmand %vm42, %vm50
  %vm59 = vmand %vm43, %vm51
  %vm60 = vmand %vm44, %vm52
  %vm61 = vmand %vm45, %vm53
  %vm62 = vmand %vm46, %vm54
  %v63 = vld [vmem:[%s3] sm:$0xf]
  %65 = vset.pattern.permute.xlu0 0
  %66 = vperm.xlu0 %65, %v63
  %v67 = vpop.permute.xlu0 %66
  %v69 = vsel %vm55, %v67, 0.0
  %v70 = vsel %vm56, %v67, 0.0
  %v71 = vsel %vm57, %v67, 0.0
  %v72 = vsel %vm58, %v67, 0.0
  %v73 = vsel %vm59, %v67, 0.0
  %v74 = vsel %vm60, %v67, 0.0
  %v75 = vsel %vm61, %v67, 0.0
  %v76 = vsel %vm62, %v67, 0.0
  %vm77 = vcmp.ge.s32.totalorder %v31, 512
  %vm78 = vcmp.ge.s32.totalorder %v32, 512
  %vm79 = vcmp.ge.s32.totalorder %v33, 512
  %vm80 = vcmp.ge.s32.totalorder %v34, 512
  %vm81 = vcmp.ge.s32.totalorder %v35, 512
  %vm82 = vcmp.ge.s32.totalorder %v36, 512
  %vm83 = vcmp.ge.s32.totalorder %v37, 512
  %vm84 = vcmp.ge.s32.totalorder %v38, 512
  %vm85 = vcmp.lt.s32.totalorder %v31, 1024
  %vm86 = vcmp.lt.s32.totalorder %v32, 1024
  %vm87 = vcmp.lt.s32.totalorder %v33, 1024
  %vm88 = vcmp.lt.s32.totalorder %v34, 1024
  %vm89 = vcmp.lt.s32.totalorder %v35, 1024
  %vm90 = vcmp.lt.s32.totalorder %v36, 1024
  %vm91 = vcmp.lt.s32.totalorder %v37, 1024
  %vm92 = vcmp.lt.s32.totalorder %v38, 1024
  %vm93 = vmand %vm77, %vm85
  %vm94 = vmand %vm78, %vm86
  %vm95 = vmand %vm79, %vm87
  %vm96 = vmand %vm80, %vm88
  %vm97 = vmand %vm81, %vm89
  %vm98 = vmand %vm82, %vm90
  %vm99 = vmand %vm83, %vm91
  %vm100 = vmand %vm84, %vm92
  %s101 = scalar_lea.vmem %s3, 4
  %v102 = vld [vmem:[%s101] sm:$0xf]
  %104 = vset.pattern.permute.xlu0 0
  %105 = vperm.xlu0 %104, %v102
  %v106 = vpop.permute.xlu0 %105
  %v108 = vsel %vm93, %v106, %v69
  %v109 = vsel %vm94, %v106, %v70
  %v110 = vsel %vm95, %v106, %v71
  %v111 = vsel %vm96, %v106, %v72
  %v112 = vsel %vm97, %v106, %v73
  %v113 = vsel %vm98, %v106, %v74
  %v114 = vsel %vm99, %v106, %v75
  %v115 = vsel %vm100, %v106, %v76
  %v116 = vld [vmem:[%s1] sm:$0xf]
  %118 = vset.pattern.permute.xlu0 0
  %119 = vperm.xlu0 %118, %v116
  %v120 = vpop.permute.xlu0 %119
  %v122 = vunpack.c.l.s4 839922192
  %v123 = vunpack.c.0.s8 %v122
  %v124 = vlaneseq
  %v125 = vshrl.u32 %v124, 7
  %v126 = vsub.s32 %v123, %v125
  %v127 = vrot.slane %v120, %v126
  %v129 = vmul.f32 %v26, %v127
  %v130 = vmul.f32 %v27, %v127
  %v131 = vmul.f32 %v28, %v127
  %v132 = vmul.f32 %v29, %v127
  %v133 = vld [vmem:[%s2] sm:$0xf]
  %135 = vset.pattern.permute.xlu0 0
  %136 = vperm.xlu0 %135, %v133
  %v137 = vpop.permute.xlu0 %136
  %v139 = vunpack.c.l.s4 839922192
  %v140 = vunpack.c.0.s8 %v139
  %v141 = vlaneseq
  %v142 = vshrl.u32 %v141, 7
  %v143 = vsub.s32 %v140, %v142
  %v144 = vrot.slane %v137, %v143
  %v146 = vadd.f32 %v129, %v144
  %v147 = vadd.f32 %v130, %v144
  %v148 = vadd.f32 %v131, %v144
  %v149 = vadd.f32 %v132, %v144
  %v158 = vcombine.low %v108, %v109
  %v159 = vcombine.low %v110, %v111
  %v160 = vcombine.low %v112, %v113
  %v161 = vcombine.low %v114, %v115
  %v166 = vmul.f32 %v146, %v158
  %v167 = vmul.f32 %v147, %v159
  %v168 = vmul.f32 %v148, %v160
  %v169 = vmul.f32 %v149, %v161
  %v170 = vld [vmem:[%s4] sm:$0xff]
  %v171 = vld [vmem:[%s4 + $0x8] sm:$0xff]
  %v172 = vld [vmem:[%s4 + $0x10] sm:$0xff]
  %v173 = vld [vmem:[%s4 + $0x18] sm:$0xff]
  %v174 = vadd.f32 %v166, %v170
  %v175 = vadd.f32 %v167, %v171
  %v176 = vadd.f32 %v168, %v172
  %v177 = vadd.f32 %v169, %v173
  %vm178 = vcmp.ge.f32.partialorder %v174, 0.0
  %vm179 = vcmp.ge.f32.partialorder %v175, 0.0
  %vm180 = vcmp.ge.f32.partialorder %v176, 0.0
  %vm181 = vcmp.ge.f32.partialorder %v177, 0.0
  %v182 = vmul.f32 %v174, 0.01
  %v183 = vmul.f32 %v175, 0.01
  %v184 = vmul.f32 %v176, 0.01
  %v185 = vmul.f32 %v177, 0.01
  %v186 = vsel %vm178, %v174, %v182
  %v187 = vsel %vm179, %v175, %v183
  %v188 = vsel %vm180, %v176, %v184
  %v189 = vsel %vm181, %v177, %v185
  %v194 = vcombine.high %v186, %v186
  %v195 = vcombine.high %v187, %v187
  %v196 = vcombine.high %v188, %v188
  %v197 = vcombine.high %v189, %v189
  %vm202 = vcmask 1043456
  %v203 = vsel %vm202, %v186, 0.0
  %v204 = vsel %vm202, %v194, 0.0
  %v205 = vadd.f32 %v203, %v204
  %v206 = vsel %vm202, %v187, 0.0
  %v207 = vadd.f32 %v205, %v206
  %v208 = vsel %vm202, %v195, 0.0
  %v209 = vadd.f32 %v207, %v208
  %v210 = vsel %vm202, %v188, 0.0
  %v211 = vadd.f32 %v209, %v210
  %v212 = vsel %vm202, %v196, 0.0
  %v213 = vadd.f32 %v211, %v212
  %v214 = vsel %vm202, %v189, 0.0
  %v215 = vadd.f32 %v213, %v214
  %v216 = vsel %vm202, %v197, 0.0
  %v217 = vadd.f32 %v215, %v216
  %218 = vadd.xlane.f32.xlu0 %v217
  %v219 = vpop.xlane.xlu0 %218
  %v220 = vmul.f32 %v219, 0.0009765625
  %v221 = vmul.f32 %v186, %v186
  %v222 = vmul.f32 %v187, %v187
  %v223 = vmul.f32 %v188, %v188
  %v224 = vmul.f32 %v189, %v189
  %v229 = vcombine.high %v221, %v221
  %v230 = vcombine.high %v222, %v222
  %v231 = vcombine.high %v223, %v223
  %v232 = vcombine.high %v224, %v224
  %v237 = vsel %vm202, %v221, 0.0
  %v238 = vsel %vm202, %v229, 0.0
  %v239 = vadd.f32 %v237, %v238
  %v240 = vsel %vm202, %v222, 0.0
  %v241 = vadd.f32 %v239, %v240
  %v242 = vsel %vm202, %v230, 0.0
  %v243 = vadd.f32 %v241, %v242
  %v244 = vsel %vm202, %v223, 0.0
  %v245 = vadd.f32 %v243, %v244
  %v246 = vsel %vm202, %v231, 0.0
  %v247 = vadd.f32 %v245, %v246
  %v248 = vsel %vm202, %v224, 0.0
  %v249 = vadd.f32 %v247, %v248
  %v250 = vsel %vm202, %v232, 0.0
  %v251 = vadd.f32 %v249, %v250
  %252 = vadd.xlane.f32.xlu0 %v251
  %v253 = vpop.xlane.xlu0 %252
  %v254 = vmul.f32 %v253, 0.0009765625
  %v255 = vmul.f32 %v220, %v220
  %v256 = vsub.f32 %v254, %v255
  %v257 = vmax.f32 %v256, 0.0
  %v258 = vld [vmem:[%s5] sm:$0xf]
  %v259 = vadd.f32 %v257, 1e-05
  %v260 = vrsqrt.pop %v259
  %v261 = vmul.f32 %v258, %v260
  %v262 = vld [vmem:[%s6] sm:$0xf]
  %v263 = vmul.f32 %v220, %v261
  %v264 = vsub.f32 %v262, %v263
  %266 = vset.pattern.permute.xlu0 0
  %267 = vperm.xlu0 %266, %v261
  %v268 = vpop.permute.xlu0 %267
  %v270 = vunpack.c.l.s4 839922192
  %v271 = vunpack.c.0.s8 %v270
  %v272 = vlaneseq
  %v273 = vshrl.u32 %v272, 7
  %v274 = vsub.s32 %v271, %v273
  %v275 = vrot.slane %v268, %v274
  %v277 = vmul.f32 %v186, %v275
  %v278 = vmul.f32 %v187, %v275
  %v279 = vmul.f32 %v188, %v275
  %v280 = vmul.f32 %v189, %v275
  %282 = vset.pattern.permute.xlu0 0
  %283 = vperm.xlu0 %282, %v264
  %v284 = vpop.permute.xlu0 %283
  %v286 = vunpack.c.l.s4 839922192
  %v287 = vunpack.c.0.s8 %v286
  %v288 = vlaneseq
  %v289 = vshrl.u32 %v288, 7
  %v290 = vsub.s32 %v287, %v289
  %v291 = vrot.slane %v284, %v290
  %v293 = vadd.f32 %v277, %v291
  %v294 = vadd.f32 %v278, %v291
  %v295 = vadd.f32 %v279, %v291
  %v296 = vadd.f32 %v280, %v291
  %vm297 = vcmp.ge.f32.partialorder %v293, 0.0
  %vm298 = vcmp.ge.f32.partialorder %v294, 0.0
  %vm299 = vcmp.ge.f32.partialorder %v295, 0.0
  %vm300 = vcmp.ge.f32.partialorder %v296, 0.0
  %v301 = vmul.f32 %v293, 0.01
  %v302 = vmul.f32 %v294, 0.01
  %v303 = vmul.f32 %v295, 0.01
  %v304 = vmul.f32 %v296, 0.01
  %v305 = vsel %vm297, %v293, %v301
  %v306 = vsel %vm298, %v294, %v302
  %v307 = vsel %vm299, %v295, %v303
  %v308 = vsel %vm300, %v296, %v304
  %v313 = vcombine.high %v305, %v305
  %v314 = vcombine.high %v306, %v306
  %v315 = vcombine.high %v307, %v307
  %v316 = vcombine.high %v308, %v308
  %v321 = vpack.c.bf16 %v305, %v305
  %v322 = vpack.c.bf16 %v313, %v313
  %v323 = vpack.c.bf16 %v306, %v306
  %v324 = vpack.c.bf16 %v314, %v314
  %v325 = vpack.c.bf16 %v307, %v307
  %v326 = vpack.c.bf16 %v315, %v315
  %v327 = vpack.c.bf16 %v308, %v308
  %v328 = vpack.c.bf16 %v316, %v316
  %v337 = vcombine.low %v321, %v322
  %v338 = vcombine.low %v323, %v324
  %v340 = vunpack.c.l.s4 1983009808
  %v341 = vunpack.c.0.s8 %v340
  %v342 = vlaneseq
  %v343 = vshrl.u32 %v342, 7
  %v344 = vsub.s32 %v341, %v343
  %v345 = vrot.slane %v337, %v344
  %v347 = vunpack.c.l.s4 1983009808
  %v348 = vunpack.c.0.s8 %v347
  %v349 = vlaneseq
  %v350 = vshrl.u32 %v349, 7
  %v351 = vsub.s32 %v348, %v350
  %v352 = vrot.slane %v338, %v351
  %v353 = vcombine.low %v345, %v352
  %v354 = vcombine.low %v325, %v326
  %v355 = vcombine.low %v327, %v328
  %v357 = vunpack.c.l.s4 1983009808
  %v358 = vunpack.c.0.s8 %v357
  %v359 = vlaneseq
  %v360 = vshrl.u32 %v359, 7
  %v361 = vsub.s32 %v358, %v360
  %v362 = vrot.slane %v354, %v361
  %v364 = vunpack.c.l.s4 1983009808
  %v365 = vunpack.c.0.s8 %v364
  %v366 = vlaneseq
  %v367 = vshrl.u32 %v366, 7
  %v368 = vsub.s32 %v365, %v367
  %v369 = vrot.slane %v355, %v368
  %v370 = vcombine.low %v362, %v369
  %373 = vst [vmem:[%s7] sm:$0xff] %v353
  %374 = vst [vmem:[%s7 + $0x8] sm:$0xff] %v370
  // Predicated region
  $region30: #{svs_decoder_forward.32} parent=0 // pred_check
    _
  $region31: #{svs_decoder_forward.32} parent=0 // pred_check_branch
    %376 = sbr.rel (0) target = $region33
  $region32: #{svs_decoder_forward.32} parent=0 // pred_region
    _
  $region33: #{svs_decoder_forward.32} parent=0 // pred_fallthru
    _
  // Predicated region
  $region34: #{svs_decoder_forward.32} parent=0 // pred_check
    _
  $region35: #{svs_decoder_forward.32} parent=0 // pred_check_branch
    %378 = sbr.rel (0) target = $region37
  $region36: #{svs_decoder_forward.32} parent=0 // pred_region
    _
  $region37: #{svs_decoder_forward.32} parent=0 // pred_fallthru
    _

// kernel: svs_decoder_forward.33
$region0: #{svs_decoder_forward.33}
  #allocation0 [shape = 'u32[]', space=smem, size = 0x4, offset = 0x4, fixed_abs, tag = 'smem constant byte address 0x4 - core index']
  #allocation1 [shape = 'u32[144,128]{1,0:T(1,128)}', space=vmem, size = 0x12000, scoped, tag = 'internal scratch']
  #allocation2 [shape = 'f32[1,1]{1,0:T(1,128)S(1)}', space=vmem, size = 0x200, scoped, tag = 'scoped memory for svs_decoder_forward.33']
  #allocation3 [shape = 'f32[1,1]{1,0:T(1,128)S(1)}', space=vmem, size = 0x200, scoped, tag = 'scoped memory for svs_decoder_forward.33']
  #allocation4 [shape = 'f32[1,1]{1,0:T(1,128)S(1)}', space=vmem, size = 0x200, scoped, tag = 'scoped memory for svs_decoder_forward.33']
  %s0 = inlined_call_operand.vmem [shape: bf16[8,108], index: 0, kind: input, shape index: {}]
  %s1 = inlined_call_operand.vmem [shape: bf16[108,1024], index: 1, kind: input, shape index: {}]
  %s2 = inlined_call_operand.<no memory space> [shape: f32[1,1], index: 2, kind: input, shape index: {}]
  %s3 = inlined_call_operand.<no memory space> [shape: f32[1,1], index: 3, kind: input, shape index: {}]
  %s4 = inlined_call_operand.<no memory space> [shape: f32[1,1], index: 4, kind: input, shape index: {}]
  %s5 = inlined_call_operand.vmem [shape: f32[8,1024], index: 5, kind: output, shape index: {}]
  %s6 = sld [smem:[#allocation0]]
  $region30: #{svs_decoder_forward.33} parent=0
    _
  %s8 = ssub.s32 1, %s6
  %s9 = scalar_select 0, %s8, %s6
  %v10 = vstv %s2
  %11 = vst [vmem:[#allocation2] sm:$0x1] %v10
  %v12 = vstv %s3
  %13 = vst [vmem:[#allocation3] sm:$0x1] %v12
  %v14 = vstv %s4
  %15 = vst [vmem:[#allocation4] sm:$0x1] %v14
  // Predicated region
  $region2: #{svs_decoder_forward.33} parent=0 // pred_check
    _
  $region3: #{svs_decoder_forward.33} parent=0 // pred_check_branch
    %17 = sbr.rel (0) target = $region5
  $region4: #{svs_decoder_forward.33} parent=0 // pred_region
    _
  $region5: #{svs_decoder_forward.33} parent=0 // pred_fallthru
    _
  // Predicated region
  $region6: #{svs_decoder_forward.33} parent=0 // pred_check
    _
  $region7: #{svs_decoder_forward.33} parent=0 // pred_check_branch
    %19 = sbr.rel (0) target = $region9
  $region8: #{svs_decoder_forward.33} parent=0 // pred_region
    _
  $region9: #{svs_decoder_forward.33} parent=0 // pred_fallthru
    _
  // Predicated region
  $region10: #{svs_decoder_forward.33} parent=0 // pred_check
    _
  $region11: #{svs_decoder_forward.33} parent=0 // pred_check_branch
    %21 = sbr.rel (0) target = $region13
  $region12: #{svs_decoder_forward.33} parent=0 // pred_region
    _
  $region13: #{svs_decoder_forward.33} parent=0 // pred_fallthru
    _
  // Predicated region
  $region14: #{svs_decoder_forward.33} parent=0 // pred_check
    _
  $region15: #{svs_decoder_forward.33} parent=0 // pred_check_branch
    %23 = sbr.rel (0) target = $region17
  $region16: #{svs_decoder_forward.33} parent=0 // pred_region
    _
  $region17: #{svs_decoder_forward.33} parent=0 // pred_fallthru
    _
  // Predicated region
  $region18: #{svs_decoder_forward.33} parent=0 // pred_check
    _
  $region19: #{svs_decoder_forward.33} parent=0 // pred_check_branch
    %25 = sbr.rel (0) target = $region21
  $region20: #{svs_decoder_forward.33} parent=0 // pred_region
    _
  $region21: #{svs_decoder_forward.33} parent=0 // pred_fallthru
    _
  %v27 = vld [vmem:[%s0] sm:$0xf]
  %v28 = vld [vmem:[%s1] sm:$0xff]
  %v29 = vld [vmem:[%s1 + $0x8] sm:$0xff]
  %v30 = vld [vmem:[%s1 + $0x10] sm:$0xff]
  %v31 = vld [vmem:[%s1 + $0x18] sm:$0xff]
  %v32 = vld [vmem:[%s1 + $0x20] sm:$0xff]
  %v33 = vld [vmem:[%s1 + $0x28] sm:$0xff]
  %v34 = vld [vmem:[%s1 + $0x30] sm:$0xff]
  %v35 = vld [vmem:[%s1 + $0x38] sm:$0xff]
  %v36 = vld [vmem:[%s1 + $0x40] sm:$0xff]
  %v37 = vld [vmem:[%s1 + $0x48] sm:$0xff]
  %v38 = vld [vmem:[%s1 + $0x50] sm:$0xff]
  %v39 = vld [vmem:[%s1 + $0x58] sm:$0xff]
  %v40 = vld [vmem:[%s1 + $0x60] sm:$0xff]
  %v41 = vld [vmem:[%s1 + $0x68] sm:$0xff]
  %v42 = vld [vmem:[%s1 + $0x70] sm:$0xff]
  %v43 = vld [vmem:[%s1 + $0x78] sm:$0xff]
  %v44 = vld [vmem:[%s1 + $0x80] sm:$0xff]
  %v45 = vld [vmem:[%s1 + $0x88] sm:$0xff]
  %v46 = vld [vmem:[%s1 + $0x90] sm:$0xff]
  %v47 = vld [vmem:[%s1 + $0x98] sm:$0xff]
  %v48 = vld [vmem:[%s1 + $0xa0] sm:$0xff]
  %v49 = vld [vmem:[%s1 + $0xa8] sm:$0xff]
  %v50 = vld [vmem:[%s1 + $0xb0] sm:$0xff]
  %v51 = vld [vmem:[%s1 + $0xb8] sm:$0xff]
  %v52 = vld [vmem:[%s1 + $0xc0] sm:$0xff]
  %v53 = vld [vmem:[%s1 + $0xc8] sm:$0xff]
  %v54 = vld [vmem:[%s1 + $0xd0] sm:$0xff]
  %v55 = vld [vmem:[%s1 + $0xd8] sm:$0xff]
  %v56 = vld [vmem:[%s1 + $0xe0] sm:$0xff]
  %v57 = vld [vmem:[%s1 + $0xe8] sm:$0xff]
  %v58 = vld [vmem:[%s1 + $0xf0] sm:$0xff]
  %v59 = vld [vmem:[%s1 + $0xf8] sm:$0xff]
  %v60 = vld [vmem:[%s1 + $0x100] sm:$0xff]
  %v61 = vld [vmem:[%s1 + $0x108] sm:$0xff]
  %v62 = vld [vmem:[%s1 + $0x110] sm:$0xff]
  %v63 = vld [vmem:[%s1 + $0x118] sm:$0xff]
  %v64 = vld [vmem:[%s1 + $0x120] sm:$0xff]
  %v65 = vld [vmem:[%s1 + $0x128] sm:$0xff]
  %v66 = vld [vmem:[%s1 + $0x130] sm:$0xff]
  %v67 = vld [vmem:[%s1 + $0x138] sm:$0xff]
  %v68 = vld [vmem:[%s1 + $0x140] sm:$0xff]
  %v69 = vld [vmem:[%s1 + $0x148] sm:$0xff]
  %v70 = vld [vmem:[%s1 + $0x150] sm:$0xff]
  %v71 = vld [vmem:[%s1 + $0x158] sm:$0xff]
  %v72 = vld [vmem:[%s1 + $0x160] sm:$0xff]
  %v73 = vld [vmem:[%s1 + $0x168] sm:$0xff]
  %v74 = vld [vmem:[%s1 + $0x170] sm:$0xff]
  %v75 = vld [vmem:[%s1 + $0x178] sm:$0xff]
  %v76 = vld [vmem:[%s1 + $0x180] sm:$0xff]
  %v77 = vld [vmem:[%s1 + $0x188] sm:$0xff]
  %v78 = vld [vmem:[%s1 + $0x190] sm:$0xff]
  %v79 = vld [vmem:[%s1 + $0x198] sm:$0xff]
  %v80 = vld [vmem:[%s1 + $0x1a0] sm:$0x33]
  %v81 = vld [vmem:[%s1 + $0x1a8] sm:$0x33]
  %v82 = vld [vmem:[%s1 + $0x1b0] sm:$0x33]
  %v83 = vld [vmem:[%s1 + $0x1b8] sm:$0x33]
  %v84 = vld [vmem:[#allocation2] sm:$0x1]
  %v86 = vlaneseq
  %v87 = vshrl.u32 %v86, 7
  %v88 = vsub.s32 0, %v87
  %v89 = vrot.slane %v84, %v88
  %90 = vset.pattern.permute.xlu0 0
  %91 = vperm.xlu0 %90, %v89
  %v92 = vpop.permute.xlu0 %91
  %v150 = vunpack.c.l.b16 %v28
  %v151 = vunpack.c.h.b16 %v28
  %v152 = vunpack.c.l.b16 %v29
  %v153 = vunpack.c.h.b16 %v29
  %v154 = vunpack.c.l.b16 %v30
  %v155 = vunpack.c.h.b16 %v30
  %v156 = vunpack.c.l.b16 %v31
  %v157 = vunpack.c.h.b16 %v31
  %v158 = vunpack.c.l.b16 %v32
  %v159 = vunpack.c.h.b16 %v32
  %v160 = vunpack.c.l.b16 %v33
  %v161 = vunpack.c.h.b16 %v33
  %v162 = vunpack.c.l.b16 %v34
  %v163 = vunpack.c.h.b16 %v34
  %v164 = vunpack.c.l.b16 %v35
  %v165 = vunpack.c.h.b16 %v35
  %v166 = vunpack.c.l.b16 %v36
  %v167 = vunpack.c.h.b16 %v36
  %v168 = vunpack.c.l.b16 %v37
  %v169 = vunpack.c.h.b16 %v37
  %v170 = vunpack.c.l.b16 %v38
  %v171 = vunpack.c.h.b16 %v38
  %v172 = vunpack.c.l.b16 %v39
  %v173 = vunpack.c.h.b16 %v39
  %v174 = vunpack.c.l.b16 %v40
  %v175 = vunpack.c.h.b16 %v40
  %v176 = vunpack.c.l.b16 %v41
  %v177 = vunpack.c.h.b16 %v41
  %v178 = vunpack.c.l.b16 %v42
  %v179 = vunpack.c.h.b16 %v42
  %v180 = vunpack.c.l.b16 %v43
  %v181 = vunpack.c.h.b16 %v43
  %v182 = vunpack.c.l.b16 %v44
  %v183 = vunpack.c.h.b16 %v44
  %v184 = vunpack.c.l.b16 %v45
  %v185 = vunpack.c.h.b16 %v45
  %v186 = vunpack.c.l.b16 %v46
  %v187 = vunpack.c.h.b16 %v46
  %v188 = vunpack.c.l.b16 %v47
  %v189 = vunpack.c.h.b16 %v47
  %v190 = vunpack.c.l.b16 %v48
  %v191 = vunpack.c.h.b16 %v48
  %v192 = vunpack.c.l.b16 %v49
  %v193 = vunpack.c.h.b16 %v49
  %v194 = vunpack.c.l.b16 %v50
  %v195 = vunpack.c.h.b16 %v50
  %v196 = vunpack.c.l.b16 %v51
  %v197 = vunpack.c.h.b16 %v51
  %v198 = vunpack.c.l.b16 %v52
  %v199 = vunpack.c.h.b16 %v52
  %v200 = vunpack.c.l.b16 %v53
  %v201 = vunpack.c.h.b16 %v53
  %v202 = vunpack.c.l.b16 %v54
  %v203 = vunpack.c.h.b16 %v54
  %v204 = vunpack.c.l.b16 %v55
  %v205 = vunpack.c.h.b16 %v55
  %v206 = vunpack.c.l.b16 %v56
  %v207 = vunpack.c.h.b16 %v56
  %v208 = vunpack.c.l.b16 %v57
  %v209 = vunpack.c.h.b16 %v57
  %v210 = vunpack.c.l.b16 %v58
  %v211 = vunpack.c.h.b16 %v58
  %v212 = vunpack.c.l.b16 %v59
  %v213 = vunpack.c.h.b16 %v59
  %v214 = vunpack.c.l.b16 %v60
  %v215 = vunpack.c.h.b16 %v60
  %v216 = vunpack.c.l.b16 %v61
  %v217 = vunpack.c.h.b16 %v61
  %v218 = vunpack.c.l.b16 %v62
  %v219 = vunpack.c.h.b16 %v62
  %v220 = vunpack.c.l.b16 %v63
  %v221 = vunpack.c.h.b16 %v63
  %v222 = vunpack.c.l.b16 %v64
  %v223 = vunpack.c.h.b16 %v64
  %v224 = vunpack.c.l.b16 %v65
  %v225 = vunpack.c.h.b16 %v65
  %v226 = vunpack.c.l.b16 %v66
  %v227 = vunpack.c.h.b16 %v66
  %v228 = vunpack.c.l.b16 %v67
  %v229 = vunpack.c.h.b16 %v67
  %v230 = vunpack.c.l.b16 %v68
  %v231 = vunpack.c.h.b16 %v68
  %v232 = vunpack.c.l.b16 %v69
  %v233 = vunpack.c.h.b16 %v69
  %v234 = vunpack.c.l.b16 %v70
  %v235 = vunpack.c.h.b16 %v70
  %v236 = vunpack.c.l.b16 %v71
  %v237 = vunpack.c.h.b16 %v71
  %v238 = vunpack.c.l.b16 %v72
  %v239 = vunpack.c.h.b16 %v72
  %v240 = vunpack.c.l.b16 %v73
  %v241 = vunpack.c.h.b16 %v73
  %v242 = vunpack.c.l.b16 %v74
  %v243 = vunpack.c.h.b16 %v74
  %v244 = vunpack.c.l.b16 %v75
  %v245 = vunpack.c.h.b16 %v75
  %v246 = vunpack.c.l.b16 %v76
  %v247 = vunpack.c.h.b16 %v76
  %v248 = vunpack.c.l.b16 %v77
  %v249 = vunpack.c.h.b16 %v77
  %v250 = vunpack.c.l.b16 %v78
  %v251 = vunpack.c.h.b16 %v78
  %v252 = vunpack.c.l.b16 %v79
  %v253 = vunpack.c.h.b16 %v79
  %v254 = vunpack.c.l.b16 %v80
  %v255 = vunpack.c.h.b16 %v80
  %v256 = vunpack.c.l.b16 %v81
  %v257 = vunpack.c.h.b16 %v81
  %v258 = vunpack.c.l.b16 %v82
  %v259 = vunpack.c.h.b16 %v82
  %v260 = vunpack.c.l.b16 %v83
  %v261 = vunpack.c.h.b16 %v83
  %v262 = vpack.c.b16 %v158, %v150
  %v263 = vpack.c.b16 %v159, %v151
  %v264 = vpack.c.b16 %v160, %v152
  %v265 = vpack.c.b16 %v161, %v153
  %v266 = vpack.c.b16 %v162, %v154
  %v267 = vpack.c.b16 %v163, %v155
  %v268 = vpack.c.b16 %v164, %v156
  %v269 = vpack.c.b16 %v165, %v157
  %v270 = vpack.c.b16 %v174, %v166
  %v271 = vpack.c.b16 %v175, %v167
  %v272 = vpack.c.b16 %v176, %v168
  %v273 = vpack.c.b16 %v177, %v169
  %v274 = vpack.c.b16 %v178, %v170
  %v275 = vpack.c.b16 %v179, %v171
  %v276 = vpack.c.b16 %v180, %v172
  %v277 = vpack.c.b16 %v181, %v173
  %v278 = vpack.c.b16 %v190, %v182
  %v279 = vpack.c.b16 %v191, %v183
  %v280 = vpack.c.b16 %v192, %v184
  %v281 = vpack.c.b16 %v193, %v185
  %v282 = vpack.c.b16 %v194, %v186
  %v283 = vpack.c.b16 %v195, %v187
  %v284 = vpack.c.b16 %v196, %v188
  %v285 = vpack.c.b16 %v197, %v189
  %v286 = vpack.c.b16 %v206, %v198
  %v287 = vpack.c.b16 %v207, %v199
  %v288 = vpack.c.b16 %v208, %v200
  %v289 = vpack.c.b16 %v209, %v201
  %v290 = vpack.c.b16 %v210, %v202
  %v291 = vpack.c.b16 %v211, %v203
  %v292 = vpack.c.b16 %v212, %v204
  %v293 = vpack.c.b16 %v213, %v205
  %v294 = vpack.c.b16 %v222, %v214
  %v295 = vpack.c.b16 %v223, %v215
  %v296 = vpack.c.b16 %v224, %v216
  %v297 = vpack.c.b16 %v225, %v217
  %v298 = vpack.c.b16 %v226, %v218
  %v299 = vpack.c.b16 %v227, %v219
  %v300 = vpack.c.b16 %v228, %v220
  %v301 = vpack.c.b16 %v229, %v221
  %v302 = vpack.c.b16 %v238, %v230
  %v303 = vpack.c.b16 %v239, %v231
  %v304 = vpack.c.b16 %v240, %v232
  %v305 = vpack.c.b16 %v241, %v233
  %v306 = vpack.c.b16 %v242, %v234
  %v307 = vpack.c.b16 %v243, %v235
  %v308 = vpack.c.b16 %v244, %v236
  %v309 = vpack.c.b16 %v245, %v237
  %v310 = vpack.c.b16 %v254, %v246
  %v311 = vpack.c.b16 %v255, %v247
  %v312 = vpack.c.b16 %v256, %v248
  %v313 = vpack.c.b16 %v257, %v249
  %v314 = vpack.c.b16 %v258, %v250
  %v315 = vpack.c.b16 %v259, %v251
  %v316 = vpack.c.b16 %v260, %v252
  %v317 = vpack.c.b16 %v261, %v253
  %vm366 = vcmask 883712
  %v368 = vsel %vm366, %v27, 0
  %vm370 = vcmask 1045504
  %v372 = vsel %vm370, %v310, 0
  %v375 = vsel %vm370, %v311, 0
  %v378 = vsel %vm370, %v312, 0
  %v381 = vsel %vm370, %v313, 0
  %v384 = vsel %vm370, %v314, 0
  %v387 = vsel %vm370, %v315, 0
  %v390 = vsel %vm370, %v316, 0
  %v393 = vsel %vm370, %v317, 0
  %395 = vmatprep.subr.bf16.mxu0 0
  %396 = vmatpush1.bf16.msra.mxu0 0
  %397 = vmatprep.subr.bf16.mxu0 %v375
  %398 = vmatpush1.bf16.msra.mxu0 %v372
  %399 = vmatprep.subr.bf16.mxu0 %v303
  %400 = vmatpush1.bf16.msra.mxu0 %v302
  %401 = vmatprep.subr.bf16.mxu0 %v295
  %402 = vmatpush1.bf16.msra.mxu0 %v294
  %403 = vmatprep.subr.bf16.mxu0 %v287
  %404 = vmatpush1.bf16.msra.mxu0 %v286
  %405 = vmatprep.subr.bf16.mxu0 %v279
  %406 = vmatpush1.bf16.msra.mxu0 %v278
  %407 = vmatprep.subr.bf16.mxu0 %v271
  %408 = vmatpush1.bf16.msra.mxu0 %v270
  %409 = vmatprep.subr.bf16.mxu0 %v263
  %410 = vmatpush1.bf16.msra.mxu0 %v262
  %411 = vmatprep.subr.bf16.mxu0 0
  %412 = vmatpush2.bf16.msra.mxu0 0
  %413 = vmatprep.subr.bf16.mxu0 0
  %414 = vmatpush2.bf16.msra.mxu0 0
  %415 = vmatprep.subr.bf16.mxu0 0
  %416 = vmatpush2.bf16.msra.mxu0 0
  %417 = vmatprep.subr.bf16.mxu0 0
  %418 = vmatpush2.bf16.msra.mxu0 0
  %419 = vmatprep.subr.bf16.mxu0 0
  %420 = vmatpush2.bf16.msra.mxu0 0
  %421 = vmatprep.subr.bf16.mxu0 0
  %422 = vmatpush2.bf16.msra.mxu0 0
  %423 = vmatprep.subr.bf16.mxu0 0
  %424 = vmatpush2.bf16.msra.mxu0 0
  %425 = vmatprep.subr.bf16.mxu0 0
  %426 = vmatpush2.bf16.msra.mxu0 0
  %427 = vmatprep.mubr.bf16.mxu0 0
  %428 = vmatmul.mubr.bf16.gmra.mxu0 %v368
  %v429 = vpop.f32.mrf.mxu0
  %v430 = vadd.f32 %v92, %v429
  %v431 = vpop.f32.mrf.mxu0
  %v432 = vadd.f32 %v92, %v431
  %v433 = vpop.f32.mrf.mxu0
  %v434 = vpop.f32.mrf.mxu0
  %435 = vdwg.mxu0
  %436 = vmatprep.subr.bf16.mxu0 0
  %437 = vmatpush1.bf16.msra.mxu0 0
  %438 = vmatprep.subr.bf16.mxu0 %v381
  %439 = vmatpush1.bf16.msra.mxu0 %v378
  %440 = vmatprep.subr.bf16.mxu0 %v305
  %441 = vmatpush1.bf16.msra.mxu0 %v304
  %442 = vmatprep.subr.bf16.mxu0 %v297
  %443 = vmatpush1.bf16.msra.mxu0 %v296
  %444 = vmatprep.subr.bf16.mxu0 %v289
  %445 = vmatpush1.bf16.msra.mxu0 %v288
  %446 = vmatprep.subr.bf16.mxu0 %v281
  %447 = vmatpush1.bf16.msra.mxu0 %v280
  %448 = vmatprep.subr.bf16.mxu0 %v273
  %449 = vmatpush1.bf16.msra.mxu0 %v272
  %450 = vmatprep.subr.bf16.mxu0 %v265
  %451 = vmatpush1.bf16.msra.mxu0 %v264
  %452 = vmatprep.subr.bf16.mxu0 0
  %453 = vmatpush2.bf16.msra.mxu0 0
  %454 = vmatprep.subr.bf16.mxu0 0
  %455 = vmatpush2.bf16.msra.mxu0 0
  %456 = vmatprep.subr.bf16.mxu0 0
  %457 = vmatpush2.bf16.msra.mxu0 0
  %458 = vmatprep.subr.bf16.mxu0 0
  %459 = vmatpush2.bf16.msra.mxu0 0
  %460 = vmatprep.subr.bf16.mxu0 0
  %461 = vmatpush2.bf16.msra.mxu0 0
  %462 = vmatprep.subr.bf16.mxu0 0
  %463 = vmatpush2.bf16.msra.mxu0 0
  %464 = vmatprep.subr.bf16.mxu0 0
  %465 = vmatpush2.bf16.msra.mxu0 0
  %466 = vmatprep.subr.bf16.mxu0 0
  %467 = vmatpush2.bf16.msra.mxu0 0
  %468 = vmatprep.mubr.bf16.mxu0 0
  %469 = vmatmul.mubr.bf16.gmra.mxu0 %v368
  %v470 = vpop.f32.mrf.mxu0
  %v471 = vadd.f32 %v92, %v470
  %v472 = vpop.f32.mrf.mxu0
  %v473 = vadd.f32 %v92, %v472
  %v474 = vpop.f32.mrf.mxu0
  %v475 = vpop.f32.mrf.mxu0
  %476 = vdwg.mxu0
  %477 = vmatprep.subr.bf16.mxu0 0
  %478 = vmatpush1.bf16.msra.mxu0 0
  %479 = vmatprep.subr.bf16.mxu0 %v387
  %480 = vmatpush1.bf16.msra.mxu0 %v384
  %481 = vmatprep.subr.bf16.mxu0 %v307
  %482 = vmatpush1.bf16.msra.mxu0 %v306
  %483 = vmatprep.subr.bf16.mxu0 %v299
  %484 = vmatpush1.bf16.msra.mxu0 %v298
  %485 = vmatprep.subr.bf16.mxu0 %v291
  %486 = vmatpush1.bf16.msra.mxu0 %v290
  %487 = vmatprep.subr.bf16.mxu0 %v283
  %488 = vmatpush1.bf16.msra.mxu0 %v282
  %489 = vmatprep.subr.bf16.mxu0 %v275
  %490 = vmatpush1.bf16.msra.mxu0 %v274
  %491 = vmatprep.subr.bf16.mxu0 %v267
  %492 = vmatpush1.bf16.msra.mxu0 %v266
  %493 = vmatprep.subr.bf16.mxu0 0
  %494 = vmatpush2.bf16.msra.mxu0 0
  %495 = vmatprep.subr.bf16.mxu0 0
  %496 = vmatpush2.bf16.msra.mxu0 0
  %497 = vmatprep.subr.bf16.mxu0 0
  %498 = vmatpush2.bf16.msra.mxu0 0
  %499 = vmatprep.subr.bf16.mxu0 0
  %500 = vmatpush2.bf16.msra.mxu0 0
  %501 = vmatprep.subr.bf16.mxu0 0
  %502 = vmatpush2.bf16.msra.mxu0 0
  %503 = vmatprep.subr.bf16.mxu0 0
  %504 = vmatpush2.bf16.msra.mxu0 0
  %505 = vmatprep.subr.bf16.mxu0 0
  %506 = vmatpush2.bf16.msra.mxu0 0
  %507 = vmatprep.subr.bf16.mxu0 0
  %508 = vmatpush2.bf16.msra.mxu0 0
  %509 = vmatprep.mubr.bf16.mxu0 0
  %510 = vmatmul.mubr.bf16.gmra.mxu0 %v368
  %v511 = vpop.f32.mrf.mxu0
  %v512 = vadd.f32 %v92, %v511
  %v513 = vpop.f32.mrf.mxu0
  %v514 = vadd.f32 %v92, %v513
  %v515 = vpop.f32.mrf.mxu0
  %v516 = vpop.f32.mrf.mxu0
  %517 = vdwg.mxu0
  %518 = vmatprep.subr.bf16.mxu0 0
  %519 = vmatpush1.bf16.msra.mxu0 0
  %520 = vmatprep.subr.bf16.mxu0 %v393
  %521 = vmatpush1.bf16.msra.mxu0 %v390
  %522 = vmatprep.subr.bf16.mxu0 %v309
  %523 = vmatpush1.bf16.msra.mxu0 %v308
  %524 = vmatprep.subr.bf16.mxu0 %v301
  %525 = vmatpush1.bf16.msra.mxu0 %v300
  %526 = vmatprep.subr.bf16.mxu0 %v293
  %527 = vmatpush1.bf16.msra.mxu0 %v292
  %528 = vmatprep.subr.bf16.mxu0 %v285
  %529 = vmatpush1.bf16.msra.mxu0 %v284
  %530 = vmatprep.subr.bf16.mxu0 %v277
  %531 = vmatpush1.bf16.msra.mxu0 %v276
  %532 = vmatprep.subr.bf16.mxu0 %v269
  %533 = vmatpush1.bf16.msra.mxu0 %v268
  %534 = vmatprep.subr.bf16.mxu0 0
  %535 = vmatpush2.bf16.msra.mxu0 0
  %536 = vmatprep.subr.bf16.mxu0 0
  %537 = vmatpush2.bf16.msra.mxu0 0
  %538 = vmatprep.subr.bf16.mxu0 0
  %539 = vmatpush2.bf16.msra.mxu0 0
  %540 = vmatprep.subr.bf16.mxu0 0
  %541 = vmatpush2.bf16.msra.mxu0 0
  %542 = vmatprep.subr.bf16.mxu0 0
  %543 = vmatpush2.bf16.msra.mxu0 0
  %544 = vmatprep.subr.bf16.mxu0 0
  %545 = vmatpush2.bf16.msra.mxu0 0
  %546 = vmatprep.subr.bf16.mxu0 0
  %547 = vmatpush2.bf16.msra.mxu0 0
  %548 = vmatprep.subr.bf16.mxu0 0
  %549 = vmatpush2.bf16.msra.mxu0 0
  %550 = vmatprep.mubr.bf16.mxu0 0
  %551 = vmatmul.mubr.bf16.gmra.mxu0 %v368
  %v552 = vpop.f32.mrf.mxu0
  %v553 = vadd.f32 %v92, %v552
  %v554 = vpop.f32.mrf.mxu0
  %v555 = vadd.f32 %v92, %v554
  %v556 = vpop.f32.mrf.mxu0
  %v557 = vpop.f32.mrf.mxu0
  %558 = vdwg.mxu0
  %v559 = vadd.f32 %v430, %v432
  %v560 = vadd.f32 %v559, %v471
  %v561 = vadd.f32 %v560, %v473
  %v562 = vadd.f32 %v561, %v512
  %v563 = vadd.f32 %v562, %v514
  %v564 = vadd.f32 %v563, %v553
  %v565 = vadd.f32 %v564, %v555
  %566 = vadd.xlane.f32.xlu0 %v565
  %v567 = vpop.xlane.xlu0 %566
  %v568 = vrot.slane %v567, 4
  %v569 = vadd.f32 %v567, %v568
  %v570 = vrot.slane %v569, 2
  %v571 = vadd.f32 %v569, %v570
  %v572 = vrot.slane %v571, 1
  %v573 = vadd.f32 %v571, %v572
  %v574 = vmul.f32 %v430, %v430
  %v575 = vmul.f32 %v432, %v432
  %v576 = vmul.f32 %v471, %v471
  %v577 = vmul.f32 %v473, %v473
  %v578 = vmul.f32 %v512, %v512
  %v579 = vmul.f32 %v514, %v514
  %v580 = vmul.f32 %v553, %v553
  %v581 = vmul.f32 %v555, %v555
  %v582 = vadd.f32 %v574, %v575
  %v583 = vadd.f32 %v582, %v576
  %v584 = vadd.f32 %v583, %v577
  %v585 = vadd.f32 %v584, %v578
  %v586 = vadd.f32 %v585, %v579
  %v587 = vadd.f32 %v586, %v580
  %v588 = vadd.f32 %v587, %v581
  %589 = vadd.xlane.f32.xlu0 %v588
  %v590 = vpop.xlane.xlu0 %589
  %v591 = vrot.slane %v590, 4
  %v592 = vadd.f32 %v590, %v591
  %v593 = vrot.slane %v592, 2
  %v594 = vadd.f32 %v592, %v593
  %v595 = vrot.slane %v594, 1
  %v596 = vadd.f32 %v594, %v595
  %v597 = vmul.f32 %v573, 0.00012207031
  %v598 = vmul.f32 %v596, 0.00012207031
  %v599 = vmul.f32 %v597, %v597
  %v600 = vsub.f32 %v598, %v599
  %v601 = vmax.f32 %v600, 0.0
  %v602 = vld [vmem:[#allocation3] sm:$0x1]
  %v603 = vadd.f32 %v601, 1e-05
  %v604 = vrsqrt.pop %v603
  %v605 = vmul.f32 %v602, %v604
  %v606 = vld [vmem:[#allocation4] sm:$0x1]
  %v607 = vmul.f32 %v597, %v605
  %v608 = vsub.f32 %v606, %v607
  %v610 = vlaneseq
  %v611 = vshrl.u32 %v610, 7
  %v612 = vsub.s32 0, %v611
  %v613 = vrot.slane %v605, %v612
  %614 = vset.pattern.permute.xlu0 0
  %615 = vperm.xlu0 %614, %v613
  %v616 = vpop.permute.xlu0 %615
  %v618 = vmul.f32 %v430, %v616
  %v619 = vmul.f32 %v432, %v616
  %v620 = vmul.f32 %v471, %v616
  %v621 = vmul.f32 %v473, %v616
  %v622 = vmul.f32 %v512, %v616
  %v623 = vmul.f32 %v514, %v616
  %v624 = vmul.f32 %v553, %v616
  %v625 = vmul.f32 %v555, %v616
  %v627 = vlaneseq
  %v628 = vshrl.u32 %v627, 7
  %v629 = vsub.s32 0, %v628
  %v630 = vrot.slane %v608, %v629
  %631 = vset.pattern.permute.xlu0 0
  %632 = vperm.xlu0 %631, %v630
  %v633 = vpop.permute.xlu0 %632
  %v635 = vadd.f32 %v618, %v633
  %v636 = vadd.f32 %v619, %v633
  %v637 = vadd.f32 %v620, %v633
  %v638 = vadd.f32 %v621, %v633
  %v639 = vadd.f32 %v622, %v633
  %v640 = vadd.f32 %v623, %v633
  %v641 = vadd.f32 %v624, %v633
  %v642 = vadd.f32 %v625, %v633
  %v643 = vtanh.pop %v635
  %v644 = vtanh.pop %v636
  %v645 = vtanh.pop %v637
  %v646 = vtanh.pop %v638
  %v647 = vtanh.pop %v639
  %v648 = vtanh.pop %v640
  %v649 = vtanh.pop %v641
  %v650 = vtanh.pop %v642
  %651 = vst [vmem:[%s5] sm:$0xff] %v643
  %652 = vst [vmem:[%s5 + $0x8] sm:$0xff] %v644
  %653 = vst [vmem:[%s5 + $0x10] sm:$0xff] %v645
  %654 = vst [vmem:[%s5 + $0x18] sm:$0xff] %v646
  %655 = vst [vmem:[%s5 + $0x20] sm:$0xff] %v647
  %656 = vst [vmem:[%s5 + $0x28] sm:$0xff] %v648
  %657 = vst [vmem:[%s5 + $0x30] sm:$0xff] %v649
  %658 = vst [vmem:[%s5 + $0x38] sm:$0xff] %v650
  // Predicated region
  $region22: #{svs_decoder_forward.33} parent=0 // pred_check
    _
  $region23: #{svs_decoder_forward.33} parent=0 // pred_check_branch
    %660 = sbr.rel (0) target = $region25
  $region24: #{svs_decoder_forward.33} parent=0 // pred_region
    _
  $region25: #{svs_decoder_forward.33} parent=0 // pred_fallthru
    _
  // Predicated region
  $region26: #{svs_decoder_forward.33} parent=0 // pred_check
    _
  $region27: #{svs_decoder_forward.33} parent=0 // pred_check_branch
    %662 = sbr.rel (0) target = $region29
  $region28: #{svs_decoder_forward.33} parent=0 // pred_region
    _
  $region29: #{svs_decoder_forward.33} parent=0 // pred_fallthru
    _

</llo_original>
